<compile_context>
chip_gen: v5e
topology: v5e:2x2
jax: 0.10.0
libtpu: 0.0.40
codegen_flags: <defaults>
</compile_context>

<pallas_src>
import numpy as np
import jax
import jax.numpy as jnp
from jax import lax
from jax.experimental import pallas as pl
from jax.experimental.pallas import tpu as pltpu

# ---- hyperparameters (small, consistent with the module's [..., N, D] tokens) ----
B, N, D = 2, 8, 32      # batch, tokens, feature dim
H, Y = 2, 16            # attention heads, head dim
M = 64                  # hopfield memories
STEPS = 12              # module default
ALPHA = 1.0             # module default
EPS = 1e-5
BETA = 1.0 / (Y ** 0.5)
NEG_INF = -1e30         # additive mask value (exp underflows to exactly 0 in f32)

BN = B * N              # 16  (token rows, 2-D view)
HY = H * Y              # 32
P = M + 2 * HY          # 128 fused projection width (fills a full vreg lane width)


# ------------------------------------------------------------------ pure-JAX reference energy
def total_energy(x, wq, wk, xi, gamma, delta):
    """Pure-JAX energy (used for the autodiff reference check)."""
    mu = jnp.mean(x, axis=-1, keepdims=True)
    xc = x - mu
    var = jnp.mean(xc * xc, axis=-1, keepdims=True)
    inv = lax.rsqrt(var + EPS)
    g = gamma.reshape(1, 1, D) * (xc * inv) + delta.reshape(1, 1, D)
    gf = g.reshape(BN, D)
    # hopfield
    hid = jnp.dot(gf, xi, preferred_element_type=jnp.float32)
    r = jnp.maximum(hid, 0.0)
    e = -0.5 * jnp.sum(r * r)
    # attention (per-batch logsumexp over keys)
    for h in range(H):
        q = jnp.dot(gf, wq[h], preferred_element_type=jnp.float32).reshape(B, N, Y)
        k = jnp.dot(gf, wk[h], preferred_element_type=jnp.float32).reshape(B, N, Y)
        a = BETA * jnp.einsum('bcy,bky->bck', q, k, preferred_element_type=jnp.float32)
        mmax = jnp.max(a, axis=-1, keepdims=True)
        lse = mmax + jnp.log(jnp.sum(jnp.exp(a - mmax), axis=-1, keepdims=True))
        e = e - jnp.sum(lse) / BETA
    return e


# ------------------------------------------------------------------ Pallas kernel
def et_descent_kernel(x_ref, wfwd_ref, wbwd_ref, gamma_ref, delta_ref, mask_ref,
                      tok_ref, efin_ref):
    x0 = x_ref[...]                            # [BN, D] f32
    w_fwd = wfwd_ref[...]                      # [D, P]  bf16 = [xi | Wq(h0,h1) | Wk(h0,h1)]
    w_bwd = wbwd_ref[...]                      # [P, D]  bf16 = -(w_fwd^T), pre-negated in wrapper
    gamma = gamma_ref[...]                     # [1, D]  f32
    delta = delta_ref[...]                     # [1, D]  f32
    mask = mask_ref[...]                       # [BN, BN] f32 block-diagonal additive mask

    def layer_norm(x):
        mu = jnp.mean(x, axis=-1, keepdims=True)
        xc = x - mu
        var = jnp.mean(xc * xc, axis=-1, keepdims=True)
        inv = lax.rsqrt(var + EPS)
        xhat = xc * inv
        return gamma * xhat + delta, xhat, inv

    def project(g):
        # ONE fused 128-lane MXU matmul (bf16 operands, f32 accumulation) for the hopfield
        # hidden layer plus all heads' q and k; result is lane-sliced, no reshapes.
        proj = jnp.dot(g.astype(jnp.bfloat16), w_fwd,
                       preferred_element_type=jnp.float32)          # [BN, P]
        hid = proj[:, :M]                                           # [BN, M]
        qs = [proj[:, M + h * Y:M + (h + 1) * Y] for h in range(H)]         # [BN, Y]
        ks = [proj[:, M + HY + h * Y:M + HY + (h + 1) * Y] for h in range(H)]
        return hid, qs, ks

    def attn_logits(q_h, k_h):
        # Flat [BN,BN] logits (contract last dims, no explicit transpose) + block-diag mask.
        s = BETA * lax.dot_general(q_h, k_h, (((1,), (1,)), ((), ())),
                                   preferred_element_type=jnp.float32)
        s = s + mask
        mrow = jnp.max(s, axis=-1, keepdims=True)
        return jnp.exp(s - mrow), mrow          # unnormalized probs (masked entries -> 0), row max

    def grad_fn(x):
        # gradient-only path: no energy/log/lse work emitted inside the descent loop
        g, xhat, inv = layer_norm(x)
        hid, qs, ks = project(g)

        # hopfield: -dE/d(proj_hid) = relu(hid)   (sign folded into w_bwd)
        r = jnp.maximum(hid, 0.0)                                   # [BN, M]

        dq_cols, dk_cols = [], []
        for h in range(H):
            p_un, _ = attn_logits(qs[h], ks[h])                     # [BN, BN]
            denom = jnp.sum(p_un, axis=-1, keepdims=True)
            p = p_un * pl.reciprocal(denom, approx=True)            # softmax; EUP reciprocal
            # -dE/dq = P @ k ; -dE/dk = P^T @ q   (signs folded into w_bwd)
            dq_cols.append(jnp.dot(p, ks[h], preferred_element_type=jnp.float32))
            dk_cols.append(lax.dot_general(p, qs[h], (((0,), (0,)), ((), ())),
                                           preferred_element_type=jnp.float32))

        # ONE fused backward matmul: [r | P@k (h0,h1) | P^T@q (h0,h1)] @ (-w_fwd^T) = dE/dg.
        # (in-vreg lane concat; pieces at static offsets 0/64/80/96/112)
        grad_proj = jnp.concatenate([r] + dq_cols + dk_cols, axis=-1)       # [BN, P]
        dg = jnp.dot(grad_proj.astype(jnp.bfloat16), w_bwd,
                     preferred_element_type=jnp.float32)                    # [BN, D]

        # layer-norm backward (gamma/delta constants w.r.t. x); f32 throughout
        dxhat = dg * gamma
        m1 = jnp.mean(dxhat, axis=-1, keepdims=True)
        m2 = jnp.mean(dxhat * xhat, axis=-1, keepdims=True)
        return inv * (dxhat - m1 - xhat * m2)                        # dE/dx

    def energy_fn(x):
        # energy-only path: no backward matmuls / LN backward (runs once, after the loop)
        g, _, _ = layer_norm(x)
        hid, qs, ks = project(g)
        r = jnp.maximum(hid, 0.0)
        e = -0.5 * jnp.sum(r * r)
        for h in range(H):
            p_un, mrow = attn_logits(qs[h], ks[h])
            lse = mrow + jnp.log(jnp.sum(p_un, axis=-1, keepdims=True))
            e = e - jnp.sum(lse) / BETA
        return e

    def step(_, x):
        return x - ALPHA * grad_fn(x)

    # STEPS is small and static: unroll so the LLO scheduler gets slack (shapes are tiny,
    # far from vreg-spill territory).
    xf = lax.fori_loop(0, STEPS, step, x0, unroll=True)

    tok_ref[...] = xf.astype(tok_ref.dtype)
    efin_ref[0, 0] = energy_fn(xf)              # scalar energy -> SMEM output


def _full_spec(shape):
    return pl.BlockSpec(shape, lambda *_: (0,) * len(shape))


@jax.jit
def et_forward_pallas(x, wq, wk, xi, gamma, delta):
    # Build fused projection weights once, XLA-side (free relative to the kernel):
    #   w_fwd columns: [ xi (M) | Wq flattened (H*Y) | Wk flattened (H*Y) ]  -> [D, 128]
    #   w_bwd = -(w_fwd^T): pre-transposed AND pre-negated so the kernel never transposes
    #   weights or negates gradients in the descent loop. Both cast to bf16 for the MXU.
    wq_f = jnp.transpose(wq, (1, 0, 2)).reshape(D, HY)
    wk_f = jnp.transpose(wk, (1, 0, 2)).reshape(D, HY)
    w_fwd = jnp.concatenate([xi, wq_f, wk_f], axis=1).astype(jnp.float32)   # [D, P]
    w_fwd_bf = w_fwd.astype(jnp.bfloat16)
    w_bwd_bf = (-w_fwd.T).astype(jnp.bfloat16)                              # [P, D]

    # Block-diagonal additive attention mask over the flat [BN, BN] logits.
    batch_id = jnp.arange(BN, dtype=jnp.int32) // N
    mask = jnp.where(batch_id[:, None] == batch_id[None, :], 0.0, NEG_INF)
    mask = mask.astype(jnp.float32)                                         # [BN, BN]

    x2 = x.reshape(BN, D).astype(jnp.float32)   # keep tokens 2-D inside the kernel

    tokens2, e_final = pl.pallas_call(
        et_descent_kernel,
        out_shape=(
            jax.ShapeDtypeStruct((BN, D), jnp.float32),
            jax.ShapeDtypeStruct((1, 1), jnp.float32),
        ),
        grid=(1,),
        in_specs=[
            _full_spec((BN, D)),
            _full_spec((D, P)),
            _full_spec((P, D)),
            _full_spec((1, D)),
            _full_spec((1, D)),
            _full_spec((BN, BN)),
        ],
        out_specs=(
            _full_spec((BN, D)),
            pl.BlockSpec(memory_space=pltpu.SMEM),   # scalar energy lives in SMEM
        ),
        compiler_params=pltpu.CompilerParams(dimension_semantics=("arbitrary",)),
    )(x2, w_fwd_bf, w_bwd_bf, gamma, delta, mask)
    return tokens2.reshape(B, N, D), e_final[0, 0]


# ------------------------------------------------------------------ pure-JAX reference
@jax.jit
def et_forward_ref(x, wq, wk, xi, gamma, delta):
    grad_fn = jax.grad(total_energy)

    def step(_, xc):
        return xc - ALPHA * grad_fn(xc, wq, wk, xi, gamma, delta)

    xf = lax.fori_loop(0, STEPS, step, x)
    return xf, total_energy(xf, wq, wk, xi, gamma, delta)


if __name__ == "__main__":
    key = jax.random.PRNGKey(0)
    kx, kq, kk, km = jax.random.split(key, 4)
    x = jax.random.normal(kx, (B, N, D), jnp.float32)
    wq = 0.08 * jax.random.normal(kq, (H, D, Y), jnp.float32)
    wk = 0.08 * jax.random.normal(kk, (H, D, Y), jnp.float32)
    xi = 0.08 * jax.random.normal(km, (D, M), jnp.float32)
    gamma = jnp.ones((1, D), jnp.float32)
    delta = jnp.zeros((1, D), jnp.float32)

    tokens, e_final = et_forward_pallas(x, wq, wk, xi, gamma, delta)
    jax.block_until_ready((tokens, e_final))

    tokens_ref, e_ref = et_forward_ref(x, wq, wk, xi, gamma, delta)
    jax.block_until_ready((tokens_ref, e_ref))

    # Tolerances account for bf16 MXU operands + approx EUP reciprocal compounding over the
    # 12 unrolled descent steps (reference path is full-f32 autodiff).
    assert np.allclose(np.asarray(tokens), np.asarray(tokens_ref), rtol=5e-2, atol=1e-1), (
        np.max(np.abs(np.asarray(tokens) - np.asarray(tokens_ref))))
    assert np.allclose(float(e_final), float(e_ref), rtol=5e-2, atol=5e-1), (
        float(e_final), float(e_ref))

    print("KERNEL_OK")
</pallas_src>

<mosaic_0001>
module attributes {stable_mosaic.version = 11 : i64} {
  func.func @et_descent_kernel(%arg0: i32, %arg1: memref<16x32xf32, #tpu.memory_space<vmem>>, %arg2: memref<32x128xbf16, #tpu.memory_space<vmem>>, %arg3: memref<128x32xbf16, #tpu.memory_space<vmem>>, %arg4: memref<1x32xf32, #tpu.memory_space<vmem>>, %arg5: memref<1x32xf32, #tpu.memory_space<vmem>>, %arg6: memref<16x16xf32, #tpu.memory_space<vmem>>, %arg7: memref<16x32xf32, #tpu.memory_space<vmem>>, %arg8: memref<1x1xf32, #tpu.memory_space<smem>>) attributes {dimension_semantics = [#tpu.dimension_semantics<arbitrary>], iteration_bounds = array<i64: 1>, scalar_prefetch = 0 : i64, scratch_operands = 0 : i64, tpu.core_type = #tpu.core_type<tc>, window_params = [{pipeline_mode = #tpu.pipeline_mode<synchronous>, transform_indices = @transform_0, window_bounds = array<i64: 16, 32>}, {pipeline_mode = #tpu.pipeline_mode<synchronous>, transform_indices = @transform_1, window_bounds = array<i64: 32, 128>}, {pipeline_mode = #tpu.pipeline_mode<synchronous>, transform_indices = @transform_2, window_bounds = array<i64: 128, 32>}, {pipeline_mode = #tpu.pipeline_mode<synchronous>, transform_indices = @transform_3, window_bounds = array<i64: 1, 32>}, {pipeline_mode = #tpu.pipeline_mode<synchronous>, transform_indices = @transform_4, window_bounds = array<i64: 1, 32>}, {pipeline_mode = #tpu.pipeline_mode<synchronous>, transform_indices = @transform_5, window_bounds = array<i64: 16, 16>}, {pipeline_mode = #tpu.pipeline_mode<synchronous>, transform_indices = @transform_6, window_bounds = array<i64: 16, 32>}, {transform_indices = @transform_7, window_bounds = array<i64: 1, 1>}]} {
    %c0 = arith.constant 0 : index
    %c0_0 = arith.constant 0 : index
    %0 = vector.load %arg1[%c0, %c0_0] : memref<16x32xf32, #tpu.memory_space<vmem>>, vector<16x32xf32>
    %c0_1 = arith.constant 0 : index
    %c0_2 = arith.constant 0 : index
    %1 = vector.load %arg2[%c0_1, %c0_2] : memref<32x128xbf16, #tpu.memory_space<vmem>>, vector<32x128xbf16>
    %c0_3 = arith.constant 0 : index
    %c0_4 = arith.constant 0 : index
    %2 = vector.load %arg3[%c0_3, %c0_4] : memref<128x32xbf16, #tpu.memory_space<vmem>>, vector<128x32xbf16>
    %c0_5 = arith.constant 0 : index
    %c0_6 = arith.constant 0 : index
    %3 = vector.load %arg4[%c0_5, %c0_6] : memref<1x32xf32, #tpu.memory_space<vmem>>, vector<1x32xf32>
    %c0_7 = arith.constant 0 : index
    %c0_8 = arith.constant 0 : index
    %4 = vector.load %arg5[%c0_7, %c0_8] : memref<1x32xf32, #tpu.memory_space<vmem>>, vector<1x32xf32>
    %c0_9 = arith.constant 0 : index
    %c0_10 = arith.constant 0 : index
    %5 = vector.load %arg6[%c0_9, %c0_10] : memref<16x16xf32, #tpu.memory_space<vmem>>, vector<16x16xf32>
    %c0_i32 = arith.constant 0 : i32
    %cst = arith.constant dense<0.000000e+00> : vector<16xf32>
    %6 = vector.multi_reduction <add>, %0, %cst [1] : vector<16x32xf32> to vector<16xf32>
    %7 = vector.shape_cast %6 : vector<16xf32> to vector<16x1xf32>
    %cst_11 = arith.constant 3.200000e+01 : f32
    %8 = vector.broadcast %cst_11 : f32 to vector<16x1xf32>
    %9 = arith.divf %7, %8 : vector<16x1xf32>
    %10 = vector.broadcast %9 : vector<16x1xf32> to vector<16x32xf32>
    %11 = arith.subf %0, %10 : vector<16x32xf32>
    %12 = arith.mulf %11, %11 : vector<16x32xf32>
    %cst_12 = arith.constant dense<0.000000e+00> : vector<16xf32>
    %13 = vector.multi_reduction <add>, %12, %cst_12 [1] : vector<16x32xf32> to vector<16xf32>
    %14 = vector.shape_cast %13 : vector<16xf32> to vector<16x1xf32>
    %cst_13 = arith.constant 3.200000e+01 : f32
    %15 = vector.broadcast %cst_13 : f32 to vector<16x1xf32>
    %16 = arith.divf %14, %15 : vector<16x1xf32>
    %cst_14 = arith.constant 9.99999974E-6 : f32
    %17 = vector.broadcast %cst_14 : f32 to vector<16x1xf32>
    %18 = arith.addf %16, %17 : vector<16x1xf32>
    %19 = math.rsqrt %18 : vector<16x1xf32>
    %20 = vector.broadcast %19 : vector<16x1xf32> to vector<16x32xf32>
    %21 = arith.mulf %11, %20 : vector<16x32xf32>
    %22 = vector.broadcast %3 : vector<1x32xf32> to vector<16x32xf32>
    %23 = arith.mulf %22, %21 : vector<16x32xf32>
    %24 = vector.broadcast %4 : vector<1x32xf32> to vector<16x32xf32>
    %25 = arith.addf %23, %24 : vector<16x32xf32>
    %26 = arith.truncf %25 : vector<16x32xf32> to vector<16x32xbf16>
    %cst_15 = arith.constant dense<0.000000e+00> : vector<16x128xf32>
    %27 = tpu.matmul %26, %1, %cst_15 {dimension_numbers = #tpu.dot_dimension_numbers<[1], [0], [0], [1], [0, 0, 1, 1], [], []>} : vector<16x32xbf16>, vector<32x128xbf16>, vector<16x128xf32> -> vector<16x128xf32>
    %28 = vector.extract_strided_slice %27 {offsets = [0, 0], sizes = [16, 64], strides = [1, 1]} : vector<16x128xf32> to vector<16x64xf32>
    %29 = vector.extract_strided_slice %27 {offsets = [0, 64], sizes = [16, 16], strides = [1, 1]} : vector<16x128xf32> to vector<16x16xf32>
    %30 = vector.extract_strided_slice %27 {offsets = [0, 80], sizes = [16, 16], strides = [1, 1]} : vector<16x128xf32> to vector<16x16xf32>
    %31 = vector.extract_strided_slice %27 {offsets = [0, 96], sizes = [16, 16], strides = [1, 1]} : vector<16x128xf32> to vector<16x16xf32>
    %32 = vector.extract_strided_slice %27 {offsets = [0, 112], sizes = [16, 16], strides = [1, 1]} : vector<16x128xf32> to vector<16x16xf32>
    %cst_16 = arith.constant 0.000000e+00 : f32
    %33 = vector.broadcast %cst_16 : f32 to vector<16x64xf32>
    %34 = arith.maximumf %28, %33 : vector<16x64xf32>
    %cst_17 = arith.constant dense<0.000000e+00> : vector<16x16xf32>
    %35 = tpu.matmul %29, %31, %cst_17 {dimension_numbers = #tpu.dot_dimension_numbers<[1], [1], [0], [0], [0, 0, 1, 0], [], []>} : vector<16x16xf32>, vector<16x16xf32>, vector<16x16xf32> -> vector<16x16xf32>
    %cst_18 = arith.constant 2.500000e-01 : f32
    %36 = vector.broadcast %cst_18 : f32 to vector<16x16xf32>
    %37 = arith.mulf %36, %35 : vector<16x16xf32>
    %38 = arith.addf %37, %5 : vector<16x16xf32>
    %cst_19 = arith.constant dense<0xFF800000> : vector<16xf32>
    %39 = vector.multi_reduction <maximumf>, %38, %cst_19 [1] : vector<16x16xf32> to vector<16xf32>
    %40 = vector.shape_cast %39 : vector<16xf32> to vector<16x1xf32>
    %41 = vector.broadcast %40 : vector<16x1xf32> to vector<16x16xf32>
    %42 = arith.subf %38, %41 : vector<16x16xf32>
    %43 = math.exp %42 : vector<16x16xf32>
    %cst_20 = arith.constant dense<0.000000e+00> : vector<16xf32>
    %44 = vector.multi_reduction <add>, %43, %cst_20 [1] : vector<16x16xf32> to vector<16xf32>
    %45 = vector.shape_cast %44 : vector<16xf32> to vector<16x1xf32>
    %46 = tpu.reciprocal %45 {approx = true} : vector<16x1xf32> -> vector<16x1xf32>
    %47 = vector.broadcast %46 : vector<16x1xf32> to vector<16x16xf32>
    %48 = arith.mulf %43, %47 : vector<16x16xf32>
    %cst_21 = arith.constant dense<0.000000e+00> : vector<16x16xf32>
    %49 = tpu.matmul %48, %31, %cst_21 {dimension_numbers = #tpu.dot_dimension_numbers<[1], [0], [0], [1], [0, 0, 1, 1], [], []>} : vector<16x16xf32>, vector<16x16xf32>, vector<16x16xf32> -> vector<16x16xf32>
    %cst_22 = arith.constant dense<0.000000e+00> : vector<16x16xf32>
    %50 = tpu.matmul %48, %29, %cst_22 {dimension_numbers = #tpu.dot_dimension_numbers<[0], [0], [1], [1], [0, 1, 1, 1], [], []>} : vector<16x16xf32>, vector<16x16xf32>, vector<16x16xf32> -> vector<16x16xf32>
    %cst_23 = arith.constant dense<0.000000e+00> : vector<16x16xf32>
    %51 = tpu.matmul %30, %32, %cst_23 {dimension_numbers = #tpu.dot_dimension_numbers<[1], [1], [0], [0], [0, 0, 1, 0], [], []>} : vector<16x16xf32>, vector<16x16xf32>, vector<16x16xf32> -> vector<16x16xf32>
    %cst_24 = arith.constant 2.500000e-01 : f32
    %52 = vector.broadcast %cst_24 : f32 to vector<16x16xf32>
    %53 = arith.mulf %52, %51 : vector<16x16xf32>
    %54 = arith.addf %53, %5 : vector<16x16xf32>
    %cst_25 = arith.constant dense<0xFF800000> : vector<16xf32>
    %55 = vector.multi_reduction <maximumf>, %54, %cst_25 [1] : vector<16x16xf32> to vector<16xf32>
    %56 = vector.shape_cast %55 : vector<16xf32> to vector<16x1xf32>
    %57 = vector.broadcast %56 : vector<16x1xf32> to vector<16x16xf32>
    %58 = arith.subf %54, %57 : vector<16x16xf32>
    %59 = math.exp %58 : vector<16x16xf32>
    %cst_26 = arith.constant dense<0.000000e+00> : vector<16xf32>
    %60 = vector.multi_reduction <add>, %59, %cst_26 [1] : vector<16x16xf32> to vector<16xf32>
    %61 = vector.shape_cast %60 : vector<16xf32> to vector<16x1xf32>
    %62 = tpu.reciprocal %61 {approx = true} : vector<16x1xf32> -> vector<16x1xf32>
    %63 = vector.broadcast %62 : vector<16x1xf32> to vector<16x16xf32>
    %64 = arith.mulf %59, %63 : vector<16x16xf32>
    %cst_27 = arith.constant dense<0.000000e+00> : vector<16x16xf32>
    %65 = tpu.matmul %64, %32, %cst_27 {dimension_numbers = #tpu.dot_dimension_numbers<[1], [0], [0], [1], [0, 0, 1, 1], [], []>} : vector<16x16xf32>, vector<16x16xf32>, vector<16x16xf32> -> vector<16x16xf32>
    %cst_28 = arith.constant dense<0.000000e+00> : vector<16x16xf32>
    %66 = tpu.matmul %64, %30, %cst_28 {dimension_numbers = #tpu.dot_dimension_numbers<[0], [0], [1], [1], [0, 1, 1, 1], [], []>} : vector<16x16xf32>, vector<16x16xf32>, vector<16x16xf32> -> vector<16x16xf32>
    %67 = tpu.concatenate %34, %49, %65, %50, %66 in 1 : vector<16x64xf32>, vector<16x16xf32>, vector<16x16xf32>, vector<16x16xf32>, vector<16x16xf32> -> vector<16x128xf32>
    %68 = arith.truncf %67 : vector<16x128xf32> to vector<16x128xbf16>
    %cst_29 = arith.constant dense<0.000000e+00> : vector<16x32xf32>
    %69 = tpu.matmul %68, %2, %cst_29 {dimension_numbers = #tpu.dot_dimension_numbers<[1], [0], [0], [1], [0, 0, 1, 1], [], []>} : vector<16x128xbf16>, vector<128x32xbf16>, vector<16x32xf32> -> vector<16x32xf32>
    %70 = vector.broadcast %3 : vector<1x32xf32> to vector<16x32xf32>
    %71 = arith.mulf %69, %70 : vector<16x32xf32>
    %cst_30 = arith.constant dense<0.000000e+00> : vector<16xf32>
    %72 = vector.multi_reduction <add>, %71, %cst_30 [1] : vector<16x32xf32> to vector<16xf32>
    %73 = vector.shape_cast %72 : vector<16xf32> to vector<16x1xf32>
    %cst_31 = arith.constant 3.200000e+01 : f32
    %74 = vector.broadcast %cst_31 : f32 to vector<16x1xf32>
    %75 = arith.divf %73, %74 : vector<16x1xf32>
    %76 = arith.mulf %71, %21 : vector<16x32xf32>
    %cst_32 = arith.constant dense<0.000000e+00> : vector<16xf32>
    %77 = vector.multi_reduction <add>, %76, %cst_32 [1] : vector<16x32xf32> to vector<16xf32>
    %78 = vector.shape_cast %77 : vector<16xf32> to vector<16x1xf32>
    %cst_33 = arith.constant 3.200000e+01 : f32
    %79 = vector.broadcast %cst_33 : f32 to vector<16x1xf32>
    %80 = arith.divf %78, %79 : vector<16x1xf32>
    %81 = vector.broadcast %75 : vector<16x1xf32> to vector<16x32xf32>
    %82 = arith.subf %71, %81 : vector<16x32xf32>
    %83 = vector.broadcast %80 : vector<16x1xf32> to vector<16x32xf32>
    %84 = arith.mulf %21, %83 : vector<16x32xf32>
    %85 = arith.subf %82, %84 : vector<16x32xf32>
    %86 = vector.broadcast %19 : vector<16x1xf32> to vector<16x32xf32>
    %87 = arith.mulf %86, %85 : vector<16x32xf32>
    %cst_34 = arith.constant 1.000000e+00 : f32
    %88 = vector.broadcast %cst_34 : f32 to vector<16x32xf32>
    %89 = arith.mulf %88, %87 : vector<16x32xf32>
    %90 = arith.subf %0, %89 : vector<16x32xf32>
    %c1_i32 = arith.constant 1 : i32
    %cst_35 = arith.constant dense<0.000000e+00> : vector<16xf32>
    %91 = vector.multi_reduction <add>, %90, %cst_35 [1] : vector<16x32xf32> to vector<16xf32>
    %92 = vector.shape_cast %91 : vector<16xf32> to vector<16x1xf32>
    %cst_36 = arith.constant 3.200000e+01 : f32
    %93 = vector.broadcast %cst_36 : f32 to vector<16x1xf32>
    %94 = arith.divf %92, %93 : vector<16x1xf32>
    %95 = vector.broadcast %94 : vector<16x1xf32> to vector<16x32xf32>
    %96 = arith.subf %90, %95 : vector<16x32xf32>
    %97 = arith.mulf %96, %96 : vector<16x32xf32>
    %cst_37 = arith.constant dense<0.000000e+00> : vector<16xf32>
    %98 = vector.multi_reduction <add>, %97, %cst_37 [1] : vector<16x32xf32> to vector<16xf32>
    %99 = vector.shape_cast %98 : vector<16xf32> to vector<16x1xf32>
    %cst_38 = arith.constant 3.200000e+01 : f32
    %100 = vector.broadcast %cst_38 : f32 to vector<16x1xf32>
    %101 = arith.divf %99, %100 : vector<16x1xf32>
    %cst_39 = arith.constant 9.99999974E-6 : f32
    %102 = vector.broadcast %cst_39 : f32 to vector<16x1xf32>
    %103 = arith.addf %101, %102 : vector<16x1xf32>
    %104 = math.rsqrt %103 : vector<16x1xf32>
    %105 = vector.broadcast %104 : vector<16x1xf32> to vector<16x32xf32>
    %106 = arith.mulf %96, %105 : vector<16x32xf32>
    %107 = vector.broadcast %3 : vector<1x32xf32> to vector<16x32xf32>
    %108 = arith.mulf %107, %106 : vector<16x32xf32>
    %109 = vector.broadcast %4 : vector<1x32xf32> to vector<16x32xf32>
    %110 = arith.addf %108, %109 : vector<16x32xf32>
    %111 = arith.truncf %110 : vector<16x32xf32> to vector<16x32xbf16>
    %cst_40 = arith.constant dense<0.000000e+00> : vector<16x128xf32>
    %112 = tpu.matmul %111, %1, %cst_40 {dimension_numbers = #tpu.dot_dimension_numbers<[1], [0], [0], [1], [0, 0, 1, 1], [], []>} : vector<16x32xbf16>, vector<32x128xbf16>, vector<16x128xf32> -> vector<16x128xf32>
    %113 = vector.extract_strided_slice %112 {offsets = [0, 0], sizes = [16, 64], strides = [1, 1]} : vector<16x128xf32> to vector<16x64xf32>
    %114 = vector.extract_strided_slice %112 {offsets = [0, 64], sizes = [16, 16], strides = [1, 1]} : vector<16x128xf32> to vector<16x16xf32>
    %115 = vector.extract_strided_slice %112 {offsets = [0, 80], sizes = [16, 16], strides = [1, 1]} : vector<16x128xf32> to vector<16x16xf32>
    %116 = vector.extract_strided_slice %112 {offsets = [0, 96], sizes = [16, 16], strides = [1, 1]} : vector<16x128xf32> to vector<16x16xf32>
    %117 = vector.extract_strided_slice %112 {offsets = [0, 112], sizes = [16, 16], strides = [1, 1]} : vector<16x128xf32> to vector<16x16xf32>
    %cst_41 = arith.constant 0.000000e+00 : f32
    %118 = vector.broadcast %cst_41 : f32 to vector<16x64xf32>
    %119 = arith.maximumf %113, %118 : vector<16x64xf32>
    %cst_42 = arith.constant dense<0.000000e+00> : vector<16x16xf32>
    %120 = tpu.matmul %114, %116, %cst_42 {dimension_numbers = #tpu.dot_dimension_numbers<[1], [1], [0], [0], [0, 0, 1, 0], [], []>} : vector<16x16xf32>, vector<16x16xf32>, vector<16x16xf32> -> vector<16x16xf32>
    %cst_43 = arith.constant 2.500000e-01 : f32
    %121 = vector.broadcast %cst_43 : f32 to vector<16x16xf32>
    %122 = arith.mulf %121, %120 : vector<16x16xf32>
    %123 = arith.addf %122, %5 : vector<16x16xf32>
    %cst_44 = arith.constant dense<0xFF800000> : vector<16xf32>
    %124 = vector.multi_reduction <maximumf>, %123, %cst_44 [1] : vector<16x16xf32> to vector<16xf32>
    %125 = vector.shape_cast %124 : vector<16xf32> to vector<16x1xf32>
    %126 = vector.broadcast %125 : vector<16x1xf32> to vector<16x16xf32>
    %127 = arith.subf %123, %126 : vector<16x16xf32>
    %128 = math.exp %127 : vector<16x16xf32>
    %cst_45 = arith.constant dense<0.000000e+00> : vector<16xf32>
    %129 = vector.multi_reduction <add>, %128, %cst_45 [1] : vector<16x16xf32> to vector<16xf32>
    %130 = vector.shape_cast %129 : vector<16xf32> to vector<16x1xf32>
    %131 = tpu.reciprocal %130 {approx = true} : vector<16x1xf32> -> vector<16x1xf32>
    %132 = vector.broadcast %131 : vector<16x1xf32> to vector<16x16xf32>
    %133 = arith.mulf %128, %132 : vector<16x16xf32>
    %cst_46 = arith.constant dense<0.000000e+00> : vector<16x16xf32>
    %134 = tpu.matmul %133, %116, %cst_46 {dimension_numbers = #tpu.dot_dimension_numbers<[1], [0], [0], [1], [0, 0, 1, 1], [], []>} : vector<16x16xf32>, vector<16x16xf32>, vector<16x16xf32> -> vector<16x16xf32>
    %cst_47 = arith.constant dense<0.000000e+00> : vector<16x16xf32>
    %135 = tpu.matmul %133, %114, %cst_47 {dimension_numbers = #tpu.dot_dimension_numbers<[0], [0], [1], [1], [0, 1, 1, 1], [], []>} : vector<16x16xf32>, vector<16x16xf32>, vector<16x16xf32> -> vector<16x16xf32>
    %cst_48 = arith.constant dense<0.000000e+00> : vector<16x16xf32>
    %136 = tpu.matmul %115, %117, %cst_48 {dimension_numbers = #tpu.dot_dimension_numbers<[1], [1], [0], [0], [0, 0, 1, 0], [], []>} : vector<16x16xf32>, vector<16x16xf32>, vector<16x16xf32> -> vector<16x16xf32>
    %cst_49 = arith.constant 2.500000e-01 : f32
    %137 = vector.broadcast %cst_49 : f32 to vector<16x16xf32>
    %138 = arith.mulf %137, %136 : vector<16x16xf32>
    %139 = arith.addf %138, %5 : vector<16x16xf32>
    %cst_50 = arith.constant dense<0xFF800000> : vector<16xf32>
    %140 = vector.multi_reduction <maximumf>, %139, %cst_50 [1] : vector<16x16xf32> to vector<16xf32>
    %141 = vector.shape_cast %140 : vector<16xf32> to vector<16x1xf32>
    %142 = vector.broadcast %141 : vector<16x1xf32> to vector<16x16xf32>
    %143 = arith.subf %139, %142 : vector<16x16xf32>
    %144 = math.exp %143 : vector<16x16xf32>
    %cst_51 = arith.constant dense<0.000000e+00> : vector<16xf32>
    %145 = vector.multi_reduction <add>, %144, %cst_51 [1] : vector<16x16xf32> to vector<16xf32>
    %146 = vector.shape_cast %145 : vector<16xf32> to vector<16x1xf32>
    %147 = tpu.reciprocal %146 {approx = true} : vector<16x1xf32> -> vector<16x1xf32>
    %148 = vector.broadcast %147 : vector<16x1xf32> to vector<16x16xf32>
    %149 = arith.mulf %144, %148 : vector<16x16xf32>
    %cst_52 = arith.constant dense<0.000000e+00> : vector<16x16xf32>
    %150 = tpu.matmul %149, %117, %cst_52 {dimension_numbers = #tpu.dot_dimension_numbers<[1], [0], [0], [1], [0, 0, 1, 1], [], []>} : vector<16x16xf32>, vector<16x16xf32>, vector<16x16xf32> -> vector<16x16xf32>
    %cst_53 = arith.constant dense<0.000000e+00> : vector<16x16xf32>
    %151 = tpu.matmul %149, %115, %cst_53 {dimension_numbers = #tpu.dot_dimension_numbers<[0], [0], [1], [1], [0, 1, 1, 1], [], []>} : vector<16x16xf32>, vector<16x16xf32>, vector<16x16xf32> -> vector<16x16xf32>
    %152 = tpu.concatenate %119, %134, %150, %135, %151 in 1 : vector<16x64xf32>, vector<16x16xf32>, vector<16x16xf32>, vector<16x16xf32>, vector<16x16xf32> -> vector<16x128xf32>
    %153 = arith.truncf %152 : vector<16x128xf32> to vector<16x128xbf16>
    %cst_54 = arith.constant dense<0.000000e+00> : vector<16x32xf32>
    %154 = tpu.matmul %153, %2, %cst_54 {dimension_numbers = #tpu.dot_dimension_numbers<[1], [0], [0], [1], [0, 0, 1, 1], [], []>} : vector<16x128xbf16>, vector<128x32xbf16>, vector<16x32xf32> -> vector<16x32xf32>
    %155 = vector.broadcast %3 : vector<1x32xf32> to vector<16x32xf32>
    %156 = arith.mulf %154, %155 : vector<16x32xf32>
    %cst_55 = arith.constant dense<0.000000e+00> : vector<16xf32>
    %157 = vector.multi_reduction <add>, %156, %cst_55 [1] : vector<16x32xf32> to vector<16xf32>
    %158 = vector.shape_cast %157 : vector<16xf32> to vector<16x1xf32>
    %cst_56 = arith.constant 3.200000e+01 : f32
    %159 = vector.broadcast %cst_56 : f32 to vector<16x1xf32>
    %160 = arith.divf %158, %159 : vector<16x1xf32>
    %161 = arith.mulf %156, %106 : vector<16x32xf32>
    %cst_57 = arith.constant dense<0.000000e+00> : vector<16xf32>
    %162 = vector.multi_reduction <add>, %161, %cst_57 [1] : vector<16x32xf32> to vector<16xf32>
    %163 = vector.shape_cast %162 : vector<16xf32> to vector<16x1xf32>
    %cst_58 = arith.constant 3.200000e+01 : f32
    %164 = vector.broadcast %cst_58 : f32 to vector<16x1xf32>
    %165 = arith.divf %163, %164 : vector<16x1xf32>
    %166 = vector.broadcast %160 : vector<16x1xf32> to vector<16x32xf32>
    %167 = arith.subf %156, %166 : vector<16x32xf32>
    %168 = vector.broadcast %165 : vector<16x1xf32> to vector<16x32xf32>
    %169 = arith.mulf %106, %168 : vector<16x32xf32>
    %170 = arith.subf %167, %169 : vector<16x32xf32>
    %171 = vector.broadcast %104 : vector<16x1xf32> to vector<16x32xf32>
    %172 = arith.mulf %171, %170 : vector<16x32xf32>
    %cst_59 = arith.constant 1.000000e+00 : f32
    %173 = vector.broadcast %cst_59 : f32 to vector<16x32xf32>
    %174 = arith.mulf %173, %172 : vector<16x32xf32>
    %175 = arith.subf %90, %174 : vector<16x32xf32>
    %c2_i32 = arith.constant 2 : i32
    %cst_60 = arith.constant dense<0.000000e+00> : vector<16xf32>
    %176 = vector.multi_reduction <add>, %175, %cst_60 [1] : vector<16x32xf32> to vector<16xf32>
    %177 = vector.shape_cast %176 : vector<16xf32> to vector<16x1xf32>
    %cst_61 = arith.constant 3.200000e+01 : f32
    %178 = vector.broadcast %cst_61 : f32 to vector<16x1xf32>
    %179 = arith.divf %177, %178 : vector<16x1xf32>
    %180 = vector.broadcast %179 : vector<16x1xf32> to vector<16x32xf32>
    %181 = arith.subf %175, %180 : vector<16x32xf32>
    %182 = arith.mulf %181, %181 : vector<16x32xf32>
    %cst_62 = arith.constant dense<0.000000e+00> : vector<16xf32>
    %183 = vector.multi_reduction <add>, %182, %cst_62 [1] : vector<16x32xf32> to vector<16xf32>
    %184 = vector.shape_cast %183 : vector<16xf32> to vector<16x1xf32>
    %cst_63 = arith.constant 3.200000e+01 : f32
    %185 = vector.broadcast %cst_63 : f32 to vector<16x1xf32>
    %186 = arith.divf %184, %185 : vector<16x1xf32>
    %cst_64 = arith.constant 9.99999974E-6 : f32
    %187 = vector.broadcast %cst_64 : f32 to vector<16x1xf32>
    %188 = arith.addf %186, %187 : vector<16x1xf32>
    %189 = math.rsqrt %188 : vector<16x1xf32>
    %190 = vector.broadcast %189 : vector<16x1xf32> to vector<16x32xf32>
    %191 = arith.mulf %181, %190 : vector<16x32xf32>
    %192 = vector.broadcast %3 : vector<1x32xf32> to vector<16x32xf32>
    %193 = arith.mulf %192, %191 : vector<16x32xf32>
    %194 = vector.broadcast %4 : vector<1x32xf32> to vector<16x32xf32>
    %195 = arith.addf %193, %194 : vector<16x32xf32>
    %196 = arith.truncf %195 : vector<16x32xf32> to vector<16x32xbf16>
    %cst_65 = arith.constant dense<0.000000e+00> : vector<16x128xf32>
    %197 = tpu.matmul %196, %1, %cst_65 {dimension_numbers = #tpu.dot_dimension_numbers<[1], [0], [0], [1], [0, 0, 1, 1], [], []>} : vector<16x32xbf16>, vector<32x128xbf16>, vector<16x128xf32> -> vector<16x128xf32>
    %198 = vector.extract_strided_slice %197 {offsets = [0, 0], sizes = [16, 64], strides = [1, 1]} : vector<16x128xf32> to vector<16x64xf32>
    %199 = vector.extract_strided_slice %197 {offsets = [0, 64], sizes = [16, 16], strides = [1, 1]} : vector<16x128xf32> to vector<16x16xf32>
    %200 = vector.extract_strided_slice %197 {offsets = [0, 80], sizes = [16, 16], strides = [1, 1]} : vector<16x128xf32> to vector<16x16xf32>
    %201 = vector.extract_strided_slice %197 {offsets = [0, 96], sizes = [16, 16], strides = [1, 1]} : vector<16x128xf32> to vector<16x16xf32>
    %202 = vector.extract_strided_slice %197 {offsets = [0, 112], sizes = [16, 16], strides = [1, 1]} : vector<16x128xf32> to vector<16x16xf32>
    %cst_66 = arith.constant 0.000000e+00 : f32
    %203 = vector.broadcast %cst_66 : f32 to vector<16x64xf32>
    %204 = arith.maximumf %198, %203 : vector<16x64xf32>
    %cst_67 = arith.constant dense<0.000000e+00> : vector<16x16xf32>
    %205 = tpu.matmul %199, %201, %cst_67 {dimension_numbers = #tpu.dot_dimension_numbers<[1], [1], [0], [0], [0, 0, 1, 0], [], []>} : vector<16x16xf32>, vector<16x16xf32>, vector<16x16xf32> -> vector<16x16xf32>
    %cst_68 = arith.constant 2.500000e-01 : f32
    %206 = vector.broadcast %cst_68 : f32 to vector<16x16xf32>
    %207 = arith.mulf %206, %205 : vector<16x16xf32>
    %208 = arith.addf %207, %5 : vector<16x16xf32>
    %cst_69 = arith.constant dense<0xFF800000> : vector<16xf32>
    %209 = vector.multi_reduction <maximumf>, %208, %cst_69 [1] : vector<16x16xf32> to vector<16xf32>
    %210 = vector.shape_cast %209 : vector<16xf32> to vector<16x1xf32>
    %211 = vector.broadcast %210 : vector<16x1xf32> to vector<16x16xf32>
    %212 = arith.subf %208, %211 : vector<16x16xf32>
    %213 = math.exp %212 : vector<16x16xf32>
    %cst_70 = arith.constant dense<0.000000e+00> : vector<16xf32>
    %214 = vector.multi_reduction <add>, %213, %cst_70 [1] : vector<16x16xf32> to vector<16xf32>
    %215 = vector.shape_cast %214 : vector<16xf32> to vector<16x1xf32>
    %216 = tpu.reciprocal %215 {approx = true} : vector<16x1xf32> -> vector<16x1xf32>
    %217 = vector.broadcast %216 : vector<16x1xf32> to vector<16x16xf32>
    %218 = arith.mulf %213, %217 : vector<16x16xf32>
    %cst_71 = arith.constant dense<0.000000e+00> : vector<16x16xf32>
    %219 = tpu.matmul %218, %201, %cst_71 {dimension_numbers = #tpu.dot_dimension_numbers<[1], [0], [0], [1], [0, 0, 1, 1], [], []>} : vector<16x16xf32>, vector<16x16xf32>, vector<16x16xf32> -> vector<16x16xf32>
    %cst_72 = arith.constant dense<0.000000e+00> : vector<16x16xf32>
    %220 = tpu.matmul %218, %199, %cst_72 {dimension_numbers = #tpu.dot_dimension_numbers<[0], [0], [1], [1], [0, 1, 1, 1], [], []>} : vector<16x16xf32>, vector<16x16xf32>, vector<16x16xf32> -> vector<16x16xf32>
    %cst_73 = arith.constant dense<0.000000e+00> : vector<16x16xf32>
    %221 = tpu.matmul %200, %202, %cst_73 {dimension_numbers = #tpu.dot_dimension_numbers<[1], [1], [0], [0], [0, 0, 1, 0], [], []>} : vector<16x16xf32>, vector<16x16xf32>, vector<16x16xf32> -> vector<16x16xf32>
    %cst_74 = arith.constant 2.500000e-01 : f32
    %222 = vector.broadcast %cst_74 : f32 to vector<16x16xf32>
    %223 = arith.mulf %222, %221 : vector<16x16xf32>
    %224 = arith.addf %223, %5 : vector<16x16xf32>
    %cst_75 = arith.constant dense<0xFF800000> : vector<16xf32>
    %225 = vector.multi_reduction <maximumf>, %224, %cst_75 [1] : vector<16x16xf32> to vector<16xf32>
    %226 = vector.shape_cast %225 : vector<16xf32> to vector<16x1xf32>
    %227 = vector.broadcast %226 : vector<16x1xf32> to vector<16x16xf32>
    %228 = arith.subf %224, %227 : vector<16x16xf32>
    %229 = math.exp %228 : vector<16x16xf32>
    %cst_76 = arith.constant dense<0.000000e+00> : vector<16xf32>
    %230 = vector.multi_reduction <add>, %229, %cst_76 [1] : vector<16x16xf32> to vector<16xf32>
    %231 = vector.shape_cast %230 : vector<16xf32> to vector<16x1xf32>
    %232 = tpu.reciprocal %231 {approx = true} : vector<16x1xf32> -> vector<16x1xf32>
    %233 = vector.broadcast %232 : vector<16x1xf32> to vector<16x16xf32>
    %234 = arith.mulf %229, %233 : vector<16x16xf32>
    %cst_77 = arith.constant dense<0.000000e+00> : vector<16x16xf32>
    %235 = tpu.matmul %234, %202, %cst_77 {dimension_numbers = #tpu.dot_dimension_numbers<[1], [0], [0], [1], [0, 0, 1, 1], [], []>} : vector<16x16xf32>, vector<16x16xf32>, vector<16x16xf32> -> vector<16x16xf32>
    %cst_78 = arith.constant dense<0.000000e+00> : vector<16x16xf32>
    %236 = tpu.matmul %234, %200, %cst_78 {dimension_numbers = #tpu.dot_dimension_numbers<[0], [0], [1], [1], [0, 1, 1, 1], [], []>} : vector<16x16xf32>, vector<16x16xf32>, vector<16x16xf32> -> vector<16x16xf32>
    %237 = tpu.concatenate %204, %219, %235, %220, %236 in 1 : vector<16x64xf32>, vector<16x16xf32>, vector<16x16xf32>, vector<16x16xf32>, vector<16x16xf32> -> vector<16x128xf32>
    %238 = arith.truncf %237 : vector<16x128xf32> to vector<16x128xbf16>
    %cst_79 = arith.constant dense<0.000000e+00> : vector<16x32xf32>
    %239 = tpu.matmul %238, %2, %cst_79 {dimension_numbers = #tpu.dot_dimension_numbers<[1], [0], [0], [1], [0, 0, 1, 1], [], []>} : vector<16x128xbf16>, vector<128x32xbf16>, vector<16x32xf32> -> vector<16x32xf32>
    %240 = vector.broadcast %3 : vector<1x32xf32> to vector<16x32xf32>
    %241 = arith.mulf %239, %240 : vector<16x32xf32>
    %cst_80 = arith.constant dense<0.000000e+00> : vector<16xf32>
    %242 = vector.multi_reduction <add>, %241, %cst_80 [1] : vector<16x32xf32> to vector<16xf32>
    %243 = vector.shape_cast %242 : vector<16xf32> to vector<16x1xf32>
    %cst_81 = arith.constant 3.200000e+01 : f32
    %244 = vector.broadcast %cst_81 : f32 to vector<16x1xf32>
    %245 = arith.divf %243, %244 : vector<16x1xf32>
    %246 = arith.mulf %241, %191 : vector<16x32xf32>
    %cst_82 = arith.constant dense<0.000000e+00> : vector<16xf32>
    %247 = vector.multi_reduction <add>, %246, %cst_82 [1] : vector<16x32xf32> to vector<16xf32>
    %248 = vector.shape_cast %247 : vector<16xf32> to vector<16x1xf32>
    %cst_83 = arith.constant 3.200000e+01 : f32
    %249 = vector.broadcast %cst_83 : f32 to vector<16x1xf32>
    %250 = arith.divf %248, %249 : vector<16x1xf32>
    %251 = vector.broadcast %245 : vector<16x1xf32> to vector<16x32xf32>
    %252 = arith.subf %241, %251 : vector<16x32xf32>
    %253 = vector.broadcast %250 : vector<16x1xf32> to vector<16x32xf32>
    %254 = arith.mulf %191, %253 : vector<16x32xf32>
    %255 = arith.subf %252, %254 : vector<16x32xf32>
    %256 = vector.broadcast %189 : vector<16x1xf32> to vector<16x32xf32>
    %257 = arith.mulf %256, %255 : vector<16x32xf32>
    %cst_84 = arith.constant 1.000000e+00 : f32
    %258 = vector.broadcast %cst_84 : f32 to vector<16x32xf32>
    %259 = arith.mulf %258, %257 : vector<16x32xf32>
    %260 = arith.subf %175, %259 : vector<16x32xf32>
    %c3_i32 = arith.constant 3 : i32
    %cst_85 = arith.constant dense<0.000000e+00> : vector<16xf32>
    %261 = vector.multi_reduction <add>, %260, %cst_85 [1] : vector<16x32xf32> to vector<16xf32>
    %262 = vector.shape_cast %261 : vector<16xf32> to vector<16x1xf32>
    %cst_86 = arith.constant 3.200000e+01 : f32
    %263 = vector.broadcast %cst_86 : f32 to vector<16x1xf32>
    %264 = arith.divf %262, %263 : vector<16x1xf32>
    %265 = vector.broadcast %264 : vector<16x1xf32> to vector<16x32xf32>
    %266 = arith.subf %260, %265 : vector<16x32xf32>
    %267 = arith.mulf %266, %266 : vector<16x32xf32>
    %cst_87 = arith.constant dense<0.000000e+00> : vector<16xf32>
    %268 = vector.multi_reduction <add>, %267, %cst_87 [1] : vector<16x32xf32> to vector<16xf32>
    %269 = vector.shape_cast %268 : vector<16xf32> to vector<16x1xf32>
    %cst_88 = arith.constant 3.200000e+01 : f32
    %270 = vector.broadcast %cst_88 : f32 to vector<16x1xf32>
    %271 = arith.divf %269, %270 : vector<16x1xf32>
    %cst_89 = arith.constant 9.99999974E-6 : f32
    %272 = vector.broadcast %cst_89 : f32 to vector<16x1xf32>
    %273 = arith.addf %271, %272 : vector<16x1xf32>
    %274 = math.rsqrt %273 : vector<16x1xf32>
    %275 = vector.broadcast %274 : vector<16x1xf32> to vector<16x32xf32>
    %276 = arith.mulf %266, %275 : vector<16x32xf32>
    %277 = vector.broadcast %3 : vector<1x32xf32> to vector<16x32xf32>
    %278 = arith.mulf %277, %276 : vector<16x32xf32>
    %279 = vector.broadcast %4 : vector<1x32xf32> to vector<16x32xf32>
    %280 = arith.addf %278, %279 : vector<16x32xf32>
    %281 = arith.truncf %280 : vector<16x32xf32> to vector<16x32xbf16>
    %cst_90 = arith.constant dense<0.000000e+00> : vector<16x128xf32>
    %282 = tpu.matmul %281, %1, %cst_90 {dimension_numbers = #tpu.dot_dimension_numbers<[1], [0], [0], [1], [0, 0, 1, 1], [], []>} : vector<16x32xbf16>, vector<32x128xbf16>, vector<16x128xf32> -> vector<16x128xf32>
    %283 = vector.extract_strided_slice %282 {offsets = [0, 0], sizes = [16, 64], strides = [1, 1]} : vector<16x128xf32> to vector<16x64xf32>
    %284 = vector.extract_strided_slice %282 {offsets = [0, 64], sizes = [16, 16], strides = [1, 1]} : vector<16x128xf32> to vector<16x16xf32>
    %285 = vector.extract_strided_slice %282 {offsets = [0, 80], sizes = [16, 16], strides = [1, 1]} : vector<16x128xf32> to vector<16x16xf32>
    %286 = vector.extract_strided_slice %282 {offsets = [0, 96], sizes = [16, 16], strides = [1, 1]} : vector<16x128xf32> to vector<16x16xf32>
    %287 = vector.extract_strided_slice %282 {offsets = [0, 112], sizes = [16, 16], strides = [1, 1]} : vector<16x128xf32> to vector<16x16xf32>
    %cst_91 = arith.constant 0.000000e+00 : f32
    %288 = vector.broadcast %cst_91 : f32 to vector<16x64xf32>
    %289 = arith.maximumf %283, %288 : vector<16x64xf32>
    %cst_92 = arith.constant dense<0.000000e+00> : vector<16x16xf32>
    %290 = tpu.matmul %284, %286, %cst_92 {dimension_numbers = #tpu.dot_dimension_numbers<[1], [1], [0], [0], [0, 0, 1, 0], [], []>} : vector<16x16xf32>, vector<16x16xf32>, vector<16x16xf32> -> vector<16x16xf32>
    %cst_93 = arith.constant 2.500000e-01 : f32
    %291 = vector.broadcast %cst_93 : f32 to vector<16x16xf32>
    %292 = arith.mulf %291, %290 : vector<16x16xf32>
    %293 = arith.addf %292, %5 : vector<16x16xf32>
    %cst_94 = arith.constant dense<0xFF800000> : vector<16xf32>
    %294 = vector.multi_reduction <maximumf>, %293, %cst_94 [1] : vector<16x16xf32> to vector<16xf32>
    %295 = vector.shape_cast %294 : vector<16xf32> to vector<16x1xf32>
    %296 = vector.broadcast %295 : vector<16x1xf32> to vector<16x16xf32>
    %297 = arith.subf %293, %296 : vector<16x16xf32>
    %298 = math.exp %297 : vector<16x16xf32>
    %cst_95 = arith.constant dense<0.000000e+00> : vector<16xf32>
    %299 = vector.multi_reduction <add>, %298, %cst_95 [1] : vector<16x16xf32> to vector<16xf32>
    %300 = vector.shape_cast %299 : vector<16xf32> to vector<16x1xf32>
    %301 = tpu.reciprocal %300 {approx = true} : vector<16x1xf32> -> vector<16x1xf32>
    %302 = vector.broadcast %301 : vector<16x1xf32> to vector<16x16xf32>
    %303 = arith.mulf %298, %302 : vector<16x16xf32>
    %cst_96 = arith.constant dense<0.000000e+00> : vector<16x16xf32>
    %304 = tpu.matmul %303, %286, %cst_96 {dimension_numbers = #tpu.dot_dimension_numbers<[1], [0], [0], [1], [0, 0, 1, 1], [], []>} : vector<16x16xf32>, vector<16x16xf32>, vector<16x16xf32> -> vector<16x16xf32>
    %cst_97 = arith.constant dense<0.000000e+00> : vector<16x16xf32>
    %305 = tpu.matmul %303, %284, %cst_97 {dimension_numbers = #tpu.dot_dimension_numbers<[0], [0], [1], [1], [0, 1, 1, 1], [], []>} : vector<16x16xf32>, vector<16x16xf32>, vector<16x16xf32> -> vector<16x16xf32>
    %cst_98 = arith.constant dense<0.000000e+00> : vector<16x16xf32>
    %306 = tpu.matmul %285, %287, %cst_98 {dimension_numbers = #tpu.dot_dimension_numbers<[1], [1], [0], [0], [0, 0, 1, 0], [], []>} : vector<16x16xf32>, vector<16x16xf32>, vector<16x16xf32> -> vector<16x16xf32>
    %cst_99 = arith.constant 2.500000e-01 : f32
    %307 = vector.broadcast %cst_99 : f32 to vector<16x16xf32>
    %308 = arith.mulf %307, %306 : vector<16x16xf32>
    %309 = arith.addf %308, %5 : vector<16x16xf32>
    %cst_100 = arith.constant dense<0xFF800000> : vector<16xf32>
    %310 = vector.multi_reduction <maximumf>, %309, %cst_100 [1] : vector<16x16xf32> to vector<16xf32>
    %311 = vector.shape_cast %310 : vector<16xf32> to vector<16x1xf32>
    %312 = vector.broadcast %311 : vector<16x1xf32> to vector<16x16xf32>
    %313 = arith.subf %309, %312 : vector<16x16xf32>
    %314 = math.exp %313 : vector<16x16xf32>
    %cst_101 = arith.constant dense<0.000000e+00> : vector<16xf32>
    %315 = vector.multi_reduction <add>, %314, %cst_101 [1] : vector<16x16xf32> to vector<16xf32>
    %316 = vector.shape_cast %315 : vector<16xf32> to vector<16x1xf32>
    %317 = tpu.reciprocal %316 {approx = true} : vector<16x1xf32> -> vector<16x1xf32>
    %318 = vector.broadcast %317 : vector<16x1xf32> to vector<16x16xf32>
    %319 = arith.mulf %314, %318 : vector<16x16xf32>
    %cst_102 = arith.constant dense<0.000000e+00> : vector<16x16xf32>
    %320 = tpu.matmul %319, %287, %cst_102 {dimension_numbers = #tpu.dot_dimension_numbers<[1], [0], [0], [1], [0, 0, 1, 1], [], []>} : vector<16x16xf32>, vector<16x16xf32>, vector<16x16xf32> -> vector<16x16xf32>
    %cst_103 = arith.constant dense<0.000000e+00> : vector<16x16xf32>
    %321 = tpu.matmul %319, %285, %cst_103 {dimension_numbers = #tpu.dot_dimension_numbers<[0], [0], [1], [1], [0, 1, 1, 1], [], []>} : vector<16x16xf32>, vector<16x16xf32>, vector<16x16xf32> -> vector<16x16xf32>
    %322 = tpu.concatenate %289, %304, %320, %305, %321 in 1 : vector<16x64xf32>, vector<16x16xf32>, vector<16x16xf32>, vector<16x16xf32>, vector<16x16xf32> -> vector<16x128xf32>
    %323 = arith.truncf %322 : vector<16x128xf32> to vector<16x128xbf16>
    %cst_104 = arith.constant dense<0.000000e+00> : vector<16x32xf32>
    %324 = tpu.matmul %323, %2, %cst_104 {dimension_numbers = #tpu.dot_dimension_numbers<[1], [0], [0], [1], [0, 0, 1, 1], [], []>} : vector<16x128xbf16>, vector<128x32xbf16>, vector<16x32xf32> -> vector<16x32xf32>
    %325 = vector.broadcast %3 : vector<1x32xf32> to vector<16x32xf32>
    %326 = arith.mulf %324, %325 : vector<16x32xf32>
    %cst_105 = arith.constant dense<0.000000e+00> : vector<16xf32>
    %327 = vector.multi_reduction <add>, %326, %cst_105 [1] : vector<16x32xf32> to vector<16xf32>
    %328 = vector.shape_cast %327 : vector<16xf32> to vector<16x1xf32>
    %cst_106 = arith.constant 3.200000e+01 : f32
    %329 = vector.broadcast %cst_106 : f32 to vector<16x1xf32>
    %330 = arith.divf %328, %329 : vector<16x1xf32>
    %331 = arith.mulf %326, %276 : vector<16x32xf32>
    %cst_107 = arith.constant dense<0.000000e+00> : vector<16xf32>
    %332 = vector.multi_reduction <add>, %331, %cst_107 [1] : vector<16x32xf32> to vector<16xf32>
    %333 = vector.shape_cast %332 : vector<16xf32> to vector<16x1xf32>
    %cst_108 = arith.constant 3.200000e+01 : f32
    %334 = vector.broadcast %cst_108 : f32 to vector<16x1xf32>
    %335 = arith.divf %333, %334 : vector<16x1xf32>
    %336 = vector.broadcast %330 : vector<16x1xf32> to vector<16x32xf32>
    %337 = arith.subf %326, %336 : vector<16x32xf32>
    %338 = vector.broadcast %335 : vector<16x1xf32> to vector<16x32xf32>
    %339 = arith.mulf %276, %338 : vector<16x32xf32>
    %340 = arith.subf %337, %339 : vector<16x32xf32>
    %341 = vector.broadcast %274 : vector<16x1xf32> to vector<16x32xf32>
    %342 = arith.mulf %341, %340 : vector<16x32xf32>
    %cst_109 = arith.constant 1.000000e+00 : f32
    %343 = vector.broadcast %cst_109 : f32 to vector<16x32xf32>
    %344 = arith.mulf %343, %342 : vector<16x32xf32>
    %345 = arith.subf %260, %344 : vector<16x32xf32>
    %c4_i32 = arith.constant 4 : i32
    %cst_110 = arith.constant dense<0.000000e+00> : vector<16xf32>
    %346 = vector.multi_reduction <add>, %345, %cst_110 [1] : vector<16x32xf32> to vector<16xf32>
    %347 = vector.shape_cast %346 : vector<16xf32> to vector<16x1xf32>
    %cst_111 = arith.constant 3.200000e+01 : f32
    %348 = vector.broadcast %cst_111 : f32 to vector<16x1xf32>
    %349 = arith.divf %347, %348 : vector<16x1xf32>
    %350 = vector.broadcast %349 : vector<16x1xf32> to vector<16x32xf32>
    %351 = arith.subf %345, %350 : vector<16x32xf32>
    %352 = arith.mulf %351, %351 : vector<16x32xf32>
    %cst_112 = arith.constant dense<0.000000e+00> : vector<16xf32>
    %353 = vector.multi_reduction <add>, %352, %cst_112 [1] : vector<16x32xf32> to vector<16xf32>
    %354 = vector.shape_cast %353 : vector<16xf32> to vector<16x1xf32>
    %cst_113 = arith.constant 3.200000e+01 : f32
    %355 = vector.broadcast %cst_113 : f32 to vector<16x1xf32>
    %356 = arith.divf %354, %355 : vector<16x1xf32>
    %cst_114 = arith.constant 9.99999974E-6 : f32
    %357 = vector.broadcast %cst_114 : f32 to vector<16x1xf32>
    %358 = arith.addf %356, %357 : vector<16x1xf32>
    %359 = math.rsqrt %358 : vector<16x1xf32>
    %360 = vector.broadcast %359 : vector<16x1xf32> to vector<16x32xf32>
    %361 = arith.mulf %351, %360 : vector<16x32xf32>
    %362 = vector.broadcast %3 : vector<1x32xf32> to vector<16x32xf32>
    %363 = arith.mulf %362, %361 : vector<16x32xf32>
    %364 = vector.broadcast %4 : vector<1x32xf32> to vector<16x32xf32>
    %365 = arith.addf %363, %364 : vector<16x32xf32>
    %366 = arith.truncf %365 : vector<16x32xf32> to vector<16x32xbf16>
    %cst_115 = arith.constant dense<0.000000e+00> : vector<16x128xf32>
    %367 = tpu.matmul %366, %1, %cst_115 {dimension_numbers = #tpu.dot_dimension_numbers<[1], [0], [0], [1], [0, 0, 1, 1], [], []>} : vector<16x32xbf16>, vector<32x128xbf16>, vector<16x128xf32> -> vector<16x128xf32>
    %368 = vector.extract_strided_slice %367 {offsets = [0, 0], sizes = [16, 64], strides = [1, 1]} : vector<16x128xf32> to vector<16x64xf32>
    %369 = vector.extract_strided_slice %367 {offsets = [0, 64], sizes = [16, 16], strides = [1, 1]} : vector<16x128xf32> to vector<16x16xf32>
    %370 = vector.extract_strided_slice %367 {offsets = [0, 80], sizes = [16, 16], strides = [1, 1]} : vector<16x128xf32> to vector<16x16xf32>
    %371 = vector.extract_strided_slice %367 {offsets = [0, 96], sizes = [16, 16], strides = [1, 1]} : vector<16x128xf32> to vector<16x16xf32>
    %372 = vector.extract_strided_slice %367 {offsets = [0, 112], sizes = [16, 16], strides = [1, 1]} : vector<16x128xf32> to vector<16x16xf32>
    %cst_116 = arith.constant 0.000000e+00 : f32
    %373 = vector.broadcast %cst_116 : f32 to vector<16x64xf32>
    %374 = arith.maximumf %368, %373 : vector<16x64xf32>
    %cst_117 = arith.constant dense<0.000000e+00> : vector<16x16xf32>
    %375 = tpu.matmul %369, %371, %cst_117 {dimension_numbers = #tpu.dot_dimension_numbers<[1], [1], [0], [0], [0, 0, 1, 0], [], []>} : vector<16x16xf32>, vector<16x16xf32>, vector<16x16xf32> -> vector<16x16xf32>
    %cst_118 = arith.constant 2.500000e-01 : f32
    %376 = vector.broadcast %cst_118 : f32 to vector<16x16xf32>
    %377 = arith.mulf %376, %375 : vector<16x16xf32>
    %378 = arith.addf %377, %5 : vector<16x16xf32>
    %cst_119 = arith.constant dense<0xFF800000> : vector<16xf32>
    %379 = vector.multi_reduction <maximumf>, %378, %cst_119 [1] : vector<16x16xf32> to vector<16xf32>
    %380 = vector.shape_cast %379 : vector<16xf32> to vector<16x1xf32>
    %381 = vector.broadcast %380 : vector<16x1xf32> to vector<16x16xf32>
    %382 = arith.subf %378, %381 : vector<16x16xf32>
    %383 = math.exp %382 : vector<16x16xf32>
    %cst_120 = arith.constant dense<0.000000e+00> : vector<16xf32>
    %384 = vector.multi_reduction <add>, %383, %cst_120 [1] : vector<16x16xf32> to vector<16xf32>
    %385 = vector.shape_cast %384 : vector<16xf32> to vector<16x1xf32>
    %386 = tpu.reciprocal %385 {approx = true} : vector<16x1xf32> -> vector<16x1xf32>
    %387 = vector.broadcast %386 : vector<16x1xf32> to vector<16x16xf32>
    %388 = arith.mulf %383, %387 : vector<16x16xf32>
    %cst_121 = arith.constant dense<0.000000e+00> : vector<16x16xf32>
    %389 = tpu.matmul %388, %371, %cst_121 {dimension_numbers = #tpu.dot_dimension_numbers<[1], [0], [0], [1], [0, 0, 1, 1], [], []>} : vector<16x16xf32>, vector<16x16xf32>, vector<16x16xf32> -> vector<16x16xf32>
    %cst_122 = arith.constant dense<0.000000e+00> : vector<16x16xf32>
    %390 = tpu.matmul %388, %369, %cst_122 {dimension_numbers = #tpu.dot_dimension_numbers<[0], [0], [1], [1], [0, 1, 1, 1], [], []>} : vector<16x16xf32>, vector<16x16xf32>, vector<16x16xf32> -> vector<16x16xf32>
    %cst_123 = arith.constant dense<0.000000e+00> : vector<16x16xf32>
    %391 = tpu.matmul %370, %372, %cst_123 {dimension_numbers = #tpu.dot_dimension_numbers<[1], [1], [0], [0], [0, 0, 1, 0], [], []>} : vector<16x16xf32>, vector<16x16xf32>, vector<16x16xf32> -> vector<16x16xf32>
    %cst_124 = arith.constant 2.500000e-01 : f32
    %392 = vector.broadcast %cst_124 : f32 to vector<16x16xf32>
    %393 = arith.mulf %392, %391 : vector<16x16xf32>
    %394 = arith.addf %393, %5 : vector<16x16xf32>
    %cst_125 = arith.constant dense<0xFF800000> : vector<16xf32>
    %395 = vector.multi_reduction <maximumf>, %394, %cst_125 [1] : vector<16x16xf32> to vector<16xf32>
    %396 = vector.shape_cast %395 : vector<16xf32> to vector<16x1xf32>
    %397 = vector.broadcast %396 : vector<16x1xf32> to vector<16x16xf32>
    %398 = arith.subf %394, %397 : vector<16x16xf32>
    %399 = math.exp %398 : vector<16x16xf32>
    %cst_126 = arith.constant dense<0.000000e+00> : vector<16xf32>
    %400 = vector.multi_reduction <add>, %399, %cst_126 [1] : vector<16x16xf32> to vector<16xf32>
    %401 = vector.shape_cast %400 : vector<16xf32> to vector<16x1xf32>
    %402 = tpu.reciprocal %401 {approx = true} : vector<16x1xf32> -> vector<16x1xf32>
    %403 = vector.broadcast %402 : vector<16x1xf32> to vector<16x16xf32>
    %404 = arith.mulf %399, %403 : vector<16x16xf32>
    %cst_127 = arith.constant dense<0.000000e+00> : vector<16x16xf32>
    %405 = tpu.matmul %404, %372, %cst_127 {dimension_numbers = #tpu.dot_dimension_numbers<[1], [0], [0], [1], [0, 0, 1, 1], [], []>} : vector<16x16xf32>, vector<16x16xf32>, vector<16x16xf32> -> vector<16x16xf32>
    %cst_128 = arith.constant dense<0.000000e+00> : vector<16x16xf32>
    %406 = tpu.matmul %404, %370, %cst_128 {dimension_numbers = #tpu.dot_dimension_numbers<[0], [0], [1], [1], [0, 1, 1, 1], [], []>} : vector<16x16xf32>, vector<16x16xf32>, vector<16x16xf32> -> vector<16x16xf32>
    %407 = tpu.concatenate %374, %389, %405, %390, %406 in 1 : vector<16x64xf32>, vector<16x16xf32>, vector<16x16xf32>, vector<16x16xf32>, vector<16x16xf32> -> vector<16x128xf32>
    %408 = arith.truncf %407 : vector<16x128xf32> to vector<16x128xbf16>
    %cst_129 = arith.constant dense<0.000000e+00> : vector<16x32xf32>
    %409 = tpu.matmul %408, %2, %cst_129 {dimension_numbers = #tpu.dot_dimension_numbers<[1], [0], [0], [1], [0, 0, 1, 1], [], []>} : vector<16x128xbf16>, vector<128x32xbf16>, vector<16x32xf32> -> vector<16x32xf32>
    %410 = vector.broadcast %3 : vector<1x32xf32> to vector<16x32xf32>
    %411 = arith.mulf %409, %410 : vector<16x32xf32>
    %cst_130 = arith.constant dense<0.000000e+00> : vector<16xf32>
    %412 = vector.multi_reduction <add>, %411, %cst_130 [1] : vector<16x32xf32> to vector<16xf32>
    %413 = vector.shape_cast %412 : vector<16xf32> to vector<16x1xf32>
    %cst_131 = arith.constant 3.200000e+01 : f32
    %414 = vector.broadcast %cst_131 : f32 to vector<16x1xf32>
    %415 = arith.divf %413, %414 : vector<16x1xf32>
    %416 = arith.mulf %411, %361 : vector<16x32xf32>
    %cst_132 = arith.constant dense<0.000000e+00> : vector<16xf32>
    %417 = vector.multi_reduction <add>, %416, %cst_132 [1] : vector<16x32xf32> to vector<16xf32>
    %418 = vector.shape_cast %417 : vector<16xf32> to vector<16x1xf32>
    %cst_133 = arith.constant 3.200000e+01 : f32
    %419 = vector.broadcast %cst_133 : f32 to vector<16x1xf32>
    %420 = arith.divf %418, %419 : vector<16x1xf32>
    %421 = vector.broadcast %415 : vector<16x1xf32> to vector<16x32xf32>
    %422 = arith.subf %411, %421 : vector<16x32xf32>
    %423 = vector.broadcast %420 : vector<16x1xf32> to vector<16x32xf32>
    %424 = arith.mulf %361, %423 : vector<16x32xf32>
    %425 = arith.subf %422, %424 : vector<16x32xf32>
    %426 = vector.broadcast %359 : vector<16x1xf32> to vector<16x32xf32>
    %427 = arith.mulf %426, %425 : vector<16x32xf32>
    %cst_134 = arith.constant 1.000000e+00 : f32
    %428 = vector.broadcast %cst_134 : f32 to vector<16x32xf32>
    %429 = arith.mulf %428, %427 : vector<16x32xf32>
    %430 = arith.subf %345, %429 : vector<16x32xf32>
    %c5_i32 = arith.constant 5 : i32
    %cst_135 = arith.constant dense<0.000000e+00> : vector<16xf32>
    %431 = vector.multi_reduction <add>, %430, %cst_135 [1] : vector<16x32xf32> to vector<16xf32>
    %432 = vector.shape_cast %431 : vector<16xf32> to vector<16x1xf32>
    %cst_136 = arith.constant 3.200000e+01 : f32
    %433 = vector.broadcast %cst_136 : f32 to vector<16x1xf32>
    %434 = arith.divf %432, %433 : vector<16x1xf32>
    %435 = vector.broadcast %434 : vector<16x1xf32> to vector<16x32xf32>
    %436 = arith.subf %430, %435 : vector<16x32xf32>
    %437 = arith.mulf %436, %436 : vector<16x32xf32>
    %cst_137 = arith.constant dense<0.000000e+00> : vector<16xf32>
    %438 = vector.multi_reduction <add>, %437, %cst_137 [1] : vector<16x32xf32> to vector<16xf32>
    %439 = vector.shape_cast %438 : vector<16xf32> to vector<16x1xf32>
    %cst_138 = arith.constant 3.200000e+01 : f32
    %440 = vector.broadcast %cst_138 : f32 to vector<16x1xf32>
    %441 = arith.divf %439, %440 : vector<16x1xf32>
    %cst_139 = arith.constant 9.99999974E-6 : f32
    %442 = vector.broadcast %cst_139 : f32 to vector<16x1xf32>
    %443 = arith.addf %441, %442 : vector<16x1xf32>
    %444 = math.rsqrt %443 : vector<16x1xf32>
    %445 = vector.broadcast %444 : vector<16x1xf32> to vector<16x32xf32>
    %446 = arith.mulf %436, %445 : vector<16x32xf32>
    %447 = vector.broadcast %3 : vector<1x32xf32> to vector<16x32xf32>
    %448 = arith.mulf %447, %446 : vector<16x32xf32>
    %449 = vector.broadcast %4 : vector<1x32xf32> to vector<16x32xf32>
    %450 = arith.addf %448, %449 : vector<16x32xf32>
    %451 = arith.truncf %450 : vector<16x32xf32> to vector<16x32xbf16>
    %cst_140 = arith.constant dense<0.000000e+00> : vector<16x128xf32>
    %452 = tpu.matmul %451, %1, %cst_140 {dimension_numbers = #tpu.dot_dimension_numbers<[1], [0], [0], [1], [0, 0, 1, 1], [], []>} : vector<16x32xbf16>, vector<32x128xbf16>, vector<16x128xf32> -> vector<16x128xf32>
    %453 = vector.extract_strided_slice %452 {offsets = [0, 0], sizes = [16, 64], strides = [1, 1]} : vector<16x128xf32> to vector<16x64xf32>
    %454 = vector.extract_strided_slice %452 {offsets = [0, 64], sizes = [16, 16], strides = [1, 1]} : vector<16x128xf32> to vector<16x16xf32>
    %455 = vector.extract_strided_slice %452 {offsets = [0, 80], sizes = [16, 16], strides = [1, 1]} : vector<16x128xf32> to vector<16x16xf32>
    %456 = vector.extract_strided_slice %452 {offsets = [0, 96], sizes = [16, 16], strides = [1, 1]} : vector<16x128xf32> to vector<16x16xf32>
    %457 = vector.extract_strided_slice %452 {offsets = [0, 112], sizes = [16, 16], strides = [1, 1]} : vector<16x128xf32> to vector<16x16xf32>
    %cst_141 = arith.constant 0.000000e+00 : f32
    %458 = vector.broadcast %cst_141 : f32 to vector<16x64xf32>
    %459 = arith.maximumf %453, %458 : vector<16x64xf32>
    %cst_142 = arith.constant dense<0.000000e+00> : vector<16x16xf32>
    %460 = tpu.matmul %454, %456, %cst_142 {dimension_numbers = #tpu.dot_dimension_numbers<[1], [1], [0], [0], [0, 0, 1, 0], [], []>} : vector<16x16xf32>, vector<16x16xf32>, vector<16x16xf32> -> vector<16x16xf32>
    %cst_143 = arith.constant 2.500000e-01 : f32
    %461 = vector.broadcast %cst_143 : f32 to vector<16x16xf32>
    %462 = arith.mulf %461, %460 : vector<16x16xf32>
    %463 = arith.addf %462, %5 : vector<16x16xf32>
    %cst_144 = arith.constant dense<0xFF800000> : vector<16xf32>
    %464 = vector.multi_reduction <maximumf>, %463, %cst_144 [1] : vector<16x16xf32> to vector<16xf32>
    %465 = vector.shape_cast %464 : vector<16xf32> to vector<16x1xf32>
    %466 = vector.broadcast %465 : vector<16x1xf32> to vector<16x16xf32>
    %467 = arith.subf %463, %466 : vector<16x16xf32>
    %468 = math.exp %467 : vector<16x16xf32>
    %cst_145 = arith.constant dense<0.000000e+00> : vector<16xf32>
    %469 = vector.multi_reduction <add>, %468, %cst_145 [1] : vector<16x16xf32> to vector<16xf32>
    %470 = vector.shape_cast %469 : vector<16xf32> to vector<16x1xf32>
    %471 = tpu.reciprocal %470 {approx = true} : vector<16x1xf32> -> vector<16x1xf32>
    %472 = vector.broadcast %471 : vector<16x1xf32> to vector<16x16xf32>
    %473 = arith.mulf %468, %472 : vector<16x16xf32>
    %cst_146 = arith.constant dense<0.000000e+00> : vector<16x16xf32>
    %474 = tpu.matmul %473, %456, %cst_146 {dimension_numbers = #tpu.dot_dimension_numbers<[1], [0], [0], [1], [0, 0, 1, 1], [], []>} : vector<16x16xf32>, vector<16x16xf32>, vector<16x16xf32> -> vector<16x16xf32>
    %cst_147 = arith.constant dense<0.000000e+00> : vector<16x16xf32>
    %475 = tpu.matmul %473, %454, %cst_147 {dimension_numbers = #tpu.dot_dimension_numbers<[0], [0], [1], [1], [0, 1, 1, 1], [], []>} : vector<16x16xf32>, vector<16x16xf32>, vector<16x16xf32> -> vector<16x16xf32>
    %cst_148 = arith.constant dense<0.000000e+00> : vector<16x16xf32>
    %476 = tpu.matmul %455, %457, %cst_148 {dimension_numbers = #tpu.dot_dimension_numbers<[1], [1], [0], [0], [0, 0, 1, 0], [], []>} : vector<16x16xf32>, vector<16x16xf32>, vector<16x16xf32> -> vector<16x16xf32>
    %cst_149 = arith.constant 2.500000e-01 : f32
    %477 = vector.broadcast %cst_149 : f32 to vector<16x16xf32>
    %478 = arith.mulf %477, %476 : vector<16x16xf32>
    %479 = arith.addf %478, %5 : vector<16x16xf32>
    %cst_150 = arith.constant dense<0xFF800000> : vector<16xf32>
    %480 = vector.multi_reduction <maximumf>, %479, %cst_150 [1] : vector<16x16xf32> to vector<16xf32>
    %481 = vector.shape_cast %480 : vector<16xf32> to vector<16x1xf32>
    %482 = vector.broadcast %481 : vector<16x1xf32> to vector<16x16xf32>
    %483 = arith.subf %479, %482 : vector<16x16xf32>
    %484 = math.exp %483 : vector<16x16xf32>
    %cst_151 = arith.constant dense<0.000000e+00> : vector<16xf32>
    %485 = vector.multi_reduction <add>, %484, %cst_151 [1] : vector<16x16xf32> to vector<16xf32>
    %486 = vector.shape_cast %485 : vector<16xf32> to vector<16x1xf32>
    %487 = tpu.reciprocal %486 {approx = true} : vector<16x1xf32> -> vector<16x1xf32>
    %488 = vector.broadcast %487 : vector<16x1xf32> to vector<16x16xf32>
    %489 = arith.mulf %484, %488 : vector<16x16xf32>
    %cst_152 = arith.constant dense<0.000000e+00> : vector<16x16xf32>
    %490 = tpu.matmul %489, %457, %cst_152 {dimension_numbers = #tpu.dot_dimension_numbers<[1], [0], [0], [1], [0, 0, 1, 1], [], []>} : vector<16x16xf32>, vector<16x16xf32>, vector<16x16xf32> -> vector<16x16xf32>
    %cst_153 = arith.constant dense<0.000000e+00> : vector<16x16xf32>
    %491 = tpu.matmul %489, %455, %cst_153 {dimension_numbers = #tpu.dot_dimension_numbers<[0], [0], [1], [1], [0, 1, 1, 1], [], []>} : vector<16x16xf32>, vector<16x16xf32>, vector<16x16xf32> -> vector<16x16xf32>
    %492 = tpu.concatenate %459, %474, %490, %475, %491 in 1 : vector<16x64xf32>, vector<16x16xf32>, vector<16x16xf32>, vector<16x16xf32>, vector<16x16xf32> -> vector<16x128xf32>
    %493 = arith.truncf %492 : vector<16x128xf32> to vector<16x128xbf16>
    %cst_154 = arith.constant dense<0.000000e+00> : vector<16x32xf32>
    %494 = tpu.matmul %493, %2, %cst_154 {dimension_numbers = #tpu.dot_dimension_numbers<[1], [0], [0], [1], [0, 0, 1, 1], [], []>} : vector<16x128xbf16>, vector<128x32xbf16>, vector<16x32xf32> -> vector<16x32xf32>
    %495 = vector.broadcast %3 : vector<1x32xf32> to vector<16x32xf32>
    %496 = arith.mulf %494, %495 : vector<16x32xf32>
    %cst_155 = arith.constant dense<0.000000e+00> : vector<16xf32>
    %497 = vector.multi_reduction <add>, %496, %cst_155 [1] : vector<16x32xf32> to vector<16xf32>
    %498 = vector.shape_cast %497 : vector<16xf32> to vector<16x1xf32>
    %cst_156 = arith.constant 3.200000e+01 : f32
    %499 = vector.broadcast %cst_156 : f32 to vector<16x1xf32>
    %500 = arith.divf %498, %499 : vector<16x1xf32>
    %501 = arith.mulf %496, %446 : vector<16x32xf32>
    %cst_157 = arith.constant dense<0.000000e+00> : vector<16xf32>
    %502 = vector.multi_reduction <add>, %501, %cst_157 [1] : vector<16x32xf32> to vector<16xf32>
    %503 = vector.shape_cast %502 : vector<16xf32> to vector<16x1xf32>
    %cst_158 = arith.constant 3.200000e+01 : f32
    %504 = vector.broadcast %cst_158 : f32 to vector<16x1xf32>
    %505 = arith.divf %503, %504 : vector<16x1xf32>
    %506 = vector.broadcast %500 : vector<16x1xf32> to vector<16x32xf32>
    %507 = arith.subf %496, %506 : vector<16x32xf32>
    %508 = vector.broadcast %505 : vector<16x1xf32> to vector<16x32xf32>
    %509 = arith.mulf %446, %508 : vector<16x32xf32>
    %510 = arith.subf %507, %509 : vector<16x32xf32>
    %511 = vector.broadcast %444 : vector<16x1xf32> to vector<16x32xf32>
    %512 = arith.mulf %511, %510 : vector<16x32xf32>
    %cst_159 = arith.constant 1.000000e+00 : f32
    %513 = vector.broadcast %cst_159 : f32 to vector<16x32xf32>
    %514 = arith.mulf %513, %512 : vector<16x32xf32>
    %515 = arith.subf %430, %514 : vector<16x32xf32>
    %c6_i32 = arith.constant 6 : i32
    %cst_160 = arith.constant dense<0.000000e+00> : vector<16xf32>
    %516 = vector.multi_reduction <add>, %515, %cst_160 [1] : vector<16x32xf32> to vector<16xf32>
    %517 = vector.shape_cast %516 : vector<16xf32> to vector<16x1xf32>
    %cst_161 = arith.constant 3.200000e+01 : f32
    %518 = vector.broadcast %cst_161 : f32 to vector<16x1xf32>
    %519 = arith.divf %517, %518 : vector<16x1xf32>
    %520 = vector.broadcast %519 : vector<16x1xf32> to vector<16x32xf32>
    %521 = arith.subf %515, %520 : vector<16x32xf32>
    %522 = arith.mulf %521, %521 : vector<16x32xf32>
    %cst_162 = arith.constant dense<0.000000e+00> : vector<16xf32>
    %523 = vector.multi_reduction <add>, %522, %cst_162 [1] : vector<16x32xf32> to vector<16xf32>
    %524 = vector.shape_cast %523 : vector<16xf32> to vector<16x1xf32>
    %cst_163 = arith.constant 3.200000e+01 : f32
    %525 = vector.broadcast %cst_163 : f32 to vector<16x1xf32>
    %526 = arith.divf %524, %525 : vector<16x1xf32>
    %cst_164 = arith.constant 9.99999974E-6 : f32
    %527 = vector.broadcast %cst_164 : f32 to vector<16x1xf32>
    %528 = arith.addf %526, %527 : vector<16x1xf32>
    %529 = math.rsqrt %528 : vector<16x1xf32>
    %530 = vector.broadcast %529 : vector<16x1xf32> to vector<16x32xf32>
    %531 = arith.mulf %521, %530 : vector<16x32xf32>
    %532 = vector.broadcast %3 : vector<1x32xf32> to vector<16x32xf32>
    %533 = arith.mulf %532, %531 : vector<16x32xf32>
    %534 = vector.broadcast %4 : vector<1x32xf32> to vector<16x32xf32>
    %535 = arith.addf %533, %534 : vector<16x32xf32>
    %536 = arith.truncf %535 : vector<16x32xf32> to vector<16x32xbf16>
    %cst_165 = arith.constant dense<0.000000e+00> : vector<16x128xf32>
    %537 = tpu.matmul %536, %1, %cst_165 {dimension_numbers = #tpu.dot_dimension_numbers<[1], [0], [0], [1], [0, 0, 1, 1], [], []>} : vector<16x32xbf16>, vector<32x128xbf16>, vector<16x128xf32> -> vector<16x128xf32>
    %538 = vector.extract_strided_slice %537 {offsets = [0, 0], sizes = [16, 64], strides = [1, 1]} : vector<16x128xf32> to vector<16x64xf32>
    %539 = vector.extract_strided_slice %537 {offsets = [0, 64], sizes = [16, 16], strides = [1, 1]} : vector<16x128xf32> to vector<16x16xf32>
    %540 = vector.extract_strided_slice %537 {offsets = [0, 80], sizes = [16, 16], strides = [1, 1]} : vector<16x128xf32> to vector<16x16xf32>
    %541 = vector.extract_strided_slice %537 {offsets = [0, 96], sizes = [16, 16], strides = [1, 1]} : vector<16x128xf32> to vector<16x16xf32>
    %542 = vector.extract_strided_slice %537 {offsets = [0, 112], sizes = [16, 16], strides = [1, 1]} : vector<16x128xf32> to vector<16x16xf32>
    %cst_166 = arith.constant 0.000000e+00 : f32
    %543 = vector.broadcast %cst_166 : f32 to vector<16x64xf32>
    %544 = arith.maximumf %538, %543 : vector<16x64xf32>
    %cst_167 = arith.constant dense<0.000000e+00> : vector<16x16xf32>
    %545 = tpu.matmul %539, %541, %cst_167 {dimension_numbers = #tpu.dot_dimension_numbers<[1], [1], [0], [0], [0, 0, 1, 0], [], []>} : vector<16x16xf32>, vector<16x16xf32>, vector<16x16xf32> -> vector<16x16xf32>
    %cst_168 = arith.constant 2.500000e-01 : f32
    %546 = vector.broadcast %cst_168 : f32 to vector<16x16xf32>
    %547 = arith.mulf %546, %545 : vector<16x16xf32>
    %548 = arith.addf %547, %5 : vector<16x16xf32>
    %cst_169 = arith.constant dense<0xFF800000> : vector<16xf32>
    %549 = vector.multi_reduction <maximumf>, %548, %cst_169 [1] : vector<16x16xf32> to vector<16xf32>
    %550 = vector.shape_cast %549 : vector<16xf32> to vector<16x1xf32>
    %551 = vector.broadcast %550 : vector<16x1xf32> to vector<16x16xf32>
    %552 = arith.subf %548, %551 : vector<16x16xf32>
    %553 = math.exp %552 : vector<16x16xf32>
    %cst_170 = arith.constant dense<0.000000e+00> : vector<16xf32>
    %554 = vector.multi_reduction <add>, %553, %cst_170 [1] : vector<16x16xf32> to vector<16xf32>
    %555 = vector.shape_cast %554 : vector<16xf32> to vector<16x1xf32>
    %556 = tpu.reciprocal %555 {approx = true} : vector<16x1xf32> -> vector<16x1xf32>
    %557 = vector.broadcast %556 : vector<16x1xf32> to vector<16x16xf32>
    %558 = arith.mulf %553, %557 : vector<16x16xf32>
    %cst_171 = arith.constant dense<0.000000e+00> : vector<16x16xf32>
    %559 = tpu.matmul %558, %541, %cst_171 {dimension_numbers = #tpu.dot_dimension_numbers<[1], [0], [0], [1], [0, 0, 1, 1], [], []>} : vector<16x16xf32>, vector<16x16xf32>, vector<16x16xf32> -> vector<16x16xf32>
    %cst_172 = arith.constant dense<0.000000e+00> : vector<16x16xf32>
    %560 = tpu.matmul %558, %539, %cst_172 {dimension_numbers = #tpu.dot_dimension_numbers<[0], [0], [1], [1], [0, 1, 1, 1], [], []>} : vector<16x16xf32>, vector<16x16xf32>, vector<16x16xf32> -> vector<16x16xf32>
    %cst_173 = arith.constant dense<0.000000e+00> : vector<16x16xf32>
    %561 = tpu.matmul %540, %542, %cst_173 {dimension_numbers = #tpu.dot_dimension_numbers<[1], [1], [0], [0], [0, 0, 1, 0], [], []>} : vector<16x16xf32>, vector<16x16xf32>, vector<16x16xf32> -> vector<16x16xf32>
    %cst_174 = arith.constant 2.500000e-01 : f32
    %562 = vector.broadcast %cst_174 : f32 to vector<16x16xf32>
    %563 = arith.mulf %562, %561 : vector<16x16xf32>
    %564 = arith.addf %563, %5 : vector<16x16xf32>
    %cst_175 = arith.constant dense<0xFF800000> : vector<16xf32>
    %565 = vector.multi_reduction <maximumf>, %564, %cst_175 [1] : vector<16x16xf32> to vector<16xf32>
    %566 = vector.shape_cast %565 : vector<16xf32> to vector<16x1xf32>
    %567 = vector.broadcast %566 : vector<16x1xf32> to vector<16x16xf32>
    %568 = arith.subf %564, %567 : vector<16x16xf32>
    %569 = math.exp %568 : vector<16x16xf32>
    %cst_176 = arith.constant dense<0.000000e+00> : vector<16xf32>
    %570 = vector.multi_reduction <add>, %569, %cst_176 [1] : vector<16x16xf32> to vector<16xf32>
    %571 = vector.shape_cast %570 : vector<16xf32> to vector<16x1xf32>
    %572 = tpu.reciprocal %571 {approx = true} : vector<16x1xf32> -> vector<16x1xf32>
    %573 = vector.broadcast %572 : vector<16x1xf32> to vector<16x16xf32>
    %574 = arith.mulf %569, %573 : vector<16x16xf32>
    %cst_177 = arith.constant dense<0.000000e+00> : vector<16x16xf32>
    %575 = tpu.matmul %574, %542, %cst_177 {dimension_numbers = #tpu.dot_dimension_numbers<[1], [0], [0], [1], [0, 0, 1, 1], [], []>} : vector<16x16xf32>, vector<16x16xf32>, vector<16x16xf32> -> vector<16x16xf32>
    %cst_178 = arith.constant dense<0.000000e+00> : vector<16x16xf32>
    %576 = tpu.matmul %574, %540, %cst_178 {dimension_numbers = #tpu.dot_dimension_numbers<[0], [0], [1], [1], [0, 1, 1, 1], [], []>} : vector<16x16xf32>, vector<16x16xf32>, vector<16x16xf32> -> vector<16x16xf32>
    %577 = tpu.concatenate %544, %559, %575, %560, %576 in 1 : vector<16x64xf32>, vector<16x16xf32>, vector<16x16xf32>, vector<16x16xf32>, vector<16x16xf32> -> vector<16x128xf32>
    %578 = arith.truncf %577 : vector<16x128xf32> to vector<16x128xbf16>
    %cst_179 = arith.constant dense<0.000000e+00> : vector<16x32xf32>
    %579 = tpu.matmul %578, %2, %cst_179 {dimension_numbers = #tpu.dot_dimension_numbers<[1], [0], [0], [1], [0, 0, 1, 1], [], []>} : vector<16x128xbf16>, vector<128x32xbf16>, vector<16x32xf32> -> vector<16x32xf32>
    %580 = vector.broadcast %3 : vector<1x32xf32> to vector<16x32xf32>
    %581 = arith.mulf %579, %580 : vector<16x32xf32>
    %cst_180 = arith.constant dense<0.000000e+00> : vector<16xf32>
    %582 = vector.multi_reduction <add>, %581, %cst_180 [1] : vector<16x32xf32> to vector<16xf32>
    %583 = vector.shape_cast %582 : vector<16xf32> to vector<16x1xf32>
    %cst_181 = arith.constant 3.200000e+01 : f32
    %584 = vector.broadcast %cst_181 : f32 to vector<16x1xf32>
    %585 = arith.divf %583, %584 : vector<16x1xf32>
    %586 = arith.mulf %581, %531 : vector<16x32xf32>
    %cst_182 = arith.constant dense<0.000000e+00> : vector<16xf32>
    %587 = vector.multi_reduction <add>, %586, %cst_182 [1] : vector<16x32xf32> to vector<16xf32>
    %588 = vector.shape_cast %587 : vector<16xf32> to vector<16x1xf32>
    %cst_183 = arith.constant 3.200000e+01 : f32
    %589 = vector.broadcast %cst_183 : f32 to vector<16x1xf32>
    %590 = arith.divf %588, %589 : vector<16x1xf32>
    %591 = vector.broadcast %585 : vector<16x1xf32> to vector<16x32xf32>
    %592 = arith.subf %581, %591 : vector<16x32xf32>
    %593 = vector.broadcast %590 : vector<16x1xf32> to vector<16x32xf32>
    %594 = arith.mulf %531, %593 : vector<16x32xf32>
    %595 = arith.subf %592, %594 : vector<16x32xf32>
    %596 = vector.broadcast %529 : vector<16x1xf32> to vector<16x32xf32>
    %597 = arith.mulf %596, %595 : vector<16x32xf32>
    %cst_184 = arith.constant 1.000000e+00 : f32
    %598 = vector.broadcast %cst_184 : f32 to vector<16x32xf32>
    %599 = arith.mulf %598, %597 : vector<16x32xf32>
    %600 = arith.subf %515, %599 : vector<16x32xf32>
    %c7_i32 = arith.constant 7 : i32
    %cst_185 = arith.constant dense<0.000000e+00> : vector<16xf32>
    %601 = vector.multi_reduction <add>, %600, %cst_185 [1] : vector<16x32xf32> to vector<16xf32>
    %602 = vector.shape_cast %601 : vector<16xf32> to vector<16x1xf32>
    %cst_186 = arith.constant 3.200000e+01 : f32
    %603 = vector.broadcast %cst_186 : f32 to vector<16x1xf32>
    %604 = arith.divf %602, %603 : vector<16x1xf32>
    %605 = vector.broadcast %604 : vector<16x1xf32> to vector<16x32xf32>
    %606 = arith.subf %600, %605 : vector<16x32xf32>
    %607 = arith.mulf %606, %606 : vector<16x32xf32>
    %cst_187 = arith.constant dense<0.000000e+00> : vector<16xf32>
    %608 = vector.multi_reduction <add>, %607, %cst_187 [1] : vector<16x32xf32> to vector<16xf32>
    %609 = vector.shape_cast %608 : vector<16xf32> to vector<16x1xf32>
    %cst_188 = arith.constant 3.200000e+01 : f32
    %610 = vector.broadcast %cst_188 : f32 to vector<16x1xf32>
    %611 = arith.divf %609, %610 : vector<16x1xf32>
    %cst_189 = arith.constant 9.99999974E-6 : f32
    %612 = vector.broadcast %cst_189 : f32 to vector<16x1xf32>
    %613 = arith.addf %611, %612 : vector<16x1xf32>
    %614 = math.rsqrt %613 : vector<16x1xf32>
    %615 = vector.broadcast %614 : vector<16x1xf32> to vector<16x32xf32>
    %616 = arith.mulf %606, %615 : vector<16x32xf32>
    %617 = vector.broadcast %3 : vector<1x32xf32> to vector<16x32xf32>
    %618 = arith.mulf %617, %616 : vector<16x32xf32>
    %619 = vector.broadcast %4 : vector<1x32xf32> to vector<16x32xf32>
    %620 = arith.addf %618, %619 : vector<16x32xf32>
    %621 = arith.truncf %620 : vector<16x32xf32> to vector<16x32xbf16>
    %cst_190 = arith.constant dense<0.000000e+00> : vector<16x128xf32>
    %622 = tpu.matmul %621, %1, %cst_190 {dimension_numbers = #tpu.dot_dimension_numbers<[1], [0], [0], [1], [0, 0, 1, 1], [], []>} : vector<16x32xbf16>, vector<32x128xbf16>, vector<16x128xf32> -> vector<16x128xf32>
    %623 = vector.extract_strided_slice %622 {offsets = [0, 0], sizes = [16, 64], strides = [1, 1]} : vector<16x128xf32> to vector<16x64xf32>
    %624 = vector.extract_strided_slice %622 {offsets = [0, 64], sizes = [16, 16], strides = [1, 1]} : vector<16x128xf32> to vector<16x16xf32>
    %625 = vector.extract_strided_slice %622 {offsets = [0, 80], sizes = [16, 16], strides = [1, 1]} : vector<16x128xf32> to vector<16x16xf32>
    %626 = vector.extract_strided_slice %622 {offsets = [0, 96], sizes = [16, 16], strides = [1, 1]} : vector<16x128xf32> to vector<16x16xf32>
    %627 = vector.extract_strided_slice %622 {offsets = [0, 112], sizes = [16, 16], strides = [1, 1]} : vector<16x128xf32> to vector<16x16xf32>
    %cst_191 = arith.constant 0.000000e+00 : f32
    %628 = vector.broadcast %cst_191 : f32 to vector<16x64xf32>
    %629 = arith.maximumf %623, %628 : vector<16x64xf32>
    %cst_192 = arith.constant dense<0.000000e+00> : vector<16x16xf32>
    %630 = tpu.matmul %624, %626, %cst_192 {dimension_numbers = #tpu.dot_dimension_numbers<[1], [1], [0], [0], [0, 0, 1, 0], [], []>} : vector<16x16xf32>, vector<16x16xf32>, vector<16x16xf32> -> vector<16x16xf32>
    %cst_193 = arith.constant 2.500000e-01 : f32
    %631 = vector.broadcast %cst_193 : f32 to vector<16x16xf32>
    %632 = arith.mulf %631, %630 : vector<16x16xf32>
    %633 = arith.addf %632, %5 : vector<16x16xf32>
    %cst_194 = arith.constant dense<0xFF800000> : vector<16xf32>
    %634 = vector.multi_reduction <maximumf>, %633, %cst_194 [1] : vector<16x16xf32> to vector<16xf32>
    %635 = vector.shape_cast %634 : vector<16xf32> to vector<16x1xf32>
    %636 = vector.broadcast %635 : vector<16x1xf32> to vector<16x16xf32>
    %637 = arith.subf %633, %636 : vector<16x16xf32>
    %638 = math.exp %637 : vector<16x16xf32>
    %cst_195 = arith.constant dense<0.000000e+00> : vector<16xf32>
    %639 = vector.multi_reduction <add>, %638, %cst_195 [1] : vector<16x16xf32> to vector<16xf32>
    %640 = vector.shape_cast %639 : vector<16xf32> to vector<16x1xf32>
    %641 = tpu.reciprocal %640 {approx = true} : vector<16x1xf32> -> vector<16x1xf32>
    %642 = vector.broadcast %641 : vector<16x1xf32> to vector<16x16xf32>
    %643 = arith.mulf %638, %642 : vector<16x16xf32>
    %cst_196 = arith.constant dense<0.000000e+00> : vector<16x16xf32>
    %644 = tpu.matmul %643, %626, %cst_196 {dimension_numbers = #tpu.dot_dimension_numbers<[1], [0], [0], [1], [0, 0, 1, 1], [], []>} : vector<16x16xf32>, vector<16x16xf32>, vector<16x16xf32> -> vector<16x16xf32>
    %cst_197 = arith.constant dense<0.000000e+00> : vector<16x16xf32>
    %645 = tpu.matmul %643, %624, %cst_197 {dimension_numbers = #tpu.dot_dimension_numbers<[0], [0], [1], [1], [0, 1, 1, 1], [], []>} : vector<16x16xf32>, vector<16x16xf32>, vector<16x16xf32> -> vector<16x16xf32>
    %cst_198 = arith.constant dense<0.000000e+00> : vector<16x16xf32>
    %646 = tpu.matmul %625, %627, %cst_198 {dimension_numbers = #tpu.dot_dimension_numbers<[1], [1], [0], [0], [0, 0, 1, 0], [], []>} : vector<16x16xf32>, vector<16x16xf32>, vector<16x16xf32> -> vector<16x16xf32>
    %cst_199 = arith.constant 2.500000e-01 : f32
    %647 = vector.broadcast %cst_199 : f32 to vector<16x16xf32>
    %648 = arith.mulf %647, %646 : vector<16x16xf32>
    %649 = arith.addf %648, %5 : vector<16x16xf32>
    %cst_200 = arith.constant dense<0xFF800000> : vector<16xf32>
    %650 = vector.multi_reduction <maximumf>, %649, %cst_200 [1] : vector<16x16xf32> to vector<16xf32>
    %651 = vector.shape_cast %650 : vector<16xf32> to vector<16x1xf32>
    %652 = vector.broadcast %651 : vector<16x1xf32> to vector<16x16xf32>
    %653 = arith.subf %649, %652 : vector<16x16xf32>
    %654 = math.exp %653 : vector<16x16xf32>
    %cst_201 = arith.constant dense<0.000000e+00> : vector<16xf32>
    %655 = vector.multi_reduction <add>, %654, %cst_201 [1] : vector<16x16xf32> to vector<16xf32>
    %656 = vector.shape_cast %655 : vector<16xf32> to vector<16x1xf32>
    %657 = tpu.reciprocal %656 {approx = true} : vector<16x1xf32> -> vector<16x1xf32>
    %658 = vector.broadcast %657 : vector<16x1xf32> to vector<16x16xf32>
    %659 = arith.mulf %654, %658 : vector<16x16xf32>
    %cst_202 = arith.constant dense<0.000000e+00> : vector<16x16xf32>
    %660 = tpu.matmul %659, %627, %cst_202 {dimension_numbers = #tpu.dot_dimension_numbers<[1], [0], [0], [1], [0, 0, 1, 1], [], []>} : vector<16x16xf32>, vector<16x16xf32>, vector<16x16xf32> -> vector<16x16xf32>
    %cst_203 = arith.constant dense<0.000000e+00> : vector<16x16xf32>
    %661 = tpu.matmul %659, %625, %cst_203 {dimension_numbers = #tpu.dot_dimension_numbers<[0], [0], [1], [1], [0, 1, 1, 1], [], []>} : vector<16x16xf32>, vector<16x16xf32>, vector<16x16xf32> -> vector<16x16xf32>
    %662 = tpu.concatenate %629, %644, %660, %645, %661 in 1 : vector<16x64xf32>, vector<16x16xf32>, vector<16x16xf32>, vector<16x16xf32>, vector<16x16xf32> -> vector<16x128xf32>
    %663 = arith.truncf %662 : vector<16x128xf32> to vector<16x128xbf16>
    %cst_204 = arith.constant dense<0.000000e+00> : vector<16x32xf32>
    %664 = tpu.matmul %663, %2, %cst_204 {dimension_numbers = #tpu.dot_dimension_numbers<[1], [0], [0], [1], [0, 0, 1, 1], [], []>} : vector<16x128xbf16>, vector<128x32xbf16>, vector<16x32xf32> -> vector<16x32xf32>
    %665 = vector.broadcast %3 : vector<1x32xf32> to vector<16x32xf32>
    %666 = arith.mulf %664, %665 : vector<16x32xf32>
    %cst_205 = arith.constant dense<0.000000e+00> : vector<16xf32>
    %667 = vector.multi_reduction <add>, %666, %cst_205 [1] : vector<16x32xf32> to vector<16xf32>
    %668 = vector.shape_cast %667 : vector<16xf32> to vector<16x1xf32>
    %cst_206 = arith.constant 3.200000e+01 : f32
    %669 = vector.broadcast %cst_206 : f32 to vector<16x1xf32>
    %670 = arith.divf %668, %669 : vector<16x1xf32>
    %671 = arith.mulf %666, %616 : vector<16x32xf32>
    %cst_207 = arith.constant dense<0.000000e+00> : vector<16xf32>
    %672 = vector.multi_reduction <add>, %671, %cst_207 [1] : vector<16x32xf32> to vector<16xf32>
    %673 = vector.shape_cast %672 : vector<16xf32> to vector<16x1xf32>
    %cst_208 = arith.constant 3.200000e+01 : f32
    %674 = vector.broadcast %cst_208 : f32 to vector<16x1xf32>
    %675 = arith.divf %673, %674 : vector<16x1xf32>
    %676 = vector.broadcast %670 : vector<16x1xf32> to vector<16x32xf32>
    %677 = arith.subf %666, %676 : vector<16x32xf32>
    %678 = vector.broadcast %675 : vector<16x1xf32> to vector<16x32xf32>
    %679 = arith.mulf %616, %678 : vector<16x32xf32>
    %680 = arith.subf %677, %679 : vector<16x32xf32>
    %681 = vector.broadcast %614 : vector<16x1xf32> to vector<16x32xf32>
    %682 = arith.mulf %681, %680 : vector<16x32xf32>
    %cst_209 = arith.constant 1.000000e+00 : f32
    %683 = vector.broadcast %cst_209 : f32 to vector<16x32xf32>
    %684 = arith.mulf %683, %682 : vector<16x32xf32>
    %685 = arith.subf %600, %684 : vector<16x32xf32>
    %c8_i32 = arith.constant 8 : i32
    %cst_210 = arith.constant dense<0.000000e+00> : vector<16xf32>
    %686 = vector.multi_reduction <add>, %685, %cst_210 [1] : vector<16x32xf32> to vector<16xf32>
    %687 = vector.shape_cast %686 : vector<16xf32> to vector<16x1xf32>
    %cst_211 = arith.constant 3.200000e+01 : f32
    %688 = vector.broadcast %cst_211 : f32 to vector<16x1xf32>
    %689 = arith.divf %687, %688 : vector<16x1xf32>
    %690 = vector.broadcast %689 : vector<16x1xf32> to vector<16x32xf32>
    %691 = arith.subf %685, %690 : vector<16x32xf32>
    %692 = arith.mulf %691, %691 : vector<16x32xf32>
    %cst_212 = arith.constant dense<0.000000e+00> : vector<16xf32>
    %693 = vector.multi_reduction <add>, %692, %cst_212 [1] : vector<16x32xf32> to vector<16xf32>
    %694 = vector.shape_cast %693 : vector<16xf32> to vector<16x1xf32>
    %cst_213 = arith.constant 3.200000e+01 : f32
    %695 = vector.broadcast %cst_213 : f32 to vector<16x1xf32>
    %696 = arith.divf %694, %695 : vector<16x1xf32>
    %cst_214 = arith.constant 9.99999974E-6 : f32
    %697 = vector.broadcast %cst_214 : f32 to vector<16x1xf32>
    %698 = arith.addf %696, %697 : vector<16x1xf32>
    %699 = math.rsqrt %698 : vector<16x1xf32>
    %700 = vector.broadcast %699 : vector<16x1xf32> to vector<16x32xf32>
    %701 = arith.mulf %691, %700 : vector<16x32xf32>
    %702 = vector.broadcast %3 : vector<1x32xf32> to vector<16x32xf32>
    %703 = arith.mulf %702, %701 : vector<16x32xf32>
    %704 = vector.broadcast %4 : vector<1x32xf32> to vector<16x32xf32>
    %705 = arith.addf %703, %704 : vector<16x32xf32>
    %706 = arith.truncf %705 : vector<16x32xf32> to vector<16x32xbf16>
    %cst_215 = arith.constant dense<0.000000e+00> : vector<16x128xf32>
    %707 = tpu.matmul %706, %1, %cst_215 {dimension_numbers = #tpu.dot_dimension_numbers<[1], [0], [0], [1], [0, 0, 1, 1], [], []>} : vector<16x32xbf16>, vector<32x128xbf16>, vector<16x128xf32> -> vector<16x128xf32>
    %708 = vector.extract_strided_slice %707 {offsets = [0, 0], sizes = [16, 64], strides = [1, 1]} : vector<16x128xf32> to vector<16x64xf32>
    %709 = vector.extract_strided_slice %707 {offsets = [0, 64], sizes = [16, 16], strides = [1, 1]} : vector<16x128xf32> to vector<16x16xf32>
    %710 = vector.extract_strided_slice %707 {offsets = [0, 80], sizes = [16, 16], strides = [1, 1]} : vector<16x128xf32> to vector<16x16xf32>
    %711 = vector.extract_strided_slice %707 {offsets = [0, 96], sizes = [16, 16], strides = [1, 1]} : vector<16x128xf32> to vector<16x16xf32>
    %712 = vector.extract_strided_slice %707 {offsets = [0, 112], sizes = [16, 16], strides = [1, 1]} : vector<16x128xf32> to vector<16x16xf32>
    %cst_216 = arith.constant 0.000000e+00 : f32
    %713 = vector.broadcast %cst_216 : f32 to vector<16x64xf32>
    %714 = arith.maximumf %708, %713 : vector<16x64xf32>
    %cst_217 = arith.constant dense<0.000000e+00> : vector<16x16xf32>
    %715 = tpu.matmul %709, %711, %cst_217 {dimension_numbers = #tpu.dot_dimension_numbers<[1], [1], [0], [0], [0, 0, 1, 0], [], []>} : vector<16x16xf32>, vector<16x16xf32>, vector<16x16xf32> -> vector<16x16xf32>
    %cst_218 = arith.constant 2.500000e-01 : f32
    %716 = vector.broadcast %cst_218 : f32 to vector<16x16xf32>
    %717 = arith.mulf %716, %715 : vector<16x16xf32>
    %718 = arith.addf %717, %5 : vector<16x16xf32>
    %cst_219 = arith.constant dense<0xFF800000> : vector<16xf32>
    %719 = vector.multi_reduction <maximumf>, %718, %cst_219 [1] : vector<16x16xf32> to vector<16xf32>
    %720 = vector.shape_cast %719 : vector<16xf32> to vector<16x1xf32>
    %721 = vector.broadcast %720 : vector<16x1xf32> to vector<16x16xf32>
    %722 = arith.subf %718, %721 : vector<16x16xf32>
    %723 = math.exp %722 : vector<16x16xf32>
    %cst_220 = arith.constant dense<0.000000e+00> : vector<16xf32>
    %724 = vector.multi_reduction <add>, %723, %cst_220 [1] : vector<16x16xf32> to vector<16xf32>
    %725 = vector.shape_cast %724 : vector<16xf32> to vector<16x1xf32>
    %726 = tpu.reciprocal %725 {approx = true} : vector<16x1xf32> -> vector<16x1xf32>
    %727 = vector.broadcast %726 : vector<16x1xf32> to vector<16x16xf32>
    %728 = arith.mulf %723, %727 : vector<16x16xf32>
    %cst_221 = arith.constant dense<0.000000e+00> : vector<16x16xf32>
    %729 = tpu.matmul %728, %711, %cst_221 {dimension_numbers = #tpu.dot_dimension_numbers<[1], [0], [0], [1], [0, 0, 1, 1], [], []>} : vector<16x16xf32>, vector<16x16xf32>, vector<16x16xf32> -> vector<16x16xf32>
    %cst_222 = arith.constant dense<0.000000e+00> : vector<16x16xf32>
    %730 = tpu.matmul %728, %709, %cst_222 {dimension_numbers = #tpu.dot_dimension_numbers<[0], [0], [1], [1], [0, 1, 1, 1], [], []>} : vector<16x16xf32>, vector<16x16xf32>, vector<16x16xf32> -> vector<16x16xf32>
    %cst_223 = arith.constant dense<0.000000e+00> : vector<16x16xf32>
    %731 = tpu.matmul %710, %712, %cst_223 {dimension_numbers = #tpu.dot_dimension_numbers<[1], [1], [0], [0], [0, 0, 1, 0], [], []>} : vector<16x16xf32>, vector<16x16xf32>, vector<16x16xf32> -> vector<16x16xf32>
    %cst_224 = arith.constant 2.500000e-01 : f32
    %732 = vector.broadcast %cst_224 : f32 to vector<16x16xf32>
    %733 = arith.mulf %732, %731 : vector<16x16xf32>
    %734 = arith.addf %733, %5 : vector<16x16xf32>
    %cst_225 = arith.constant dense<0xFF800000> : vector<16xf32>
    %735 = vector.multi_reduction <maximumf>, %734, %cst_225 [1] : vector<16x16xf32> to vector<16xf32>
    %736 = vector.shape_cast %735 : vector<16xf32> to vector<16x1xf32>
    %737 = vector.broadcast %736 : vector<16x1xf32> to vector<16x16xf32>
    %738 = arith.subf %734, %737 : vector<16x16xf32>
    %739 = math.exp %738 : vector<16x16xf32>
    %cst_226 = arith.constant dense<0.000000e+00> : vector<16xf32>
    %740 = vector.multi_reduction <add>, %739, %cst_226 [1] : vector<16x16xf32> to vector<16xf32>
    %741 = vector.shape_cast %740 : vector<16xf32> to vector<16x1xf32>
    %742 = tpu.reciprocal %741 {approx = true} : vector<16x1xf32> -> vector<16x1xf32>
    %743 = vector.broadcast %742 : vector<16x1xf32> to vector<16x16xf32>
    %744 = arith.mulf %739, %743 : vector<16x16xf32>
    %cst_227 = arith.constant dense<0.000000e+00> : vector<16x16xf32>
    %745 = tpu.matmul %744, %712, %cst_227 {dimension_numbers = #tpu.dot_dimension_numbers<[1], [0], [0], [1], [0, 0, 1, 1], [], []>} : vector<16x16xf32>, vector<16x16xf32>, vector<16x16xf32> -> vector<16x16xf32>
    %cst_228 = arith.constant dense<0.000000e+00> : vector<16x16xf32>
    %746 = tpu.matmul %744, %710, %cst_228 {dimension_numbers = #tpu.dot_dimension_numbers<[0], [0], [1], [1], [0, 1, 1, 1], [], []>} : vector<16x16xf32>, vector<16x16xf32>, vector<16x16xf32> -> vector<16x16xf32>
    %747 = tpu.concatenate %714, %729, %745, %730, %746 in 1 : vector<16x64xf32>, vector<16x16xf32>, vector<16x16xf32>, vector<16x16xf32>, vector<16x16xf32> -> vector<16x128xf32>
    %748 = arith.truncf %747 : vector<16x128xf32> to vector<16x128xbf16>
    %cst_229 = arith.constant dense<0.000000e+00> : vector<16x32xf32>
    %749 = tpu.matmul %748, %2, %cst_229 {dimension_numbers = #tpu.dot_dimension_numbers<[1], [0], [0], [1], [0, 0, 1, 1], [], []>} : vector<16x128xbf16>, vector<128x32xbf16>, vector<16x32xf32> -> vector<16x32xf32>
    %750 = vector.broadcast %3 : vector<1x32xf32> to vector<16x32xf32>
    %751 = arith.mulf %749, %750 : vector<16x32xf32>
    %cst_230 = arith.constant dense<0.000000e+00> : vector<16xf32>
    %752 = vector.multi_reduction <add>, %751, %cst_230 [1] : vector<16x32xf32> to vector<16xf32>
    %753 = vector.shape_cast %752 : vector<16xf32> to vector<16x1xf32>
    %cst_231 = arith.constant 3.200000e+01 : f32
    %754 = vector.broadcast %cst_231 : f32 to vector<16x1xf32>
    %755 = arith.divf %753, %754 : vector<16x1xf32>
    %756 = arith.mulf %751, %701 : vector<16x32xf32>
    %cst_232 = arith.constant dense<0.000000e+00> : vector<16xf32>
    %757 = vector.multi_reduction <add>, %756, %cst_232 [1] : vector<16x32xf32> to vector<16xf32>
    %758 = vector.shape_cast %757 : vector<16xf32> to vector<16x1xf32>
    %cst_233 = arith.constant 3.200000e+01 : f32
    %759 = vector.broadcast %cst_233 : f32 to vector<16x1xf32>
    %760 = arith.divf %758, %759 : vector<16x1xf32>
    %761 = vector.broadcast %755 : vector<16x1xf32> to vector<16x32xf32>
    %762 = arith.subf %751, %761 : vector<16x32xf32>
    %763 = vector.broadcast %760 : vector<16x1xf32> to vector<16x32xf32>
    %764 = arith.mulf %701, %763 : vector<16x32xf32>
    %765 = arith.subf %762, %764 : vector<16x32xf32>
    %766 = vector.broadcast %699 : vector<16x1xf32> to vector<16x32xf32>
    %767 = arith.mulf %766, %765 : vector<16x32xf32>
    %cst_234 = arith.constant 1.000000e+00 : f32
    %768 = vector.broadcast %cst_234 : f32 to vector<16x32xf32>
    %769 = arith.mulf %768, %767 : vector<16x32xf32>
    %770 = arith.subf %685, %769 : vector<16x32xf32>
    %c9_i32 = arith.constant 9 : i32
    %cst_235 = arith.constant dense<0.000000e+00> : vector<16xf32>
    %771 = vector.multi_reduction <add>, %770, %cst_235 [1] : vector<16x32xf32> to vector<16xf32>
    %772 = vector.shape_cast %771 : vector<16xf32> to vector<16x1xf32>
    %cst_236 = arith.constant 3.200000e+01 : f32
    %773 = vector.broadcast %cst_236 : f32 to vector<16x1xf32>
    %774 = arith.divf %772, %773 : vector<16x1xf32>
    %775 = vector.broadcast %774 : vector<16x1xf32> to vector<16x32xf32>
    %776 = arith.subf %770, %775 : vector<16x32xf32>
    %777 = arith.mulf %776, %776 : vector<16x32xf32>
    %cst_237 = arith.constant dense<0.000000e+00> : vector<16xf32>
    %778 = vector.multi_reduction <add>, %777, %cst_237 [1] : vector<16x32xf32> to vector<16xf32>
    %779 = vector.shape_cast %778 : vector<16xf32> to vector<16x1xf32>
    %cst_238 = arith.constant 3.200000e+01 : f32
    %780 = vector.broadcast %cst_238 : f32 to vector<16x1xf32>
    %781 = arith.divf %779, %780 : vector<16x1xf32>
    %cst_239 = arith.constant 9.99999974E-6 : f32
    %782 = vector.broadcast %cst_239 : f32 to vector<16x1xf32>
    %783 = arith.addf %781, %782 : vector<16x1xf32>
    %784 = math.rsqrt %783 : vector<16x1xf32>
    %785 = vector.broadcast %784 : vector<16x1xf32> to vector<16x32xf32>
    %786 = arith.mulf %776, %785 : vector<16x32xf32>
    %787 = vector.broadcast %3 : vector<1x32xf32> to vector<16x32xf32>
    %788 = arith.mulf %787, %786 : vector<16x32xf32>
    %789 = vector.broadcast %4 : vector<1x32xf32> to vector<16x32xf32>
    %790 = arith.addf %788, %789 : vector<16x32xf32>
    %791 = arith.truncf %790 : vector<16x32xf32> to vector<16x32xbf16>
    %cst_240 = arith.constant dense<0.000000e+00> : vector<16x128xf32>
    %792 = tpu.matmul %791, %1, %cst_240 {dimension_numbers = #tpu.dot_dimension_numbers<[1], [0], [0], [1], [0, 0, 1, 1], [], []>} : vector<16x32xbf16>, vector<32x128xbf16>, vector<16x128xf32> -> vector<16x128xf32>
    %793 = vector.extract_strided_slice %792 {offsets = [0, 0], sizes = [16, 64], strides = [1, 1]} : vector<16x128xf32> to vector<16x64xf32>
    %794 = vector.extract_strided_slice %792 {offsets = [0, 64], sizes = [16, 16], strides = [1, 1]} : vector<16x128xf32> to vector<16x16xf32>
    %795 = vector.extract_strided_slice %792 {offsets = [0, 80], sizes = [16, 16], strides = [1, 1]} : vector<16x128xf32> to vector<16x16xf32>
    %796 = vector.extract_strided_slice %792 {offsets = [0, 96], sizes = [16, 16], strides = [1, 1]} : vector<16x128xf32> to vector<16x16xf32>
    %797 = vector.extract_strided_slice %792 {offsets = [0, 112], sizes = [16, 16], strides = [1, 1]} : vector<16x128xf32> to vector<16x16xf32>
    %cst_241 = arith.constant 0.000000e+00 : f32
    %798 = vector.broadcast %cst_241 : f32 to vector<16x64xf32>
    %799 = arith.maximumf %793, %798 : vector<16x64xf32>
    %cst_242 = arith.constant dense<0.000000e+00> : vector<16x16xf32>
    %800 = tpu.matmul %794, %796, %cst_242 {dimension_numbers = #tpu.dot_dimension_numbers<[1], [1], [0], [0], [0, 0, 1, 0], [], []>} : vector<16x16xf32>, vector<16x16xf32>, vector<16x16xf32> -> vector<16x16xf32>
    %cst_243 = arith.constant 2.500000e-01 : f32
    %801 = vector.broadcast %cst_243 : f32 to vector<16x16xf32>
    %802 = arith.mulf %801, %800 : vector<16x16xf32>
    %803 = arith.addf %802, %5 : vector<16x16xf32>
    %cst_244 = arith.constant dense<0xFF800000> : vector<16xf32>
    %804 = vector.multi_reduction <maximumf>, %803, %cst_244 [1] : vector<16x16xf32> to vector<16xf32>
    %805 = vector.shape_cast %804 : vector<16xf32> to vector<16x1xf32>
    %806 = vector.broadcast %805 : vector<16x1xf32> to vector<16x16xf32>
    %807 = arith.subf %803, %806 : vector<16x16xf32>
    %808 = math.exp %807 : vector<16x16xf32>
    %cst_245 = arith.constant dense<0.000000e+00> : vector<16xf32>
    %809 = vector.multi_reduction <add>, %808, %cst_245 [1] : vector<16x16xf32> to vector<16xf32>
    %810 = vector.shape_cast %809 : vector<16xf32> to vector<16x1xf32>
    %811 = tpu.reciprocal %810 {approx = true} : vector<16x1xf32> -> vector<16x1xf32>
    %812 = vector.broadcast %811 : vector<16x1xf32> to vector<16x16xf32>
    %813 = arith.mulf %808, %812 : vector<16x16xf32>
    %cst_246 = arith.constant dense<0.000000e+00> : vector<16x16xf32>
    %814 = tpu.matmul %813, %796, %cst_246 {dimension_numbers = #tpu.dot_dimension_numbers<[1], [0], [0], [1], [0, 0, 1, 1], [], []>} : vector<16x16xf32>, vector<16x16xf32>, vector<16x16xf32> -> vector<16x16xf32>
    %cst_247 = arith.constant dense<0.000000e+00> : vector<16x16xf32>
    %815 = tpu.matmul %813, %794, %cst_247 {dimension_numbers = #tpu.dot_dimension_numbers<[0], [0], [1], [1], [0, 1, 1, 1], [], []>} : vector<16x16xf32>, vector<16x16xf32>, vector<16x16xf32> -> vector<16x16xf32>
    %cst_248 = arith.constant dense<0.000000e+00> : vector<16x16xf32>
    %816 = tpu.matmul %795, %797, %cst_248 {dimension_numbers = #tpu.dot_dimension_numbers<[1], [1], [0], [0], [0, 0, 1, 0], [], []>} : vector<16x16xf32>, vector<16x16xf32>, vector<16x16xf32> -> vector<16x16xf32>
    %cst_249 = arith.constant 2.500000e-01 : f32
    %817 = vector.broadcast %cst_249 : f32 to vector<16x16xf32>
    %818 = arith.mulf %817, %816 : vector<16x16xf32>
    %819 = arith.addf %818, %5 : vector<16x16xf32>
    %cst_250 = arith.constant dense<0xFF800000> : vector<16xf32>
    %820 = vector.multi_reduction <maximumf>, %819, %cst_250 [1] : vector<16x16xf32> to vector<16xf32>
    %821 = vector.shape_cast %820 : vector<16xf32> to vector<16x1xf32>
    %822 = vector.broadcast %821 : vector<16x1xf32> to vector<16x16xf32>
    %823 = arith.subf %819, %822 : vector<16x16xf32>
    %824 = math.exp %823 : vector<16x16xf32>
    %cst_251 = arith.constant dense<0.000000e+00> : vector<16xf32>
    %825 = vector.multi_reduction <add>, %824, %cst_251 [1] : vector<16x16xf32> to vector<16xf32>
    %826 = vector.shape_cast %825 : vector<16xf32> to vector<16x1xf32>
    %827 = tpu.reciprocal %826 {approx = true} : vector<16x1xf32> -> vector<16x1xf32>
    %828 = vector.broadcast %827 : vector<16x1xf32> to vector<16x16xf32>
    %829 = arith.mulf %824, %828 : vector<16x16xf32>
    %cst_252 = arith.constant dense<0.000000e+00> : vector<16x16xf32>
    %830 = tpu.matmul %829, %797, %cst_252 {dimension_numbers = #tpu.dot_dimension_numbers<[1], [0], [0], [1], [0, 0, 1, 1], [], []>} : vector<16x16xf32>, vector<16x16xf32>, vector<16x16xf32> -> vector<16x16xf32>
    %cst_253 = arith.constant dense<0.000000e+00> : vector<16x16xf32>
    %831 = tpu.matmul %829, %795, %cst_253 {dimension_numbers = #tpu.dot_dimension_numbers<[0], [0], [1], [1], [0, 1, 1, 1], [], []>} : vector<16x16xf32>, vector<16x16xf32>, vector<16x16xf32> -> vector<16x16xf32>
    %832 = tpu.concatenate %799, %814, %830, %815, %831 in 1 : vector<16x64xf32>, vector<16x16xf32>, vector<16x16xf32>, vector<16x16xf32>, vector<16x16xf32> -> vector<16x128xf32>
    %833 = arith.truncf %832 : vector<16x128xf32> to vector<16x128xbf16>
    %cst_254 = arith.constant dense<0.000000e+00> : vector<16x32xf32>
    %834 = tpu.matmul %833, %2, %cst_254 {dimension_numbers = #tpu.dot_dimension_numbers<[1], [0], [0], [1], [0, 0, 1, 1], [], []>} : vector<16x128xbf16>, vector<128x32xbf16>, vector<16x32xf32> -> vector<16x32xf32>
    %835 = vector.broadcast %3 : vector<1x32xf32> to vector<16x32xf32>
    %836 = arith.mulf %834, %835 : vector<16x32xf32>
    %cst_255 = arith.constant dense<0.000000e+00> : vector<16xf32>
    %837 = vector.multi_reduction <add>, %836, %cst_255 [1] : vector<16x32xf32> to vector<16xf32>
    %838 = vector.shape_cast %837 : vector<16xf32> to vector<16x1xf32>
    %cst_256 = arith.constant 3.200000e+01 : f32
    %839 = vector.broadcast %cst_256 : f32 to vector<16x1xf32>
    %840 = arith.divf %838, %839 : vector<16x1xf32>
    %841 = arith.mulf %836, %786 : vector<16x32xf32>
    %cst_257 = arith.constant dense<0.000000e+00> : vector<16xf32>
    %842 = vector.multi_reduction <add>, %841, %cst_257 [1] : vector<16x32xf32> to vector<16xf32>
    %843 = vector.shape_cast %842 : vector<16xf32> to vector<16x1xf32>
    %cst_258 = arith.constant 3.200000e+01 : f32
    %844 = vector.broadcast %cst_258 : f32 to vector<16x1xf32>
    %845 = arith.divf %843, %844 : vector<16x1xf32>
    %846 = vector.broadcast %840 : vector<16x1xf32> to vector<16x32xf32>
    %847 = arith.subf %836, %846 : vector<16x32xf32>
    %848 = vector.broadcast %845 : vector<16x1xf32> to vector<16x32xf32>
    %849 = arith.mulf %786, %848 : vector<16x32xf32>
    %850 = arith.subf %847, %849 : vector<16x32xf32>
    %851 = vector.broadcast %784 : vector<16x1xf32> to vector<16x32xf32>
    %852 = arith.mulf %851, %850 : vector<16x32xf32>
    %cst_259 = arith.constant 1.000000e+00 : f32
    %853 = vector.broadcast %cst_259 : f32 to vector<16x32xf32>
    %854 = arith.mulf %853, %852 : vector<16x32xf32>
    %855 = arith.subf %770, %854 : vector<16x32xf32>
    %c10_i32 = arith.constant 10 : i32
    %cst_260 = arith.constant dense<0.000000e+00> : vector<16xf32>
    %856 = vector.multi_reduction <add>, %855, %cst_260 [1] : vector<16x32xf32> to vector<16xf32>
    %857 = vector.shape_cast %856 : vector<16xf32> to vector<16x1xf32>
    %cst_261 = arith.constant 3.200000e+01 : f32
    %858 = vector.broadcast %cst_261 : f32 to vector<16x1xf32>
    %859 = arith.divf %857, %858 : vector<16x1xf32>
    %860 = vector.broadcast %859 : vector<16x1xf32> to vector<16x32xf32>
    %861 = arith.subf %855, %860 : vector<16x32xf32>
    %862 = arith.mulf %861, %861 : vector<16x32xf32>
    %cst_262 = arith.constant dense<0.000000e+00> : vector<16xf32>
    %863 = vector.multi_reduction <add>, %862, %cst_262 [1] : vector<16x32xf32> to vector<16xf32>
    %864 = vector.shape_cast %863 : vector<16xf32> to vector<16x1xf32>
    %cst_263 = arith.constant 3.200000e+01 : f32
    %865 = vector.broadcast %cst_263 : f32 to vector<16x1xf32>
    %866 = arith.divf %864, %865 : vector<16x1xf32>
    %cst_264 = arith.constant 9.99999974E-6 : f32
    %867 = vector.broadcast %cst_264 : f32 to vector<16x1xf32>
    %868 = arith.addf %866, %867 : vector<16x1xf32>
    %869 = math.rsqrt %868 : vector<16x1xf32>
    %870 = vector.broadcast %869 : vector<16x1xf32> to vector<16x32xf32>
    %871 = arith.mulf %861, %870 : vector<16x32xf32>
    %872 = vector.broadcast %3 : vector<1x32xf32> to vector<16x32xf32>
    %873 = arith.mulf %872, %871 : vector<16x32xf32>
    %874 = vector.broadcast %4 : vector<1x32xf32> to vector<16x32xf32>
    %875 = arith.addf %873, %874 : vector<16x32xf32>
    %876 = arith.truncf %875 : vector<16x32xf32> to vector<16x32xbf16>
    %cst_265 = arith.constant dense<0.000000e+00> : vector<16x128xf32>
    %877 = tpu.matmul %876, %1, %cst_265 {dimension_numbers = #tpu.dot_dimension_numbers<[1], [0], [0], [1], [0, 0, 1, 1], [], []>} : vector<16x32xbf16>, vector<32x128xbf16>, vector<16x128xf32> -> vector<16x128xf32>
    %878 = vector.extract_strided_slice %877 {offsets = [0, 0], sizes = [16, 64], strides = [1, 1]} : vector<16x128xf32> to vector<16x64xf32>
    %879 = vector.extract_strided_slice %877 {offsets = [0, 64], sizes = [16, 16], strides = [1, 1]} : vector<16x128xf32> to vector<16x16xf32>
    %880 = vector.extract_strided_slice %877 {offsets = [0, 80], sizes = [16, 16], strides = [1, 1]} : vector<16x128xf32> to vector<16x16xf32>
    %881 = vector.extract_strided_slice %877 {offsets = [0, 96], sizes = [16, 16], strides = [1, 1]} : vector<16x128xf32> to vector<16x16xf32>
    %882 = vector.extract_strided_slice %877 {offsets = [0, 112], sizes = [16, 16], strides = [1, 1]} : vector<16x128xf32> to vector<16x16xf32>
    %cst_266 = arith.constant 0.000000e+00 : f32
    %883 = vector.broadcast %cst_266 : f32 to vector<16x64xf32>
    %884 = arith.maximumf %878, %883 : vector<16x64xf32>
    %cst_267 = arith.constant dense<0.000000e+00> : vector<16x16xf32>
    %885 = tpu.matmul %879, %881, %cst_267 {dimension_numbers = #tpu.dot_dimension_numbers<[1], [1], [0], [0], [0, 0, 1, 0], [], []>} : vector<16x16xf32>, vector<16x16xf32>, vector<16x16xf32> -> vector<16x16xf32>
    %cst_268 = arith.constant 2.500000e-01 : f32
    %886 = vector.broadcast %cst_268 : f32 to vector<16x16xf32>
    %887 = arith.mulf %886, %885 : vector<16x16xf32>
    %888 = arith.addf %887, %5 : vector<16x16xf32>
    %cst_269 = arith.constant dense<0xFF800000> : vector<16xf32>
    %889 = vector.multi_reduction <maximumf>, %888, %cst_269 [1] : vector<16x16xf32> to vector<16xf32>
    %890 = vector.shape_cast %889 : vector<16xf32> to vector<16x1xf32>
    %891 = vector.broadcast %890 : vector<16x1xf32> to vector<16x16xf32>
    %892 = arith.subf %888, %891 : vector<16x16xf32>
    %893 = math.exp %892 : vector<16x16xf32>
    %cst_270 = arith.constant dense<0.000000e+00> : vector<16xf32>
    %894 = vector.multi_reduction <add>, %893, %cst_270 [1] : vector<16x16xf32> to vector<16xf32>
    %895 = vector.shape_cast %894 : vector<16xf32> to vector<16x1xf32>
    %896 = tpu.reciprocal %895 {approx = true} : vector<16x1xf32> -> vector<16x1xf32>
    %897 = vector.broadcast %896 : vector<16x1xf32> to vector<16x16xf32>
    %898 = arith.mulf %893, %897 : vector<16x16xf32>
    %cst_271 = arith.constant dense<0.000000e+00> : vector<16x16xf32>
    %899 = tpu.matmul %898, %881, %cst_271 {dimension_numbers = #tpu.dot_dimension_numbers<[1], [0], [0], [1], [0, 0, 1, 1], [], []>} : vector<16x16xf32>, vector<16x16xf32>, vector<16x16xf32> -> vector<16x16xf32>
    %cst_272 = arith.constant dense<0.000000e+00> : vector<16x16xf32>
    %900 = tpu.matmul %898, %879, %cst_272 {dimension_numbers = #tpu.dot_dimension_numbers<[0], [0], [1], [1], [0, 1, 1, 1], [], []>} : vector<16x16xf32>, vector<16x16xf32>, vector<16x16xf32> -> vector<16x16xf32>
    %cst_273 = arith.constant dense<0.000000e+00> : vector<16x16xf32>
    %901 = tpu.matmul %880, %882, %cst_273 {dimension_numbers = #tpu.dot_dimension_numbers<[1], [1], [0], [0], [0, 0, 1, 0], [], []>} : vector<16x16xf32>, vector<16x16xf32>, vector<16x16xf32> -> vector<16x16xf32>
    %cst_274 = arith.constant 2.500000e-01 : f32
    %902 = vector.broadcast %cst_274 : f32 to vector<16x16xf32>
    %903 = arith.mulf %902, %901 : vector<16x16xf32>
    %904 = arith.addf %903, %5 : vector<16x16xf32>
    %cst_275 = arith.constant dense<0xFF800000> : vector<16xf32>
    %905 = vector.multi_reduction <maximumf>, %904, %cst_275 [1] : vector<16x16xf32> to vector<16xf32>
    %906 = vector.shape_cast %905 : vector<16xf32> to vector<16x1xf32>
    %907 = vector.broadcast %906 : vector<16x1xf32> to vector<16x16xf32>
    %908 = arith.subf %904, %907 : vector<16x16xf32>
    %909 = math.exp %908 : vector<16x16xf32>
    %cst_276 = arith.constant dense<0.000000e+00> : vector<16xf32>
    %910 = vector.multi_reduction <add>, %909, %cst_276 [1] : vector<16x16xf32> to vector<16xf32>
    %911 = vector.shape_cast %910 : vector<16xf32> to vector<16x1xf32>
    %912 = tpu.reciprocal %911 {approx = true} : vector<16x1xf32> -> vector<16x1xf32>
    %913 = vector.broadcast %912 : vector<16x1xf32> to vector<16x16xf32>
    %914 = arith.mulf %909, %913 : vector<16x16xf32>
    %cst_277 = arith.constant dense<0.000000e+00> : vector<16x16xf32>
    %915 = tpu.matmul %914, %882, %cst_277 {dimension_numbers = #tpu.dot_dimension_numbers<[1], [0], [0], [1], [0, 0, 1, 1], [], []>} : vector<16x16xf32>, vector<16x16xf32>, vector<16x16xf32> -> vector<16x16xf32>
    %cst_278 = arith.constant dense<0.000000e+00> : vector<16x16xf32>
    %916 = tpu.matmul %914, %880, %cst_278 {dimension_numbers = #tpu.dot_dimension_numbers<[0], [0], [1], [1], [0, 1, 1, 1], [], []>} : vector<16x16xf32>, vector<16x16xf32>, vector<16x16xf32> -> vector<16x16xf32>
    %917 = tpu.concatenate %884, %899, %915, %900, %916 in 1 : vector<16x64xf32>, vector<16x16xf32>, vector<16x16xf32>, vector<16x16xf32>, vector<16x16xf32> -> vector<16x128xf32>
    %918 = arith.truncf %917 : vector<16x128xf32> to vector<16x128xbf16>
    %cst_279 = arith.constant dense<0.000000e+00> : vector<16x32xf32>
    %919 = tpu.matmul %918, %2, %cst_279 {dimension_numbers = #tpu.dot_dimension_numbers<[1], [0], [0], [1], [0, 0, 1, 1], [], []>} : vector<16x128xbf16>, vector<128x32xbf16>, vector<16x32xf32> -> vector<16x32xf32>
    %920 = vector.broadcast %3 : vector<1x32xf32> to vector<16x32xf32>
    %921 = arith.mulf %919, %920 : vector<16x32xf32>
    %cst_280 = arith.constant dense<0.000000e+00> : vector<16xf32>
    %922 = vector.multi_reduction <add>, %921, %cst_280 [1] : vector<16x32xf32> to vector<16xf32>
    %923 = vector.shape_cast %922 : vector<16xf32> to vector<16x1xf32>
    %cst_281 = arith.constant 3.200000e+01 : f32
    %924 = vector.broadcast %cst_281 : f32 to vector<16x1xf32>
    %925 = arith.divf %923, %924 : vector<16x1xf32>
    %926 = arith.mulf %921, %871 : vector<16x32xf32>
    %cst_282 = arith.constant dense<0.000000e+00> : vector<16xf32>
    %927 = vector.multi_reduction <add>, %926, %cst_282 [1] : vector<16x32xf32> to vector<16xf32>
    %928 = vector.shape_cast %927 : vector<16xf32> to vector<16x1xf32>
    %cst_283 = arith.constant 3.200000e+01 : f32
    %929 = vector.broadcast %cst_283 : f32 to vector<16x1xf32>
    %930 = arith.divf %928, %929 : vector<16x1xf32>
    %931 = vector.broadcast %925 : vector<16x1xf32> to vector<16x32xf32>
    %932 = arith.subf %921, %931 : vector<16x32xf32>
    %933 = vector.broadcast %930 : vector<16x1xf32> to vector<16x32xf32>
    %934 = arith.mulf %871, %933 : vector<16x32xf32>
    %935 = arith.subf %932, %934 : vector<16x32xf32>
    %936 = vector.broadcast %869 : vector<16x1xf32> to vector<16x32xf32>
    %937 = arith.mulf %936, %935 : vector<16x32xf32>
    %cst_284 = arith.constant 1.000000e+00 : f32
    %938 = vector.broadcast %cst_284 : f32 to vector<16x32xf32>
    %939 = arith.mulf %938, %937 : vector<16x32xf32>
    %940 = arith.subf %855, %939 : vector<16x32xf32>
    %c11_i32 = arith.constant 11 : i32
    %cst_285 = arith.constant dense<0.000000e+00> : vector<16xf32>
    %941 = vector.multi_reduction <add>, %940, %cst_285 [1] : vector<16x32xf32> to vector<16xf32>
    %942 = vector.shape_cast %941 : vector<16xf32> to vector<16x1xf32>
    %cst_286 = arith.constant 3.200000e+01 : f32
    %943 = vector.broadcast %cst_286 : f32 to vector<16x1xf32>
    %944 = arith.divf %942, %943 : vector<16x1xf32>
    %945 = vector.broadcast %944 : vector<16x1xf32> to vector<16x32xf32>
    %946 = arith.subf %940, %945 : vector<16x32xf32>
    %947 = arith.mulf %946, %946 : vector<16x32xf32>
    %cst_287 = arith.constant dense<0.000000e+00> : vector<16xf32>
    %948 = vector.multi_reduction <add>, %947, %cst_287 [1] : vector<16x32xf32> to vector<16xf32>
    %949 = vector.shape_cast %948 : vector<16xf32> to vector<16x1xf32>
    %cst_288 = arith.constant 3.200000e+01 : f32
    %950 = vector.broadcast %cst_288 : f32 to vector<16x1xf32>
    %951 = arith.divf %949, %950 : vector<16x1xf32>
    %cst_289 = arith.constant 9.99999974E-6 : f32
    %952 = vector.broadcast %cst_289 : f32 to vector<16x1xf32>
    %953 = arith.addf %951, %952 : vector<16x1xf32>
    %954 = math.rsqrt %953 : vector<16x1xf32>
    %955 = vector.broadcast %954 : vector<16x1xf32> to vector<16x32xf32>
    %956 = arith.mulf %946, %955 : vector<16x32xf32>
    %957 = vector.broadcast %3 : vector<1x32xf32> to vector<16x32xf32>
    %958 = arith.mulf %957, %956 : vector<16x32xf32>
    %959 = vector.broadcast %4 : vector<1x32xf32> to vector<16x32xf32>
    %960 = arith.addf %958, %959 : vector<16x32xf32>
    %961 = arith.truncf %960 : vector<16x32xf32> to vector<16x32xbf16>
    %cst_290 = arith.constant dense<0.000000e+00> : vector<16x128xf32>
    %962 = tpu.matmul %961, %1, %cst_290 {dimension_numbers = #tpu.dot_dimension_numbers<[1], [0], [0], [1], [0, 0, 1, 1], [], []>} : vector<16x32xbf16>, vector<32x128xbf16>, vector<16x128xf32> -> vector<16x128xf32>
    %963 = vector.extract_strided_slice %962 {offsets = [0, 0], sizes = [16, 64], strides = [1, 1]} : vector<16x128xf32> to vector<16x64xf32>
    %964 = vector.extract_strided_slice %962 {offsets = [0, 64], sizes = [16, 16], strides = [1, 1]} : vector<16x128xf32> to vector<16x16xf32>
    %965 = vector.extract_strided_slice %962 {offsets = [0, 80], sizes = [16, 16], strides = [1, 1]} : vector<16x128xf32> to vector<16x16xf32>
    %966 = vector.extract_strided_slice %962 {offsets = [0, 96], sizes = [16, 16], strides = [1, 1]} : vector<16x128xf32> to vector<16x16xf32>
    %967 = vector.extract_strided_slice %962 {offsets = [0, 112], sizes = [16, 16], strides = [1, 1]} : vector<16x128xf32> to vector<16x16xf32>
    %cst_291 = arith.constant 0.000000e+00 : f32
    %968 = vector.broadcast %cst_291 : f32 to vector<16x64xf32>
    %969 = arith.maximumf %963, %968 : vector<16x64xf32>
    %cst_292 = arith.constant dense<0.000000e+00> : vector<16x16xf32>
    %970 = tpu.matmul %964, %966, %cst_292 {dimension_numbers = #tpu.dot_dimension_numbers<[1], [1], [0], [0], [0, 0, 1, 0], [], []>} : vector<16x16xf32>, vector<16x16xf32>, vector<16x16xf32> -> vector<16x16xf32>
    %cst_293 = arith.constant 2.500000e-01 : f32
    %971 = vector.broadcast %cst_293 : f32 to vector<16x16xf32>
    %972 = arith.mulf %971, %970 : vector<16x16xf32>
    %973 = arith.addf %972, %5 : vector<16x16xf32>
    %cst_294 = arith.constant dense<0xFF800000> : vector<16xf32>
    %974 = vector.multi_reduction <maximumf>, %973, %cst_294 [1] : vector<16x16xf32> to vector<16xf32>
    %975 = vector.shape_cast %974 : vector<16xf32> to vector<16x1xf32>
    %976 = vector.broadcast %975 : vector<16x1xf32> to vector<16x16xf32>
    %977 = arith.subf %973, %976 : vector<16x16xf32>
    %978 = math.exp %977 : vector<16x16xf32>
    %cst_295 = arith.constant dense<0.000000e+00> : vector<16xf32>
    %979 = vector.multi_reduction <add>, %978, %cst_295 [1] : vector<16x16xf32> to vector<16xf32>
    %980 = vector.shape_cast %979 : vector<16xf32> to vector<16x1xf32>
    %981 = tpu.reciprocal %980 {approx = true} : vector<16x1xf32> -> vector<16x1xf32>
    %982 = vector.broadcast %981 : vector<16x1xf32> to vector<16x16xf32>
    %983 = arith.mulf %978, %982 : vector<16x16xf32>
    %cst_296 = arith.constant dense<0.000000e+00> : vector<16x16xf32>
    %984 = tpu.matmul %983, %966, %cst_296 {dimension_numbers = #tpu.dot_dimension_numbers<[1], [0], [0], [1], [0, 0, 1, 1], [], []>} : vector<16x16xf32>, vector<16x16xf32>, vector<16x16xf32> -> vector<16x16xf32>
    %cst_297 = arith.constant dense<0.000000e+00> : vector<16x16xf32>
    %985 = tpu.matmul %983, %964, %cst_297 {dimension_numbers = #tpu.dot_dimension_numbers<[0], [0], [1], [1], [0, 1, 1, 1], [], []>} : vector<16x16xf32>, vector<16x16xf32>, vector<16x16xf32> -> vector<16x16xf32>
    %cst_298 = arith.constant dense<0.000000e+00> : vector<16x16xf32>
    %986 = tpu.matmul %965, %967, %cst_298 {dimension_numbers = #tpu.dot_dimension_numbers<[1], [1], [0], [0], [0, 0, 1, 0], [], []>} : vector<16x16xf32>, vector<16x16xf32>, vector<16x16xf32> -> vector<16x16xf32>
    %cst_299 = arith.constant 2.500000e-01 : f32
    %987 = vector.broadcast %cst_299 : f32 to vector<16x16xf32>
    %988 = arith.mulf %987, %986 : vector<16x16xf32>
    %989 = arith.addf %988, %5 : vector<16x16xf32>
    %cst_300 = arith.constant dense<0xFF800000> : vector<16xf32>
    %990 = vector.multi_reduction <maximumf>, %989, %cst_300 [1] : vector<16x16xf32> to vector<16xf32>
    %991 = vector.shape_cast %990 : vector<16xf32> to vector<16x1xf32>
    %992 = vector.broadcast %991 : vector<16x1xf32> to vector<16x16xf32>
    %993 = arith.subf %989, %992 : vector<16x16xf32>
    %994 = math.exp %993 : vector<16x16xf32>
    %cst_301 = arith.constant dense<0.000000e+00> : vector<16xf32>
    %995 = vector.multi_reduction <add>, %994, %cst_301 [1] : vector<16x16xf32> to vector<16xf32>
    %996 = vector.shape_cast %995 : vector<16xf32> to vector<16x1xf32>
    %997 = tpu.reciprocal %996 {approx = true} : vector<16x1xf32> -> vector<16x1xf32>
    %998 = vector.broadcast %997 : vector<16x1xf32> to vector<16x16xf32>
    %999 = arith.mulf %994, %998 : vector<16x16xf32>
    %cst_302 = arith.constant dense<0.000000e+00> : vector<16x16xf32>
    %1000 = tpu.matmul %999, %967, %cst_302 {dimension_numbers = #tpu.dot_dimension_numbers<[1], [0], [0], [1], [0, 0, 1, 1], [], []>} : vector<16x16xf32>, vector<16x16xf32>, vector<16x16xf32> -> vector<16x16xf32>
    %cst_303 = arith.constant dense<0.000000e+00> : vector<16x16xf32>
    %1001 = tpu.matmul %999, %965, %cst_303 {dimension_numbers = #tpu.dot_dimension_numbers<[0], [0], [1], [1], [0, 1, 1, 1], [], []>} : vector<16x16xf32>, vector<16x16xf32>, vector<16x16xf32> -> vector<16x16xf32>
    %1002 = tpu.concatenate %969, %984, %1000, %985, %1001 in 1 : vector<16x64xf32>, vector<16x16xf32>, vector<16x16xf32>, vector<16x16xf32>, vector<16x16xf32> -> vector<16x128xf32>
    %1003 = arith.truncf %1002 : vector<16x128xf32> to vector<16x128xbf16>
    %cst_304 = arith.constant dense<0.000000e+00> : vector<16x32xf32>
    %1004 = tpu.matmul %1003, %2, %cst_304 {dimension_numbers = #tpu.dot_dimension_numbers<[1], [0], [0], [1], [0, 0, 1, 1], [], []>} : vector<16x128xbf16>, vector<128x32xbf16>, vector<16x32xf32> -> vector<16x32xf32>
    %1005 = vector.broadcast %3 : vector<1x32xf32> to vector<16x32xf32>
    %1006 = arith.mulf %1004, %1005 : vector<16x32xf32>
    %cst_305 = arith.constant dense<0.000000e+00> : vector<16xf32>
    %1007 = vector.multi_reduction <add>, %1006, %cst_305 [1] : vector<16x32xf32> to vector<16xf32>
    %1008 = vector.shape_cast %1007 : vector<16xf32> to vector<16x1xf32>
    %cst_306 = arith.constant 3.200000e+01 : f32
    %1009 = vector.broadcast %cst_306 : f32 to vector<16x1xf32>
    %1010 = arith.divf %1008, %1009 : vector<16x1xf32>
    %1011 = arith.mulf %1006, %956 : vector<16x32xf32>
    %cst_307 = arith.constant dense<0.000000e+00> : vector<16xf32>
    %1012 = vector.multi_reduction <add>, %1011, %cst_307 [1] : vector<16x32xf32> to vector<16xf32>
    %1013 = vector.shape_cast %1012 : vector<16xf32> to vector<16x1xf32>
    %cst_308 = arith.constant 3.200000e+01 : f32
    %1014 = vector.broadcast %cst_308 : f32 to vector<16x1xf32>
    %1015 = arith.divf %1013, %1014 : vector<16x1xf32>
    %1016 = vector.broadcast %1010 : vector<16x1xf32> to vector<16x32xf32>
    %1017 = arith.subf %1006, %1016 : vector<16x32xf32>
    %1018 = vector.broadcast %1015 : vector<16x1xf32> to vector<16x32xf32>
    %1019 = arith.mulf %956, %1018 : vector<16x32xf32>
    %1020 = arith.subf %1017, %1019 : vector<16x32xf32>
    %1021 = vector.broadcast %954 : vector<16x1xf32> to vector<16x32xf32>
    %1022 = arith.mulf %1021, %1020 : vector<16x32xf32>
    %cst_309 = arith.constant 1.000000e+00 : f32
    %1023 = vector.broadcast %cst_309 : f32 to vector<16x32xf32>
    %1024 = arith.mulf %1023, %1022 : vector<16x32xf32>
    %1025 = arith.subf %940, %1024 : vector<16x32xf32>
    %c0_310 = arith.constant 0 : index
    %c0_311 = arith.constant 0 : index
    %1026 = vector.load %arg7[%c0_310, %c0_311] : memref<16x32xf32, #tpu.memory_space<vmem>>, vector<16x32xf32>
    tpu.vector_store %arg7[%c0_310, %c0_311], %1025 {strides = array<i32>} : memref<16x32xf32, #tpu.memory_space<vmem>>, vector<16x32xf32>,
    %cst_312 = arith.constant dense<0.000000e+00> : vector<16xf32>
    %1027 = vector.multi_reduction <add>, %1025, %cst_312 [1] : vector<16x32xf32> to vector<16xf32>
    %1028 = vector.shape_cast %1027 : vector<16xf32> to vector<16x1xf32>
    %cst_313 = arith.constant 3.200000e+01 : f32
    %1029 = vector.broadcast %cst_313 : f32 to vector<16x1xf32>
    %1030 = arith.divf %1028, %1029 : vector<16x1xf32>
    %1031 = vector.broadcast %1030 : vector<16x1xf32> to vector<16x32xf32>
    %1032 = arith.subf %1025, %1031 : vector<16x32xf32>
    %1033 = arith.mulf %1032, %1032 : vector<16x32xf32>
    %cst_314 = arith.constant dense<0.000000e+00> : vector<16xf32>
    %1034 = vector.multi_reduction <add>, %1033, %cst_314 [1] : vector<16x32xf32> to vector<16xf32>
    %1035 = vector.shape_cast %1034 : vector<16xf32> to vector<16x1xf32>
    %cst_315 = arith.constant 3.200000e+01 : f32
    %1036 = vector.broadcast %cst_315 : f32 to vector<16x1xf32>
    %1037 = arith.divf %1035, %1036 : vector<16x1xf32>
    %cst_316 = arith.constant 9.99999974E-6 : f32
    %1038 = vector.broadcast %cst_316 : f32 to vector<16x1xf32>
    %1039 = arith.addf %1037, %1038 : vector<16x1xf32>
    %1040 = math.rsqrt %1039 : vector<16x1xf32>
    %1041 = vector.broadcast %1040 : vector<16x1xf32> to vector<16x32xf32>
    %1042 = arith.mulf %1032, %1041 : vector<16x32xf32>
    %1043 = vector.broadcast %3 : vector<1x32xf32> to vector<16x32xf32>
    %1044 = arith.mulf %1043, %1042 : vector<16x32xf32>
    %1045 = vector.broadcast %4 : vector<1x32xf32> to vector<16x32xf32>
    %1046 = arith.addf %1044, %1045 : vector<16x32xf32>
    %1047 = arith.truncf %1046 : vector<16x32xf32> to vector<16x32xbf16>
    %cst_317 = arith.constant dense<0.000000e+00> : vector<16x128xf32>
    %1048 = tpu.matmul %1047, %1, %cst_317 {dimension_numbers = #tpu.dot_dimension_numbers<[1], [0], [0], [1], [0, 0, 1, 1], [], []>} : vector<16x32xbf16>, vector<32x128xbf16>, vector<16x128xf32> -> vector<16x128xf32>
    %1049 = vector.extract_strided_slice %1048 {offsets = [0, 0], sizes = [16, 64], strides = [1, 1]} : vector<16x128xf32> to vector<16x64xf32>
    %1050 = vector.extract_strided_slice %1048 {offsets = [0, 64], sizes = [16, 16], strides = [1, 1]} : vector<16x128xf32> to vector<16x16xf32>
    %1051 = vector.extract_strided_slice %1048 {offsets = [0, 80], sizes = [16, 16], strides = [1, 1]} : vector<16x128xf32> to vector<16x16xf32>
    %1052 = vector.extract_strided_slice %1048 {offsets = [0, 96], sizes = [16, 16], strides = [1, 1]} : vector<16x128xf32> to vector<16x16xf32>
    %1053 = vector.extract_strided_slice %1048 {offsets = [0, 112], sizes = [16, 16], strides = [1, 1]} : vector<16x128xf32> to vector<16x16xf32>
    %cst_318 = arith.constant 0.000000e+00 : f32
    %1054 = vector.broadcast %cst_318 : f32 to vector<16x64xf32>
    %1055 = arith.maximumf %1049, %1054 : vector<16x64xf32>
    %1056 = arith.mulf %1055, %1055 : vector<16x64xf32>
    %1057 = vector.shape_cast %1056 : vector<16x64xf32> to vector<1x16x64xf32>
    %cst_319 = arith.constant dense<0.000000e+00> : vector<1xf32>
    %1058 = vector.multi_reduction <add>, %1057, %cst_319 [1, 2] : vector<1x16x64xf32> to vector<1xf32>
    %1059 = vector.shape_cast %1058 : vector<1xf32> to vector<1x1x1xf32>
    %1060 = vector.extract %1059[0, 0, 0] : f32 from vector<1x1x1xf32>
    %cst_320 = arith.constant -5.000000e-01 : f32
    %1061 = arith.mulf %cst_320, %1060 : f32
    %cst_321 = arith.constant dense<0.000000e+00> : vector<16x16xf32>
    %1062 = tpu.matmul %1050, %1052, %cst_321 {dimension_numbers = #tpu.dot_dimension_numbers<[1], [1], [0], [0], [0, 0, 1, 0], [], []>} : vector<16x16xf32>, vector<16x16xf32>, vector<16x16xf32> -> vector<16x16xf32>
    %cst_322 = arith.constant 2.500000e-01 : f32
    %1063 = vector.broadcast %cst_322 : f32 to vector<16x16xf32>
    %1064 = arith.mulf %1063, %1062 : vector<16x16xf32>
    %1065 = arith.addf %1064, %5 : vector<16x16xf32>
    %cst_323 = arith.constant dense<0xFF800000> : vector<16xf32>
    %1066 = vector.multi_reduction <maximumf>, %1065, %cst_323 [1] : vector<16x16xf32> to vector<16xf32>
    %1067 = vector.shape_cast %1066 : vector<16xf32> to vector<16x1xf32>
    %1068 = vector.broadcast %1067 : vector<16x1xf32> to vector<16x16xf32>
    %1069 = arith.subf %1065, %1068 : vector<16x16xf32>
    %1070 = math.exp %1069 : vector<16x16xf32>
    %cst_324 = arith.constant dense<0.000000e+00> : vector<16xf32>
    %1071 = vector.multi_reduction <add>, %1070, %cst_324 [1] : vector<16x16xf32> to vector<16xf32>
    %1072 = vector.shape_cast %1071 : vector<16xf32> to vector<16x1xf32>
    %1073 = math.log %1072 : vector<16x1xf32>
    %1074 = arith.addf %1067, %1073 : vector<16x1xf32>
    %1075 = vector.shape_cast %1074 : vector<16x1xf32> to vector<1x16x1xf32>
    %cst_325 = arith.constant dense<0.000000e+00> : vector<1xf32>
    %1076 = vector.multi_reduction <add>, %1075, %cst_325 [1, 2] : vector<1x16x1xf32> to vector<1xf32>
    %1077 = vector.shape_cast %1076 : vector<1xf32> to vector<1x1x1xf32>
    %1078 = vector.extract %1077[0, 0, 0] : f32 from vector<1x1x1xf32>
    %cst_326 = arith.constant 2.500000e-01 : f32
    %1079 = arith.divf %1078, %cst_326 : f32
    %1080 = arith.subf %1061, %1079 : f32
    %cst_327 = arith.constant dense<0.000000e+00> : vector<16x16xf32>
    %1081 = tpu.matmul %1051, %1053, %cst_327 {dimension_numbers = #tpu.dot_dimension_numbers<[1], [1], [0], [0], [0, 0, 1, 0], [], []>} : vector<16x16xf32>, vector<16x16xf32>, vector<16x16xf32> -> vector<16x16xf32>
    %cst_328 = arith.constant 2.500000e-01 : f32
    %1082 = vector.broadcast %cst_328 : f32 to vector<16x16xf32>
    %1083 = arith.mulf %1082, %1081 : vector<16x16xf32>
    %1084 = arith.addf %1083, %5 : vector<16x16xf32>
    %cst_329 = arith.constant dense<0xFF800000> : vector<16xf32>
    %1085 = vector.multi_reduction <maximumf>, %1084, %cst_329 [1] : vector<16x16xf32> to vector<16xf32>
    %1086 = vector.shape_cast %1085 : vector<16xf32> to vector<16x1xf32>
    %1087 = vector.broadcast %1086 : vector<16x1xf32> to vector<16x16xf32>
    %1088 = arith.subf %1084, %1087 : vector<16x16xf32>
    %1089 = math.exp %1088 : vector<16x16xf32>
    %cst_330 = arith.constant dense<0.000000e+00> : vector<16xf32>
    %1090 = vector.multi_reduction <add>, %1089, %cst_330 [1] : vector<16x16xf32> to vector<16xf32>
    %1091 = vector.shape_cast %1090 : vector<16xf32> to vector<16x1xf32>
    %1092 = math.log %1091 : vector<16x1xf32>
    %1093 = arith.addf %1086, %1092 : vector<16x1xf32>
    %1094 = vector.shape_cast %1093 : vector<16x1xf32> to vector<1x16x1xf32>
    %cst_331 = arith.constant dense<0.000000e+00> : vector<1xf32>
    %1095 = vector.multi_reduction <add>, %1094, %cst_331 [1, 2] : vector<1x16x1xf32> to vector<1xf32>
    %1096 = vector.shape_cast %1095 : vector<1xf32> to vector<1x1x1xf32>
    %1097 = vector.extract %1096[0, 0, 0] : f32 from vector<1x1x1xf32>
    %cst_332 = arith.constant 2.500000e-01 : f32
    %1098 = arith.divf %1097, %cst_332 : f32
    %1099 = arith.subf %1080, %1098 : f32
    %c0_333 = arith.constant 0 : index
    %c0_334 = arith.constant 0 : index
    %1100 = memref.load %arg8[%c0_333, %c0_334] : memref<1x1xf32, #tpu.memory_space<smem>>
    memref.store %1099, %arg8[%c0_333, %c0_334] : memref<1x1xf32, #tpu.memory_space<smem>>
    return
  }
  func.func @transform_0(%arg0: i32) -> (i32, i32) {
    %c0_i32 = arith.constant 0 : i32
    %c0_i32_0 = arith.constant 0 : i32
    %c0_i32_1 = arith.constant 0 : i32
    return %c0_i32, %c0_i32_0 : i32, i32
  }
  func.func @transform_1(%arg0: i32) -> (i32, i32) {
    %c0_i32 = arith.constant 0 : i32
    %c0_i32_0 = arith.constant 0 : i32
    %c0_i32_1 = arith.constant 0 : i32
    return %c0_i32, %c0_i32_0 : i32, i32
  }
  func.func @transform_2(%arg0: i32) -> (i32, i32) {
    %c0_i32 = arith.constant 0 : i32
    %c0_i32_0 = arith.constant 0 : i32
    %c0_i32_1 = arith.constant 0 : i32
    return %c0_i32, %c0_i32_0 : i32, i32
  }
  func.func @transform_3(%arg0: i32) -> (i32, i32) {
    %c0_i32 = arith.constant 0 : i32
    %c0_i32_0 = arith.constant 0 : i32
    %c0_i32_1 = arith.constant 0 : i32
    return %c0_i32, %c0_i32_0 : i32, i32
  }
  func.func @transform_4(%arg0: i32) -> (i32, i32) {
    %c0_i32 = arith.constant 0 : i32
    %c0_i32_0 = arith.constant 0 : i32
    %c0_i32_1 = arith.constant 0 : i32
    return %c0_i32, %c0_i32_0 : i32, i32
  }
  func.func @transform_5(%arg0: i32) -> (i32, i32) {
    %c0_i32 = arith.constant 0 : i32
    %c0_i32_0 = arith.constant 0 : i32
    %c0_i32_1 = arith.constant 0 : i32
    return %c0_i32, %c0_i32_0 : i32, i32
  }
  func.func @transform_6(%arg0: i32) -> (i32, i32) {
    %c0_i32 = arith.constant 0 : i32
    %c0_i32_0 = arith.constant 0 : i32
    %c0_i32_1 = arith.constant 0 : i32
    return %c0_i32, %c0_i32_0 : i32, i32
  }
  func.func @transform_7(%arg0: i32) -> (i32, i32) {
    %c0_i32 = arith.constant 0 : i32
    %c0_i32_0 = arith.constant 0 : i32
    %c0_i32_1 = arith.constant 0 : i32
    return %c0_i32, %c0_i32_0 : i32, i32
  }
}

</mosaic_0001>

<llo_original>
// kernel: et_forward_pallas.1
$region0: #{et_forward_pallas.1}
  #allocation0 [shape = 'u32[]', space=smem, size = 0x4, offset = 0x4, fixed_abs, tag = 'smem constant byte address 0x4 - core index']
  #allocation1 [shape = 'u32[72,128]{1,0:T(1,128)}', space=vmem, size = 0x9000, scoped, tag = 'internal scratch']
  %s0 = inlined_call_operand.vmem [shape: f32[16,32], index: 0, kind: input, shape index: {}]
  %s1 = inlined_call_operand.vmem [shape: bf16[32,128], index: 1, kind: input, shape index: {}]
  %s2 = inlined_call_operand.vmem [shape: bf16[128,32], index: 2, kind: input, shape index: {}]
  %s3 = inlined_call_operand.vmem [shape: f32[1,32], index: 3, kind: input, shape index: {}]
  %s4 = inlined_call_operand.vmem [shape: f32[1,32], index: 4, kind: input, shape index: {}]
  %s5 = inlined_call_operand.vmem [shape: f32[16,16], index: 5, kind: input, shape index: {}]
  %s6 = inlined_call_operand.hbm [shape: f32[16,32], index: 6, kind: output, shape index: {0}]
  %s7 = inlined_call_operand.hbm [shape: f32[1,1], index: 7, kind: output, shape index: {1}]
  %8 = xla_tuple %s6, %s7
  %s9 = sld [smem:[#allocation0]]
  $region42: #{et_forward_pallas.1} parent=0
    _
  %s11 = ssub.s32 1, %s9
  %s12 = scalar_select 0, %s11, %s9
  $region1: #{et_forward_pallas.1} parent=0
    #allocation2 [shape = 'u8[8192]{0}', space=vmem, size = 0x2000, scoped, tag = 'output window, operand 0, single buffered']
    #allocation3 [shape = 's32[1]{0}', space=sflag, size = 0x4, scoped, tag = 'scoped memory for et_forward_pallas.1']
    #allocation4 [shape = 's32[1]{0}', space=sflag, size = 0x4, scoped, tag = 'scoped memory for et_forward_pallas.1']
    #allocation5 [shape = 'u8[512]{0}', space=smem, size = 0x200, scoped, tag = 'output window, operand 1, single buffered']
    %13 = vsyncpa [#allocation3], 0
    %14 = vsyncpa [#allocation4], 0
    // Predicated region
    $region2: #{et_forward_pallas.1} parent=1 // pred_check
      _
    $region3: #{et_forward_pallas.1} parent=1 // pred_check_branch
      %16 = sbr.rel (0) target = $region5
    $region4: #{et_forward_pallas.1} parent=1 // pred_region
      _
    $region5: #{et_forward_pallas.1} parent=1 // pred_fallthru
      _
    // Predicated region
    $region6: #{et_forward_pallas.1} parent=1 // pred_check
      _
    $region7: #{et_forward_pallas.1} parent=1 // pred_check_branch
      %18 = sbr.rel (0) target = $region9
    $region8: #{et_forward_pallas.1} parent=1 // pred_region
      _
    $region9: #{et_forward_pallas.1} parent=1 // pred_fallthru
      _
    // Predicated region
    $region10: #{et_forward_pallas.1} parent=1 // pred_check
      _
    $region11: #{et_forward_pallas.1} parent=1 // pred_check_branch
      %20 = sbr.rel (0) target = $region13
    $region12: #{et_forward_pallas.1} parent=1 // pred_region
      _
    $region13: #{et_forward_pallas.1} parent=1 // pred_fallthru
      _
    // Predicated region
    $region14: #{et_forward_pallas.1} parent=1 // pred_check
      _
    $region15: #{et_forward_pallas.1} parent=1 // pred_check_branch
      %22 = sbr.rel (0) target = $region17
    $region16: #{et_forward_pallas.1} parent=1 // pred_region
      _
    $region17: #{et_forward_pallas.1} parent=1 // pred_fallthru
      _
    // Predicated region
    $region18: #{et_forward_pallas.1} parent=1 // pred_check
      _
    $region19: #{et_forward_pallas.1} parent=1 // pred_check_branch
      %24 = sbr.rel (0) target = $region21
    $region20: #{et_forward_pallas.1} parent=1 // pred_region
      _
    $region21: #{et_forward_pallas.1} parent=1 // pred_fallthru
      _
    // Predicated region
    $region22: #{et_forward_pallas.1} parent=1 // pred_check
      _
    $region23: #{et_forward_pallas.1} parent=1 // pred_check_branch
      %26 = sbr.rel (0) target = $region25
    $region24: #{et_forward_pallas.1} parent=1 // pred_region
      _
    $region25: #{et_forward_pallas.1} parent=1 // pred_fallthru
      _
    %v28 = vld [vmem:[%s0] sm:$0xff]
    %v29 = vld [vmem:[%s0 + $0x8] sm:$0xff]
    %v30 = vld [vmem:[%s1] sm:$0xf]
    %v31 = vld [vmem:[%s1 + $0x4] sm:$0xf]
    %v32 = vld [vmem:[%s1 + $0x8] sm:$0xf]
    %v33 = vld [vmem:[%s1 + $0xc] sm:$0xf]
    %v34 = vld [vmem:[%s2] sm:$0xf]
    %v35 = vld [vmem:[%s2 + $0x4] sm:$0xf]
    %v36 = vld [vmem:[%s2 + $0x8] sm:$0xf]
    %v37 = vld [vmem:[%s2 + $0xc] sm:$0xf]
    %v38 = vld [vmem:[%s2 + $0x10] sm:$0xf]
    %v39 = vld [vmem:[%s2 + $0x14] sm:$0xf]
    %v40 = vld [vmem:[%s2 + $0x18] sm:$0xf]
    %v41 = vld [vmem:[%s2 + $0x1c] sm:$0xf]
    %v42 = vld [vmem:[%s2 + $0x20] sm:$0xf]
    %v43 = vld [vmem:[%s2 + $0x24] sm:$0xf]
    %v44 = vld [vmem:[%s2 + $0x28] sm:$0xf]
    %v45 = vld [vmem:[%s2 + $0x2c] sm:$0xf]
    %v46 = vld [vmem:[%s2 + $0x30] sm:$0xf]
    %v47 = vld [vmem:[%s2 + $0x34] sm:$0xf]
    %v48 = vld [vmem:[%s2 + $0x38] sm:$0xf]
    %v49 = vld [vmem:[%s2 + $0x3c] sm:$0xf]
    %v50 = vld [vmem:[%s3] sm:$0x1]
    %v51 = vld [vmem:[%s4] sm:$0x1]
    %v52 = vld [vmem:[%s5] sm:$0xff]
    %v53 = vld [vmem:[%s5 + $0x8] sm:$0xff]
    %vm54 = vcmask 261120
    %v55 = vsel %vm54, %v28, 0.0
    %56 = vadd.xlane.f32.xlu0 %v55
    %v57 = vpop.xlane.xlu0 %56
    %v58 = vsel %vm54, %v29, 0.0
    %59 = vadd.xlane.f32.xlu0 %v58
    %v60 = vpop.xlane.xlu0 %59
    %v61 = vrcp.pop 32.0
    %v62 = vmul.f32 32.0, %v61
    %v63 = vsub.f32 1.0, %v62
    %v64 = vmul.f32 %v61, %v63
    %v65 = vadd.f32 %v61, %v64
    %vm66 = vweird.f32 %v61
    %v67 = vsel %vm66, %v61, %v65
    %v68 = vmul.f32 %v57, %v67
    %v69 = vmul.f32 %v60, %v67
    %v70 = vsub.f32 %v28, %v68
    %v71 = vsub.f32 %v29, %v69
    %v72 = vmul.f32 %v70, %v70
    %v73 = vmul.f32 %v71, %v71
    %v74 = vsel %vm54, %v72, 0.0
    %75 = vadd.xlane.f32.xlu0 %v74
    %v76 = vpop.xlane.xlu0 %75
    %v77 = vsel %vm54, %v73, 0.0
    %78 = vadd.xlane.f32.xlu0 %v77
    %v79 = vpop.xlane.xlu0 %78
    %v80 = vmul.f32 %v76, %v67
    %v81 = vmul.f32 %v79, %v67
    %v82 = vadd.f32 %v80, 1e-05
    %v83 = vadd.f32 %v81, 1e-05
    %v84 = vrsqrt.pop %v82
    %v85 = vmul.f32 %v84, %v82
    %v86 = vmul.f32 %v85, %v84
    %v87 = vmul.f32 0.5, %v86
    %v88 = vsub.f32 1.5, %v87
    %v89 = vmul.f32 %v84, %v88
    %vm90 = vweird.f32 %v82
    %vm91 = vweird.f32 %v84
    %vm92 = vmor %vm90, %vm91
    %v93 = vsel %vm92, %v84, %v89
    %v94 = vrsqrt.pop %v83
    %v95 = vmul.f32 %v94, %v83
    %v96 = vmul.f32 %v95, %v94
    %v97 = vmul.f32 0.5, %v96
    %v98 = vsub.f32 1.5, %v97
    %v99 = vmul.f32 %v94, %v98
    %vm100 = vweird.f32 %v83
    %vm101 = vweird.f32 %v94
    %vm102 = vmor %vm100, %vm101
    %v103 = vsel %vm102, %v94, %v99
    %v104 = vmul.f32 %v70, %v93
    %v105 = vmul.f32 %v71, %v103
    %v107 = vperm.slane %v50, 0
    %v109 = vmul.f32 %v107, %v104
    %v110 = vmul.f32 %v107, %v105
    %v112 = vperm.slane %v51, 0
    %v114 = vadd.f32 %v109, %v112
    %v115 = vadd.f32 %v110, %v112
    %v116 = vpack.c.bf16 %v115, %v114
    %v121 = vunpack.c.l.b16 %v30
    %v122 = vunpack.c.l.b16 %v31
    %v123 = vunpack.c.l.b16 %v32
    %v124 = vunpack.c.l.b16 %v33
    %v125 = vpack.c.b16 %v122, %v121
    %v126 = vpack.c.b16 %v124, %v123
    %v130 = vsel %vm54, %v116, 0
    %132 = vmatpush.bf16.msra.mxu0 0
    %133 = vmatpush.bf16.msra.mxu0 0
    %134 = vmatpush.bf16.msra.mxu0 0
    %135 = vmatpush.bf16.msra.mxu0 0
    %136 = vmatpush.bf16.msra.mxu0 0
    %137 = vmatpush.bf16.msra.mxu0 0
    %138 = vmatpush.bf16.msra.mxu0 %v126
    %139 = vmatpush.bf16.msra.mxu0 %v125
    %140 = vmatmul.bf16.gmra.mxu0 %v130
    %v141 = vpop.f32.mrf.mxu0
    %v142 = vadd.f32 0.0, %v141
    %v143 = vpop.f32.mrf.mxu0
    %v144 = vadd.f32 0.0, %v143
    %145 = vdwg.mxu0
    %v146 = vmax.f32 %v142, 0.0
    %v147 = vmax.f32 %v144, 0.0
    %150 = vrot.lane.b32.xlu0 %v142, 64
    %v151 = vpop.permute.xlu0 %150
    %152 = vrot.lane.b32.xlu0 %v144, 64
    %v153 = vpop.permute.xlu0 %152
    %154 = vrot.lane.b32.xlu0 %v142, 32
    %v155 = vpop.permute.xlu0 %154
    %156 = vrot.lane.b32.xlu0 %v144, 32
    %v157 = vpop.permute.xlu0 %156
    %vm158 = vcmask 130048
    %v159 = vsel %vm158, %v151, 0
    %v161 = vsel %vm158, %v153, 0
    %v163 = vsel %vm158, %v155, 0
    %v165 = vsel %vm158, %v157, 0
    %167 = vmatpush.xpose.msra.mxu0 0.0
    %168 = vmatpush.xpose.msra.mxu0 0.0
    %169 = vmatpush.xpose.msra.mxu0 0.0
    %170 = vmatpush.xpose.msra.mxu0 0.0
    %171 = vmatpush.xpose.msra.mxu0 0.0
    %172 = vmatpush.xpose.msra.mxu0 0.0
    %173 = vmatpush.xpose.msra.mxu0 0.0
    %174 = vmatpush.xpose.msra.mxu0 0.0
    %175 = vmatpush.xpose.msra.mxu0 0.0
    %176 = vmatpush.xpose.msra.mxu0 0.0
    %177 = vmatpush.xpose.msra.mxu0 0.0
    %178 = vmatpush.xpose.msra.mxu0 0.0
    %179 = vmatpush.xpose.msra.mxu0 0.0
    %180 = vmatpush.xpose.msra.mxu0 0.0
    %181 = vmatpush.xpose.msra.mxu0 %v165
    %182 = vmatpush.xpose.msra.mxu0 %v163
    %183 = vmatmul.f32.gmra.mxu0 %v159
    %v184 = vpop.f32.mrf.mxu0
    %v185 = vadd.f32 0.0, %v184
    %186 = vmatmul.f32.gmra.mxu0 %v161
    %v187 = vpop.f32.mrf.mxu0
    %v188 = vadd.f32 0.0, %v187
    %189 = vdwg.mxu0
    %v190 = vmul.f32 %v185, 0.25
    %v191 = vmul.f32 %v188, 0.25
    %v192 = vadd.f32 %v190, %v52
    %v193 = vadd.f32 %v191, %v53
    %v194 = vsel %vm158, %v192, -inf
    %195 = vmax.xlane.f32.xlu0 %v194
    %v196 = vpop.xlane.xlu0 %195
    %v197 = vsel %vm158, %v193, -inf
    %198 = vmax.xlane.f32.xlu0 %v197
    %v199 = vpop.xlane.xlu0 %198
    %v200 = vsub.f32 %v192, %v196
    %v201 = vsub.f32 %v193, %v199
    %v202 = vmul.f32 %v200, 1.442695
    %v203 = vpow.pop %v202
    %v204 = vmul.f32 %v201, 1.442695
    %v205 = vpow.pop %v204
    %v206 = vsel %vm158, %v203, 0.0
    %207 = vadd.xlane.f32.xlu0 %v206
    %v208 = vpop.xlane.xlu0 %207
    %v209 = vsel %vm158, %v205, 0.0
    %210 = vadd.xlane.f32.xlu0 %v209
    %v211 = vpop.xlane.xlu0 %210
    %v212 = vrcp.pop %v208
    %v213 = vrcp.pop %v211
    %v214 = vmul.f32 %v203, %v212
    %v215 = vmul.f32 %v205, %v213
    %v219 = vsel %vm158, %v214, 0
    %v222 = vsel %vm158, %v215, 0
    %224 = vmatpush.msra.mxu0 0.0
    %225 = vmatpush.msra.mxu0 0.0
    %226 = vmatpush.msra.mxu0 0.0
    %227 = vmatpush.msra.mxu0 0.0
    %228 = vmatpush.msra.mxu0 0.0
    %229 = vmatpush.msra.mxu0 0.0
    %230 = vmatpush.msra.mxu0 0.0
    %231 = vmatpush.msra.mxu0 0.0
    %232 = vmatpush.msra.mxu0 0.0
    %233 = vmatpush.msra.mxu0 0.0
    %234 = vmatpush.msra.mxu0 0.0
    %235 = vmatpush.msra.mxu0 0.0
    %236 = vmatpush.msra.mxu0 0.0
    %237 = vmatpush.msra.mxu0 0.0
    %238 = vmatpush.msra.mxu0 %v157
    %239 = vmatpush.msra.mxu0 %v155
    %240 = vmatmul.f32.gmra.mxu0 %v219
    %v241 = vpop.f32.mrf.mxu0
    %v242 = vadd.f32 0.0, %v241
    %243 = vmatmul.f32.gmra.mxu0 %v222
    %v244 = vpop.f32.mrf.mxu0
    %v245 = vadd.f32 0.0, %v244
    %246 = vdwg.mxu0
    %247 = vxpose.xlu0.b32.start [1/16] %v214, 128
    %248 = vxpose.xlu0.b32.cont [2/16] %v215, 128
    %249 = vxpose.xlu0.b32.cont [3/16] 0.0, 128
    %250 = vxpose.xlu0.b32.cont [4/16] 0.0, 128
    %251 = vxpose.xlu0.b32.cont [5/16] 0.0, 128
    %252 = vxpose.xlu0.b32.cont [6/16] 0.0, 128
    %253 = vxpose.xlu0.b32.cont [7/16] 0.0, 128
    %254 = vxpose.xlu0.b32.cont [8/16] 0.0, 128
    %255 = vxpose.xlu0.b32.cont [9/16] 0.0, 128
    %256 = vxpose.xlu0.b32.cont [10/16] 0.0, 128
    %257 = vxpose.xlu0.b32.cont [11/16] 0.0, 128
    %258 = vxpose.xlu0.b32.cont [12/16] 0.0, 128
    %259 = vxpose.xlu0.b32.cont [13/16] 0.0, 128
    %260 = vxpose.xlu0.b32.cont [14/16] 0.0, 128
    %261 = vxpose.xlu0.b32.cont [15/16] 0.0, 128
    %262 = vxpose.xlu0.b32.end [16/16] 0.0, 128
    %v263 = vpop.trf.xlu0
    %v264 = vpop.trf.xlu0
    %v265 = vpop.trf.xlu0
    %v266 = vpop.trf.xlu0
    %v267 = vpop.trf.xlu0
    %v268 = vpop.trf.xlu0
    %v269 = vpop.trf.xlu0
    %v270 = vpop.trf.xlu0
    %v271 = vpop.trf.xlu0
    %v272 = vpop.trf.xlu0
    %v273 = vpop.trf.xlu0
    %v274 = vpop.trf.xlu0
    %v275 = vpop.trf.xlu0
    %v276 = vpop.trf.xlu0
    %v277 = vpop.trf.xlu0
    %v278 = vpop.trf.xlu0
    %v282 = vsel %vm158, %v263, 0
    %v285 = vsel %vm158, %v264, 0
    %287 = vmatpush.msra.mxu0 0.0
    %288 = vmatpush.msra.mxu0 0.0
    %289 = vmatpush.msra.mxu0 0.0
    %290 = vmatpush.msra.mxu0 0.0
    %291 = vmatpush.msra.mxu0 0.0
    %292 = vmatpush.msra.mxu0 0.0
    %293 = vmatpush.msra.mxu0 0.0
    %294 = vmatpush.msra.mxu0 0.0
    %295 = vmatpush.msra.mxu0 0.0
    %296 = vmatpush.msra.mxu0 0.0
    %297 = vmatpush.msra.mxu0 0.0
    %298 = vmatpush.msra.mxu0 0.0
    %299 = vmatpush.msra.mxu0 0.0
    %300 = vmatpush.msra.mxu0 0.0
    %301 = vmatpush.msra.mxu0 %v153
    %302 = vmatpush.msra.mxu0 %v151
    %303 = vmatmul.f32.gmra.mxu0 %v282
    %v304 = vpop.f32.mrf.mxu0
    %v305 = vadd.f32 0.0, %v304
    %306 = vmatmul.f32.gmra.mxu0 %v285
    %v307 = vpop.f32.mrf.mxu0
    %v308 = vadd.f32 0.0, %v307
    %309 = vdwg.mxu0
    %310 = vrot.lane.b32.xlu0 %v142, 48
    %v311 = vpop.permute.xlu0 %310
    %312 = vrot.lane.b32.xlu0 %v144, 48
    %v313 = vpop.permute.xlu0 %312
    %314 = vrot.lane.b32.xlu0 %v142, 16
    %v315 = vpop.permute.xlu0 %314
    %316 = vrot.lane.b32.xlu0 %v144, 16
    %v317 = vpop.permute.xlu0 %316
    %v318 = vsel %vm158, %v311, 0
    %v320 = vsel %vm158, %v313, 0
    %v322 = vsel %vm158, %v315, 0
    %v324 = vsel %vm158, %v317, 0
    %326 = vmatpush.xpose.msra.mxu0 0.0
    %327 = vmatpush.xpose.msra.mxu0 0.0
    %328 = vmatpush.xpose.msra.mxu0 0.0
    %329 = vmatpush.xpose.msra.mxu0 0.0
    %330 = vmatpush.xpose.msra.mxu0 0.0
    %331 = vmatpush.xpose.msra.mxu0 0.0
    %332 = vmatpush.xpose.msra.mxu0 0.0
    %333 = vmatpush.xpose.msra.mxu0 0.0
    %334 = vmatpush.xpose.msra.mxu0 0.0
    %335 = vmatpush.xpose.msra.mxu0 0.0
    %336 = vmatpush.xpose.msra.mxu0 0.0
    %337 = vmatpush.xpose.msra.mxu0 0.0
    %338 = vmatpush.xpose.msra.mxu0 0.0
    %339 = vmatpush.xpose.msra.mxu0 0.0
    %340 = vmatpush.xpose.msra.mxu0 %v324
    %341 = vmatpush.xpose.msra.mxu0 %v322
    %342 = vmatmul.f32.gmra.mxu0 %v318
    %v343 = vpop.f32.mrf.mxu0
    %v344 = vadd.f32 0.0, %v343
    %345 = vmatmul.f32.gmra.mxu0 %v320
    %v346 = vpop.f32.mrf.mxu0
    %v347 = vadd.f32 0.0, %v346
    %348 = vdwg.mxu0
    %v349 = vmul.f32 %v344, 0.25
    %v350 = vmul.f32 %v347, 0.25
    %v351 = vadd.f32 %v349, %v52
    %v352 = vadd.f32 %v350, %v53
    %v353 = vsel %vm158, %v351, -inf
    %354 = vmax.xlane.f32.xlu0 %v353
    %v355 = vpop.xlane.xlu0 %354
    %v356 = vsel %vm158, %v352, -inf
    %357 = vmax.xlane.f32.xlu0 %v356
    %v358 = vpop.xlane.xlu0 %357
    %v359 = vsub.f32 %v351, %v355
    %v360 = vsub.f32 %v352, %v358
    %v361 = vmul.f32 %v359, 1.442695
    %v362 = vpow.pop %v361
    %v363 = vmul.f32 %v360, 1.442695
    %v364 = vpow.pop %v363
    %v365 = vsel %vm158, %v362, 0.0
    %366 = vadd.xlane.f32.xlu0 %v365
    %v367 = vpop.xlane.xlu0 %366
    %v368 = vsel %vm158, %v364, 0.0
    %369 = vadd.xlane.f32.xlu0 %v368
    %v370 = vpop.xlane.xlu0 %369
    %v371 = vrcp.pop %v367
    %v372 = vrcp.pop %v370
    %v373 = vmul.f32 %v362, %v371
    %v374 = vmul.f32 %v364, %v372
    %v378 = vsel %vm158, %v373, 0
    %v381 = vsel %vm158, %v374, 0
    %383 = vmatpush.msra.mxu0 0.0
    %384 = vmatpush.msra.mxu0 0.0
    %385 = vmatpush.msra.mxu0 0.0
    %386 = vmatpush.msra.mxu0 0.0
    %387 = vmatpush.msra.mxu0 0.0
    %388 = vmatpush.msra.mxu0 0.0
    %389 = vmatpush.msra.mxu0 0.0
    %390 = vmatpush.msra.mxu0 0.0
    %391 = vmatpush.msra.mxu0 0.0
    %392 = vmatpush.msra.mxu0 0.0
    %393 = vmatpush.msra.mxu0 0.0
    %394 = vmatpush.msra.mxu0 0.0
    %395 = vmatpush.msra.mxu0 0.0
    %396 = vmatpush.msra.mxu0 0.0
    %397 = vmatpush.msra.mxu0 %v317
    %398 = vmatpush.msra.mxu0 %v315
    %399 = vmatmul.f32.gmra.mxu0 %v378
    %v400 = vpop.f32.mrf.mxu0
    %v401 = vadd.f32 0.0, %v400
    %402 = vmatmul.f32.gmra.mxu0 %v381
    %v403 = vpop.f32.mrf.mxu0
    %v404 = vadd.f32 0.0, %v403
    %405 = vdwg.mxu0
    %406 = vxpose.xlu0.b32.start [1/16] %v373, 128
    %407 = vxpose.xlu0.b32.cont [2/16] %v374, 128
    %408 = vxpose.xlu0.b32.cont [3/16] 0.0, 128
    %409 = vxpose.xlu0.b32.cont [4/16] 0.0, 128
    %410 = vxpose.xlu0.b32.cont [5/16] 0.0, 128
    %411 = vxpose.xlu0.b32.cont [6/16] 0.0, 128
    %412 = vxpose.xlu0.b32.cont [7/16] 0.0, 128
    %413 = vxpose.xlu0.b32.cont [8/16] 0.0, 128
    %414 = vxpose.xlu0.b32.cont [9/16] 0.0, 128
    %415 = vxpose.xlu0.b32.cont [10/16] 0.0, 128
    %416 = vxpose.xlu0.b32.cont [11/16] 0.0, 128
    %417 = vxpose.xlu0.b32.cont [12/16] 0.0, 128
    %418 = vxpose.xlu0.b32.cont [13/16] 0.0, 128
    %419 = vxpose.xlu0.b32.cont [14/16] 0.0, 128
    %420 = vxpose.xlu0.b32.cont [15/16] 0.0, 128
    %421 = vxpose.xlu0.b32.end [16/16] 0.0, 128
    %v422 = vpop.trf.xlu0
    %v423 = vpop.trf.xlu0
    %v424 = vpop.trf.xlu0
    %v425 = vpop.trf.xlu0
    %v426 = vpop.trf.xlu0
    %v427 = vpop.trf.xlu0
    %v428 = vpop.trf.xlu0
    %v429 = vpop.trf.xlu0
    %v430 = vpop.trf.xlu0
    %v431 = vpop.trf.xlu0
    %v432 = vpop.trf.xlu0
    %v433 = vpop.trf.xlu0
    %v434 = vpop.trf.xlu0
    %v435 = vpop.trf.xlu0
    %v436 = vpop.trf.xlu0
    %v437 = vpop.trf.xlu0
    %v441 = vsel %vm158, %v422, 0
    %v444 = vsel %vm158, %v423, 0
    %446 = vmatpush.msra.mxu0 0.0
    %447 = vmatpush.msra.mxu0 0.0
    %448 = vmatpush.msra.mxu0 0.0
    %449 = vmatpush.msra.mxu0 0.0
    %450 = vmatpush.msra.mxu0 0.0
    %451 = vmatpush.msra.mxu0 0.0
    %452 = vmatpush.msra.mxu0 0.0
    %453 = vmatpush.msra.mxu0 0.0
    %454 = vmatpush.msra.mxu0 0.0
    %455 = vmatpush.msra.mxu0 0.0
    %456 = vmatpush.msra.mxu0 0.0
    %457 = vmatpush.msra.mxu0 0.0
    %458 = vmatpush.msra.mxu0 0.0
    %459 = vmatpush.msra.mxu0 0.0
    %460 = vmatpush.msra.mxu0 %v313
    %461 = vmatpush.msra.mxu0 %v311
    %462 = vmatmul.f32.gmra.mxu0 %v441
    %v463 = vpop.f32.mrf.mxu0
    %v464 = vadd.f32 0.0, %v463
    %465 = vmatmul.f32.gmra.mxu0 %v444
    %v466 = vpop.f32.mrf.mxu0
    %v467 = vadd.f32 0.0, %v466
    %468 = vdwg.mxu0
    %471 = vrot.lane.b32.xlu0 %v242, 64
    %v472 = vpop.permute.xlu0 %471
    %473 = vrot.lane.b32.xlu0 %v245, 64
    %v474 = vpop.permute.xlu0 %473
    %479 = vrot.lane.b32.xlu0 %v401, 80
    %v480 = vpop.permute.xlu0 %479
    %481 = vrot.lane.b32.xlu0 %v404, 80
    %v482 = vpop.permute.xlu0 %481
    %487 = vrot.lane.b32.xlu0 %v305, 96
    %v488 = vpop.permute.xlu0 %487
    %489 = vrot.lane.b32.xlu0 %v308, 96
    %v490 = vpop.permute.xlu0 %489
    %495 = vrot.lane.b32.xlu0 %v464, 112
    %v496 = vpop.permute.xlu0 %495
    %497 = vrot.lane.b32.xlu0 %v467, 112
    %v498 = vpop.permute.xlu0 %497
    %vm501 = vcmask 523264
    %v502 = vsel %vm501, %v146, %v472
    %v503 = vsel %vm501, %v147, %v474
    %vm504 = vcmask 654336
    %v505 = vsel %vm504, %v502, %v480
    %v506 = vsel %vm504, %v503, %v482
    %vm507 = vcmask 785408
    %v508 = vsel %vm507, %v505, %v488
    %v509 = vsel %vm507, %v506, %v490
    %vm510 = vcmask 916480
    %v511 = vsel %vm510, %v508, %v496
    %v512 = vsel %vm510, %v509, %v498
    %v513 = vpack.c.bf16 %v512, %v511
    %v530 = vunpack.c.l.b16 %v34
    %v531 = vunpack.c.l.b16 %v35
    %v532 = vunpack.c.l.b16 %v36
    %v533 = vunpack.c.l.b16 %v37
    %v534 = vunpack.c.l.b16 %v38
    %v535 = vunpack.c.l.b16 %v39
    %v536 = vunpack.c.l.b16 %v40
    %v537 = vunpack.c.l.b16 %v41
    %v538 = vunpack.c.l.b16 %v42
    %v539 = vunpack.c.l.b16 %v43
    %v540 = vunpack.c.l.b16 %v44
    %v541 = vunpack.c.l.b16 %v45
    %v542 = vunpack.c.l.b16 %v46
    %v543 = vunpack.c.l.b16 %v47
    %v544 = vunpack.c.l.b16 %v48
    %v545 = vunpack.c.l.b16 %v49
    %v546 = vpack.c.b16 %v531, %v530
    %v547 = vpack.c.b16 %v533, %v532
    %v548 = vpack.c.b16 %v535, %v534
    %v549 = vpack.c.b16 %v537, %v536
    %v550 = vpack.c.b16 %v539, %v538
    %v551 = vpack.c.b16 %v541, %v540
    %v552 = vpack.c.b16 %v543, %v542
    %v553 = vpack.c.b16 %v545, %v544
    %562 = vmatpush.bf16.msra.mxu0 %v553
    %563 = vmatpush.bf16.msra.mxu0 %v552
    %564 = vmatpush.bf16.msra.mxu0 %v551
    %565 = vmatpush.bf16.msra.mxu0 %v550
    %566 = vmatpush.bf16.msra.mxu0 %v549
    %567 = vmatpush.bf16.msra.mxu0 %v548
    %568 = vmatpush.bf16.msra.mxu0 %v547
    %569 = vmatpush.bf16.msra.mxu0 %v546
    %570 = vmatmul.bf16.gmra.mxu0 %v513
    %v571 = vpop.f32.mrf.mxu0
    %v572 = vadd.f32 0.0, %v571
    %v573 = vpop.f32.mrf.mxu0
    %v574 = vadd.f32 0.0, %v573
    %575 = vdwg.mxu0
    %v576 = vmul.f32 %v572, %v107
    %v577 = vmul.f32 %v574, %v107
    %v578 = vsel %vm54, %v576, 0.0
    %579 = vadd.xlane.f32.xlu0 %v578
    %v580 = vpop.xlane.xlu0 %579
    %v581 = vsel %vm54, %v577, 0.0
    %582 = vadd.xlane.f32.xlu0 %v581
    %v583 = vpop.xlane.xlu0 %582
    %v584 = vmul.f32 %v580, %v67
    %v585 = vmul.f32 %v583, %v67
    %v586 = vmul.f32 %v576, %v104
    %v587 = vmul.f32 %v577, %v105
    %v588 = vsel %vm54, %v586, 0.0
    %589 = vadd.xlane.f32.xlu0 %v588
    %v590 = vpop.xlane.xlu0 %589
    %v591 = vsel %vm54, %v587, 0.0
    %592 = vadd.xlane.f32.xlu0 %v591
    %v593 = vpop.xlane.xlu0 %592
    %v594 = vmul.f32 %v590, %v67
    %v595 = vmul.f32 %v593, %v67
    %v596 = vsub.f32 %v576, %v584
    %v597 = vsub.f32 %v577, %v585
    %v598 = vmul.f32 %v104, %v594
    %v599 = vmul.f32 %v105, %v595
    %v600 = vsub.f32 %v596, %v598
    %v601 = vsub.f32 %v597, %v599
    %v602 = vmul.f32 %v93, %v600
    %v603 = vmul.f32 %v103, %v601
    %v604 = vsub.f32 %v28, %v602
    %v605 = vsub.f32 %v29, %v603
    %v606 = vsel %vm54, %v604, 0.0
    %607 = vadd.xlane.f32.xlu0 %v606
    %v608 = vpop.xlane.xlu0 %607
    %v609 = vsel %vm54, %v605, 0.0
    %610 = vadd.xlane.f32.xlu0 %v609
    %v611 = vpop.xlane.xlu0 %610
    %v612 = vmul.f32 %v608, %v67
    %v613 = vmul.f32 %v611, %v67
    %v614 = vsub.f32 %v604, %v612
    %v615 = vsub.f32 %v605, %v613
    %v616 = vmul.f32 %v614, %v614
    %v617 = vmul.f32 %v615, %v615
    %v618 = vsel %vm54, %v616, 0.0
    %619 = vadd.xlane.f32.xlu0 %v618
    %v620 = vpop.xlane.xlu0 %619
    %v621 = vsel %vm54, %v617, 0.0
    %622 = vadd.xlane.f32.xlu0 %v621
    %v623 = vpop.xlane.xlu0 %622
    %v624 = vmul.f32 %v620, %v67
    %v625 = vmul.f32 %v623, %v67
    %v626 = vadd.f32 %v624, 1e-05
    %v627 = vadd.f32 %v625, 1e-05
    %v628 = vrsqrt.pop %v626
    %v629 = vmul.f32 %v628, %v626
    %v630 = vmul.f32 %v629, %v628
    %v631 = vmul.f32 0.5, %v630
    %v632 = vsub.f32 1.5, %v631
    %v633 = vmul.f32 %v628, %v632
    %vm634 = vweird.f32 %v626
    %vm635 = vweird.f32 %v628
    %vm636 = vmor %vm634, %vm635
    %v637 = vsel %vm636, %v628, %v633
    %v638 = vrsqrt.pop %v627
    %v639 = vmul.f32 %v638, %v627
    %v640 = vmul.f32 %v639, %v638
    %v641 = vmul.f32 0.5, %v640
    %v642 = vsub.f32 1.5, %v641
    %v643 = vmul.f32 %v638, %v642
    %vm644 = vweird.f32 %v627
    %vm645 = vweird.f32 %v638
    %vm646 = vmor %vm644, %vm645
    %v647 = vsel %vm646, %v638, %v643
    %v648 = vmul.f32 %v614, %v637
    %v649 = vmul.f32 %v615, %v647
    %v650 = vmul.f32 %v107, %v648
    %v651 = vmul.f32 %v107, %v649
    %v652 = vadd.f32 %v650, %v112
    %v653 = vadd.f32 %v651, %v112
    %v654 = vpack.c.bf16 %v653, %v652
    %v656 = vsel %vm54, %v654, 0
    %658 = vmatpush.bf16.msra.mxu0 0
    %659 = vmatpush.bf16.msra.mxu0 0
    %660 = vmatpush.bf16.msra.mxu0 0
    %661 = vmatpush.bf16.msra.mxu0 0
    %662 = vmatpush.bf16.msra.mxu0 0
    %663 = vmatpush.bf16.msra.mxu0 0
    %664 = vmatpush.bf16.msra.mxu0 %v126
    %665 = vmatpush.bf16.msra.mxu0 %v125
    %666 = vmatmul.bf16.gmra.mxu0 %v656
    %v667 = vpop.f32.mrf.mxu0
    %v668 = vadd.f32 0.0, %v667
    %v669 = vpop.f32.mrf.mxu0
    %v670 = vadd.f32 0.0, %v669
    %671 = vdwg.mxu0
    %v672 = vmax.f32 %v668, 0.0
    %v673 = vmax.f32 %v670, 0.0
    %676 = vrot.lane.b32.xlu0 %v668, 64
    %v677 = vpop.permute.xlu0 %676
    %678 = vrot.lane.b32.xlu0 %v670, 64
    %v679 = vpop.permute.xlu0 %678
    %680 = vrot.lane.b32.xlu0 %v668, 32
    %v681 = vpop.permute.xlu0 %680
    %682 = vrot.lane.b32.xlu0 %v670, 32
    %v683 = vpop.permute.xlu0 %682
    %v684 = vsel %vm158, %v677, 0
    %v686 = vsel %vm158, %v679, 0
    %v688 = vsel %vm158, %v681, 0
    %v690 = vsel %vm158, %v683, 0
    %692 = vmatpush.xpose.msra.mxu0 0.0
    %693 = vmatpush.xpose.msra.mxu0 0.0
    %694 = vmatpush.xpose.msra.mxu0 0.0
    %695 = vmatpush.xpose.msra.mxu0 0.0
    %696 = vmatpush.xpose.msra.mxu0 0.0
    %697 = vmatpush.xpose.msra.mxu0 0.0
    %698 = vmatpush.xpose.msra.mxu0 0.0
    %699 = vmatpush.xpose.msra.mxu0 0.0
    %700 = vmatpush.xpose.msra.mxu0 0.0
    %701 = vmatpush.xpose.msra.mxu0 0.0
    %702 = vmatpush.xpose.msra.mxu0 0.0
    %703 = vmatpush.xpose.msra.mxu0 0.0
    %704 = vmatpush.xpose.msra.mxu0 0.0
    %705 = vmatpush.xpose.msra.mxu0 0.0
    %706 = vmatpush.xpose.msra.mxu0 %v690
    %707 = vmatpush.xpose.msra.mxu0 %v688
    %708 = vmatmul.f32.gmra.mxu0 %v684
    %v709 = vpop.f32.mrf.mxu0
    %v710 = vadd.f32 0.0, %v709
    %711 = vmatmul.f32.gmra.mxu0 %v686
    %v712 = vpop.f32.mrf.mxu0
    %v713 = vadd.f32 0.0, %v712
    %714 = vdwg.mxu0
    %v715 = vmul.f32 %v710, 0.25
    %v716 = vmul.f32 %v713, 0.25
    %v717 = vadd.f32 %v715, %v52
    %v718 = vadd.f32 %v716, %v53
    %v719 = vsel %vm158, %v717, -inf
    %720 = vmax.xlane.f32.xlu0 %v719
    %v721 = vpop.xlane.xlu0 %720
    %v722 = vsel %vm158, %v718, -inf
    %723 = vmax.xlane.f32.xlu0 %v722
    %v724 = vpop.xlane.xlu0 %723
    %v725 = vsub.f32 %v717, %v721
    %v726 = vsub.f32 %v718, %v724
    %v727 = vmul.f32 %v725, 1.442695
    %v728 = vpow.pop %v727
    %v729 = vmul.f32 %v726, 1.442695
    %v730 = vpow.pop %v729
    %v731 = vsel %vm158, %v728, 0.0
    %732 = vadd.xlane.f32.xlu0 %v731
    %v733 = vpop.xlane.xlu0 %732
    %v734 = vsel %vm158, %v730, 0.0
    %735 = vadd.xlane.f32.xlu0 %v734
    %v736 = vpop.xlane.xlu0 %735
    %v737 = vrcp.pop %v733
    %v738 = vrcp.pop %v736
    %v739 = vmul.f32 %v728, %v737
    %v740 = vmul.f32 %v730, %v738
    %v744 = vsel %vm158, %v739, 0
    %v747 = vsel %vm158, %v740, 0
    %749 = vmatpush.msra.mxu0 0.0
    %750 = vmatpush.msra.mxu0 0.0
    %751 = vmatpush.msra.mxu0 0.0
    %752 = vmatpush.msra.mxu0 0.0
    %753 = vmatpush.msra.mxu0 0.0
    %754 = vmatpush.msra.mxu0 0.0
    %755 = vmatpush.msra.mxu0 0.0
    %756 = vmatpush.msra.mxu0 0.0
    %757 = vmatpush.msra.mxu0 0.0
    %758 = vmatpush.msra.mxu0 0.0
    %759 = vmatpush.msra.mxu0 0.0
    %760 = vmatpush.msra.mxu0 0.0
    %761 = vmatpush.msra.mxu0 0.0
    %762 = vmatpush.msra.mxu0 0.0
    %763 = vmatpush.msra.mxu0 %v683
    %764 = vmatpush.msra.mxu0 %v681
    %765 = vmatmul.f32.gmra.mxu0 %v744
    %v766 = vpop.f32.mrf.mxu0
    %v767 = vadd.f32 0.0, %v766
    %768 = vmatmul.f32.gmra.mxu0 %v747
    %v769 = vpop.f32.mrf.mxu0
    %v770 = vadd.f32 0.0, %v769
    %771 = vdwg.mxu0
    %772 = vxpose.xlu0.b32.start [1/16] %v739, 128
    %773 = vxpose.xlu0.b32.cont [2/16] %v740, 128
    %774 = vxpose.xlu0.b32.cont [3/16] 0.0, 128
    %775 = vxpose.xlu0.b32.cont [4/16] 0.0, 128
    %776 = vxpose.xlu0.b32.cont [5/16] 0.0, 128
    %777 = vxpose.xlu0.b32.cont [6/16] 0.0, 128
    %778 = vxpose.xlu0.b32.cont [7/16] 0.0, 128
    %779 = vxpose.xlu0.b32.cont [8/16] 0.0, 128
    %780 = vxpose.xlu0.b32.cont [9/16] 0.0, 128
    %781 = vxpose.xlu0.b32.cont [10/16] 0.0, 128
    %782 = vxpose.xlu0.b32.cont [11/16] 0.0, 128
    %783 = vxpose.xlu0.b32.cont [12/16] 0.0, 128
    %784 = vxpose.xlu0.b32.cont [13/16] 0.0, 128
    %785 = vxpose.xlu0.b32.cont [14/16] 0.0, 128
    %786 = vxpose.xlu0.b32.cont [15/16] 0.0, 128
    %787 = vxpose.xlu0.b32.end [16/16] 0.0, 128
    %v788 = vpop.trf.xlu0
    %v789 = vpop.trf.xlu0
    %v790 = vpop.trf.xlu0
    %v791 = vpop.trf.xlu0
    %v792 = vpop.trf.xlu0
    %v793 = vpop.trf.xlu0
    %v794 = vpop.trf.xlu0
    %v795 = vpop.trf.xlu0
    %v796 = vpop.trf.xlu0
    %v797 = vpop.trf.xlu0
    %v798 = vpop.trf.xlu0
    %v799 = vpop.trf.xlu0
    %v800 = vpop.trf.xlu0
    %v801 = vpop.trf.xlu0
    %v802 = vpop.trf.xlu0
    %v803 = vpop.trf.xlu0
    %v807 = vsel %vm158, %v788, 0
    %v810 = vsel %vm158, %v789, 0
    %812 = vmatpush.msra.mxu0 0.0
    %813 = vmatpush.msra.mxu0 0.0
    %814 = vmatpush.msra.mxu0 0.0
    %815 = vmatpush.msra.mxu0 0.0
    %816 = vmatpush.msra.mxu0 0.0
    %817 = vmatpush.msra.mxu0 0.0
    %818 = vmatpush.msra.mxu0 0.0
    %819 = vmatpush.msra.mxu0 0.0
    %820 = vmatpush.msra.mxu0 0.0
    %821 = vmatpush.msra.mxu0 0.0
    %822 = vmatpush.msra.mxu0 0.0
    %823 = vmatpush.msra.mxu0 0.0
    %824 = vmatpush.msra.mxu0 0.0
    %825 = vmatpush.msra.mxu0 0.0
    %826 = vmatpush.msra.mxu0 %v679
    %827 = vmatpush.msra.mxu0 %v677
    %828 = vmatmul.f32.gmra.mxu0 %v807
    %v829 = vpop.f32.mrf.mxu0
    %v830 = vadd.f32 0.0, %v829
    %831 = vmatmul.f32.gmra.mxu0 %v810
    %v832 = vpop.f32.mrf.mxu0
    %v833 = vadd.f32 0.0, %v832
    %834 = vdwg.mxu0
    %835 = vrot.lane.b32.xlu0 %v668, 48
    %v836 = vpop.permute.xlu0 %835
    %837 = vrot.lane.b32.xlu0 %v670, 48
    %v838 = vpop.permute.xlu0 %837
    %839 = vrot.lane.b32.xlu0 %v668, 16
    %v840 = vpop.permute.xlu0 %839
    %841 = vrot.lane.b32.xlu0 %v670, 16
    %v842 = vpop.permute.xlu0 %841
    %v843 = vsel %vm158, %v836, 0
    %v845 = vsel %vm158, %v838, 0
    %v847 = vsel %vm158, %v840, 0
    %v849 = vsel %vm158, %v842, 0
    %851 = vmatpush.xpose.msra.mxu0 0.0
    %852 = vmatpush.xpose.msra.mxu0 0.0
    %853 = vmatpush.xpose.msra.mxu0 0.0
    %854 = vmatpush.xpose.msra.mxu0 0.0
    %855 = vmatpush.xpose.msra.mxu0 0.0
    %856 = vmatpush.xpose.msra.mxu0 0.0
    %857 = vmatpush.xpose.msra.mxu0 0.0
    %858 = vmatpush.xpose.msra.mxu0 0.0
    %859 = vmatpush.xpose.msra.mxu0 0.0
    %860 = vmatpush.xpose.msra.mxu0 0.0
    %861 = vmatpush.xpose.msra.mxu0 0.0
    %862 = vmatpush.xpose.msra.mxu0 0.0
    %863 = vmatpush.xpose.msra.mxu0 0.0
    %864 = vmatpush.xpose.msra.mxu0 0.0
    %865 = vmatpush.xpose.msra.mxu0 %v849
    %866 = vmatpush.xpose.msra.mxu0 %v847
    %867 = vmatmul.f32.gmra.mxu0 %v843
    %v868 = vpop.f32.mrf.mxu0
    %v869 = vadd.f32 0.0, %v868
    %870 = vmatmul.f32.gmra.mxu0 %v845
    %v871 = vpop.f32.mrf.mxu0
    %v872 = vadd.f32 0.0, %v871
    %873 = vdwg.mxu0
    %v874 = vmul.f32 %v869, 0.25
    %v875 = vmul.f32 %v872, 0.25
    %v876 = vadd.f32 %v874, %v52
    %v877 = vadd.f32 %v875, %v53
    %v878 = vsel %vm158, %v876, -inf
    %879 = vmax.xlane.f32.xlu0 %v878
    %v880 = vpop.xlane.xlu0 %879
    %v881 = vsel %vm158, %v877, -inf
    %882 = vmax.xlane.f32.xlu0 %v881
    %v883 = vpop.xlane.xlu0 %882
    %v884 = vsub.f32 %v876, %v880
    %v885 = vsub.f32 %v877, %v883
    %v886 = vmul.f32 %v884, 1.442695
    %v887 = vpow.pop %v886
    %v888 = vmul.f32 %v885, 1.442695
    %v889 = vpow.pop %v888
    %v890 = vsel %vm158, %v887, 0.0
    %891 = vadd.xlane.f32.xlu0 %v890
    %v892 = vpop.xlane.xlu0 %891
    %v893 = vsel %vm158, %v889, 0.0
    %894 = vadd.xlane.f32.xlu0 %v893
    %v895 = vpop.xlane.xlu0 %894
    %v896 = vrcp.pop %v892
    %v897 = vrcp.pop %v895
    %v898 = vmul.f32 %v887, %v896
    %v899 = vmul.f32 %v889, %v897
    %v903 = vsel %vm158, %v898, 0
    %v906 = vsel %vm158, %v899, 0
    %908 = vmatpush.msra.mxu0 0.0
    %909 = vmatpush.msra.mxu0 0.0
    %910 = vmatpush.msra.mxu0 0.0
    %911 = vmatpush.msra.mxu0 0.0
    %912 = vmatpush.msra.mxu0 0.0
    %913 = vmatpush.msra.mxu0 0.0
    %914 = vmatpush.msra.mxu0 0.0
    %915 = vmatpush.msra.mxu0 0.0
    %916 = vmatpush.msra.mxu0 0.0
    %917 = vmatpush.msra.mxu0 0.0
    %918 = vmatpush.msra.mxu0 0.0
    %919 = vmatpush.msra.mxu0 0.0
    %920 = vmatpush.msra.mxu0 0.0
    %921 = vmatpush.msra.mxu0 0.0
    %922 = vmatpush.msra.mxu0 %v842
    %923 = vmatpush.msra.mxu0 %v840
    %924 = vmatmul.f32.gmra.mxu0 %v903
    %v925 = vpop.f32.mrf.mxu0
    %v926 = vadd.f32 0.0, %v925
    %927 = vmatmul.f32.gmra.mxu0 %v906
    %v928 = vpop.f32.mrf.mxu0
    %v929 = vadd.f32 0.0, %v928
    %930 = vdwg.mxu0
    %931 = vxpose.xlu0.b32.start [1/16] %v898, 128
    %932 = vxpose.xlu0.b32.cont [2/16] %v899, 128
    %933 = vxpose.xlu0.b32.cont [3/16] 0.0, 128
    %934 = vxpose.xlu0.b32.cont [4/16] 0.0, 128
    %935 = vxpose.xlu0.b32.cont [5/16] 0.0, 128
    %936 = vxpose.xlu0.b32.cont [6/16] 0.0, 128
    %937 = vxpose.xlu0.b32.cont [7/16] 0.0, 128
    %938 = vxpose.xlu0.b32.cont [8/16] 0.0, 128
    %939 = vxpose.xlu0.b32.cont [9/16] 0.0, 128
    %940 = vxpose.xlu0.b32.cont [10/16] 0.0, 128
    %941 = vxpose.xlu0.b32.cont [11/16] 0.0, 128
    %942 = vxpose.xlu0.b32.cont [12/16] 0.0, 128
    %943 = vxpose.xlu0.b32.cont [13/16] 0.0, 128
    %944 = vxpose.xlu0.b32.cont [14/16] 0.0, 128
    %945 = vxpose.xlu0.b32.cont [15/16] 0.0, 128
    %946 = vxpose.xlu0.b32.end [16/16] 0.0, 128
    %v947 = vpop.trf.xlu0
    %v948 = vpop.trf.xlu0
    %v949 = vpop.trf.xlu0
    %v950 = vpop.trf.xlu0
    %v951 = vpop.trf.xlu0
    %v952 = vpop.trf.xlu0
    %v953 = vpop.trf.xlu0
    %v954 = vpop.trf.xlu0
    %v955 = vpop.trf.xlu0
    %v956 = vpop.trf.xlu0
    %v957 = vpop.trf.xlu0
    %v958 = vpop.trf.xlu0
    %v959 = vpop.trf.xlu0
    %v960 = vpop.trf.xlu0
    %v961 = vpop.trf.xlu0
    %v962 = vpop.trf.xlu0
    %v966 = vsel %vm158, %v947, 0
    %v969 = vsel %vm158, %v948, 0
    %971 = vmatpush.msra.mxu0 0.0
    %972 = vmatpush.msra.mxu0 0.0
    %973 = vmatpush.msra.mxu0 0.0
    %974 = vmatpush.msra.mxu0 0.0
    %975 = vmatpush.msra.mxu0 0.0
    %976 = vmatpush.msra.mxu0 0.0
    %977 = vmatpush.msra.mxu0 0.0
    %978 = vmatpush.msra.mxu0 0.0
    %979 = vmatpush.msra.mxu0 0.0
    %980 = vmatpush.msra.mxu0 0.0
    %981 = vmatpush.msra.mxu0 0.0
    %982 = vmatpush.msra.mxu0 0.0
    %983 = vmatpush.msra.mxu0 0.0
    %984 = vmatpush.msra.mxu0 0.0
    %985 = vmatpush.msra.mxu0 %v838
    %986 = vmatpush.msra.mxu0 %v836
    %987 = vmatmul.f32.gmra.mxu0 %v966
    %v988 = vpop.f32.mrf.mxu0
    %v989 = vadd.f32 0.0, %v988
    %990 = vmatmul.f32.gmra.mxu0 %v969
    %v991 = vpop.f32.mrf.mxu0
    %v992 = vadd.f32 0.0, %v991
    %993 = vdwg.mxu0
    %996 = vrot.lane.b32.xlu0 %v767, 64
    %v997 = vpop.permute.xlu0 %996
    %998 = vrot.lane.b32.xlu0 %v770, 64
    %v999 = vpop.permute.xlu0 %998
    %1004 = vrot.lane.b32.xlu0 %v926, 80
    %v1005 = vpop.permute.xlu0 %1004
    %1006 = vrot.lane.b32.xlu0 %v929, 80
    %v1007 = vpop.permute.xlu0 %1006
    %1012 = vrot.lane.b32.xlu0 %v830, 96
    %v1013 = vpop.permute.xlu0 %1012
    %1014 = vrot.lane.b32.xlu0 %v833, 96
    %v1015 = vpop.permute.xlu0 %1014
    %1020 = vrot.lane.b32.xlu0 %v989, 112
    %v1021 = vpop.permute.xlu0 %1020
    %1022 = vrot.lane.b32.xlu0 %v992, 112
    %v1023 = vpop.permute.xlu0 %1022
    %v1026 = vsel %vm501, %v672, %v997
    %v1027 = vsel %vm501, %v673, %v999
    %v1028 = vsel %vm504, %v1026, %v1005
    %v1029 = vsel %vm504, %v1027, %v1007
    %v1030 = vsel %vm507, %v1028, %v1013
    %v1031 = vsel %vm507, %v1029, %v1015
    %v1032 = vsel %vm510, %v1030, %v1021
    %v1033 = vsel %vm510, %v1031, %v1023
    %v1034 = vpack.c.bf16 %v1033, %v1032
    %1035 = vmatpush.bf16.msra.mxu0 %v553
    %1036 = vmatpush.bf16.msra.mxu0 %v552
    %1037 = vmatpush.bf16.msra.mxu0 %v551
    %1038 = vmatpush.bf16.msra.mxu0 %v550
    %1039 = vmatpush.bf16.msra.mxu0 %v549
    %1040 = vmatpush.bf16.msra.mxu0 %v548
    %1041 = vmatpush.bf16.msra.mxu0 %v547
    %1042 = vmatpush.bf16.msra.mxu0 %v546
    %1043 = vmatmul.bf16.gmra.mxu0 %v1034
    %v1044 = vpop.f32.mrf.mxu0
    %v1045 = vadd.f32 0.0, %v1044
    %v1046 = vpop.f32.mrf.mxu0
    %v1047 = vadd.f32 0.0, %v1046
    %1048 = vdwg.mxu0
    %v1049 = vmul.f32 %v1045, %v107
    %v1050 = vmul.f32 %v1047, %v107
    %v1051 = vsel %vm54, %v1049, 0.0
    %1052 = vadd.xlane.f32.xlu0 %v1051
    %v1053 = vpop.xlane.xlu0 %1052
    %v1054 = vsel %vm54, %v1050, 0.0
    %1055 = vadd.xlane.f32.xlu0 %v1054
    %v1056 = vpop.xlane.xlu0 %1055
    %v1057 = vmul.f32 %v1053, %v67
    %v1058 = vmul.f32 %v1056, %v67
    %v1059 = vmul.f32 %v1049, %v648
    %v1060 = vmul.f32 %v1050, %v649
    %v1061 = vsel %vm54, %v1059, 0.0
    %1062 = vadd.xlane.f32.xlu0 %v1061
    %v1063 = vpop.xlane.xlu0 %1062
    %v1064 = vsel %vm54, %v1060, 0.0
    %1065 = vadd.xlane.f32.xlu0 %v1064
    %v1066 = vpop.xlane.xlu0 %1065
    %v1067 = vmul.f32 %v1063, %v67
    %v1068 = vmul.f32 %v1066, %v67
    %v1069 = vsub.f32 %v1049, %v1057
    %v1070 = vsub.f32 %v1050, %v1058
    %v1071 = vmul.f32 %v648, %v1067
    %v1072 = vmul.f32 %v649, %v1068
    %v1073 = vsub.f32 %v1069, %v1071
    %v1074 = vsub.f32 %v1070, %v1072
    %v1075 = vmul.f32 %v637, %v1073
    %v1076 = vmul.f32 %v647, %v1074
    %v1077 = vsub.f32 %v604, %v1075
    %v1078 = vsub.f32 %v605, %v1076
    %v1079 = vsel %vm54, %v1077, 0.0
    %1080 = vadd.xlane.f32.xlu0 %v1079
    %v1081 = vpop.xlane.xlu0 %1080
    %v1082 = vsel %vm54, %v1078, 0.0
    %1083 = vadd.xlane.f32.xlu0 %v1082
    %v1084 = vpop.xlane.xlu0 %1083
    %v1085 = vmul.f32 %v1081, %v67
    %v1086 = vmul.f32 %v1084, %v67
    %v1087 = vsub.f32 %v1077, %v1085
    %v1088 = vsub.f32 %v1078, %v1086
    %v1089 = vmul.f32 %v1087, %v1087
    %v1090 = vmul.f32 %v1088, %v1088
    %v1091 = vsel %vm54, %v1089, 0.0
    %1092 = vadd.xlane.f32.xlu0 %v1091
    %v1093 = vpop.xlane.xlu0 %1092
    %v1094 = vsel %vm54, %v1090, 0.0
    %1095 = vadd.xlane.f32.xlu0 %v1094
    %v1096 = vpop.xlane.xlu0 %1095
    %v1097 = vmul.f32 %v1093, %v67
    %v1098 = vmul.f32 %v1096, %v67
    %v1099 = vadd.f32 %v1097, 1e-05
    %v1100 = vadd.f32 %v1098, 1e-05
    %v1101 = vrsqrt.pop %v1099
    %v1102 = vmul.f32 %v1101, %v1099
    %v1103 = vmul.f32 %v1102, %v1101
    %v1104 = vmul.f32 0.5, %v1103
    %v1105 = vsub.f32 1.5, %v1104
    %v1106 = vmul.f32 %v1101, %v1105
    %vm1107 = vweird.f32 %v1099
    %vm1108 = vweird.f32 %v1101
    %vm1109 = vmor %vm1107, %vm1108
    %v1110 = vsel %vm1109, %v1101, %v1106
    %v1111 = vrsqrt.pop %v1100
    %v1112 = vmul.f32 %v1111, %v1100
    %v1113 = vmul.f32 %v1112, %v1111
    %v1114 = vmul.f32 0.5, %v1113
    %v1115 = vsub.f32 1.5, %v1114
    %v1116 = vmul.f32 %v1111, %v1115
    %vm1117 = vweird.f32 %v1100
    %vm1118 = vweird.f32 %v1111
    %vm1119 = vmor %vm1117, %vm1118
    %v1120 = vsel %vm1119, %v1111, %v1116
    %v1121 = vmul.f32 %v1087, %v1110
    %v1122 = vmul.f32 %v1088, %v1120
    %v1123 = vmul.f32 %v107, %v1121
    %v1124 = vmul.f32 %v107, %v1122
    %v1125 = vadd.f32 %v1123, %v112
    %v1126 = vadd.f32 %v1124, %v112
    %v1127 = vpack.c.bf16 %v1126, %v1125
    %v1129 = vsel %vm54, %v1127, 0
    %1131 = vmatpush.bf16.msra.mxu0 0
    %1132 = vmatpush.bf16.msra.mxu0 0
    %1133 = vmatpush.bf16.msra.mxu0 0
    %1134 = vmatpush.bf16.msra.mxu0 0
    %1135 = vmatpush.bf16.msra.mxu0 0
    %1136 = vmatpush.bf16.msra.mxu0 0
    %1137 = vmatpush.bf16.msra.mxu0 %v126
    %1138 = vmatpush.bf16.msra.mxu0 %v125
    %1139 = vmatmul.bf16.gmra.mxu0 %v1129
    %v1140 = vpop.f32.mrf.mxu0
    %v1141 = vadd.f32 0.0, %v1140
    %v1142 = vpop.f32.mrf.mxu0
    %v1143 = vadd.f32 0.0, %v1142
    %1144 = vdwg.mxu0
    %v1145 = vmax.f32 %v1141, 0.0
    %v1146 = vmax.f32 %v1143, 0.0
    %1149 = vrot.lane.b32.xlu0 %v1141, 64
    %v1150 = vpop.permute.xlu0 %1149
    %1151 = vrot.lane.b32.xlu0 %v1143, 64
    %v1152 = vpop.permute.xlu0 %1151
    %1153 = vrot.lane.b32.xlu0 %v1141, 32
    %v1154 = vpop.permute.xlu0 %1153
    %1155 = vrot.lane.b32.xlu0 %v1143, 32
    %v1156 = vpop.permute.xlu0 %1155
    %v1157 = vsel %vm158, %v1150, 0
    %v1159 = vsel %vm158, %v1152, 0
    %v1161 = vsel %vm158, %v1154, 0
    %v1163 = vsel %vm158, %v1156, 0
    %1165 = vmatpush.xpose.msra.mxu0 0.0
    %1166 = vmatpush.xpose.msra.mxu0 0.0
    %1167 = vmatpush.xpose.msra.mxu0 0.0
    %1168 = vmatpush.xpose.msra.mxu0 0.0
    %1169 = vmatpush.xpose.msra.mxu0 0.0
    %1170 = vmatpush.xpose.msra.mxu0 0.0
    %1171 = vmatpush.xpose.msra.mxu0 0.0
    %1172 = vmatpush.xpose.msra.mxu0 0.0
    %1173 = vmatpush.xpose.msra.mxu0 0.0
    %1174 = vmatpush.xpose.msra.mxu0 0.0
    %1175 = vmatpush.xpose.msra.mxu0 0.0
    %1176 = vmatpush.xpose.msra.mxu0 0.0
    %1177 = vmatpush.xpose.msra.mxu0 0.0
    %1178 = vmatpush.xpose.msra.mxu0 0.0
    %1179 = vmatpush.xpose.msra.mxu0 %v1163
    %1180 = vmatpush.xpose.msra.mxu0 %v1161
    %1181 = vmatmul.f32.gmra.mxu0 %v1157
    %v1182 = vpop.f32.mrf.mxu0
    %v1183 = vadd.f32 0.0, %v1182
    %1184 = vmatmul.f32.gmra.mxu0 %v1159
    %v1185 = vpop.f32.mrf.mxu0
    %v1186 = vadd.f32 0.0, %v1185
    %1187 = vdwg.mxu0
    %v1188 = vmul.f32 %v1183, 0.25
    %v1189 = vmul.f32 %v1186, 0.25
    %v1190 = vadd.f32 %v1188, %v52
    %v1191 = vadd.f32 %v1189, %v53
    %v1192 = vsel %vm158, %v1190, -inf
    %1193 = vmax.xlane.f32.xlu0 %v1192
    %v1194 = vpop.xlane.xlu0 %1193
    %v1195 = vsel %vm158, %v1191, -inf
    %1196 = vmax.xlane.f32.xlu0 %v1195
    %v1197 = vpop.xlane.xlu0 %1196
    %v1198 = vsub.f32 %v1190, %v1194
    %v1199 = vsub.f32 %v1191, %v1197
    %v1200 = vmul.f32 %v1198, 1.442695
    %v1201 = vpow.pop %v1200
    %v1202 = vmul.f32 %v1199, 1.442695
    %v1203 = vpow.pop %v1202
    %v1204 = vsel %vm158, %v1201, 0.0
    %1205 = vadd.xlane.f32.xlu0 %v1204
    %v1206 = vpop.xlane.xlu0 %1205
    %v1207 = vsel %vm158, %v1203, 0.0
    %1208 = vadd.xlane.f32.xlu0 %v1207
    %v1209 = vpop.xlane.xlu0 %1208
    %v1210 = vrcp.pop %v1206
    %v1211 = vrcp.pop %v1209
    %v1212 = vmul.f32 %v1201, %v1210
    %v1213 = vmul.f32 %v1203, %v1211
    %v1217 = vsel %vm158, %v1212, 0
    %v1220 = vsel %vm158, %v1213, 0
    %1222 = vmatpush.msra.mxu0 0.0
    %1223 = vmatpush.msra.mxu0 0.0
    %1224 = vmatpush.msra.mxu0 0.0
    %1225 = vmatpush.msra.mxu0 0.0
    %1226 = vmatpush.msra.mxu0 0.0
    %1227 = vmatpush.msra.mxu0 0.0
    %1228 = vmatpush.msra.mxu0 0.0
    %1229 = vmatpush.msra.mxu0 0.0
    %1230 = vmatpush.msra.mxu0 0.0
    %1231 = vmatpush.msra.mxu0 0.0
    %1232 = vmatpush.msra.mxu0 0.0
    %1233 = vmatpush.msra.mxu0 0.0
    %1234 = vmatpush.msra.mxu0 0.0
    %1235 = vmatpush.msra.mxu0 0.0
    %1236 = vmatpush.msra.mxu0 %v1156
    %1237 = vmatpush.msra.mxu0 %v1154
    %1238 = vmatmul.f32.gmra.mxu0 %v1217
    %v1239 = vpop.f32.mrf.mxu0
    %v1240 = vadd.f32 0.0, %v1239
    %1241 = vmatmul.f32.gmra.mxu0 %v1220
    %v1242 = vpop.f32.mrf.mxu0
    %v1243 = vadd.f32 0.0, %v1242
    %1244 = vdwg.mxu0
    %1245 = vxpose.xlu0.b32.start [1/16] %v1212, 128
    %1246 = vxpose.xlu0.b32.cont [2/16] %v1213, 128
    %1247 = vxpose.xlu0.b32.cont [3/16] 0.0, 128
    %1248 = vxpose.xlu0.b32.cont [4/16] 0.0, 128
    %1249 = vxpose.xlu0.b32.cont [5/16] 0.0, 128
    %1250 = vxpose.xlu0.b32.cont [6/16] 0.0, 128
    %1251 = vxpose.xlu0.b32.cont [7/16] 0.0, 128
    %1252 = vxpose.xlu0.b32.cont [8/16] 0.0, 128
    %1253 = vxpose.xlu0.b32.cont [9/16] 0.0, 128
    %1254 = vxpose.xlu0.b32.cont [10/16] 0.0, 128
    %1255 = vxpose.xlu0.b32.cont [11/16] 0.0, 128
    %1256 = vxpose.xlu0.b32.cont [12/16] 0.0, 128
    %1257 = vxpose.xlu0.b32.cont [13/16] 0.0, 128
    %1258 = vxpose.xlu0.b32.cont [14/16] 0.0, 128
    %1259 = vxpose.xlu0.b32.cont [15/16] 0.0, 128
    %1260 = vxpose.xlu0.b32.end [16/16] 0.0, 128
    %v1261 = vpop.trf.xlu0
    %v1262 = vpop.trf.xlu0
    %v1263 = vpop.trf.xlu0
    %v1264 = vpop.trf.xlu0
    %v1265 = vpop.trf.xlu0
    %v1266 = vpop.trf.xlu0
    %v1267 = vpop.trf.xlu0
    %v1268 = vpop.trf.xlu0
    %v1269 = vpop.trf.xlu0
    %v1270 = vpop.trf.xlu0
    %v1271 = vpop.trf.xlu0
    %v1272 = vpop.trf.xlu0
    %v1273 = vpop.trf.xlu0
    %v1274 = vpop.trf.xlu0
    %v1275 = vpop.trf.xlu0
    %v1276 = vpop.trf.xlu0
    %v1280 = vsel %vm158, %v1261, 0
    %v1283 = vsel %vm158, %v1262, 0
    %1285 = vmatpush.msra.mxu0 0.0
    %1286 = vmatpush.msra.mxu0 0.0
    %1287 = vmatpush.msra.mxu0 0.0
    %1288 = vmatpush.msra.mxu0 0.0
    %1289 = vmatpush.msra.mxu0 0.0
    %1290 = vmatpush.msra.mxu0 0.0
    %1291 = vmatpush.msra.mxu0 0.0
    %1292 = vmatpush.msra.mxu0 0.0
    %1293 = vmatpush.msra.mxu0 0.0
    %1294 = vmatpush.msra.mxu0 0.0
    %1295 = vmatpush.msra.mxu0 0.0
    %1296 = vmatpush.msra.mxu0 0.0
    %1297 = vmatpush.msra.mxu0 0.0
    %1298 = vmatpush.msra.mxu0 0.0
    %1299 = vmatpush.msra.mxu0 %v1152
    %1300 = vmatpush.msra.mxu0 %v1150
    %1301 = vmatmul.f32.gmra.mxu0 %v1280
    %v1302 = vpop.f32.mrf.mxu0
    %v1303 = vadd.f32 0.0, %v1302
    %1304 = vmatmul.f32.gmra.mxu0 %v1283
    %v1305 = vpop.f32.mrf.mxu0
    %v1306 = vadd.f32 0.0, %v1305
    %1307 = vdwg.mxu0
    %1308 = vrot.lane.b32.xlu0 %v1141, 48
    %v1309 = vpop.permute.xlu0 %1308
    %1310 = vrot.lane.b32.xlu0 %v1143, 48
    %v1311 = vpop.permute.xlu0 %1310
    %1312 = vrot.lane.b32.xlu0 %v1141, 16
    %v1313 = vpop.permute.xlu0 %1312
    %1314 = vrot.lane.b32.xlu0 %v1143, 16
    %v1315 = vpop.permute.xlu0 %1314
    %v1316 = vsel %vm158, %v1309, 0
    %v1318 = vsel %vm158, %v1311, 0
    %v1320 = vsel %vm158, %v1313, 0
    %v1322 = vsel %vm158, %v1315, 0
    %1324 = vmatpush.xpose.msra.mxu0 0.0
    %1325 = vmatpush.xpose.msra.mxu0 0.0
    %1326 = vmatpush.xpose.msra.mxu0 0.0
    %1327 = vmatpush.xpose.msra.mxu0 0.0
    %1328 = vmatpush.xpose.msra.mxu0 0.0
    %1329 = vmatpush.xpose.msra.mxu0 0.0
    %1330 = vmatpush.xpose.msra.mxu0 0.0
    %1331 = vmatpush.xpose.msra.mxu0 0.0
    %1332 = vmatpush.xpose.msra.mxu0 0.0
    %1333 = vmatpush.xpose.msra.mxu0 0.0
    %1334 = vmatpush.xpose.msra.mxu0 0.0
    %1335 = vmatpush.xpose.msra.mxu0 0.0
    %1336 = vmatpush.xpose.msra.mxu0 0.0
    %1337 = vmatpush.xpose.msra.mxu0 0.0
    %1338 = vmatpush.xpose.msra.mxu0 %v1322
    %1339 = vmatpush.xpose.msra.mxu0 %v1320
    %1340 = vmatmul.f32.gmra.mxu0 %v1316
    %v1341 = vpop.f32.mrf.mxu0
    %v1342 = vadd.f32 0.0, %v1341
    %1343 = vmatmul.f32.gmra.mxu0 %v1318
    %v1344 = vpop.f32.mrf.mxu0
    %v1345 = vadd.f32 0.0, %v1344
    %1346 = vdwg.mxu0
    %v1347 = vmul.f32 %v1342, 0.25
    %v1348 = vmul.f32 %v1345, 0.25
    %v1349 = vadd.f32 %v1347, %v52
    %v1350 = vadd.f32 %v1348, %v53
    %v1351 = vsel %vm158, %v1349, -inf
    %1352 = vmax.xlane.f32.xlu0 %v1351
    %v1353 = vpop.xlane.xlu0 %1352
    %v1354 = vsel %vm158, %v1350, -inf
    %1355 = vmax.xlane.f32.xlu0 %v1354
    %v1356 = vpop.xlane.xlu0 %1355
    %v1357 = vsub.f32 %v1349, %v1353
    %v1358 = vsub.f32 %v1350, %v1356
    %v1359 = vmul.f32 %v1357, 1.442695
    %v1360 = vpow.pop %v1359
    %v1361 = vmul.f32 %v1358, 1.442695
    %v1362 = vpow.pop %v1361
    %v1363 = vsel %vm158, %v1360, 0.0
    %1364 = vadd.xlane.f32.xlu0 %v1363
    %v1365 = vpop.xlane.xlu0 %1364
    %v1366 = vsel %vm158, %v1362, 0.0
    %1367 = vadd.xlane.f32.xlu0 %v1366
    %v1368 = vpop.xlane.xlu0 %1367
    %v1369 = vrcp.pop %v1365
    %v1370 = vrcp.pop %v1368
    %v1371 = vmul.f32 %v1360, %v1369
    %v1372 = vmul.f32 %v1362, %v1370
    %v1376 = vsel %vm158, %v1371, 0
    %v1379 = vsel %vm158, %v1372, 0
    %1381 = vmatpush.msra.mxu0 0.0
    %1382 = vmatpush.msra.mxu0 0.0
    %1383 = vmatpush.msra.mxu0 0.0
    %1384 = vmatpush.msra.mxu0 0.0
    %1385 = vmatpush.msra.mxu0 0.0
    %1386 = vmatpush.msra.mxu0 0.0
    %1387 = vmatpush.msra.mxu0 0.0
    %1388 = vmatpush.msra.mxu0 0.0
    %1389 = vmatpush.msra.mxu0 0.0
    %1390 = vmatpush.msra.mxu0 0.0
    %1391 = vmatpush.msra.mxu0 0.0
    %1392 = vmatpush.msra.mxu0 0.0
    %1393 = vmatpush.msra.mxu0 0.0
    %1394 = vmatpush.msra.mxu0 0.0
    %1395 = vmatpush.msra.mxu0 %v1315
    %1396 = vmatpush.msra.mxu0 %v1313
    %1397 = vmatmul.f32.gmra.mxu0 %v1376
    %v1398 = vpop.f32.mrf.mxu0
    %v1399 = vadd.f32 0.0, %v1398
    %1400 = vmatmul.f32.gmra.mxu0 %v1379
    %v1401 = vpop.f32.mrf.mxu0
    %v1402 = vadd.f32 0.0, %v1401
    %1403 = vdwg.mxu0
    %1404 = vxpose.xlu0.b32.start [1/16] %v1371, 128
    %1405 = vxpose.xlu0.b32.cont [2/16] %v1372, 128
    %1406 = vxpose.xlu0.b32.cont [3/16] 0.0, 128
    %1407 = vxpose.xlu0.b32.cont [4/16] 0.0, 128
    %1408 = vxpose.xlu0.b32.cont [5/16] 0.0, 128
    %1409 = vxpose.xlu0.b32.cont [6/16] 0.0, 128
    %1410 = vxpose.xlu0.b32.cont [7/16] 0.0, 128
    %1411 = vxpose.xlu0.b32.cont [8/16] 0.0, 128
    %1412 = vxpose.xlu0.b32.cont [9/16] 0.0, 128
    %1413 = vxpose.xlu0.b32.cont [10/16] 0.0, 128
    %1414 = vxpose.xlu0.b32.cont [11/16] 0.0, 128
    %1415 = vxpose.xlu0.b32.cont [12/16] 0.0, 128
    %1416 = vxpose.xlu0.b32.cont [13/16] 0.0, 128
    %1417 = vxpose.xlu0.b32.cont [14/16] 0.0, 128
    %1418 = vxpose.xlu0.b32.cont [15/16] 0.0, 128
    %1419 = vxpose.xlu0.b32.end [16/16] 0.0, 128
    %v1420 = vpop.trf.xlu0
    %v1421 = vpop.trf.xlu0
    %v1422 = vpop.trf.xlu0
    %v1423 = vpop.trf.xlu0
    %v1424 = vpop.trf.xlu0
    %v1425 = vpop.trf.xlu0
    %v1426 = vpop.trf.xlu0
    %v1427 = vpop.trf.xlu0
    %v1428 = vpop.trf.xlu0
    %v1429 = vpop.trf.xlu0
    %v1430 = vpop.trf.xlu0
    %v1431 = vpop.trf.xlu0
    %v1432 = vpop.trf.xlu0
    %v1433 = vpop.trf.xlu0
    %v1434 = vpop.trf.xlu0
    %v1435 = vpop.trf.xlu0
    %v1439 = vsel %vm158, %v1420, 0
    %v1442 = vsel %vm158, %v1421, 0
    %1444 = vmatpush.msra.mxu0 0.0
    %1445 = vmatpush.msra.mxu0 0.0
    %1446 = vmatpush.msra.mxu0 0.0
    %1447 = vmatpush.msra.mxu0 0.0
    %1448 = vmatpush.msra.mxu0 0.0
    %1449 = vmatpush.msra.mxu0 0.0
    %1450 = vmatpush.msra.mxu0 0.0
    %1451 = vmatpush.msra.mxu0 0.0
    %1452 = vmatpush.msra.mxu0 0.0
    %1453 = vmatpush.msra.mxu0 0.0
    %1454 = vmatpush.msra.mxu0 0.0
    %1455 = vmatpush.msra.mxu0 0.0
    %1456 = vmatpush.msra.mxu0 0.0
    %1457 = vmatpush.msra.mxu0 0.0
    %1458 = vmatpush.msra.mxu0 %v1311
    %1459 = vmatpush.msra.mxu0 %v1309
    %1460 = vmatmul.f32.gmra.mxu0 %v1439
    %v1461 = vpop.f32.mrf.mxu0
    %v1462 = vadd.f32 0.0, %v1461
    %1463 = vmatmul.f32.gmra.mxu0 %v1442
    %v1464 = vpop.f32.mrf.mxu0
    %v1465 = vadd.f32 0.0, %v1464
    %1466 = vdwg.mxu0
    %1469 = vrot.lane.b32.xlu0 %v1240, 64
    %v1470 = vpop.permute.xlu0 %1469
    %1471 = vrot.lane.b32.xlu0 %v1243, 64
    %v1472 = vpop.permute.xlu0 %1471
    %1477 = vrot.lane.b32.xlu0 %v1399, 80
    %v1478 = vpop.permute.xlu0 %1477
    %1479 = vrot.lane.b32.xlu0 %v1402, 80
    %v1480 = vpop.permute.xlu0 %1479
    %1485 = vrot.lane.b32.xlu0 %v1303, 96
    %v1486 = vpop.permute.xlu0 %1485
    %1487 = vrot.lane.b32.xlu0 %v1306, 96
    %v1488 = vpop.permute.xlu0 %1487
    %1493 = vrot.lane.b32.xlu0 %v1462, 112
    %v1494 = vpop.permute.xlu0 %1493
    %1495 = vrot.lane.b32.xlu0 %v1465, 112
    %v1496 = vpop.permute.xlu0 %1495
    %v1499 = vsel %vm501, %v1145, %v1470
    %v1500 = vsel %vm501, %v1146, %v1472
    %v1501 = vsel %vm504, %v1499, %v1478
    %v1502 = vsel %vm504, %v1500, %v1480
    %v1503 = vsel %vm507, %v1501, %v1486
    %v1504 = vsel %vm507, %v1502, %v1488
    %v1505 = vsel %vm510, %v1503, %v1494
    %v1506 = vsel %vm510, %v1504, %v1496
    %v1507 = vpack.c.bf16 %v1506, %v1505
    %1508 = vmatpush.bf16.msra.mxu0 %v553
    %1509 = vmatpush.bf16.msra.mxu0 %v552
    %1510 = vmatpush.bf16.msra.mxu0 %v551
    %1511 = vmatpush.bf16.msra.mxu0 %v550
    %1512 = vmatpush.bf16.msra.mxu0 %v549
    %1513 = vmatpush.bf16.msra.mxu0 %v548
    %1514 = vmatpush.bf16.msra.mxu0 %v547
    %1515 = vmatpush.bf16.msra.mxu0 %v546
    %1516 = vmatmul.bf16.gmra.mxu0 %v1507
    %v1517 = vpop.f32.mrf.mxu0
    %v1518 = vadd.f32 0.0, %v1517
    %v1519 = vpop.f32.mrf.mxu0
    %v1520 = vadd.f32 0.0, %v1519
    %1521 = vdwg.mxu0
    %v1522 = vmul.f32 %v1518, %v107
    %v1523 = vmul.f32 %v1520, %v107
    %v1524 = vsel %vm54, %v1522, 0.0
    %1525 = vadd.xlane.f32.xlu0 %v1524
    %v1526 = vpop.xlane.xlu0 %1525
    %v1527 = vsel %vm54, %v1523, 0.0
    %1528 = vadd.xlane.f32.xlu0 %v1527
    %v1529 = vpop.xlane.xlu0 %1528
    %v1530 = vmul.f32 %v1526, %v67
    %v1531 = vmul.f32 %v1529, %v67
    %v1532 = vmul.f32 %v1522, %v1121
    %v1533 = vmul.f32 %v1523, %v1122
    %v1534 = vsel %vm54, %v1532, 0.0
    %1535 = vadd.xlane.f32.xlu0 %v1534
    %v1536 = vpop.xlane.xlu0 %1535
    %v1537 = vsel %vm54, %v1533, 0.0
    %1538 = vadd.xlane.f32.xlu0 %v1537
    %v1539 = vpop.xlane.xlu0 %1538
    %v1540 = vmul.f32 %v1536, %v67
    %v1541 = vmul.f32 %v1539, %v67
    %v1542 = vsub.f32 %v1522, %v1530
    %v1543 = vsub.f32 %v1523, %v1531
    %v1544 = vmul.f32 %v1121, %v1540
    %v1545 = vmul.f32 %v1122, %v1541
    %v1546 = vsub.f32 %v1542, %v1544
    %v1547 = vsub.f32 %v1543, %v1545
    %v1548 = vmul.f32 %v1110, %v1546
    %v1549 = vmul.f32 %v1120, %v1547
    %v1550 = vsub.f32 %v1077, %v1548
    %v1551 = vsub.f32 %v1078, %v1549
    %v1552 = vsel %vm54, %v1550, 0.0
    %1553 = vadd.xlane.f32.xlu0 %v1552
    %v1554 = vpop.xlane.xlu0 %1553
    %v1555 = vsel %vm54, %v1551, 0.0
    %1556 = vadd.xlane.f32.xlu0 %v1555
    %v1557 = vpop.xlane.xlu0 %1556
    %v1558 = vmul.f32 %v1554, %v67
    %v1559 = vmul.f32 %v1557, %v67
    %v1560 = vsub.f32 %v1550, %v1558
    %v1561 = vsub.f32 %v1551, %v1559
    %v1562 = vmul.f32 %v1560, %v1560
    %v1563 = vmul.f32 %v1561, %v1561
    %v1564 = vsel %vm54, %v1562, 0.0
    %1565 = vadd.xlane.f32.xlu0 %v1564
    %v1566 = vpop.xlane.xlu0 %1565
    %v1567 = vsel %vm54, %v1563, 0.0
    %1568 = vadd.xlane.f32.xlu0 %v1567
    %v1569 = vpop.xlane.xlu0 %1568
    %v1570 = vmul.f32 %v1566, %v67
    %v1571 = vmul.f32 %v1569, %v67
    %v1572 = vadd.f32 %v1570, 1e-05
    %v1573 = vadd.f32 %v1571, 1e-05
    %v1574 = vrsqrt.pop %v1572
    %v1575 = vmul.f32 %v1574, %v1572
    %v1576 = vmul.f32 %v1575, %v1574
    %v1577 = vmul.f32 0.5, %v1576
    %v1578 = vsub.f32 1.5, %v1577
    %v1579 = vmul.f32 %v1574, %v1578
    %vm1580 = vweird.f32 %v1572
    %vm1581 = vweird.f32 %v1574
    %vm1582 = vmor %vm1580, %vm1581
    %v1583 = vsel %vm1582, %v1574, %v1579
    %v1584 = vrsqrt.pop %v1573
    %v1585 = vmul.f32 %v1584, %v1573
    %v1586 = vmul.f32 %v1585, %v1584
    %v1587 = vmul.f32 0.5, %v1586
    %v1588 = vsub.f32 1.5, %v1587
    %v1589 = vmul.f32 %v1584, %v1588
    %vm1590 = vweird.f32 %v1573
    %vm1591 = vweird.f32 %v1584
    %vm1592 = vmor %vm1590, %vm1591
    %v1593 = vsel %vm1592, %v1584, %v1589
    %v1594 = vmul.f32 %v1560, %v1583
    %v1595 = vmul.f32 %v1561, %v1593
    %v1596 = vmul.f32 %v107, %v1594
    %v1597 = vmul.f32 %v107, %v1595
    %v1598 = vadd.f32 %v1596, %v112
    %v1599 = vadd.f32 %v1597, %v112
    %v1600 = vpack.c.bf16 %v1599, %v1598
    %v1602 = vsel %vm54, %v1600, 0
    %1604 = vmatpush.bf16.msra.mxu0 0
    %1605 = vmatpush.bf16.msra.mxu0 0
    %1606 = vmatpush.bf16.msra.mxu0 0
    %1607 = vmatpush.bf16.msra.mxu0 0
    %1608 = vmatpush.bf16.msra.mxu0 0
    %1609 = vmatpush.bf16.msra.mxu0 0
    %1610 = vmatpush.bf16.msra.mxu0 %v126
    %1611 = vmatpush.bf16.msra.mxu0 %v125
    %1612 = vmatmul.bf16.gmra.mxu0 %v1602
    %v1613 = vpop.f32.mrf.mxu0
    %v1614 = vadd.f32 0.0, %v1613
    %v1615 = vpop.f32.mrf.mxu0
    %v1616 = vadd.f32 0.0, %v1615
    %1617 = vdwg.mxu0
    %v1618 = vmax.f32 %v1614, 0.0
    %v1619 = vmax.f32 %v1616, 0.0
    %1622 = vrot.lane.b32.xlu0 %v1614, 64
    %v1623 = vpop.permute.xlu0 %1622
    %1624 = vrot.lane.b32.xlu0 %v1616, 64
    %v1625 = vpop.permute.xlu0 %1624
    %1626 = vrot.lane.b32.xlu0 %v1614, 32
    %v1627 = vpop.permute.xlu0 %1626
    %1628 = vrot.lane.b32.xlu0 %v1616, 32
    %v1629 = vpop.permute.xlu0 %1628
    %v1630 = vsel %vm158, %v1623, 0
    %v1632 = vsel %vm158, %v1625, 0
    %v1634 = vsel %vm158, %v1627, 0
    %v1636 = vsel %vm158, %v1629, 0
    %1638 = vmatpush.xpose.msra.mxu0 0.0
    %1639 = vmatpush.xpose.msra.mxu0 0.0
    %1640 = vmatpush.xpose.msra.mxu0 0.0
    %1641 = vmatpush.xpose.msra.mxu0 0.0
    %1642 = vmatpush.xpose.msra.mxu0 0.0
    %1643 = vmatpush.xpose.msra.mxu0 0.0
    %1644 = vmatpush.xpose.msra.mxu0 0.0
    %1645 = vmatpush.xpose.msra.mxu0 0.0
    %1646 = vmatpush.xpose.msra.mxu0 0.0
    %1647 = vmatpush.xpose.msra.mxu0 0.0
    %1648 = vmatpush.xpose.msra.mxu0 0.0
    %1649 = vmatpush.xpose.msra.mxu0 0.0
    %1650 = vmatpush.xpose.msra.mxu0 0.0
    %1651 = vmatpush.xpose.msra.mxu0 0.0
    %1652 = vmatpush.xpose.msra.mxu0 %v1636
    %1653 = vmatpush.xpose.msra.mxu0 %v1634
    %1654 = vmatmul.f32.gmra.mxu0 %v1630
    %v1655 = vpop.f32.mrf.mxu0
    %v1656 = vadd.f32 0.0, %v1655
    %1657 = vmatmul.f32.gmra.mxu0 %v1632
    %v1658 = vpop.f32.mrf.mxu0
    %v1659 = vadd.f32 0.0, %v1658
    %1660 = vdwg.mxu0
    %v1661 = vmul.f32 %v1656, 0.25
    %v1662 = vmul.f32 %v1659, 0.25
    %v1663 = vadd.f32 %v1661, %v52
    %v1664 = vadd.f32 %v1662, %v53
    %v1665 = vsel %vm158, %v1663, -inf
    %1666 = vmax.xlane.f32.xlu0 %v1665
    %v1667 = vpop.xlane.xlu0 %1666
    %v1668 = vsel %vm158, %v1664, -inf
    %1669 = vmax.xlane.f32.xlu0 %v1668
    %v1670 = vpop.xlane.xlu0 %1669
    %v1671 = vsub.f32 %v1663, %v1667
    %v1672 = vsub.f32 %v1664, %v1670
    %v1673 = vmul.f32 %v1671, 1.442695
    %v1674 = vpow.pop %v1673
    %v1675 = vmul.f32 %v1672, 1.442695
    %v1676 = vpow.pop %v1675
    %v1677 = vsel %vm158, %v1674, 0.0
    %1678 = vadd.xlane.f32.xlu0 %v1677
    %v1679 = vpop.xlane.xlu0 %1678
    %v1680 = vsel %vm158, %v1676, 0.0
    %1681 = vadd.xlane.f32.xlu0 %v1680
    %v1682 = vpop.xlane.xlu0 %1681
    %v1683 = vrcp.pop %v1679
    %v1684 = vrcp.pop %v1682
    %v1685 = vmul.f32 %v1674, %v1683
    %v1686 = vmul.f32 %v1676, %v1684
    %v1690 = vsel %vm158, %v1685, 0
    %v1693 = vsel %vm158, %v1686, 0
    %1695 = vmatpush.msra.mxu0 0.0
    %1696 = vmatpush.msra.mxu0 0.0
    %1697 = vmatpush.msra.mxu0 0.0
    %1698 = vmatpush.msra.mxu0 0.0
    %1699 = vmatpush.msra.mxu0 0.0
    %1700 = vmatpush.msra.mxu0 0.0
    %1701 = vmatpush.msra.mxu0 0.0
    %1702 = vmatpush.msra.mxu0 0.0
    %1703 = vmatpush.msra.mxu0 0.0
    %1704 = vmatpush.msra.mxu0 0.0
    %1705 = vmatpush.msra.mxu0 0.0
    %1706 = vmatpush.msra.mxu0 0.0
    %1707 = vmatpush.msra.mxu0 0.0
    %1708 = vmatpush.msra.mxu0 0.0
    %1709 = vmatpush.msra.mxu0 %v1629
    %1710 = vmatpush.msra.mxu0 %v1627
    %1711 = vmatmul.f32.gmra.mxu0 %v1690
    %v1712 = vpop.f32.mrf.mxu0
    %v1713 = vadd.f32 0.0, %v1712
    %1714 = vmatmul.f32.gmra.mxu0 %v1693
    %v1715 = vpop.f32.mrf.mxu0
    %v1716 = vadd.f32 0.0, %v1715
    %1717 = vdwg.mxu0
    %1718 = vxpose.xlu0.b32.start [1/16] %v1685, 128
    %1719 = vxpose.xlu0.b32.cont [2/16] %v1686, 128
    %1720 = vxpose.xlu0.b32.cont [3/16] 0.0, 128
    %1721 = vxpose.xlu0.b32.cont [4/16] 0.0, 128
    %1722 = vxpose.xlu0.b32.cont [5/16] 0.0, 128
    %1723 = vxpose.xlu0.b32.cont [6/16] 0.0, 128
    %1724 = vxpose.xlu0.b32.cont [7/16] 0.0, 128
    %1725 = vxpose.xlu0.b32.cont [8/16] 0.0, 128
    %1726 = vxpose.xlu0.b32.cont [9/16] 0.0, 128
    %1727 = vxpose.xlu0.b32.cont [10/16] 0.0, 128
    %1728 = vxpose.xlu0.b32.cont [11/16] 0.0, 128
    %1729 = vxpose.xlu0.b32.cont [12/16] 0.0, 128
    %1730 = vxpose.xlu0.b32.cont [13/16] 0.0, 128
    %1731 = vxpose.xlu0.b32.cont [14/16] 0.0, 128
    %1732 = vxpose.xlu0.b32.cont [15/16] 0.0, 128
    %1733 = vxpose.xlu0.b32.end [16/16] 0.0, 128
    %v1734 = vpop.trf.xlu0
    %v1735 = vpop.trf.xlu0
    %v1736 = vpop.trf.xlu0
    %v1737 = vpop.trf.xlu0
    %v1738 = vpop.trf.xlu0
    %v1739 = vpop.trf.xlu0
    %v1740 = vpop.trf.xlu0
    %v1741 = vpop.trf.xlu0
    %v1742 = vpop.trf.xlu0
    %v1743 = vpop.trf.xlu0
    %v1744 = vpop.trf.xlu0
    %v1745 = vpop.trf.xlu0
    %v1746 = vpop.trf.xlu0
    %v1747 = vpop.trf.xlu0
    %v1748 = vpop.trf.xlu0
    %v1749 = vpop.trf.xlu0
    %v1753 = vsel %vm158, %v1734, 0
    %v1756 = vsel %vm158, %v1735, 0
    %1758 = vmatpush.msra.mxu0 0.0
    %1759 = vmatpush.msra.mxu0 0.0
    %1760 = vmatpush.msra.mxu0 0.0
    %1761 = vmatpush.msra.mxu0 0.0
    %1762 = vmatpush.msra.mxu0 0.0
    %1763 = vmatpush.msra.mxu0 0.0
    %1764 = vmatpush.msra.mxu0 0.0
    %1765 = vmatpush.msra.mxu0 0.0
    %1766 = vmatpush.msra.mxu0 0.0
    %1767 = vmatpush.msra.mxu0 0.0
    %1768 = vmatpush.msra.mxu0 0.0
    %1769 = vmatpush.msra.mxu0 0.0
    %1770 = vmatpush.msra.mxu0 0.0
    %1771 = vmatpush.msra.mxu0 0.0
    %1772 = vmatpush.msra.mxu0 %v1625
    %1773 = vmatpush.msra.mxu0 %v1623
    %1774 = vmatmul.f32.gmra.mxu0 %v1753
    %v1775 = vpop.f32.mrf.mxu0
    %v1776 = vadd.f32 0.0, %v1775
    %1777 = vmatmul.f32.gmra.mxu0 %v1756
    %v1778 = vpop.f32.mrf.mxu0
    %v1779 = vadd.f32 0.0, %v1778
    %1780 = vdwg.mxu0
    %1781 = vrot.lane.b32.xlu0 %v1614, 48
    %v1782 = vpop.permute.xlu0 %1781
    %1783 = vrot.lane.b32.xlu0 %v1616, 48
    %v1784 = vpop.permute.xlu0 %1783
    %1785 = vrot.lane.b32.xlu0 %v1614, 16
    %v1786 = vpop.permute.xlu0 %1785
    %1787 = vrot.lane.b32.xlu0 %v1616, 16
    %v1788 = vpop.permute.xlu0 %1787
    %v1789 = vsel %vm158, %v1782, 0
    %v1791 = vsel %vm158, %v1784, 0
    %v1793 = vsel %vm158, %v1786, 0
    %v1795 = vsel %vm158, %v1788, 0
    %1797 = vmatpush.xpose.msra.mxu0 0.0
    %1798 = vmatpush.xpose.msra.mxu0 0.0
    %1799 = vmatpush.xpose.msra.mxu0 0.0
    %1800 = vmatpush.xpose.msra.mxu0 0.0
    %1801 = vmatpush.xpose.msra.mxu0 0.0
    %1802 = vmatpush.xpose.msra.mxu0 0.0
    %1803 = vmatpush.xpose.msra.mxu0 0.0
    %1804 = vmatpush.xpose.msra.mxu0 0.0
    %1805 = vmatpush.xpose.msra.mxu0 0.0
    %1806 = vmatpush.xpose.msra.mxu0 0.0
    %1807 = vmatpush.xpose.msra.mxu0 0.0
    %1808 = vmatpush.xpose.msra.mxu0 0.0
    %1809 = vmatpush.xpose.msra.mxu0 0.0
    %1810 = vmatpush.xpose.msra.mxu0 0.0
    %1811 = vmatpush.xpose.msra.mxu0 %v1795
    %1812 = vmatpush.xpose.msra.mxu0 %v1793
    %1813 = vmatmul.f32.gmra.mxu0 %v1789
    %v1814 = vpop.f32.mrf.mxu0
    %v1815 = vadd.f32 0.0, %v1814
    %1816 = vmatmul.f32.gmra.mxu0 %v1791
    %v1817 = vpop.f32.mrf.mxu0
    %v1818 = vadd.f32 0.0, %v1817
    %1819 = vdwg.mxu0
    %v1820 = vmul.f32 %v1815, 0.25
    %v1821 = vmul.f32 %v1818, 0.25
    %v1822 = vadd.f32 %v1820, %v52
    %v1823 = vadd.f32 %v1821, %v53
    %v1824 = vsel %vm158, %v1822, -inf
    %1825 = vmax.xlane.f32.xlu0 %v1824
    %v1826 = vpop.xlane.xlu0 %1825
    %v1827 = vsel %vm158, %v1823, -inf
    %1828 = vmax.xlane.f32.xlu0 %v1827
    %v1829 = vpop.xlane.xlu0 %1828
    %v1830 = vsub.f32 %v1822, %v1826
    %v1831 = vsub.f32 %v1823, %v1829
    %v1832 = vmul.f32 %v1830, 1.442695
    %v1833 = vpow.pop %v1832
    %v1834 = vmul.f32 %v1831, 1.442695
    %v1835 = vpow.pop %v1834
    %v1836 = vsel %vm158, %v1833, 0.0
    %1837 = vadd.xlane.f32.xlu0 %v1836
    %v1838 = vpop.xlane.xlu0 %1837
    %v1839 = vsel %vm158, %v1835, 0.0
    %1840 = vadd.xlane.f32.xlu0 %v1839
    %v1841 = vpop.xlane.xlu0 %1840
    %v1842 = vrcp.pop %v1838
    %v1843 = vrcp.pop %v1841
    %v1844 = vmul.f32 %v1833, %v1842
    %v1845 = vmul.f32 %v1835, %v1843
    %v1849 = vsel %vm158, %v1844, 0
    %v1852 = vsel %vm158, %v1845, 0
    %1854 = vmatpush.msra.mxu0 0.0
    %1855 = vmatpush.msra.mxu0 0.0
    %1856 = vmatpush.msra.mxu0 0.0
    %1857 = vmatpush.msra.mxu0 0.0
    %1858 = vmatpush.msra.mxu0 0.0
    %1859 = vmatpush.msra.mxu0 0.0
    %1860 = vmatpush.msra.mxu0 0.0
    %1861 = vmatpush.msra.mxu0 0.0
    %1862 = vmatpush.msra.mxu0 0.0
    %1863 = vmatpush.msra.mxu0 0.0
    %1864 = vmatpush.msra.mxu0 0.0
    %1865 = vmatpush.msra.mxu0 0.0
    %1866 = vmatpush.msra.mxu0 0.0
    %1867 = vmatpush.msra.mxu0 0.0
    %1868 = vmatpush.msra.mxu0 %v1788
    %1869 = vmatpush.msra.mxu0 %v1786
    %1870 = vmatmul.f32.gmra.mxu0 %v1849
    %v1871 = vpop.f32.mrf.mxu0
    %v1872 = vadd.f32 0.0, %v1871
    %1873 = vmatmul.f32.gmra.mxu0 %v1852
    %v1874 = vpop.f32.mrf.mxu0
    %v1875 = vadd.f32 0.0, %v1874
    %1876 = vdwg.mxu0
    %1877 = vxpose.xlu0.b32.start [1/16] %v1844, 128
    %1878 = vxpose.xlu0.b32.cont [2/16] %v1845, 128
    %1879 = vxpose.xlu0.b32.cont [3/16] 0.0, 128
    %1880 = vxpose.xlu0.b32.cont [4/16] 0.0, 128
    %1881 = vxpose.xlu0.b32.cont [5/16] 0.0, 128
    %1882 = vxpose.xlu0.b32.cont [6/16] 0.0, 128
    %1883 = vxpose.xlu0.b32.cont [7/16] 0.0, 128
    %1884 = vxpose.xlu0.b32.cont [8/16] 0.0, 128
    %1885 = vxpose.xlu0.b32.cont [9/16] 0.0, 128
    %1886 = vxpose.xlu0.b32.cont [10/16] 0.0, 128
    %1887 = vxpose.xlu0.b32.cont [11/16] 0.0, 128
    %1888 = vxpose.xlu0.b32.cont [12/16] 0.0, 128
    %1889 = vxpose.xlu0.b32.cont [13/16] 0.0, 128
    %1890 = vxpose.xlu0.b32.cont [14/16] 0.0, 128
    %1891 = vxpose.xlu0.b32.cont [15/16] 0.0, 128
    %1892 = vxpose.xlu0.b32.end [16/16] 0.0, 128
    %v1893 = vpop.trf.xlu0
    %v1894 = vpop.trf.xlu0
    %v1895 = vpop.trf.xlu0
    %v1896 = vpop.trf.xlu0
    %v1897 = vpop.trf.xlu0
    %v1898 = vpop.trf.xlu0
    %v1899 = vpop.trf.xlu0
    %v1900 = vpop.trf.xlu0
    %v1901 = vpop.trf.xlu0
    %v1902 = vpop.trf.xlu0
    %v1903 = vpop.trf.xlu0
    %v1904 = vpop.trf.xlu0
    %v1905 = vpop.trf.xlu0
    %v1906 = vpop.trf.xlu0
    %v1907 = vpop.trf.xlu0
    %v1908 = vpop.trf.xlu0
    %v1912 = vsel %vm158, %v1893, 0
    %v1915 = vsel %vm158, %v1894, 0
    %1917 = vmatpush.msra.mxu0 0.0
    %1918 = vmatpush.msra.mxu0 0.0
    %1919 = vmatpush.msra.mxu0 0.0
    %1920 = vmatpush.msra.mxu0 0.0
    %1921 = vmatpush.msra.mxu0 0.0
    %1922 = vmatpush.msra.mxu0 0.0
    %1923 = vmatpush.msra.mxu0 0.0
    %1924 = vmatpush.msra.mxu0 0.0
    %1925 = vmatpush.msra.mxu0 0.0
    %1926 = vmatpush.msra.mxu0 0.0
    %1927 = vmatpush.msra.mxu0 0.0
    %1928 = vmatpush.msra.mxu0 0.0
    %1929 = vmatpush.msra.mxu0 0.0
    %1930 = vmatpush.msra.mxu0 0.0
    %1931 = vmatpush.msra.mxu0 %v1784
    %1932 = vmatpush.msra.mxu0 %v1782
    %1933 = vmatmul.f32.gmra.mxu0 %v1912
    %v1934 = vpop.f32.mrf.mxu0
    %v1935 = vadd.f32 0.0, %v1934
    %1936 = vmatmul.f32.gmra.mxu0 %v1915
    %v1937 = vpop.f32.mrf.mxu0
    %v1938 = vadd.f32 0.0, %v1937
    %1939 = vdwg.mxu0
    %1942 = vrot.lane.b32.xlu0 %v1713, 64
    %v1943 = vpop.permute.xlu0 %1942
    %1944 = vrot.lane.b32.xlu0 %v1716, 64
    %v1945 = vpop.permute.xlu0 %1944
    %1950 = vrot.lane.b32.xlu0 %v1872, 80
    %v1951 = vpop.permute.xlu0 %1950
    %1952 = vrot.lane.b32.xlu0 %v1875, 80
    %v1953 = vpop.permute.xlu0 %1952
    %1958 = vrot.lane.b32.xlu0 %v1776, 96
    %v1959 = vpop.permute.xlu0 %1958
    %1960 = vrot.lane.b32.xlu0 %v1779, 96
    %v1961 = vpop.permute.xlu0 %1960
    %1966 = vrot.lane.b32.xlu0 %v1935, 112
    %v1967 = vpop.permute.xlu0 %1966
    %1968 = vrot.lane.b32.xlu0 %v1938, 112
    %v1969 = vpop.permute.xlu0 %1968
    %v1972 = vsel %vm501, %v1618, %v1943
    %v1973 = vsel %vm501, %v1619, %v1945
    %v1974 = vsel %vm504, %v1972, %v1951
    %v1975 = vsel %vm504, %v1973, %v1953
    %v1976 = vsel %vm507, %v1974, %v1959
    %v1977 = vsel %vm507, %v1975, %v1961
    %v1978 = vsel %vm510, %v1976, %v1967
    %v1979 = vsel %vm510, %v1977, %v1969
    %v1980 = vpack.c.bf16 %v1979, %v1978
    %1981 = vmatpush.bf16.msra.mxu0 %v553
    %1982 = vmatpush.bf16.msra.mxu0 %v552
    %1983 = vmatpush.bf16.msra.mxu0 %v551
    %1984 = vmatpush.bf16.msra.mxu0 %v550
    %1985 = vmatpush.bf16.msra.mxu0 %v549
    %1986 = vmatpush.bf16.msra.mxu0 %v548
    %1987 = vmatpush.bf16.msra.mxu0 %v547
    %1988 = vmatpush.bf16.msra.mxu0 %v546
    %1989 = vmatmul.bf16.gmra.mxu0 %v1980
    %v1990 = vpop.f32.mrf.mxu0
    %v1991 = vadd.f32 0.0, %v1990
    %v1992 = vpop.f32.mrf.mxu0
    %v1993 = vadd.f32 0.0, %v1992
    %1994 = vdwg.mxu0
    %v1995 = vmul.f32 %v1991, %v107
    %v1996 = vmul.f32 %v1993, %v107
    %v1997 = vsel %vm54, %v1995, 0.0
    %1998 = vadd.xlane.f32.xlu0 %v1997
    %v1999 = vpop.xlane.xlu0 %1998
    %v2000 = vsel %vm54, %v1996, 0.0
    %2001 = vadd.xlane.f32.xlu0 %v2000
    %v2002 = vpop.xlane.xlu0 %2001
    %v2003 = vmul.f32 %v1999, %v67
    %v2004 = vmul.f32 %v2002, %v67
    %v2005 = vmul.f32 %v1995, %v1594
    %v2006 = vmul.f32 %v1996, %v1595
    %v2007 = vsel %vm54, %v2005, 0.0
    %2008 = vadd.xlane.f32.xlu0 %v2007
    %v2009 = vpop.xlane.xlu0 %2008
    %v2010 = vsel %vm54, %v2006, 0.0
    %2011 = vadd.xlane.f32.xlu0 %v2010
    %v2012 = vpop.xlane.xlu0 %2011
    %v2013 = vmul.f32 %v2009, %v67
    %v2014 = vmul.f32 %v2012, %v67
    %v2015 = vsub.f32 %v1995, %v2003
    %v2016 = vsub.f32 %v1996, %v2004
    %v2017 = vmul.f32 %v1594, %v2013
    %v2018 = vmul.f32 %v1595, %v2014
    %v2019 = vsub.f32 %v2015, %v2017
    %v2020 = vsub.f32 %v2016, %v2018
    %v2021 = vmul.f32 %v1583, %v2019
    %v2022 = vmul.f32 %v1593, %v2020
    %v2023 = vsub.f32 %v1550, %v2021
    %v2024 = vsub.f32 %v1551, %v2022
    %v2025 = vsel %vm54, %v2023, 0.0
    %2026 = vadd.xlane.f32.xlu0 %v2025
    %v2027 = vpop.xlane.xlu0 %2026
    %v2028 = vsel %vm54, %v2024, 0.0
    %2029 = vadd.xlane.f32.xlu0 %v2028
    %v2030 = vpop.xlane.xlu0 %2029
    %v2031 = vmul.f32 %v2027, %v67
    %v2032 = vmul.f32 %v2030, %v67
    %v2033 = vsub.f32 %v2023, %v2031
    %v2034 = vsub.f32 %v2024, %v2032
    %v2035 = vmul.f32 %v2033, %v2033
    %v2036 = vmul.f32 %v2034, %v2034
    %v2037 = vsel %vm54, %v2035, 0.0
    %2038 = vadd.xlane.f32.xlu0 %v2037
    %v2039 = vpop.xlane.xlu0 %2038
    %v2040 = vsel %vm54, %v2036, 0.0
    %2041 = vadd.xlane.f32.xlu0 %v2040
    %v2042 = vpop.xlane.xlu0 %2041
    %v2043 = vmul.f32 %v2039, %v67
    %v2044 = vmul.f32 %v2042, %v67
    %v2045 = vadd.f32 %v2043, 1e-05
    %v2046 = vadd.f32 %v2044, 1e-05
    %v2047 = vrsqrt.pop %v2045
    %v2048 = vmul.f32 %v2047, %v2045
    %v2049 = vmul.f32 %v2048, %v2047
    %v2050 = vmul.f32 0.5, %v2049
    %v2051 = vsub.f32 1.5, %v2050
    %v2052 = vmul.f32 %v2047, %v2051
    %vm2053 = vweird.f32 %v2045
    %vm2054 = vweird.f32 %v2047
    %vm2055 = vmor %vm2053, %vm2054
    %v2056 = vsel %vm2055, %v2047, %v2052
    %v2057 = vrsqrt.pop %v2046
    %v2058 = vmul.f32 %v2057, %v2046
    %v2059 = vmul.f32 %v2058, %v2057
    %v2060 = vmul.f32 0.5, %v2059
    %v2061 = vsub.f32 1.5, %v2060
    %v2062 = vmul.f32 %v2057, %v2061
    %vm2063 = vweird.f32 %v2046
    %vm2064 = vweird.f32 %v2057
    %vm2065 = vmor %vm2063, %vm2064
    %v2066 = vsel %vm2065, %v2057, %v2062
    %v2067 = vmul.f32 %v2033, %v2056
    %v2068 = vmul.f32 %v2034, %v2066
    %v2069 = vmul.f32 %v107, %v2067
    %v2070 = vmul.f32 %v107, %v2068
    %v2071 = vadd.f32 %v2069, %v112
    %v2072 = vadd.f32 %v2070, %v112
    %v2073 = vpack.c.bf16 %v2072, %v2071
    %v2075 = vsel %vm54, %v2073, 0
    %2077 = vmatpush.bf16.msra.mxu0 0
    %2078 = vmatpush.bf16.msra.mxu0 0
    %2079 = vmatpush.bf16.msra.mxu0 0
    %2080 = vmatpush.bf16.msra.mxu0 0
    %2081 = vmatpush.bf16.msra.mxu0 0
    %2082 = vmatpush.bf16.msra.mxu0 0
    %2083 = vmatpush.bf16.msra.mxu0 %v126
    %2084 = vmatpush.bf16.msra.mxu0 %v125
    %2085 = vmatmul.bf16.gmra.mxu0 %v2075
    %v2086 = vpop.f32.mrf.mxu0
    %v2087 = vadd.f32 0.0, %v2086
    %v2088 = vpop.f32.mrf.mxu0
    %v2089 = vadd.f32 0.0, %v2088
    %2090 = vdwg.mxu0
    %v2091 = vmax.f32 %v2087, 0.0
    %v2092 = vmax.f32 %v2089, 0.0
    %2095 = vrot.lane.b32.xlu0 %v2087, 64
    %v2096 = vpop.permute.xlu0 %2095
    %2097 = vrot.lane.b32.xlu0 %v2089, 64
    %v2098 = vpop.permute.xlu0 %2097
    %2099 = vrot.lane.b32.xlu0 %v2087, 32
    %v2100 = vpop.permute.xlu0 %2099
    %2101 = vrot.lane.b32.xlu0 %v2089, 32
    %v2102 = vpop.permute.xlu0 %2101
    %v2103 = vsel %vm158, %v2096, 0
    %v2105 = vsel %vm158, %v2098, 0
    %v2107 = vsel %vm158, %v2100, 0
    %v2109 = vsel %vm158, %v2102, 0
    %2111 = vmatpush.xpose.msra.mxu0 0.0
    %2112 = vmatpush.xpose.msra.mxu0 0.0
    %2113 = vmatpush.xpose.msra.mxu0 0.0
    %2114 = vmatpush.xpose.msra.mxu0 0.0
    %2115 = vmatpush.xpose.msra.mxu0 0.0
    %2116 = vmatpush.xpose.msra.mxu0 0.0
    %2117 = vmatpush.xpose.msra.mxu0 0.0
    %2118 = vmatpush.xpose.msra.mxu0 0.0
    %2119 = vmatpush.xpose.msra.mxu0 0.0
    %2120 = vmatpush.xpose.msra.mxu0 0.0
    %2121 = vmatpush.xpose.msra.mxu0 0.0
    %2122 = vmatpush.xpose.msra.mxu0 0.0
    %2123 = vmatpush.xpose.msra.mxu0 0.0
    %2124 = vmatpush.xpose.msra.mxu0 0.0
    %2125 = vmatpush.xpose.msra.mxu0 %v2109
    %2126 = vmatpush.xpose.msra.mxu0 %v2107
    %2127 = vmatmul.f32.gmra.mxu0 %v2103
    %v2128 = vpop.f32.mrf.mxu0
    %v2129 = vadd.f32 0.0, %v2128
    %2130 = vmatmul.f32.gmra.mxu0 %v2105
    %v2131 = vpop.f32.mrf.mxu0
    %v2132 = vadd.f32 0.0, %v2131
    %2133 = vdwg.mxu0
    %v2134 = vmul.f32 %v2129, 0.25
    %v2135 = vmul.f32 %v2132, 0.25
    %v2136 = vadd.f32 %v2134, %v52
    %v2137 = vadd.f32 %v2135, %v53
    %v2138 = vsel %vm158, %v2136, -inf
    %2139 = vmax.xlane.f32.xlu0 %v2138
    %v2140 = vpop.xlane.xlu0 %2139
    %v2141 = vsel %vm158, %v2137, -inf
    %2142 = vmax.xlane.f32.xlu0 %v2141
    %v2143 = vpop.xlane.xlu0 %2142
    %v2144 = vsub.f32 %v2136, %v2140
    %v2145 = vsub.f32 %v2137, %v2143
    %v2146 = vmul.f32 %v2144, 1.442695
    %v2147 = vpow.pop %v2146
    %v2148 = vmul.f32 %v2145, 1.442695
    %v2149 = vpow.pop %v2148
    %v2150 = vsel %vm158, %v2147, 0.0
    %2151 = vadd.xlane.f32.xlu0 %v2150
    %v2152 = vpop.xlane.xlu0 %2151
    %v2153 = vsel %vm158, %v2149, 0.0
    %2154 = vadd.xlane.f32.xlu0 %v2153
    %v2155 = vpop.xlane.xlu0 %2154
    %v2156 = vrcp.pop %v2152
    %v2157 = vrcp.pop %v2155
    %v2158 = vmul.f32 %v2147, %v2156
    %v2159 = vmul.f32 %v2149, %v2157
    %v2163 = vsel %vm158, %v2158, 0
    %v2166 = vsel %vm158, %v2159, 0
    %2168 = vmatpush.msra.mxu0 0.0
    %2169 = vmatpush.msra.mxu0 0.0
    %2170 = vmatpush.msra.mxu0 0.0
    %2171 = vmatpush.msra.mxu0 0.0
    %2172 = vmatpush.msra.mxu0 0.0
    %2173 = vmatpush.msra.mxu0 0.0
    %2174 = vmatpush.msra.mxu0 0.0
    %2175 = vmatpush.msra.mxu0 0.0
    %2176 = vmatpush.msra.mxu0 0.0
    %2177 = vmatpush.msra.mxu0 0.0
    %2178 = vmatpush.msra.mxu0 0.0
    %2179 = vmatpush.msra.mxu0 0.0
    %2180 = vmatpush.msra.mxu0 0.0
    %2181 = vmatpush.msra.mxu0 0.0
    %2182 = vmatpush.msra.mxu0 %v2102
    %2183 = vmatpush.msra.mxu0 %v2100
    %2184 = vmatmul.f32.gmra.mxu0 %v2163
    %v2185 = vpop.f32.mrf.mxu0
    %v2186 = vadd.f32 0.0, %v2185
    %2187 = vmatmul.f32.gmra.mxu0 %v2166
    %v2188 = vpop.f32.mrf.mxu0
    %v2189 = vadd.f32 0.0, %v2188
    %2190 = vdwg.mxu0
    %2191 = vxpose.xlu0.b32.start [1/16] %v2158, 128
    %2192 = vxpose.xlu0.b32.cont [2/16] %v2159, 128
    %2193 = vxpose.xlu0.b32.cont [3/16] 0.0, 128
    %2194 = vxpose.xlu0.b32.cont [4/16] 0.0, 128
    %2195 = vxpose.xlu0.b32.cont [5/16] 0.0, 128
    %2196 = vxpose.xlu0.b32.cont [6/16] 0.0, 128
    %2197 = vxpose.xlu0.b32.cont [7/16] 0.0, 128
    %2198 = vxpose.xlu0.b32.cont [8/16] 0.0, 128
    %2199 = vxpose.xlu0.b32.cont [9/16] 0.0, 128
    %2200 = vxpose.xlu0.b32.cont [10/16] 0.0, 128
    %2201 = vxpose.xlu0.b32.cont [11/16] 0.0, 128
    %2202 = vxpose.xlu0.b32.cont [12/16] 0.0, 128
    %2203 = vxpose.xlu0.b32.cont [13/16] 0.0, 128
    %2204 = vxpose.xlu0.b32.cont [14/16] 0.0, 128
    %2205 = vxpose.xlu0.b32.cont [15/16] 0.0, 128
    %2206 = vxpose.xlu0.b32.end [16/16] 0.0, 128
    %v2207 = vpop.trf.xlu0
    %v2208 = vpop.trf.xlu0
    %v2209 = vpop.trf.xlu0
    %v2210 = vpop.trf.xlu0
    %v2211 = vpop.trf.xlu0
    %v2212 = vpop.trf.xlu0
    %v2213 = vpop.trf.xlu0
    %v2214 = vpop.trf.xlu0
    %v2215 = vpop.trf.xlu0
    %v2216 = vpop.trf.xlu0
    %v2217 = vpop.trf.xlu0
    %v2218 = vpop.trf.xlu0
    %v2219 = vpop.trf.xlu0
    %v2220 = vpop.trf.xlu0
    %v2221 = vpop.trf.xlu0
    %v2222 = vpop.trf.xlu0
    %v2226 = vsel %vm158, %v2207, 0
    %v2229 = vsel %vm158, %v2208, 0
    %2231 = vmatpush.msra.mxu0 0.0
    %2232 = vmatpush.msra.mxu0 0.0
    %2233 = vmatpush.msra.mxu0 0.0
    %2234 = vmatpush.msra.mxu0 0.0
    %2235 = vmatpush.msra.mxu0 0.0
    %2236 = vmatpush.msra.mxu0 0.0
    %2237 = vmatpush.msra.mxu0 0.0
    %2238 = vmatpush.msra.mxu0 0.0
    %2239 = vmatpush.msra.mxu0 0.0
    %2240 = vmatpush.msra.mxu0 0.0
    %2241 = vmatpush.msra.mxu0 0.0
    %2242 = vmatpush.msra.mxu0 0.0
    %2243 = vmatpush.msra.mxu0 0.0
    %2244 = vmatpush.msra.mxu0 0.0
    %2245 = vmatpush.msra.mxu0 %v2098
    %2246 = vmatpush.msra.mxu0 %v2096
    %2247 = vmatmul.f32.gmra.mxu0 %v2226
    %v2248 = vpop.f32.mrf.mxu0
    %v2249 = vadd.f32 0.0, %v2248
    %2250 = vmatmul.f32.gmra.mxu0 %v2229
    %v2251 = vpop.f32.mrf.mxu0
    %v2252 = vadd.f32 0.0, %v2251
    %2253 = vdwg.mxu0
    %2254 = vrot.lane.b32.xlu0 %v2087, 48
    %v2255 = vpop.permute.xlu0 %2254
    %2256 = vrot.lane.b32.xlu0 %v2089, 48
    %v2257 = vpop.permute.xlu0 %2256
    %2258 = vrot.lane.b32.xlu0 %v2087, 16
    %v2259 = vpop.permute.xlu0 %2258
    %2260 = vrot.lane.b32.xlu0 %v2089, 16
    %v2261 = vpop.permute.xlu0 %2260
    %v2262 = vsel %vm158, %v2255, 0
    %v2264 = vsel %vm158, %v2257, 0
    %v2266 = vsel %vm158, %v2259, 0
    %v2268 = vsel %vm158, %v2261, 0
    %2270 = vmatpush.xpose.msra.mxu0 0.0
    %2271 = vmatpush.xpose.msra.mxu0 0.0
    %2272 = vmatpush.xpose.msra.mxu0 0.0
    %2273 = vmatpush.xpose.msra.mxu0 0.0
    %2274 = vmatpush.xpose.msra.mxu0 0.0
    %2275 = vmatpush.xpose.msra.mxu0 0.0
    %2276 = vmatpush.xpose.msra.mxu0 0.0
    %2277 = vmatpush.xpose.msra.mxu0 0.0
    %2278 = vmatpush.xpose.msra.mxu0 0.0
    %2279 = vmatpush.xpose.msra.mxu0 0.0
    %2280 = vmatpush.xpose.msra.mxu0 0.0
    %2281 = vmatpush.xpose.msra.mxu0 0.0
    %2282 = vmatpush.xpose.msra.mxu0 0.0
    %2283 = vmatpush.xpose.msra.mxu0 0.0
    %2284 = vmatpush.xpose.msra.mxu0 %v2268
    %2285 = vmatpush.xpose.msra.mxu0 %v2266
    %2286 = vmatmul.f32.gmra.mxu0 %v2262
    %v2287 = vpop.f32.mrf.mxu0
    %v2288 = vadd.f32 0.0, %v2287
    %2289 = vmatmul.f32.gmra.mxu0 %v2264
    %v2290 = vpop.f32.mrf.mxu0
    %v2291 = vadd.f32 0.0, %v2290
    %2292 = vdwg.mxu0
    %v2293 = vmul.f32 %v2288, 0.25
    %v2294 = vmul.f32 %v2291, 0.25
    %v2295 = vadd.f32 %v2293, %v52
    %v2296 = vadd.f32 %v2294, %v53
    %v2297 = vsel %vm158, %v2295, -inf
    %2298 = vmax.xlane.f32.xlu0 %v2297
    %v2299 = vpop.xlane.xlu0 %2298
    %v2300 = vsel %vm158, %v2296, -inf
    %2301 = vmax.xlane.f32.xlu0 %v2300
    %v2302 = vpop.xlane.xlu0 %2301
    %v2303 = vsub.f32 %v2295, %v2299
    %v2304 = vsub.f32 %v2296, %v2302
    %v2305 = vmul.f32 %v2303, 1.442695
    %v2306 = vpow.pop %v2305
    %v2307 = vmul.f32 %v2304, 1.442695
    %v2308 = vpow.pop %v2307
    %v2309 = vsel %vm158, %v2306, 0.0
    %2310 = vadd.xlane.f32.xlu0 %v2309
    %v2311 = vpop.xlane.xlu0 %2310
    %v2312 = vsel %vm158, %v2308, 0.0
    %2313 = vadd.xlane.f32.xlu0 %v2312
    %v2314 = vpop.xlane.xlu0 %2313
    %v2315 = vrcp.pop %v2311
    %v2316 = vrcp.pop %v2314
    %v2317 = vmul.f32 %v2306, %v2315
    %v2318 = vmul.f32 %v2308, %v2316
    %v2322 = vsel %vm158, %v2317, 0
    %v2325 = vsel %vm158, %v2318, 0
    %2327 = vmatpush.msra.mxu0 0.0
    %2328 = vmatpush.msra.mxu0 0.0
    %2329 = vmatpush.msra.mxu0 0.0
    %2330 = vmatpush.msra.mxu0 0.0
    %2331 = vmatpush.msra.mxu0 0.0
    %2332 = vmatpush.msra.mxu0 0.0
    %2333 = vmatpush.msra.mxu0 0.0
    %2334 = vmatpush.msra.mxu0 0.0
    %2335 = vmatpush.msra.mxu0 0.0
    %2336 = vmatpush.msra.mxu0 0.0
    %2337 = vmatpush.msra.mxu0 0.0
    %2338 = vmatpush.msra.mxu0 0.0
    %2339 = vmatpush.msra.mxu0 0.0
    %2340 = vmatpush.msra.mxu0 0.0
    %2341 = vmatpush.msra.mxu0 %v2261
    %2342 = vmatpush.msra.mxu0 %v2259
    %2343 = vmatmul.f32.gmra.mxu0 %v2322
    %v2344 = vpop.f32.mrf.mxu0
    %v2345 = vadd.f32 0.0, %v2344
    %2346 = vmatmul.f32.gmra.mxu0 %v2325
    %v2347 = vpop.f32.mrf.mxu0
    %v2348 = vadd.f32 0.0, %v2347
    %2349 = vdwg.mxu0
    %2350 = vxpose.xlu0.b32.start [1/16] %v2317, 128
    %2351 = vxpose.xlu0.b32.cont [2/16] %v2318, 128
    %2352 = vxpose.xlu0.b32.cont [3/16] 0.0, 128
    %2353 = vxpose.xlu0.b32.cont [4/16] 0.0, 128
    %2354 = vxpose.xlu0.b32.cont [5/16] 0.0, 128
    %2355 = vxpose.xlu0.b32.cont [6/16] 0.0, 128
    %2356 = vxpose.xlu0.b32.cont [7/16] 0.0, 128
    %2357 = vxpose.xlu0.b32.cont [8/16] 0.0, 128
    %2358 = vxpose.xlu0.b32.cont [9/16] 0.0, 128
    %2359 = vxpose.xlu0.b32.cont [10/16] 0.0, 128
    %2360 = vxpose.xlu0.b32.cont [11/16] 0.0, 128
    %2361 = vxpose.xlu0.b32.cont [12/16] 0.0, 128
    %2362 = vxpose.xlu0.b32.cont [13/16] 0.0, 128
    %2363 = vxpose.xlu0.b32.cont [14/16] 0.0, 128
    %2364 = vxpose.xlu0.b32.cont [15/16] 0.0, 128
    %2365 = vxpose.xlu0.b32.end [16/16] 0.0, 128
    %v2366 = vpop.trf.xlu0
    %v2367 = vpop.trf.xlu0
    %v2368 = vpop.trf.xlu0
    %v2369 = vpop.trf.xlu0
    %v2370 = vpop.trf.xlu0
    %v2371 = vpop.trf.xlu0
    %v2372 = vpop.trf.xlu0
    %v2373 = vpop.trf.xlu0
    %v2374 = vpop.trf.xlu0
    %v2375 = vpop.trf.xlu0
    %v2376 = vpop.trf.xlu0
    %v2377 = vpop.trf.xlu0
    %v2378 = vpop.trf.xlu0
    %v2379 = vpop.trf.xlu0
    %v2380 = vpop.trf.xlu0
    %v2381 = vpop.trf.xlu0
    %v2385 = vsel %vm158, %v2366, 0
    %v2388 = vsel %vm158, %v2367, 0
    %2390 = vmatpush.msra.mxu0 0.0
    %2391 = vmatpush.msra.mxu0 0.0
    %2392 = vmatpush.msra.mxu0 0.0
    %2393 = vmatpush.msra.mxu0 0.0
    %2394 = vmatpush.msra.mxu0 0.0
    %2395 = vmatpush.msra.mxu0 0.0
    %2396 = vmatpush.msra.mxu0 0.0
    %2397 = vmatpush.msra.mxu0 0.0
    %2398 = vmatpush.msra.mxu0 0.0
    %2399 = vmatpush.msra.mxu0 0.0
    %2400 = vmatpush.msra.mxu0 0.0
    %2401 = vmatpush.msra.mxu0 0.0
    %2402 = vmatpush.msra.mxu0 0.0
    %2403 = vmatpush.msra.mxu0 0.0
    %2404 = vmatpush.msra.mxu0 %v2257
    %2405 = vmatpush.msra.mxu0 %v2255
    %2406 = vmatmul.f32.gmra.mxu0 %v2385
    %v2407 = vpop.f32.mrf.mxu0
    %v2408 = vadd.f32 0.0, %v2407
    %2409 = vmatmul.f32.gmra.mxu0 %v2388
    %v2410 = vpop.f32.mrf.mxu0
    %v2411 = vadd.f32 0.0, %v2410
    %2412 = vdwg.mxu0
    %2415 = vrot.lane.b32.xlu0 %v2186, 64
    %v2416 = vpop.permute.xlu0 %2415
    %2417 = vrot.lane.b32.xlu0 %v2189, 64
    %v2418 = vpop.permute.xlu0 %2417
    %2423 = vrot.lane.b32.xlu0 %v2345, 80
    %v2424 = vpop.permute.xlu0 %2423
    %2425 = vrot.lane.b32.xlu0 %v2348, 80
    %v2426 = vpop.permute.xlu0 %2425
    %2431 = vrot.lane.b32.xlu0 %v2249, 96
    %v2432 = vpop.permute.xlu0 %2431
    %2433 = vrot.lane.b32.xlu0 %v2252, 96
    %v2434 = vpop.permute.xlu0 %2433
    %2439 = vrot.lane.b32.xlu0 %v2408, 112
    %v2440 = vpop.permute.xlu0 %2439
    %2441 = vrot.lane.b32.xlu0 %v2411, 112
    %v2442 = vpop.permute.xlu0 %2441
    %v2445 = vsel %vm501, %v2091, %v2416
    %v2446 = vsel %vm501, %v2092, %v2418
    %v2447 = vsel %vm504, %v2445, %v2424
    %v2448 = vsel %vm504, %v2446, %v2426
    %v2449 = vsel %vm507, %v2447, %v2432
    %v2450 = vsel %vm507, %v2448, %v2434
    %v2451 = vsel %vm510, %v2449, %v2440
    %v2452 = vsel %vm510, %v2450, %v2442
    %v2453 = vpack.c.bf16 %v2452, %v2451
    %2454 = vmatpush.bf16.msra.mxu0 %v553
    %2455 = vmatpush.bf16.msra.mxu0 %v552
    %2456 = vmatpush.bf16.msra.mxu0 %v551
    %2457 = vmatpush.bf16.msra.mxu0 %v550
    %2458 = vmatpush.bf16.msra.mxu0 %v549
    %2459 = vmatpush.bf16.msra.mxu0 %v548
    %2460 = vmatpush.bf16.msra.mxu0 %v547
    %2461 = vmatpush.bf16.msra.mxu0 %v546
    %2462 = vmatmul.bf16.gmra.mxu0 %v2453
    %v2463 = vpop.f32.mrf.mxu0
    %v2464 = vadd.f32 0.0, %v2463
    %v2465 = vpop.f32.mrf.mxu0
    %v2466 = vadd.f32 0.0, %v2465
    %2467 = vdwg.mxu0
    %v2468 = vmul.f32 %v2464, %v107
    %v2469 = vmul.f32 %v2466, %v107
    %v2470 = vsel %vm54, %v2468, 0.0
    %2471 = vadd.xlane.f32.xlu0 %v2470
    %v2472 = vpop.xlane.xlu0 %2471
    %v2473 = vsel %vm54, %v2469, 0.0
    %2474 = vadd.xlane.f32.xlu0 %v2473
    %v2475 = vpop.xlane.xlu0 %2474
    %v2476 = vmul.f32 %v2472, %v67
    %v2477 = vmul.f32 %v2475, %v67
    %v2478 = vmul.f32 %v2468, %v2067
    %v2479 = vmul.f32 %v2469, %v2068
    %v2480 = vsel %vm54, %v2478, 0.0
    %2481 = vadd.xlane.f32.xlu0 %v2480
    %v2482 = vpop.xlane.xlu0 %2481
    %v2483 = vsel %vm54, %v2479, 0.0
    %2484 = vadd.xlane.f32.xlu0 %v2483
    %v2485 = vpop.xlane.xlu0 %2484
    %v2486 = vmul.f32 %v2482, %v67
    %v2487 = vmul.f32 %v2485, %v67
    %v2488 = vsub.f32 %v2468, %v2476
    %v2489 = vsub.f32 %v2469, %v2477
    %v2490 = vmul.f32 %v2067, %v2486
    %v2491 = vmul.f32 %v2068, %v2487
    %v2492 = vsub.f32 %v2488, %v2490
    %v2493 = vsub.f32 %v2489, %v2491
    %v2494 = vmul.f32 %v2056, %v2492
    %v2495 = vmul.f32 %v2066, %v2493
    %v2496 = vsub.f32 %v2023, %v2494
    %v2497 = vsub.f32 %v2024, %v2495
    %v2498 = vsel %vm54, %v2496, 0.0
    %2499 = vadd.xlane.f32.xlu0 %v2498
    %v2500 = vpop.xlane.xlu0 %2499
    %v2501 = vsel %vm54, %v2497, 0.0
    %2502 = vadd.xlane.f32.xlu0 %v2501
    %v2503 = vpop.xlane.xlu0 %2502
    %v2504 = vmul.f32 %v2500, %v67
    %v2505 = vmul.f32 %v2503, %v67
    %v2506 = vsub.f32 %v2496, %v2504
    %v2507 = vsub.f32 %v2497, %v2505
    %v2508 = vmul.f32 %v2506, %v2506
    %v2509 = vmul.f32 %v2507, %v2507
    %v2510 = vsel %vm54, %v2508, 0.0
    %2511 = vadd.xlane.f32.xlu0 %v2510
    %v2512 = vpop.xlane.xlu0 %2511
    %v2513 = vsel %vm54, %v2509, 0.0
    %2514 = vadd.xlane.f32.xlu0 %v2513
    %v2515 = vpop.xlane.xlu0 %2514
    %v2516 = vmul.f32 %v2512, %v67
    %v2517 = vmul.f32 %v2515, %v67
    %v2518 = vadd.f32 %v2516, 1e-05
    %v2519 = vadd.f32 %v2517, 1e-05
    %v2520 = vrsqrt.pop %v2518
    %v2521 = vmul.f32 %v2520, %v2518
    %v2522 = vmul.f32 %v2521, %v2520
    %v2523 = vmul.f32 0.5, %v2522
    %v2524 = vsub.f32 1.5, %v2523
    %v2525 = vmul.f32 %v2520, %v2524
    %vm2526 = vweird.f32 %v2518
    %vm2527 = vweird.f32 %v2520
    %vm2528 = vmor %vm2526, %vm2527
    %v2529 = vsel %vm2528, %v2520, %v2525
    %v2530 = vrsqrt.pop %v2519
    %v2531 = vmul.f32 %v2530, %v2519
    %v2532 = vmul.f32 %v2531, %v2530
    %v2533 = vmul.f32 0.5, %v2532
    %v2534 = vsub.f32 1.5, %v2533
    %v2535 = vmul.f32 %v2530, %v2534
    %vm2536 = vweird.f32 %v2519
    %vm2537 = vweird.f32 %v2530
    %vm2538 = vmor %vm2536, %vm2537
    %v2539 = vsel %vm2538, %v2530, %v2535
    %v2540 = vmul.f32 %v2506, %v2529
    %v2541 = vmul.f32 %v2507, %v2539
    %v2542 = vmul.f32 %v107, %v2540
    %v2543 = vmul.f32 %v107, %v2541
    %v2544 = vadd.f32 %v2542, %v112
    %v2545 = vadd.f32 %v2543, %v112
    %v2546 = vpack.c.bf16 %v2545, %v2544
    %v2548 = vsel %vm54, %v2546, 0
    %2550 = vmatpush.bf16.msra.mxu0 0
    %2551 = vmatpush.bf16.msra.mxu0 0
    %2552 = vmatpush.bf16.msra.mxu0 0
    %2553 = vmatpush.bf16.msra.mxu0 0
    %2554 = vmatpush.bf16.msra.mxu0 0
    %2555 = vmatpush.bf16.msra.mxu0 0
    %2556 = vmatpush.bf16.msra.mxu0 %v126
    %2557 = vmatpush.bf16.msra.mxu0 %v125
    %2558 = vmatmul.bf16.gmra.mxu0 %v2548
    %v2559 = vpop.f32.mrf.mxu0
    %v2560 = vadd.f32 0.0, %v2559
    %v2561 = vpop.f32.mrf.mxu0
    %v2562 = vadd.f32 0.0, %v2561
    %2563 = vdwg.mxu0
    %v2564 = vmax.f32 %v2560, 0.0
    %v2565 = vmax.f32 %v2562, 0.0
    %2568 = vrot.lane.b32.xlu0 %v2560, 64
    %v2569 = vpop.permute.xlu0 %2568
    %2570 = vrot.lane.b32.xlu0 %v2562, 64
    %v2571 = vpop.permute.xlu0 %2570
    %2572 = vrot.lane.b32.xlu0 %v2560, 32
    %v2573 = vpop.permute.xlu0 %2572
    %2574 = vrot.lane.b32.xlu0 %v2562, 32
    %v2575 = vpop.permute.xlu0 %2574
    %v2576 = vsel %vm158, %v2569, 0
    %v2578 = vsel %vm158, %v2571, 0
    %v2580 = vsel %vm158, %v2573, 0
    %v2582 = vsel %vm158, %v2575, 0
    %2584 = vmatpush.xpose.msra.mxu0 0.0
    %2585 = vmatpush.xpose.msra.mxu0 0.0
    %2586 = vmatpush.xpose.msra.mxu0 0.0
    %2587 = vmatpush.xpose.msra.mxu0 0.0
    %2588 = vmatpush.xpose.msra.mxu0 0.0
    %2589 = vmatpush.xpose.msra.mxu0 0.0
    %2590 = vmatpush.xpose.msra.mxu0 0.0
    %2591 = vmatpush.xpose.msra.mxu0 0.0
    %2592 = vmatpush.xpose.msra.mxu0 0.0
    %2593 = vmatpush.xpose.msra.mxu0 0.0
    %2594 = vmatpush.xpose.msra.mxu0 0.0
    %2595 = vmatpush.xpose.msra.mxu0 0.0
    %2596 = vmatpush.xpose.msra.mxu0 0.0
    %2597 = vmatpush.xpose.msra.mxu0 0.0
    %2598 = vmatpush.xpose.msra.mxu0 %v2582
    %2599 = vmatpush.xpose.msra.mxu0 %v2580
    %2600 = vmatmul.f32.gmra.mxu0 %v2576
    %v2601 = vpop.f32.mrf.mxu0
    %v2602 = vadd.f32 0.0, %v2601
    %2603 = vmatmul.f32.gmra.mxu0 %v2578
    %v2604 = vpop.f32.mrf.mxu0
    %v2605 = vadd.f32 0.0, %v2604
    %2606 = vdwg.mxu0
    %v2607 = vmul.f32 %v2602, 0.25
    %v2608 = vmul.f32 %v2605, 0.25
    %v2609 = vadd.f32 %v2607, %v52
    %v2610 = vadd.f32 %v2608, %v53
    %v2611 = vsel %vm158, %v2609, -inf
    %2612 = vmax.xlane.f32.xlu0 %v2611
    %v2613 = vpop.xlane.xlu0 %2612
    %v2614 = vsel %vm158, %v2610, -inf
    %2615 = vmax.xlane.f32.xlu0 %v2614
    %v2616 = vpop.xlane.xlu0 %2615
    %v2617 = vsub.f32 %v2609, %v2613
    %v2618 = vsub.f32 %v2610, %v2616
    %v2619 = vmul.f32 %v2617, 1.442695
    %v2620 = vpow.pop %v2619
    %v2621 = vmul.f32 %v2618, 1.442695
    %v2622 = vpow.pop %v2621
    %v2623 = vsel %vm158, %v2620, 0.0
    %2624 = vadd.xlane.f32.xlu0 %v2623
    %v2625 = vpop.xlane.xlu0 %2624
    %v2626 = vsel %vm158, %v2622, 0.0
    %2627 = vadd.xlane.f32.xlu0 %v2626
    %v2628 = vpop.xlane.xlu0 %2627
    %v2629 = vrcp.pop %v2625
    %v2630 = vrcp.pop %v2628
    %v2631 = vmul.f32 %v2620, %v2629
    %v2632 = vmul.f32 %v2622, %v2630
    %v2636 = vsel %vm158, %v2631, 0
    %v2639 = vsel %vm158, %v2632, 0
    %2641 = vmatpush.msra.mxu0 0.0
    %2642 = vmatpush.msra.mxu0 0.0
    %2643 = vmatpush.msra.mxu0 0.0
    %2644 = vmatpush.msra.mxu0 0.0
    %2645 = vmatpush.msra.mxu0 0.0
    %2646 = vmatpush.msra.mxu0 0.0
    %2647 = vmatpush.msra.mxu0 0.0
    %2648 = vmatpush.msra.mxu0 0.0
    %2649 = vmatpush.msra.mxu0 0.0
    %2650 = vmatpush.msra.mxu0 0.0
    %2651 = vmatpush.msra.mxu0 0.0
    %2652 = vmatpush.msra.mxu0 0.0
    %2653 = vmatpush.msra.mxu0 0.0
    %2654 = vmatpush.msra.mxu0 0.0
    %2655 = vmatpush.msra.mxu0 %v2575
    %2656 = vmatpush.msra.mxu0 %v2573
    %2657 = vmatmul.f32.gmra.mxu0 %v2636
    %v2658 = vpop.f32.mrf.mxu0
    %v2659 = vadd.f32 0.0, %v2658
    %2660 = vmatmul.f32.gmra.mxu0 %v2639
    %v2661 = vpop.f32.mrf.mxu0
    %v2662 = vadd.f32 0.0, %v2661
    %2663 = vdwg.mxu0
    %2664 = vxpose.xlu0.b32.start [1/16] %v2631, 128
    %2665 = vxpose.xlu0.b32.cont [2/16] %v2632, 128
    %2666 = vxpose.xlu0.b32.cont [3/16] 0.0, 128
    %2667 = vxpose.xlu0.b32.cont [4/16] 0.0, 128
    %2668 = vxpose.xlu0.b32.cont [5/16] 0.0, 128
    %2669 = vxpose.xlu0.b32.cont [6/16] 0.0, 128
    %2670 = vxpose.xlu0.b32.cont [7/16] 0.0, 128
    %2671 = vxpose.xlu0.b32.cont [8/16] 0.0, 128
    %2672 = vxpose.xlu0.b32.cont [9/16] 0.0, 128
    %2673 = vxpose.xlu0.b32.cont [10/16] 0.0, 128
    %2674 = vxpose.xlu0.b32.cont [11/16] 0.0, 128
    %2675 = vxpose.xlu0.b32.cont [12/16] 0.0, 128
    %2676 = vxpose.xlu0.b32.cont [13/16] 0.0, 128
    %2677 = vxpose.xlu0.b32.cont [14/16] 0.0, 128
    %2678 = vxpose.xlu0.b32.cont [15/16] 0.0, 128
    %2679 = vxpose.xlu0.b32.end [16/16] 0.0, 128
    %v2680 = vpop.trf.xlu0
    %v2681 = vpop.trf.xlu0
    %v2682 = vpop.trf.xlu0
    %v2683 = vpop.trf.xlu0
    %v2684 = vpop.trf.xlu0
    %v2685 = vpop.trf.xlu0
    %v2686 = vpop.trf.xlu0
    %v2687 = vpop.trf.xlu0
    %v2688 = vpop.trf.xlu0
    %v2689 = vpop.trf.xlu0
    %v2690 = vpop.trf.xlu0
    %v2691 = vpop.trf.xlu0
    %v2692 = vpop.trf.xlu0
    %v2693 = vpop.trf.xlu0
    %v2694 = vpop.trf.xlu0
    %v2695 = vpop.trf.xlu0
    %v2699 = vsel %vm158, %v2680, 0
    %v2702 = vsel %vm158, %v2681, 0
    %2704 = vmatpush.msra.mxu0 0.0
    %2705 = vmatpush.msra.mxu0 0.0
    %2706 = vmatpush.msra.mxu0 0.0
    %2707 = vmatpush.msra.mxu0 0.0
    %2708 = vmatpush.msra.mxu0 0.0
    %2709 = vmatpush.msra.mxu0 0.0
    %2710 = vmatpush.msra.mxu0 0.0
    %2711 = vmatpush.msra.mxu0 0.0
    %2712 = vmatpush.msra.mxu0 0.0
    %2713 = vmatpush.msra.mxu0 0.0
    %2714 = vmatpush.msra.mxu0 0.0
    %2715 = vmatpush.msra.mxu0 0.0
    %2716 = vmatpush.msra.mxu0 0.0
    %2717 = vmatpush.msra.mxu0 0.0
    %2718 = vmatpush.msra.mxu0 %v2571
    %2719 = vmatpush.msra.mxu0 %v2569
    %2720 = vmatmul.f32.gmra.mxu0 %v2699
    %v2721 = vpop.f32.mrf.mxu0
    %v2722 = vadd.f32 0.0, %v2721
    %2723 = vmatmul.f32.gmra.mxu0 %v2702
    %v2724 = vpop.f32.mrf.mxu0
    %v2725 = vadd.f32 0.0, %v2724
    %2726 = vdwg.mxu0
    %2727 = vrot.lane.b32.xlu0 %v2560, 48
    %v2728 = vpop.permute.xlu0 %2727
    %2729 = vrot.lane.b32.xlu0 %v2562, 48
    %v2730 = vpop.permute.xlu0 %2729
    %2731 = vrot.lane.b32.xlu0 %v2560, 16
    %v2732 = vpop.permute.xlu0 %2731
    %2733 = vrot.lane.b32.xlu0 %v2562, 16
    %v2734 = vpop.permute.xlu0 %2733
    %v2735 = vsel %vm158, %v2728, 0
    %v2737 = vsel %vm158, %v2730, 0
    %v2739 = vsel %vm158, %v2732, 0
    %v2741 = vsel %vm158, %v2734, 0
    %2743 = vmatpush.xpose.msra.mxu0 0.0
    %2744 = vmatpush.xpose.msra.mxu0 0.0
    %2745 = vmatpush.xpose.msra.mxu0 0.0
    %2746 = vmatpush.xpose.msra.mxu0 0.0
    %2747 = vmatpush.xpose.msra.mxu0 0.0
    %2748 = vmatpush.xpose.msra.mxu0 0.0
    %2749 = vmatpush.xpose.msra.mxu0 0.0
    %2750 = vmatpush.xpose.msra.mxu0 0.0
    %2751 = vmatpush.xpose.msra.mxu0 0.0
    %2752 = vmatpush.xpose.msra.mxu0 0.0
    %2753 = vmatpush.xpose.msra.mxu0 0.0
    %2754 = vmatpush.xpose.msra.mxu0 0.0
    %2755 = vmatpush.xpose.msra.mxu0 0.0
    %2756 = vmatpush.xpose.msra.mxu0 0.0
    %2757 = vmatpush.xpose.msra.mxu0 %v2741
    %2758 = vmatpush.xpose.msra.mxu0 %v2739
    %2759 = vmatmul.f32.gmra.mxu0 %v2735
    %v2760 = vpop.f32.mrf.mxu0
    %v2761 = vadd.f32 0.0, %v2760
    %2762 = vmatmul.f32.gmra.mxu0 %v2737
    %v2763 = vpop.f32.mrf.mxu0
    %v2764 = vadd.f32 0.0, %v2763
    %2765 = vdwg.mxu0
    %v2766 = vmul.f32 %v2761, 0.25
    %v2767 = vmul.f32 %v2764, 0.25
    %v2768 = vadd.f32 %v2766, %v52
    %v2769 = vadd.f32 %v2767, %v53
    %v2770 = vsel %vm158, %v2768, -inf
    %2771 = vmax.xlane.f32.xlu0 %v2770
    %v2772 = vpop.xlane.xlu0 %2771
    %v2773 = vsel %vm158, %v2769, -inf
    %2774 = vmax.xlane.f32.xlu0 %v2773
    %v2775 = vpop.xlane.xlu0 %2774
    %v2776 = vsub.f32 %v2768, %v2772
    %v2777 = vsub.f32 %v2769, %v2775
    %v2778 = vmul.f32 %v2776, 1.442695
    %v2779 = vpow.pop %v2778
    %v2780 = vmul.f32 %v2777, 1.442695
    %v2781 = vpow.pop %v2780
    %v2782 = vsel %vm158, %v2779, 0.0
    %2783 = vadd.xlane.f32.xlu0 %v2782
    %v2784 = vpop.xlane.xlu0 %2783
    %v2785 = vsel %vm158, %v2781, 0.0
    %2786 = vadd.xlane.f32.xlu0 %v2785
    %v2787 = vpop.xlane.xlu0 %2786
    %v2788 = vrcp.pop %v2784
    %v2789 = vrcp.pop %v2787
    %v2790 = vmul.f32 %v2779, %v2788
    %v2791 = vmul.f32 %v2781, %v2789
    %v2795 = vsel %vm158, %v2790, 0
    %v2798 = vsel %vm158, %v2791, 0
    %2800 = vmatpush.msra.mxu0 0.0
    %2801 = vmatpush.msra.mxu0 0.0
    %2802 = vmatpush.msra.mxu0 0.0
    %2803 = vmatpush.msra.mxu0 0.0
    %2804 = vmatpush.msra.mxu0 0.0
    %2805 = vmatpush.msra.mxu0 0.0
    %2806 = vmatpush.msra.mxu0 0.0
    %2807 = vmatpush.msra.mxu0 0.0
    %2808 = vmatpush.msra.mxu0 0.0
    %2809 = vmatpush.msra.mxu0 0.0
    %2810 = vmatpush.msra.mxu0 0.0
    %2811 = vmatpush.msra.mxu0 0.0
    %2812 = vmatpush.msra.mxu0 0.0
    %2813 = vmatpush.msra.mxu0 0.0
    %2814 = vmatpush.msra.mxu0 %v2734
    %2815 = vmatpush.msra.mxu0 %v2732
    %2816 = vmatmul.f32.gmra.mxu0 %v2795
    %v2817 = vpop.f32.mrf.mxu0
    %v2818 = vadd.f32 0.0, %v2817
    %2819 = vmatmul.f32.gmra.mxu0 %v2798
    %v2820 = vpop.f32.mrf.mxu0
    %v2821 = vadd.f32 0.0, %v2820
    %2822 = vdwg.mxu0
    %2823 = vxpose.xlu0.b32.start [1/16] %v2790, 128
    %2824 = vxpose.xlu0.b32.cont [2/16] %v2791, 128
    %2825 = vxpose.xlu0.b32.cont [3/16] 0.0, 128
    %2826 = vxpose.xlu0.b32.cont [4/16] 0.0, 128
    %2827 = vxpose.xlu0.b32.cont [5/16] 0.0, 128
    %2828 = vxpose.xlu0.b32.cont [6/16] 0.0, 128
    %2829 = vxpose.xlu0.b32.cont [7/16] 0.0, 128
    %2830 = vxpose.xlu0.b32.cont [8/16] 0.0, 128
    %2831 = vxpose.xlu0.b32.cont [9/16] 0.0, 128
    %2832 = vxpose.xlu0.b32.cont [10/16] 0.0, 128
    %2833 = vxpose.xlu0.b32.cont [11/16] 0.0, 128
    %2834 = vxpose.xlu0.b32.cont [12/16] 0.0, 128
    %2835 = vxpose.xlu0.b32.cont [13/16] 0.0, 128
    %2836 = vxpose.xlu0.b32.cont [14/16] 0.0, 128
    %2837 = vxpose.xlu0.b32.cont [15/16] 0.0, 128
    %2838 = vxpose.xlu0.b32.end [16/16] 0.0, 128
    %v2839 = vpop.trf.xlu0
    %v2840 = vpop.trf.xlu0
    %v2841 = vpop.trf.xlu0
    %v2842 = vpop.trf.xlu0
    %v2843 = vpop.trf.xlu0
    %v2844 = vpop.trf.xlu0
    %v2845 = vpop.trf.xlu0
    %v2846 = vpop.trf.xlu0
    %v2847 = vpop.trf.xlu0
    %v2848 = vpop.trf.xlu0
    %v2849 = vpop.trf.xlu0
    %v2850 = vpop.trf.xlu0
    %v2851 = vpop.trf.xlu0
    %v2852 = vpop.trf.xlu0
    %v2853 = vpop.trf.xlu0
    %v2854 = vpop.trf.xlu0
    %v2858 = vsel %vm158, %v2839, 0
    %v2861 = vsel %vm158, %v2840, 0
    %2863 = vmatpush.msra.mxu0 0.0
    %2864 = vmatpush.msra.mxu0 0.0
    %2865 = vmatpush.msra.mxu0 0.0
    %2866 = vmatpush.msra.mxu0 0.0
    %2867 = vmatpush.msra.mxu0 0.0
    %2868 = vmatpush.msra.mxu0 0.0
    %2869 = vmatpush.msra.mxu0 0.0
    %2870 = vmatpush.msra.mxu0 0.0
    %2871 = vmatpush.msra.mxu0 0.0
    %2872 = vmatpush.msra.mxu0 0.0
    %2873 = vmatpush.msra.mxu0 0.0
    %2874 = vmatpush.msra.mxu0 0.0
    %2875 = vmatpush.msra.mxu0 0.0
    %2876 = vmatpush.msra.mxu0 0.0
    %2877 = vmatpush.msra.mxu0 %v2730
    %2878 = vmatpush.msra.mxu0 %v2728
    %2879 = vmatmul.f32.gmra.mxu0 %v2858
    %v2880 = vpop.f32.mrf.mxu0
    %v2881 = vadd.f32 0.0, %v2880
    %2882 = vmatmul.f32.gmra.mxu0 %v2861
    %v2883 = vpop.f32.mrf.mxu0
    %v2884 = vadd.f32 0.0, %v2883
    %2885 = vdwg.mxu0
    %2888 = vrot.lane.b32.xlu0 %v2659, 64
    %v2889 = vpop.permute.xlu0 %2888
    %2890 = vrot.lane.b32.xlu0 %v2662, 64
    %v2891 = vpop.permute.xlu0 %2890
    %2896 = vrot.lane.b32.xlu0 %v2818, 80
    %v2897 = vpop.permute.xlu0 %2896
    %2898 = vrot.lane.b32.xlu0 %v2821, 80
    %v2899 = vpop.permute.xlu0 %2898
    %2904 = vrot.lane.b32.xlu0 %v2722, 96
    %v2905 = vpop.permute.xlu0 %2904
    %2906 = vrot.lane.b32.xlu0 %v2725, 96
    %v2907 = vpop.permute.xlu0 %2906
    %2912 = vrot.lane.b32.xlu0 %v2881, 112
    %v2913 = vpop.permute.xlu0 %2912
    %2914 = vrot.lane.b32.xlu0 %v2884, 112
    %v2915 = vpop.permute.xlu0 %2914
    %v2918 = vsel %vm501, %v2564, %v2889
    %v2919 = vsel %vm501, %v2565, %v2891
    %v2920 = vsel %vm504, %v2918, %v2897
    %v2921 = vsel %vm504, %v2919, %v2899
    %v2922 = vsel %vm507, %v2920, %v2905
    %v2923 = vsel %vm507, %v2921, %v2907
    %v2924 = vsel %vm510, %v2922, %v2913
    %v2925 = vsel %vm510, %v2923, %v2915
    %v2926 = vpack.c.bf16 %v2925, %v2924
    %2927 = vmatpush.bf16.msra.mxu0 %v553
    %2928 = vmatpush.bf16.msra.mxu0 %v552
    %2929 = vmatpush.bf16.msra.mxu0 %v551
    %2930 = vmatpush.bf16.msra.mxu0 %v550
    %2931 = vmatpush.bf16.msra.mxu0 %v549
    %2932 = vmatpush.bf16.msra.mxu0 %v548
    %2933 = vmatpush.bf16.msra.mxu0 %v547
    %2934 = vmatpush.bf16.msra.mxu0 %v546
    %2935 = vmatmul.bf16.gmra.mxu0 %v2926
    %v2936 = vpop.f32.mrf.mxu0
    %v2937 = vadd.f32 0.0, %v2936
    %v2938 = vpop.f32.mrf.mxu0
    %v2939 = vadd.f32 0.0, %v2938
    %2940 = vdwg.mxu0
    %v2941 = vmul.f32 %v2937, %v107
    %v2942 = vmul.f32 %v2939, %v107
    %v2943 = vsel %vm54, %v2941, 0.0
    %2944 = vadd.xlane.f32.xlu0 %v2943
    %v2945 = vpop.xlane.xlu0 %2944
    %v2946 = vsel %vm54, %v2942, 0.0
    %2947 = vadd.xlane.f32.xlu0 %v2946
    %v2948 = vpop.xlane.xlu0 %2947
    %v2949 = vmul.f32 %v2945, %v67
    %v2950 = vmul.f32 %v2948, %v67
    %v2951 = vmul.f32 %v2941, %v2540
    %v2952 = vmul.f32 %v2942, %v2541
    %v2953 = vsel %vm54, %v2951, 0.0
    %2954 = vadd.xlane.f32.xlu0 %v2953
    %v2955 = vpop.xlane.xlu0 %2954
    %v2956 = vsel %vm54, %v2952, 0.0
    %2957 = vadd.xlane.f32.xlu0 %v2956
    %v2958 = vpop.xlane.xlu0 %2957
    %v2959 = vmul.f32 %v2955, %v67
    %v2960 = vmul.f32 %v2958, %v67
    %v2961 = vsub.f32 %v2941, %v2949
    %v2962 = vsub.f32 %v2942, %v2950
    %v2963 = vmul.f32 %v2540, %v2959
    %v2964 = vmul.f32 %v2541, %v2960
    %v2965 = vsub.f32 %v2961, %v2963
    %v2966 = vsub.f32 %v2962, %v2964
    %v2967 = vmul.f32 %v2529, %v2965
    %v2968 = vmul.f32 %v2539, %v2966
    %v2969 = vsub.f32 %v2496, %v2967
    %v2970 = vsub.f32 %v2497, %v2968
    %v2971 = vsel %vm54, %v2969, 0.0
    %2972 = vadd.xlane.f32.xlu0 %v2971
    %v2973 = vpop.xlane.xlu0 %2972
    %v2974 = vsel %vm54, %v2970, 0.0
    %2975 = vadd.xlane.f32.xlu0 %v2974
    %v2976 = vpop.xlane.xlu0 %2975
    %v2977 = vmul.f32 %v2973, %v67
    %v2978 = vmul.f32 %v2976, %v67
    %v2979 = vsub.f32 %v2969, %v2977
    %v2980 = vsub.f32 %v2970, %v2978
    %v2981 = vmul.f32 %v2979, %v2979
    %v2982 = vmul.f32 %v2980, %v2980
    %v2983 = vsel %vm54, %v2981, 0.0
    %2984 = vadd.xlane.f32.xlu0 %v2983
    %v2985 = vpop.xlane.xlu0 %2984
    %v2986 = vsel %vm54, %v2982, 0.0
    %2987 = vadd.xlane.f32.xlu0 %v2986
    %v2988 = vpop.xlane.xlu0 %2987
    %v2989 = vmul.f32 %v2985, %v67
    %v2990 = vmul.f32 %v2988, %v67
    %v2991 = vadd.f32 %v2989, 1e-05
    %v2992 = vadd.f32 %v2990, 1e-05
    %v2993 = vrsqrt.pop %v2991
    %v2994 = vmul.f32 %v2993, %v2991
    %v2995 = vmul.f32 %v2994, %v2993
    %v2996 = vmul.f32 0.5, %v2995
    %v2997 = vsub.f32 1.5, %v2996
    %v2998 = vmul.f32 %v2993, %v2997
    %vm2999 = vweird.f32 %v2991
    %vm3000 = vweird.f32 %v2993
    %vm3001 = vmor %vm2999, %vm3000
    %v3002 = vsel %vm3001, %v2993, %v2998
    %v3003 = vrsqrt.pop %v2992
    %v3004 = vmul.f32 %v3003, %v2992
    %v3005 = vmul.f32 %v3004, %v3003
    %v3006 = vmul.f32 0.5, %v3005
    %v3007 = vsub.f32 1.5, %v3006
    %v3008 = vmul.f32 %v3003, %v3007
    %vm3009 = vweird.f32 %v2992
    %vm3010 = vweird.f32 %v3003
    %vm3011 = vmor %vm3009, %vm3010
    %v3012 = vsel %vm3011, %v3003, %v3008
    %v3013 = vmul.f32 %v2979, %v3002
    %v3014 = vmul.f32 %v2980, %v3012
    %v3015 = vmul.f32 %v107, %v3013
    %v3016 = vmul.f32 %v107, %v3014
    %v3017 = vadd.f32 %v3015, %v112
    %v3018 = vadd.f32 %v3016, %v112
    %v3019 = vpack.c.bf16 %v3018, %v3017
    %v3021 = vsel %vm54, %v3019, 0
    %3023 = vmatpush.bf16.msra.mxu0 0
    %3024 = vmatpush.bf16.msra.mxu0 0
    %3025 = vmatpush.bf16.msra.mxu0 0
    %3026 = vmatpush.bf16.msra.mxu0 0
    %3027 = vmatpush.bf16.msra.mxu0 0
    %3028 = vmatpush.bf16.msra.mxu0 0
    %3029 = vmatpush.bf16.msra.mxu0 %v126
    %3030 = vmatpush.bf16.msra.mxu0 %v125
    %3031 = vmatmul.bf16.gmra.mxu0 %v3021
    %v3032 = vpop.f32.mrf.mxu0
    %v3033 = vadd.f32 0.0, %v3032
    %v3034 = vpop.f32.mrf.mxu0
    %v3035 = vadd.f32 0.0, %v3034
    %3036 = vdwg.mxu0
    %v3037 = vmax.f32 %v3033, 0.0
    %v3038 = vmax.f32 %v3035, 0.0
    %3041 = vrot.lane.b32.xlu0 %v3033, 64
    %v3042 = vpop.permute.xlu0 %3041
    %3043 = vrot.lane.b32.xlu0 %v3035, 64
    %v3044 = vpop.permute.xlu0 %3043
    %3045 = vrot.lane.b32.xlu0 %v3033, 32
    %v3046 = vpop.permute.xlu0 %3045
    %3047 = vrot.lane.b32.xlu0 %v3035, 32
    %v3048 = vpop.permute.xlu0 %3047
    %v3049 = vsel %vm158, %v3042, 0
    %v3051 = vsel %vm158, %v3044, 0
    %v3053 = vsel %vm158, %v3046, 0
    %v3055 = vsel %vm158, %v3048, 0
    %3057 = vmatpush.xpose.msra.mxu0 0.0
    %3058 = vmatpush.xpose.msra.mxu0 0.0
    %3059 = vmatpush.xpose.msra.mxu0 0.0
    %3060 = vmatpush.xpose.msra.mxu0 0.0
    %3061 = vmatpush.xpose.msra.mxu0 0.0
    %3062 = vmatpush.xpose.msra.mxu0 0.0
    %3063 = vmatpush.xpose.msra.mxu0 0.0
    %3064 = vmatpush.xpose.msra.mxu0 0.0
    %3065 = vmatpush.xpose.msra.mxu0 0.0
    %3066 = vmatpush.xpose.msra.mxu0 0.0
    %3067 = vmatpush.xpose.msra.mxu0 0.0
    %3068 = vmatpush.xpose.msra.mxu0 0.0
    %3069 = vmatpush.xpose.msra.mxu0 0.0
    %3070 = vmatpush.xpose.msra.mxu0 0.0
    %3071 = vmatpush.xpose.msra.mxu0 %v3055
    %3072 = vmatpush.xpose.msra.mxu0 %v3053
    %3073 = vmatmul.f32.gmra.mxu0 %v3049
    %v3074 = vpop.f32.mrf.mxu0
    %v3075 = vadd.f32 0.0, %v3074
    %3076 = vmatmul.f32.gmra.mxu0 %v3051
    %v3077 = vpop.f32.mrf.mxu0
    %v3078 = vadd.f32 0.0, %v3077
    %3079 = vdwg.mxu0
    %v3080 = vmul.f32 %v3075, 0.25
    %v3081 = vmul.f32 %v3078, 0.25
    %v3082 = vadd.f32 %v3080, %v52
    %v3083 = vadd.f32 %v3081, %v53
    %v3084 = vsel %vm158, %v3082, -inf
    %3085 = vmax.xlane.f32.xlu0 %v3084
    %v3086 = vpop.xlane.xlu0 %3085
    %v3087 = vsel %vm158, %v3083, -inf
    %3088 = vmax.xlane.f32.xlu0 %v3087
    %v3089 = vpop.xlane.xlu0 %3088
    %v3090 = vsub.f32 %v3082, %v3086
    %v3091 = vsub.f32 %v3083, %v3089
    %v3092 = vmul.f32 %v3090, 1.442695
    %v3093 = vpow.pop %v3092
    %v3094 = vmul.f32 %v3091, 1.442695
    %v3095 = vpow.pop %v3094
    %v3096 = vsel %vm158, %v3093, 0.0
    %3097 = vadd.xlane.f32.xlu0 %v3096
    %v3098 = vpop.xlane.xlu0 %3097
    %v3099 = vsel %vm158, %v3095, 0.0
    %3100 = vadd.xlane.f32.xlu0 %v3099
    %v3101 = vpop.xlane.xlu0 %3100
    %v3102 = vrcp.pop %v3098
    %v3103 = vrcp.pop %v3101
    %v3104 = vmul.f32 %v3093, %v3102
    %v3105 = vmul.f32 %v3095, %v3103
    %v3109 = vsel %vm158, %v3104, 0
    %v3112 = vsel %vm158, %v3105, 0
    %3114 = vmatpush.msra.mxu0 0.0
    %3115 = vmatpush.msra.mxu0 0.0
    %3116 = vmatpush.msra.mxu0 0.0
    %3117 = vmatpush.msra.mxu0 0.0
    %3118 = vmatpush.msra.mxu0 0.0
    %3119 = vmatpush.msra.mxu0 0.0
    %3120 = vmatpush.msra.mxu0 0.0
    %3121 = vmatpush.msra.mxu0 0.0
    %3122 = vmatpush.msra.mxu0 0.0
    %3123 = vmatpush.msra.mxu0 0.0
    %3124 = vmatpush.msra.mxu0 0.0
    %3125 = vmatpush.msra.mxu0 0.0
    %3126 = vmatpush.msra.mxu0 0.0
    %3127 = vmatpush.msra.mxu0 0.0
    %3128 = vmatpush.msra.mxu0 %v3048
    %3129 = vmatpush.msra.mxu0 %v3046
    %3130 = vmatmul.f32.gmra.mxu0 %v3109
    %v3131 = vpop.f32.mrf.mxu0
    %v3132 = vadd.f32 0.0, %v3131
    %3133 = vmatmul.f32.gmra.mxu0 %v3112
    %v3134 = vpop.f32.mrf.mxu0
    %v3135 = vadd.f32 0.0, %v3134
    %3136 = vdwg.mxu0
    %3137 = vxpose.xlu0.b32.start [1/16] %v3104, 128
    %3138 = vxpose.xlu0.b32.cont [2/16] %v3105, 128
    %3139 = vxpose.xlu0.b32.cont [3/16] 0.0, 128
    %3140 = vxpose.xlu0.b32.cont [4/16] 0.0, 128
    %3141 = vxpose.xlu0.b32.cont [5/16] 0.0, 128
    %3142 = vxpose.xlu0.b32.cont [6/16] 0.0, 128
    %3143 = vxpose.xlu0.b32.cont [7/16] 0.0, 128
    %3144 = vxpose.xlu0.b32.cont [8/16] 0.0, 128
    %3145 = vxpose.xlu0.b32.cont [9/16] 0.0, 128
    %3146 = vxpose.xlu0.b32.cont [10/16] 0.0, 128
    %3147 = vxpose.xlu0.b32.cont [11/16] 0.0, 128
    %3148 = vxpose.xlu0.b32.cont [12/16] 0.0, 128
    %3149 = vxpose.xlu0.b32.cont [13/16] 0.0, 128
    %3150 = vxpose.xlu0.b32.cont [14/16] 0.0, 128
    %3151 = vxpose.xlu0.b32.cont [15/16] 0.0, 128
    %3152 = vxpose.xlu0.b32.end [16/16] 0.0, 128
    %v3153 = vpop.trf.xlu0
    %v3154 = vpop.trf.xlu0
    %v3155 = vpop.trf.xlu0
    %v3156 = vpop.trf.xlu0
    %v3157 = vpop.trf.xlu0
    %v3158 = vpop.trf.xlu0
    %v3159 = vpop.trf.xlu0
    %v3160 = vpop.trf.xlu0
    %v3161 = vpop.trf.xlu0
    %v3162 = vpop.trf.xlu0
    %v3163 = vpop.trf.xlu0
    %v3164 = vpop.trf.xlu0
    %v3165 = vpop.trf.xlu0
    %v3166 = vpop.trf.xlu0
    %v3167 = vpop.trf.xlu0
    %v3168 = vpop.trf.xlu0
    %v3172 = vsel %vm158, %v3153, 0
    %v3175 = vsel %vm158, %v3154, 0
    %3177 = vmatpush.msra.mxu0 0.0
    %3178 = vmatpush.msra.mxu0 0.0
    %3179 = vmatpush.msra.mxu0 0.0
    %3180 = vmatpush.msra.mxu0 0.0
    %3181 = vmatpush.msra.mxu0 0.0
    %3182 = vmatpush.msra.mxu0 0.0
    %3183 = vmatpush.msra.mxu0 0.0
    %3184 = vmatpush.msra.mxu0 0.0
    %3185 = vmatpush.msra.mxu0 0.0
    %3186 = vmatpush.msra.mxu0 0.0
    %3187 = vmatpush.msra.mxu0 0.0
    %3188 = vmatpush.msra.mxu0 0.0
    %3189 = vmatpush.msra.mxu0 0.0
    %3190 = vmatpush.msra.mxu0 0.0
    %3191 = vmatpush.msra.mxu0 %v3044
    %3192 = vmatpush.msra.mxu0 %v3042
    %3193 = vmatmul.f32.gmra.mxu0 %v3172
    %v3194 = vpop.f32.mrf.mxu0
    %v3195 = vadd.f32 0.0, %v3194
    %3196 = vmatmul.f32.gmra.mxu0 %v3175
    %v3197 = vpop.f32.mrf.mxu0
    %v3198 = vadd.f32 0.0, %v3197
    %3199 = vdwg.mxu0
    %3200 = vrot.lane.b32.xlu0 %v3033, 48
    %v3201 = vpop.permute.xlu0 %3200
    %3202 = vrot.lane.b32.xlu0 %v3035, 48
    %v3203 = vpop.permute.xlu0 %3202
    %3204 = vrot.lane.b32.xlu0 %v3033, 16
    %v3205 = vpop.permute.xlu0 %3204
    %3206 = vrot.lane.b32.xlu0 %v3035, 16
    %v3207 = vpop.permute.xlu0 %3206
    %v3208 = vsel %vm158, %v3201, 0
    %v3210 = vsel %vm158, %v3203, 0
    %v3212 = vsel %vm158, %v3205, 0
    %v3214 = vsel %vm158, %v3207, 0
    %3216 = vmatpush.xpose.msra.mxu0 0.0
    %3217 = vmatpush.xpose.msra.mxu0 0.0
    %3218 = vmatpush.xpose.msra.mxu0 0.0
    %3219 = vmatpush.xpose.msra.mxu0 0.0
    %3220 = vmatpush.xpose.msra.mxu0 0.0
    %3221 = vmatpush.xpose.msra.mxu0 0.0
    %3222 = vmatpush.xpose.msra.mxu0 0.0
    %3223 = vmatpush.xpose.msra.mxu0 0.0
    %3224 = vmatpush.xpose.msra.mxu0 0.0
    %3225 = vmatpush.xpose.msra.mxu0 0.0
    %3226 = vmatpush.xpose.msra.mxu0 0.0
    %3227 = vmatpush.xpose.msra.mxu0 0.0
    %3228 = vmatpush.xpose.msra.mxu0 0.0
    %3229 = vmatpush.xpose.msra.mxu0 0.0
    %3230 = vmatpush.xpose.msra.mxu0 %v3214
    %3231 = vmatpush.xpose.msra.mxu0 %v3212
    %3232 = vmatmul.f32.gmra.mxu0 %v3208
    %v3233 = vpop.f32.mrf.mxu0
    %v3234 = vadd.f32 0.0, %v3233
    %3235 = vmatmul.f32.gmra.mxu0 %v3210
    %v3236 = vpop.f32.mrf.mxu0
    %v3237 = vadd.f32 0.0, %v3236
    %3238 = vdwg.mxu0
    %v3239 = vmul.f32 %v3234, 0.25
    %v3240 = vmul.f32 %v3237, 0.25
    %v3241 = vadd.f32 %v3239, %v52
    %v3242 = vadd.f32 %v3240, %v53
    %v3243 = vsel %vm158, %v3241, -inf
    %3244 = vmax.xlane.f32.xlu0 %v3243
    %v3245 = vpop.xlane.xlu0 %3244
    %v3246 = vsel %vm158, %v3242, -inf
    %3247 = vmax.xlane.f32.xlu0 %v3246
    %v3248 = vpop.xlane.xlu0 %3247
    %v3249 = vsub.f32 %v3241, %v3245
    %v3250 = vsub.f32 %v3242, %v3248
    %v3251 = vmul.f32 %v3249, 1.442695
    %v3252 = vpow.pop %v3251
    %v3253 = vmul.f32 %v3250, 1.442695
    %v3254 = vpow.pop %v3253
    %v3255 = vsel %vm158, %v3252, 0.0
    %3256 = vadd.xlane.f32.xlu0 %v3255
    %v3257 = vpop.xlane.xlu0 %3256
    %v3258 = vsel %vm158, %v3254, 0.0
    %3259 = vadd.xlane.f32.xlu0 %v3258
    %v3260 = vpop.xlane.xlu0 %3259
    %v3261 = vrcp.pop %v3257
    %v3262 = vrcp.pop %v3260
    %v3263 = vmul.f32 %v3252, %v3261
    %v3264 = vmul.f32 %v3254, %v3262
    %v3268 = vsel %vm158, %v3263, 0
    %v3271 = vsel %vm158, %v3264, 0
    %3273 = vmatpush.msra.mxu0 0.0
    %3274 = vmatpush.msra.mxu0 0.0
    %3275 = vmatpush.msra.mxu0 0.0
    %3276 = vmatpush.msra.mxu0 0.0
    %3277 = vmatpush.msra.mxu0 0.0
    %3278 = vmatpush.msra.mxu0 0.0
    %3279 = vmatpush.msra.mxu0 0.0
    %3280 = vmatpush.msra.mxu0 0.0
    %3281 = vmatpush.msra.mxu0 0.0
    %3282 = vmatpush.msra.mxu0 0.0
    %3283 = vmatpush.msra.mxu0 0.0
    %3284 = vmatpush.msra.mxu0 0.0
    %3285 = vmatpush.msra.mxu0 0.0
    %3286 = vmatpush.msra.mxu0 0.0
    %3287 = vmatpush.msra.mxu0 %v3207
    %3288 = vmatpush.msra.mxu0 %v3205
    %3289 = vmatmul.f32.gmra.mxu0 %v3268
    %v3290 = vpop.f32.mrf.mxu0
    %v3291 = vadd.f32 0.0, %v3290
    %3292 = vmatmul.f32.gmra.mxu0 %v3271
    %v3293 = vpop.f32.mrf.mxu0
    %v3294 = vadd.f32 0.0, %v3293
    %3295 = vdwg.mxu0
    %3296 = vxpose.xlu0.b32.start [1/16] %v3263, 128
    %3297 = vxpose.xlu0.b32.cont [2/16] %v3264, 128
    %3298 = vxpose.xlu0.b32.cont [3/16] 0.0, 128
    %3299 = vxpose.xlu0.b32.cont [4/16] 0.0, 128
    %3300 = vxpose.xlu0.b32.cont [5/16] 0.0, 128
    %3301 = vxpose.xlu0.b32.cont [6/16] 0.0, 128
    %3302 = vxpose.xlu0.b32.cont [7/16] 0.0, 128
    %3303 = vxpose.xlu0.b32.cont [8/16] 0.0, 128
    %3304 = vxpose.xlu0.b32.cont [9/16] 0.0, 128
    %3305 = vxpose.xlu0.b32.cont [10/16] 0.0, 128
    %3306 = vxpose.xlu0.b32.cont [11/16] 0.0, 128
    %3307 = vxpose.xlu0.b32.cont [12/16] 0.0, 128
    %3308 = vxpose.xlu0.b32.cont [13/16] 0.0, 128
    %3309 = vxpose.xlu0.b32.cont [14/16] 0.0, 128
    %3310 = vxpose.xlu0.b32.cont [15/16] 0.0, 128
    %3311 = vxpose.xlu0.b32.end [16/16] 0.0, 128
    %v3312 = vpop.trf.xlu0
    %v3313 = vpop.trf.xlu0
    %v3314 = vpop.trf.xlu0
    %v3315 = vpop.trf.xlu0
    %v3316 = vpop.trf.xlu0
    %v3317 = vpop.trf.xlu0
    %v3318 = vpop.trf.xlu0
    %v3319 = vpop.trf.xlu0
    %v3320 = vpop.trf.xlu0
    %v3321 = vpop.trf.xlu0
    %v3322 = vpop.trf.xlu0
    %v3323 = vpop.trf.xlu0
    %v3324 = vpop.trf.xlu0
    %v3325 = vpop.trf.xlu0
    %v3326 = vpop.trf.xlu0
    %v3327 = vpop.trf.xlu0
    %v3331 = vsel %vm158, %v3312, 0
    %v3334 = vsel %vm158, %v3313, 0
    %3336 = vmatpush.msra.mxu0 0.0
    %3337 = vmatpush.msra.mxu0 0.0
    %3338 = vmatpush.msra.mxu0 0.0
    %3339 = vmatpush.msra.mxu0 0.0
    %3340 = vmatpush.msra.mxu0 0.0
    %3341 = vmatpush.msra.mxu0 0.0
    %3342 = vmatpush.msra.mxu0 0.0
    %3343 = vmatpush.msra.mxu0 0.0
    %3344 = vmatpush.msra.mxu0 0.0
    %3345 = vmatpush.msra.mxu0 0.0
    %3346 = vmatpush.msra.mxu0 0.0
    %3347 = vmatpush.msra.mxu0 0.0
    %3348 = vmatpush.msra.mxu0 0.0
    %3349 = vmatpush.msra.mxu0 0.0
    %3350 = vmatpush.msra.mxu0 %v3203
    %3351 = vmatpush.msra.mxu0 %v3201
    %3352 = vmatmul.f32.gmra.mxu0 %v3331
    %v3353 = vpop.f32.mrf.mxu0
    %v3354 = vadd.f32 0.0, %v3353
    %3355 = vmatmul.f32.gmra.mxu0 %v3334
    %v3356 = vpop.f32.mrf.mxu0
    %v3357 = vadd.f32 0.0, %v3356
    %3358 = vdwg.mxu0
    %3361 = vrot.lane.b32.xlu0 %v3132, 64
    %v3362 = vpop.permute.xlu0 %3361
    %3363 = vrot.lane.b32.xlu0 %v3135, 64
    %v3364 = vpop.permute.xlu0 %3363
    %3369 = vrot.lane.b32.xlu0 %v3291, 80
    %v3370 = vpop.permute.xlu0 %3369
    %3371 = vrot.lane.b32.xlu0 %v3294, 80
    %v3372 = vpop.permute.xlu0 %3371
    %3377 = vrot.lane.b32.xlu0 %v3195, 96
    %v3378 = vpop.permute.xlu0 %3377
    %3379 = vrot.lane.b32.xlu0 %v3198, 96
    %v3380 = vpop.permute.xlu0 %3379
    %3385 = vrot.lane.b32.xlu0 %v3354, 112
    %v3386 = vpop.permute.xlu0 %3385
    %3387 = vrot.lane.b32.xlu0 %v3357, 112
    %v3388 = vpop.permute.xlu0 %3387
    %v3391 = vsel %vm501, %v3037, %v3362
    %v3392 = vsel %vm501, %v3038, %v3364
    %v3393 = vsel %vm504, %v3391, %v3370
    %v3394 = vsel %vm504, %v3392, %v3372
    %v3395 = vsel %vm507, %v3393, %v3378
    %v3396 = vsel %vm507, %v3394, %v3380
    %v3397 = vsel %vm510, %v3395, %v3386
    %v3398 = vsel %vm510, %v3396, %v3388
    %v3399 = vpack.c.bf16 %v3398, %v3397
    %3400 = vmatpush.bf16.msra.mxu0 %v553
    %3401 = vmatpush.bf16.msra.mxu0 %v552
    %3402 = vmatpush.bf16.msra.mxu0 %v551
    %3403 = vmatpush.bf16.msra.mxu0 %v550
    %3404 = vmatpush.bf16.msra.mxu0 %v549
    %3405 = vmatpush.bf16.msra.mxu0 %v548
    %3406 = vmatpush.bf16.msra.mxu0 %v547
    %3407 = vmatpush.bf16.msra.mxu0 %v546
    %3408 = vmatmul.bf16.gmra.mxu0 %v3399
    %v3409 = vpop.f32.mrf.mxu0
    %v3410 = vadd.f32 0.0, %v3409
    %v3411 = vpop.f32.mrf.mxu0
    %v3412 = vadd.f32 0.0, %v3411
    %3413 = vdwg.mxu0
    %v3414 = vmul.f32 %v3410, %v107
    %v3415 = vmul.f32 %v3412, %v107
    %v3416 = vsel %vm54, %v3414, 0.0
    %3417 = vadd.xlane.f32.xlu0 %v3416
    %v3418 = vpop.xlane.xlu0 %3417
    %v3419 = vsel %vm54, %v3415, 0.0
    %3420 = vadd.xlane.f32.xlu0 %v3419
    %v3421 = vpop.xlane.xlu0 %3420
    %v3422 = vmul.f32 %v3418, %v67
    %v3423 = vmul.f32 %v3421, %v67
    %v3424 = vmul.f32 %v3414, %v3013
    %v3425 = vmul.f32 %v3415, %v3014
    %v3426 = vsel %vm54, %v3424, 0.0
    %3427 = vadd.xlane.f32.xlu0 %v3426
    %v3428 = vpop.xlane.xlu0 %3427
    %v3429 = vsel %vm54, %v3425, 0.0
    %3430 = vadd.xlane.f32.xlu0 %v3429
    %v3431 = vpop.xlane.xlu0 %3430
    %v3432 = vmul.f32 %v3428, %v67
    %v3433 = vmul.f32 %v3431, %v67
    %v3434 = vsub.f32 %v3414, %v3422
    %v3435 = vsub.f32 %v3415, %v3423
    %v3436 = vmul.f32 %v3013, %v3432
    %v3437 = vmul.f32 %v3014, %v3433
    %v3438 = vsub.f32 %v3434, %v3436
    %v3439 = vsub.f32 %v3435, %v3437
    %v3440 = vmul.f32 %v3002, %v3438
    %v3441 = vmul.f32 %v3012, %v3439
    %v3442 = vsub.f32 %v2969, %v3440
    %v3443 = vsub.f32 %v2970, %v3441
    %v3444 = vsel %vm54, %v3442, 0.0
    %3445 = vadd.xlane.f32.xlu0 %v3444
    %v3446 = vpop.xlane.xlu0 %3445
    %v3447 = vsel %vm54, %v3443, 0.0
    %3448 = vadd.xlane.f32.xlu0 %v3447
    %v3449 = vpop.xlane.xlu0 %3448
    %v3450 = vmul.f32 %v3446, %v67
    %v3451 = vmul.f32 %v3449, %v67
    %v3452 = vsub.f32 %v3442, %v3450
    %v3453 = vsub.f32 %v3443, %v3451
    %v3454 = vmul.f32 %v3452, %v3452
    %v3455 = vmul.f32 %v3453, %v3453
    %v3456 = vsel %vm54, %v3454, 0.0
    %3457 = vadd.xlane.f32.xlu0 %v3456
    %v3458 = vpop.xlane.xlu0 %3457
    %v3459 = vsel %vm54, %v3455, 0.0
    %3460 = vadd.xlane.f32.xlu0 %v3459
    %v3461 = vpop.xlane.xlu0 %3460
    %v3462 = vmul.f32 %v3458, %v67
    %v3463 = vmul.f32 %v3461, %v67
    %v3464 = vadd.f32 %v3462, 1e-05
    %v3465 = vadd.f32 %v3463, 1e-05
    %v3466 = vrsqrt.pop %v3464
    %v3467 = vmul.f32 %v3466, %v3464
    %v3468 = vmul.f32 %v3467, %v3466
    %v3469 = vmul.f32 0.5, %v3468
    %v3470 = vsub.f32 1.5, %v3469
    %v3471 = vmul.f32 %v3466, %v3470
    %vm3472 = vweird.f32 %v3464
    %vm3473 = vweird.f32 %v3466
    %vm3474 = vmor %vm3472, %vm3473
    %v3475 = vsel %vm3474, %v3466, %v3471
    %v3476 = vrsqrt.pop %v3465
    %v3477 = vmul.f32 %v3476, %v3465
    %v3478 = vmul.f32 %v3477, %v3476
    %v3479 = vmul.f32 0.5, %v3478
    %v3480 = vsub.f32 1.5, %v3479
    %v3481 = vmul.f32 %v3476, %v3480
    %vm3482 = vweird.f32 %v3465
    %vm3483 = vweird.f32 %v3476
    %vm3484 = vmor %vm3482, %vm3483
    %v3485 = vsel %vm3484, %v3476, %v3481
    %v3486 = vmul.f32 %v3452, %v3475
    %v3487 = vmul.f32 %v3453, %v3485
    %v3488 = vmul.f32 %v107, %v3486
    %v3489 = vmul.f32 %v107, %v3487
    %v3490 = vadd.f32 %v3488, %v112
    %v3491 = vadd.f32 %v3489, %v112
    %v3492 = vpack.c.bf16 %v3491, %v3490
    %v3494 = vsel %vm54, %v3492, 0
    %3496 = vmatpush.bf16.msra.mxu0 0
    %3497 = vmatpush.bf16.msra.mxu0 0
    %3498 = vmatpush.bf16.msra.mxu0 0
    %3499 = vmatpush.bf16.msra.mxu0 0
    %3500 = vmatpush.bf16.msra.mxu0 0
    %3501 = vmatpush.bf16.msra.mxu0 0
    %3502 = vmatpush.bf16.msra.mxu0 %v126
    %3503 = vmatpush.bf16.msra.mxu0 %v125
    %3504 = vmatmul.bf16.gmra.mxu0 %v3494
    %v3505 = vpop.f32.mrf.mxu0
    %v3506 = vadd.f32 0.0, %v3505
    %v3507 = vpop.f32.mrf.mxu0
    %v3508 = vadd.f32 0.0, %v3507
    %3509 = vdwg.mxu0
    %v3510 = vmax.f32 %v3506, 0.0
    %v3511 = vmax.f32 %v3508, 0.0
    %3514 = vrot.lane.b32.xlu0 %v3506, 64
    %v3515 = vpop.permute.xlu0 %3514
    %3516 = vrot.lane.b32.xlu0 %v3508, 64
    %v3517 = vpop.permute.xlu0 %3516
    %3518 = vrot.lane.b32.xlu0 %v3506, 32
    %v3519 = vpop.permute.xlu0 %3518
    %3520 = vrot.lane.b32.xlu0 %v3508, 32
    %v3521 = vpop.permute.xlu0 %3520
    %v3522 = vsel %vm158, %v3515, 0
    %v3524 = vsel %vm158, %v3517, 0
    %v3526 = vsel %vm158, %v3519, 0
    %v3528 = vsel %vm158, %v3521, 0
    %3530 = vmatpush.xpose.msra.mxu0 0.0
    %3531 = vmatpush.xpose.msra.mxu0 0.0
    %3532 = vmatpush.xpose.msra.mxu0 0.0
    %3533 = vmatpush.xpose.msra.mxu0 0.0
    %3534 = vmatpush.xpose.msra.mxu0 0.0
    %3535 = vmatpush.xpose.msra.mxu0 0.0
    %3536 = vmatpush.xpose.msra.mxu0 0.0
    %3537 = vmatpush.xpose.msra.mxu0 0.0
    %3538 = vmatpush.xpose.msra.mxu0 0.0
    %3539 = vmatpush.xpose.msra.mxu0 0.0
    %3540 = vmatpush.xpose.msra.mxu0 0.0
    %3541 = vmatpush.xpose.msra.mxu0 0.0
    %3542 = vmatpush.xpose.msra.mxu0 0.0
    %3543 = vmatpush.xpose.msra.mxu0 0.0
    %3544 = vmatpush.xpose.msra.mxu0 %v3528
    %3545 = vmatpush.xpose.msra.mxu0 %v3526
    %3546 = vmatmul.f32.gmra.mxu0 %v3522
    %v3547 = vpop.f32.mrf.mxu0
    %v3548 = vadd.f32 0.0, %v3547
    %3549 = vmatmul.f32.gmra.mxu0 %v3524
    %v3550 = vpop.f32.mrf.mxu0
    %v3551 = vadd.f32 0.0, %v3550
    %3552 = vdwg.mxu0
    %v3553 = vmul.f32 %v3548, 0.25
    %v3554 = vmul.f32 %v3551, 0.25
    %v3555 = vadd.f32 %v3553, %v52
    %v3556 = vadd.f32 %v3554, %v53
    %v3557 = vsel %vm158, %v3555, -inf
    %3558 = vmax.xlane.f32.xlu0 %v3557
    %v3559 = vpop.xlane.xlu0 %3558
    %v3560 = vsel %vm158, %v3556, -inf
    %3561 = vmax.xlane.f32.xlu0 %v3560
    %v3562 = vpop.xlane.xlu0 %3561
    %v3563 = vsub.f32 %v3555, %v3559
    %v3564 = vsub.f32 %v3556, %v3562
    %v3565 = vmul.f32 %v3563, 1.442695
    %v3566 = vpow.pop %v3565
    %v3567 = vmul.f32 %v3564, 1.442695
    %v3568 = vpow.pop %v3567
    %v3569 = vsel %vm158, %v3566, 0.0
    %3570 = vadd.xlane.f32.xlu0 %v3569
    %v3571 = vpop.xlane.xlu0 %3570
    %v3572 = vsel %vm158, %v3568, 0.0
    %3573 = vadd.xlane.f32.xlu0 %v3572
    %v3574 = vpop.xlane.xlu0 %3573
    %v3575 = vrcp.pop %v3571
    %v3576 = vrcp.pop %v3574
    %v3577 = vmul.f32 %v3566, %v3575
    %v3578 = vmul.f32 %v3568, %v3576
    %v3582 = vsel %vm158, %v3577, 0
    %v3585 = vsel %vm158, %v3578, 0
    %3587 = vmatpush.msra.mxu0 0.0
    %3588 = vmatpush.msra.mxu0 0.0
    %3589 = vmatpush.msra.mxu0 0.0
    %3590 = vmatpush.msra.mxu0 0.0
    %3591 = vmatpush.msra.mxu0 0.0
    %3592 = vmatpush.msra.mxu0 0.0
    %3593 = vmatpush.msra.mxu0 0.0
    %3594 = vmatpush.msra.mxu0 0.0
    %3595 = vmatpush.msra.mxu0 0.0
    %3596 = vmatpush.msra.mxu0 0.0
    %3597 = vmatpush.msra.mxu0 0.0
    %3598 = vmatpush.msra.mxu0 0.0
    %3599 = vmatpush.msra.mxu0 0.0
    %3600 = vmatpush.msra.mxu0 0.0
    %3601 = vmatpush.msra.mxu0 %v3521
    %3602 = vmatpush.msra.mxu0 %v3519
    %3603 = vmatmul.f32.gmra.mxu0 %v3582
    %v3604 = vpop.f32.mrf.mxu0
    %v3605 = vadd.f32 0.0, %v3604
    %3606 = vmatmul.f32.gmra.mxu0 %v3585
    %v3607 = vpop.f32.mrf.mxu0
    %v3608 = vadd.f32 0.0, %v3607
    %3609 = vdwg.mxu0
    %3610 = vxpose.xlu0.b32.start [1/16] %v3577, 128
    %3611 = vxpose.xlu0.b32.cont [2/16] %v3578, 128
    %3612 = vxpose.xlu0.b32.cont [3/16] 0.0, 128
    %3613 = vxpose.xlu0.b32.cont [4/16] 0.0, 128
    %3614 = vxpose.xlu0.b32.cont [5/16] 0.0, 128
    %3615 = vxpose.xlu0.b32.cont [6/16] 0.0, 128
    %3616 = vxpose.xlu0.b32.cont [7/16] 0.0, 128
    %3617 = vxpose.xlu0.b32.cont [8/16] 0.0, 128
    %3618 = vxpose.xlu0.b32.cont [9/16] 0.0, 128
    %3619 = vxpose.xlu0.b32.cont [10/16] 0.0, 128
    %3620 = vxpose.xlu0.b32.cont [11/16] 0.0, 128
    %3621 = vxpose.xlu0.b32.cont [12/16] 0.0, 128
    %3622 = vxpose.xlu0.b32.cont [13/16] 0.0, 128
    %3623 = vxpose.xlu0.b32.cont [14/16] 0.0, 128
    %3624 = vxpose.xlu0.b32.cont [15/16] 0.0, 128
    %3625 = vxpose.xlu0.b32.end [16/16] 0.0, 128
    %v3626 = vpop.trf.xlu0
    %v3627 = vpop.trf.xlu0
    %v3628 = vpop.trf.xlu0
    %v3629 = vpop.trf.xlu0
    %v3630 = vpop.trf.xlu0
    %v3631 = vpop.trf.xlu0
    %v3632 = vpop.trf.xlu0
    %v3633 = vpop.trf.xlu0
    %v3634 = vpop.trf.xlu0
    %v3635 = vpop.trf.xlu0
    %v3636 = vpop.trf.xlu0
    %v3637 = vpop.trf.xlu0
    %v3638 = vpop.trf.xlu0
    %v3639 = vpop.trf.xlu0
    %v3640 = vpop.trf.xlu0
    %v3641 = vpop.trf.xlu0
    %v3645 = vsel %vm158, %v3626, 0
    %v3648 = vsel %vm158, %v3627, 0
    %3650 = vmatpush.msra.mxu0 0.0
    %3651 = vmatpush.msra.mxu0 0.0
    %3652 = vmatpush.msra.mxu0 0.0
    %3653 = vmatpush.msra.mxu0 0.0
    %3654 = vmatpush.msra.mxu0 0.0
    %3655 = vmatpush.msra.mxu0 0.0
    %3656 = vmatpush.msra.mxu0 0.0
    %3657 = vmatpush.msra.mxu0 0.0
    %3658 = vmatpush.msra.mxu0 0.0
    %3659 = vmatpush.msra.mxu0 0.0
    %3660 = vmatpush.msra.mxu0 0.0
    %3661 = vmatpush.msra.mxu0 0.0
    %3662 = vmatpush.msra.mxu0 0.0
    %3663 = vmatpush.msra.mxu0 0.0
    %3664 = vmatpush.msra.mxu0 %v3517
    %3665 = vmatpush.msra.mxu0 %v3515
    %3666 = vmatmul.f32.gmra.mxu0 %v3645
    %v3667 = vpop.f32.mrf.mxu0
    %v3668 = vadd.f32 0.0, %v3667
    %3669 = vmatmul.f32.gmra.mxu0 %v3648
    %v3670 = vpop.f32.mrf.mxu0
    %v3671 = vadd.f32 0.0, %v3670
    %3672 = vdwg.mxu0
    %3673 = vrot.lane.b32.xlu0 %v3506, 48
    %v3674 = vpop.permute.xlu0 %3673
    %3675 = vrot.lane.b32.xlu0 %v3508, 48
    %v3676 = vpop.permute.xlu0 %3675
    %3677 = vrot.lane.b32.xlu0 %v3506, 16
    %v3678 = vpop.permute.xlu0 %3677
    %3679 = vrot.lane.b32.xlu0 %v3508, 16
    %v3680 = vpop.permute.xlu0 %3679
    %v3681 = vsel %vm158, %v3674, 0
    %v3683 = vsel %vm158, %v3676, 0
    %v3685 = vsel %vm158, %v3678, 0
    %v3687 = vsel %vm158, %v3680, 0
    %3689 = vmatpush.xpose.msra.mxu0 0.0
    %3690 = vmatpush.xpose.msra.mxu0 0.0
    %3691 = vmatpush.xpose.msra.mxu0 0.0
    %3692 = vmatpush.xpose.msra.mxu0 0.0
    %3693 = vmatpush.xpose.msra.mxu0 0.0
    %3694 = vmatpush.xpose.msra.mxu0 0.0
    %3695 = vmatpush.xpose.msra.mxu0 0.0
    %3696 = vmatpush.xpose.msra.mxu0 0.0
    %3697 = vmatpush.xpose.msra.mxu0 0.0
    %3698 = vmatpush.xpose.msra.mxu0 0.0
    %3699 = vmatpush.xpose.msra.mxu0 0.0
    %3700 = vmatpush.xpose.msra.mxu0 0.0
    %3701 = vmatpush.xpose.msra.mxu0 0.0
    %3702 = vmatpush.xpose.msra.mxu0 0.0
    %3703 = vmatpush.xpose.msra.mxu0 %v3687
    %3704 = vmatpush.xpose.msra.mxu0 %v3685
    %3705 = vmatmul.f32.gmra.mxu0 %v3681
    %v3706 = vpop.f32.mrf.mxu0
    %v3707 = vadd.f32 0.0, %v3706
    %3708 = vmatmul.f32.gmra.mxu0 %v3683
    %v3709 = vpop.f32.mrf.mxu0
    %v3710 = vadd.f32 0.0, %v3709
    %3711 = vdwg.mxu0
    %v3712 = vmul.f32 %v3707, 0.25
    %v3713 = vmul.f32 %v3710, 0.25
    %v3714 = vadd.f32 %v3712, %v52
    %v3715 = vadd.f32 %v3713, %v53
    %v3716 = vsel %vm158, %v3714, -inf
    %3717 = vmax.xlane.f32.xlu0 %v3716
    %v3718 = vpop.xlane.xlu0 %3717
    %v3719 = vsel %vm158, %v3715, -inf
    %3720 = vmax.xlane.f32.xlu0 %v3719
    %v3721 = vpop.xlane.xlu0 %3720
    %v3722 = vsub.f32 %v3714, %v3718
    %v3723 = vsub.f32 %v3715, %v3721
    %v3724 = vmul.f32 %v3722, 1.442695
    %v3725 = vpow.pop %v3724
    %v3726 = vmul.f32 %v3723, 1.442695
    %v3727 = vpow.pop %v3726
    %v3728 = vsel %vm158, %v3725, 0.0
    %3729 = vadd.xlane.f32.xlu0 %v3728
    %v3730 = vpop.xlane.xlu0 %3729
    %v3731 = vsel %vm158, %v3727, 0.0
    %3732 = vadd.xlane.f32.xlu0 %v3731
    %v3733 = vpop.xlane.xlu0 %3732
    %v3734 = vrcp.pop %v3730
    %v3735 = vrcp.pop %v3733
    %v3736 = vmul.f32 %v3725, %v3734
    %v3737 = vmul.f32 %v3727, %v3735
    %v3741 = vsel %vm158, %v3736, 0
    %v3744 = vsel %vm158, %v3737, 0
    %3746 = vmatpush.msra.mxu0 0.0
    %3747 = vmatpush.msra.mxu0 0.0
    %3748 = vmatpush.msra.mxu0 0.0
    %3749 = vmatpush.msra.mxu0 0.0
    %3750 = vmatpush.msra.mxu0 0.0
    %3751 = vmatpush.msra.mxu0 0.0
    %3752 = vmatpush.msra.mxu0 0.0
    %3753 = vmatpush.msra.mxu0 0.0
    %3754 = vmatpush.msra.mxu0 0.0
    %3755 = vmatpush.msra.mxu0 0.0
    %3756 = vmatpush.msra.mxu0 0.0
    %3757 = vmatpush.msra.mxu0 0.0
    %3758 = vmatpush.msra.mxu0 0.0
    %3759 = vmatpush.msra.mxu0 0.0
    %3760 = vmatpush.msra.mxu0 %v3680
    %3761 = vmatpush.msra.mxu0 %v3678
    %3762 = vmatmul.f32.gmra.mxu0 %v3741
    %v3763 = vpop.f32.mrf.mxu0
    %v3764 = vadd.f32 0.0, %v3763
    %3765 = vmatmul.f32.gmra.mxu0 %v3744
    %v3766 = vpop.f32.mrf.mxu0
    %v3767 = vadd.f32 0.0, %v3766
    %3768 = vdwg.mxu0
    %3769 = vxpose.xlu0.b32.start [1/16] %v3736, 128
    %3770 = vxpose.xlu0.b32.cont [2/16] %v3737, 128
    %3771 = vxpose.xlu0.b32.cont [3/16] 0.0, 128
    %3772 = vxpose.xlu0.b32.cont [4/16] 0.0, 128
    %3773 = vxpose.xlu0.b32.cont [5/16] 0.0, 128
    %3774 = vxpose.xlu0.b32.cont [6/16] 0.0, 128
    %3775 = vxpose.xlu0.b32.cont [7/16] 0.0, 128
    %3776 = vxpose.xlu0.b32.cont [8/16] 0.0, 128
    %3777 = vxpose.xlu0.b32.cont [9/16] 0.0, 128
    %3778 = vxpose.xlu0.b32.cont [10/16] 0.0, 128
    %3779 = vxpose.xlu0.b32.cont [11/16] 0.0, 128
    %3780 = vxpose.xlu0.b32.cont [12/16] 0.0, 128
    %3781 = vxpose.xlu0.b32.cont [13/16] 0.0, 128
    %3782 = vxpose.xlu0.b32.cont [14/16] 0.0, 128
    %3783 = vxpose.xlu0.b32.cont [15/16] 0.0, 128
    %3784 = vxpose.xlu0.b32.end [16/16] 0.0, 128
    %v3785 = vpop.trf.xlu0
    %v3786 = vpop.trf.xlu0
    %v3787 = vpop.trf.xlu0
    %v3788 = vpop.trf.xlu0
    %v3789 = vpop.trf.xlu0
    %v3790 = vpop.trf.xlu0
    %v3791 = vpop.trf.xlu0
    %v3792 = vpop.trf.xlu0
    %v3793 = vpop.trf.xlu0
    %v3794 = vpop.trf.xlu0
    %v3795 = vpop.trf.xlu0
    %v3796 = vpop.trf.xlu0
    %v3797 = vpop.trf.xlu0
    %v3798 = vpop.trf.xlu0
    %v3799 = vpop.trf.xlu0
    %v3800 = vpop.trf.xlu0
    %v3804 = vsel %vm158, %v3785, 0
    %v3807 = vsel %vm158, %v3786, 0
    %3809 = vmatpush.msra.mxu0 0.0
    %3810 = vmatpush.msra.mxu0 0.0
    %3811 = vmatpush.msra.mxu0 0.0
    %3812 = vmatpush.msra.mxu0 0.0
    %3813 = vmatpush.msra.mxu0 0.0
    %3814 = vmatpush.msra.mxu0 0.0
    %3815 = vmatpush.msra.mxu0 0.0
    %3816 = vmatpush.msra.mxu0 0.0
    %3817 = vmatpush.msra.mxu0 0.0
    %3818 = vmatpush.msra.mxu0 0.0
    %3819 = vmatpush.msra.mxu0 0.0
    %3820 = vmatpush.msra.mxu0 0.0
    %3821 = vmatpush.msra.mxu0 0.0
    %3822 = vmatpush.msra.mxu0 0.0
    %3823 = vmatpush.msra.mxu0 %v3676
    %3824 = vmatpush.msra.mxu0 %v3674
    %3825 = vmatmul.f32.gmra.mxu0 %v3804
    %v3826 = vpop.f32.mrf.mxu0
    %v3827 = vadd.f32 0.0, %v3826
    %3828 = vmatmul.f32.gmra.mxu0 %v3807
    %v3829 = vpop.f32.mrf.mxu0
    %v3830 = vadd.f32 0.0, %v3829
    %3831 = vdwg.mxu0
    %3834 = vrot.lane.b32.xlu0 %v3605, 64
    %v3835 = vpop.permute.xlu0 %3834
    %3836 = vrot.lane.b32.xlu0 %v3608, 64
    %v3837 = vpop.permute.xlu0 %3836
    %3842 = vrot.lane.b32.xlu0 %v3764, 80
    %v3843 = vpop.permute.xlu0 %3842
    %3844 = vrot.lane.b32.xlu0 %v3767, 80
    %v3845 = vpop.permute.xlu0 %3844
    %3850 = vrot.lane.b32.xlu0 %v3668, 96
    %v3851 = vpop.permute.xlu0 %3850
    %3852 = vrot.lane.b32.xlu0 %v3671, 96
    %v3853 = vpop.permute.xlu0 %3852
    %3858 = vrot.lane.b32.xlu0 %v3827, 112
    %v3859 = vpop.permute.xlu0 %3858
    %3860 = vrot.lane.b32.xlu0 %v3830, 112
    %v3861 = vpop.permute.xlu0 %3860
    %v3864 = vsel %vm501, %v3510, %v3835
    %v3865 = vsel %vm501, %v3511, %v3837
    %v3866 = vsel %vm504, %v3864, %v3843
    %v3867 = vsel %vm504, %v3865, %v3845
    %v3868 = vsel %vm507, %v3866, %v3851
    %v3869 = vsel %vm507, %v3867, %v3853
    %v3870 = vsel %vm510, %v3868, %v3859
    %v3871 = vsel %vm510, %v3869, %v3861
    %v3872 = vpack.c.bf16 %v3871, %v3870
    %3873 = vmatpush.bf16.msra.mxu0 %v553
    %3874 = vmatpush.bf16.msra.mxu0 %v552
    %3875 = vmatpush.bf16.msra.mxu0 %v551
    %3876 = vmatpush.bf16.msra.mxu0 %v550
    %3877 = vmatpush.bf16.msra.mxu0 %v549
    %3878 = vmatpush.bf16.msra.mxu0 %v548
    %3879 = vmatpush.bf16.msra.mxu0 %v547
    %3880 = vmatpush.bf16.msra.mxu0 %v546
    %3881 = vmatmul.bf16.gmra.mxu0 %v3872
    %v3882 = vpop.f32.mrf.mxu0
    %v3883 = vadd.f32 0.0, %v3882
    %v3884 = vpop.f32.mrf.mxu0
    %v3885 = vadd.f32 0.0, %v3884
    %3886 = vdwg.mxu0
    %v3887 = vmul.f32 %v3883, %v107
    %v3888 = vmul.f32 %v3885, %v107
    %v3889 = vsel %vm54, %v3887, 0.0
    %3890 = vadd.xlane.f32.xlu0 %v3889
    %v3891 = vpop.xlane.xlu0 %3890
    %v3892 = vsel %vm54, %v3888, 0.0
    %3893 = vadd.xlane.f32.xlu0 %v3892
    %v3894 = vpop.xlane.xlu0 %3893
    %v3895 = vmul.f32 %v3891, %v67
    %v3896 = vmul.f32 %v3894, %v67
    %v3897 = vmul.f32 %v3887, %v3486
    %v3898 = vmul.f32 %v3888, %v3487
    %v3899 = vsel %vm54, %v3897, 0.0
    %3900 = vadd.xlane.f32.xlu0 %v3899
    %v3901 = vpop.xlane.xlu0 %3900
    %v3902 = vsel %vm54, %v3898, 0.0
    %3903 = vadd.xlane.f32.xlu0 %v3902
    %v3904 = vpop.xlane.xlu0 %3903
    %v3905 = vmul.f32 %v3901, %v67
    %v3906 = vmul.f32 %v3904, %v67
    %v3907 = vsub.f32 %v3887, %v3895
    %v3908 = vsub.f32 %v3888, %v3896
    %v3909 = vmul.f32 %v3486, %v3905
    %v3910 = vmul.f32 %v3487, %v3906
    %v3911 = vsub.f32 %v3907, %v3909
    %v3912 = vsub.f32 %v3908, %v3910
    %v3913 = vmul.f32 %v3475, %v3911
    %v3914 = vmul.f32 %v3485, %v3912
    %v3915 = vsub.f32 %v3442, %v3913
    %v3916 = vsub.f32 %v3443, %v3914
    %v3917 = vsel %vm54, %v3915, 0.0
    %3918 = vadd.xlane.f32.xlu0 %v3917
    %v3919 = vpop.xlane.xlu0 %3918
    %v3920 = vsel %vm54, %v3916, 0.0
    %3921 = vadd.xlane.f32.xlu0 %v3920
    %v3922 = vpop.xlane.xlu0 %3921
    %v3923 = vmul.f32 %v3919, %v67
    %v3924 = vmul.f32 %v3922, %v67
    %v3925 = vsub.f32 %v3915, %v3923
    %v3926 = vsub.f32 %v3916, %v3924
    %v3927 = vmul.f32 %v3925, %v3925
    %v3928 = vmul.f32 %v3926, %v3926
    %v3929 = vsel %vm54, %v3927, 0.0
    %3930 = vadd.xlane.f32.xlu0 %v3929
    %v3931 = vpop.xlane.xlu0 %3930
    %v3932 = vsel %vm54, %v3928, 0.0
    %3933 = vadd.xlane.f32.xlu0 %v3932
    %v3934 = vpop.xlane.xlu0 %3933
    %v3935 = vmul.f32 %v3931, %v67
    %v3936 = vmul.f32 %v3934, %v67
    %v3937 = vadd.f32 %v3935, 1e-05
    %v3938 = vadd.f32 %v3936, 1e-05
    %v3939 = vrsqrt.pop %v3937
    %v3940 = vmul.f32 %v3939, %v3937
    %v3941 = vmul.f32 %v3940, %v3939
    %v3942 = vmul.f32 0.5, %v3941
    %v3943 = vsub.f32 1.5, %v3942
    %v3944 = vmul.f32 %v3939, %v3943
    %vm3945 = vweird.f32 %v3937
    %vm3946 = vweird.f32 %v3939
    %vm3947 = vmor %vm3945, %vm3946
    %v3948 = vsel %vm3947, %v3939, %v3944
    %v3949 = vrsqrt.pop %v3938
    %v3950 = vmul.f32 %v3949, %v3938
    %v3951 = vmul.f32 %v3950, %v3949
    %v3952 = vmul.f32 0.5, %v3951
    %v3953 = vsub.f32 1.5, %v3952
    %v3954 = vmul.f32 %v3949, %v3953
    %vm3955 = vweird.f32 %v3938
    %vm3956 = vweird.f32 %v3949
    %vm3957 = vmor %vm3955, %vm3956
    %v3958 = vsel %vm3957, %v3949, %v3954
    %v3959 = vmul.f32 %v3925, %v3948
    %v3960 = vmul.f32 %v3926, %v3958
    %v3961 = vmul.f32 %v107, %v3959
    %v3962 = vmul.f32 %v107, %v3960
    %v3963 = vadd.f32 %v3961, %v112
    %v3964 = vadd.f32 %v3962, %v112
    %v3965 = vpack.c.bf16 %v3964, %v3963
    %v3967 = vsel %vm54, %v3965, 0
    %3969 = vmatpush.bf16.msra.mxu0 0
    %3970 = vmatpush.bf16.msra.mxu0 0
    %3971 = vmatpush.bf16.msra.mxu0 0
    %3972 = vmatpush.bf16.msra.mxu0 0
    %3973 = vmatpush.bf16.msra.mxu0 0
    %3974 = vmatpush.bf16.msra.mxu0 0
    %3975 = vmatpush.bf16.msra.mxu0 %v126
    %3976 = vmatpush.bf16.msra.mxu0 %v125
    %3977 = vmatmul.bf16.gmra.mxu0 %v3967
    %v3978 = vpop.f32.mrf.mxu0
    %v3979 = vadd.f32 0.0, %v3978
    %v3980 = vpop.f32.mrf.mxu0
    %v3981 = vadd.f32 0.0, %v3980
    %3982 = vdwg.mxu0
    %v3983 = vmax.f32 %v3979, 0.0
    %v3984 = vmax.f32 %v3981, 0.0
    %3987 = vrot.lane.b32.xlu0 %v3979, 64
    %v3988 = vpop.permute.xlu0 %3987
    %3989 = vrot.lane.b32.xlu0 %v3981, 64
    %v3990 = vpop.permute.xlu0 %3989
    %3991 = vrot.lane.b32.xlu0 %v3979, 32
    %v3992 = vpop.permute.xlu0 %3991
    %3993 = vrot.lane.b32.xlu0 %v3981, 32
    %v3994 = vpop.permute.xlu0 %3993
    %v3995 = vsel %vm158, %v3988, 0
    %v3997 = vsel %vm158, %v3990, 0
    %v3999 = vsel %vm158, %v3992, 0
    %v4001 = vsel %vm158, %v3994, 0
    %4003 = vmatpush.xpose.msra.mxu0 0.0
    %4004 = vmatpush.xpose.msra.mxu0 0.0
    %4005 = vmatpush.xpose.msra.mxu0 0.0
    %4006 = vmatpush.xpose.msra.mxu0 0.0
    %4007 = vmatpush.xpose.msra.mxu0 0.0
    %4008 = vmatpush.xpose.msra.mxu0 0.0
    %4009 = vmatpush.xpose.msra.mxu0 0.0
    %4010 = vmatpush.xpose.msra.mxu0 0.0
    %4011 = vmatpush.xpose.msra.mxu0 0.0
    %4012 = vmatpush.xpose.msra.mxu0 0.0
    %4013 = vmatpush.xpose.msra.mxu0 0.0
    %4014 = vmatpush.xpose.msra.mxu0 0.0
    %4015 = vmatpush.xpose.msra.mxu0 0.0
    %4016 = vmatpush.xpose.msra.mxu0 0.0
    %4017 = vmatpush.xpose.msra.mxu0 %v4001
    %4018 = vmatpush.xpose.msra.mxu0 %v3999
    %4019 = vmatmul.f32.gmra.mxu0 %v3995
    %v4020 = vpop.f32.mrf.mxu0
    %v4021 = vadd.f32 0.0, %v4020
    %4022 = vmatmul.f32.gmra.mxu0 %v3997
    %v4023 = vpop.f32.mrf.mxu0
    %v4024 = vadd.f32 0.0, %v4023
    %4025 = vdwg.mxu0
    %v4026 = vmul.f32 %v4021, 0.25
    %v4027 = vmul.f32 %v4024, 0.25
    %v4028 = vadd.f32 %v4026, %v52
    %v4029 = vadd.f32 %v4027, %v53
    %v4030 = vsel %vm158, %v4028, -inf
    %4031 = vmax.xlane.f32.xlu0 %v4030
    %v4032 = vpop.xlane.xlu0 %4031
    %v4033 = vsel %vm158, %v4029, -inf
    %4034 = vmax.xlane.f32.xlu0 %v4033
    %v4035 = vpop.xlane.xlu0 %4034
    %v4036 = vsub.f32 %v4028, %v4032
    %v4037 = vsub.f32 %v4029, %v4035
    %v4038 = vmul.f32 %v4036, 1.442695
    %v4039 = vpow.pop %v4038
    %v4040 = vmul.f32 %v4037, 1.442695
    %v4041 = vpow.pop %v4040
    %v4042 = vsel %vm158, %v4039, 0.0
    %4043 = vadd.xlane.f32.xlu0 %v4042
    %v4044 = vpop.xlane.xlu0 %4043
    %v4045 = vsel %vm158, %v4041, 0.0
    %4046 = vadd.xlane.f32.xlu0 %v4045
    %v4047 = vpop.xlane.xlu0 %4046
    %v4048 = vrcp.pop %v4044
    %v4049 = vrcp.pop %v4047
    %v4050 = vmul.f32 %v4039, %v4048
    %v4051 = vmul.f32 %v4041, %v4049
    %v4055 = vsel %vm158, %v4050, 0
    %v4058 = vsel %vm158, %v4051, 0
    %4060 = vmatpush.msra.mxu0 0.0
    %4061 = vmatpush.msra.mxu0 0.0
    %4062 = vmatpush.msra.mxu0 0.0
    %4063 = vmatpush.msra.mxu0 0.0
    %4064 = vmatpush.msra.mxu0 0.0
    %4065 = vmatpush.msra.mxu0 0.0
    %4066 = vmatpush.msra.mxu0 0.0
    %4067 = vmatpush.msra.mxu0 0.0
    %4068 = vmatpush.msra.mxu0 0.0
    %4069 = vmatpush.msra.mxu0 0.0
    %4070 = vmatpush.msra.mxu0 0.0
    %4071 = vmatpush.msra.mxu0 0.0
    %4072 = vmatpush.msra.mxu0 0.0
    %4073 = vmatpush.msra.mxu0 0.0
    %4074 = vmatpush.msra.mxu0 %v3994
    %4075 = vmatpush.msra.mxu0 %v3992
    %4076 = vmatmul.f32.gmra.mxu0 %v4055
    %v4077 = vpop.f32.mrf.mxu0
    %v4078 = vadd.f32 0.0, %v4077
    %4079 = vmatmul.f32.gmra.mxu0 %v4058
    %v4080 = vpop.f32.mrf.mxu0
    %v4081 = vadd.f32 0.0, %v4080
    %4082 = vdwg.mxu0
    %4083 = vxpose.xlu0.b32.start [1/16] %v4050, 128
    %4084 = vxpose.xlu0.b32.cont [2/16] %v4051, 128
    %4085 = vxpose.xlu0.b32.cont [3/16] 0.0, 128
    %4086 = vxpose.xlu0.b32.cont [4/16] 0.0, 128
    %4087 = vxpose.xlu0.b32.cont [5/16] 0.0, 128
    %4088 = vxpose.xlu0.b32.cont [6/16] 0.0, 128
    %4089 = vxpose.xlu0.b32.cont [7/16] 0.0, 128
    %4090 = vxpose.xlu0.b32.cont [8/16] 0.0, 128
    %4091 = vxpose.xlu0.b32.cont [9/16] 0.0, 128
    %4092 = vxpose.xlu0.b32.cont [10/16] 0.0, 128
    %4093 = vxpose.xlu0.b32.cont [11/16] 0.0, 128
    %4094 = vxpose.xlu0.b32.cont [12/16] 0.0, 128
    %4095 = vxpose.xlu0.b32.cont [13/16] 0.0, 128
    %4096 = vxpose.xlu0.b32.cont [14/16] 0.0, 128
    %4097 = vxpose.xlu0.b32.cont [15/16] 0.0, 128
    %4098 = vxpose.xlu0.b32.end [16/16] 0.0, 128
    %v4099 = vpop.trf.xlu0
    %v4100 = vpop.trf.xlu0
    %v4101 = vpop.trf.xlu0
    %v4102 = vpop.trf.xlu0
    %v4103 = vpop.trf.xlu0
    %v4104 = vpop.trf.xlu0
    %v4105 = vpop.trf.xlu0
    %v4106 = vpop.trf.xlu0
    %v4107 = vpop.trf.xlu0
    %v4108 = vpop.trf.xlu0
    %v4109 = vpop.trf.xlu0
    %v4110 = vpop.trf.xlu0
    %v4111 = vpop.trf.xlu0
    %v4112 = vpop.trf.xlu0
    %v4113 = vpop.trf.xlu0
    %v4114 = vpop.trf.xlu0
    %v4118 = vsel %vm158, %v4099, 0
    %v4121 = vsel %vm158, %v4100, 0
    %4123 = vmatpush.msra.mxu0 0.0
    %4124 = vmatpush.msra.mxu0 0.0
    %4125 = vmatpush.msra.mxu0 0.0
    %4126 = vmatpush.msra.mxu0 0.0
    %4127 = vmatpush.msra.mxu0 0.0
    %4128 = vmatpush.msra.mxu0 0.0
    %4129 = vmatpush.msra.mxu0 0.0
    %4130 = vmatpush.msra.mxu0 0.0
    %4131 = vmatpush.msra.mxu0 0.0
    %4132 = vmatpush.msra.mxu0 0.0
    %4133 = vmatpush.msra.mxu0 0.0
    %4134 = vmatpush.msra.mxu0 0.0
    %4135 = vmatpush.msra.mxu0 0.0
    %4136 = vmatpush.msra.mxu0 0.0
    %4137 = vmatpush.msra.mxu0 %v3990
    %4138 = vmatpush.msra.mxu0 %v3988
    %4139 = vmatmul.f32.gmra.mxu0 %v4118
    %v4140 = vpop.f32.mrf.mxu0
    %v4141 = vadd.f32 0.0, %v4140
    %4142 = vmatmul.f32.gmra.mxu0 %v4121
    %v4143 = vpop.f32.mrf.mxu0
    %v4144 = vadd.f32 0.0, %v4143
    %4145 = vdwg.mxu0
    %4146 = vrot.lane.b32.xlu0 %v3979, 48
    %v4147 = vpop.permute.xlu0 %4146
    %4148 = vrot.lane.b32.xlu0 %v3981, 48
    %v4149 = vpop.permute.xlu0 %4148
    %4150 = vrot.lane.b32.xlu0 %v3979, 16
    %v4151 = vpop.permute.xlu0 %4150
    %4152 = vrot.lane.b32.xlu0 %v3981, 16
    %v4153 = vpop.permute.xlu0 %4152
    %v4154 = vsel %vm158, %v4147, 0
    %v4156 = vsel %vm158, %v4149, 0
    %v4158 = vsel %vm158, %v4151, 0
    %v4160 = vsel %vm158, %v4153, 0
    %4162 = vmatpush.xpose.msra.mxu0 0.0
    %4163 = vmatpush.xpose.msra.mxu0 0.0
    %4164 = vmatpush.xpose.msra.mxu0 0.0
    %4165 = vmatpush.xpose.msra.mxu0 0.0
    %4166 = vmatpush.xpose.msra.mxu0 0.0
    %4167 = vmatpush.xpose.msra.mxu0 0.0
    %4168 = vmatpush.xpose.msra.mxu0 0.0
    %4169 = vmatpush.xpose.msra.mxu0 0.0
    %4170 = vmatpush.xpose.msra.mxu0 0.0
    %4171 = vmatpush.xpose.msra.mxu0 0.0
    %4172 = vmatpush.xpose.msra.mxu0 0.0
    %4173 = vmatpush.xpose.msra.mxu0 0.0
    %4174 = vmatpush.xpose.msra.mxu0 0.0
    %4175 = vmatpush.xpose.msra.mxu0 0.0
    %4176 = vmatpush.xpose.msra.mxu0 %v4160
    %4177 = vmatpush.xpose.msra.mxu0 %v4158
    %4178 = vmatmul.f32.gmra.mxu0 %v4154
    %v4179 = vpop.f32.mrf.mxu0
    %v4180 = vadd.f32 0.0, %v4179
    %4181 = vmatmul.f32.gmra.mxu0 %v4156
    %v4182 = vpop.f32.mrf.mxu0
    %v4183 = vadd.f32 0.0, %v4182
    %4184 = vdwg.mxu0
    %v4185 = vmul.f32 %v4180, 0.25
    %v4186 = vmul.f32 %v4183, 0.25
    %v4187 = vadd.f32 %v4185, %v52
    %v4188 = vadd.f32 %v4186, %v53
    %v4189 = vsel %vm158, %v4187, -inf
    %4190 = vmax.xlane.f32.xlu0 %v4189
    %v4191 = vpop.xlane.xlu0 %4190
    %v4192 = vsel %vm158, %v4188, -inf
    %4193 = vmax.xlane.f32.xlu0 %v4192
    %v4194 = vpop.xlane.xlu0 %4193
    %v4195 = vsub.f32 %v4187, %v4191
    %v4196 = vsub.f32 %v4188, %v4194
    %v4197 = vmul.f32 %v4195, 1.442695
    %v4198 = vpow.pop %v4197
    %v4199 = vmul.f32 %v4196, 1.442695
    %v4200 = vpow.pop %v4199
    %v4201 = vsel %vm158, %v4198, 0.0
    %4202 = vadd.xlane.f32.xlu0 %v4201
    %v4203 = vpop.xlane.xlu0 %4202
    %v4204 = vsel %vm158, %v4200, 0.0
    %4205 = vadd.xlane.f32.xlu0 %v4204
    %v4206 = vpop.xlane.xlu0 %4205
    %v4207 = vrcp.pop %v4203
    %v4208 = vrcp.pop %v4206
    %v4209 = vmul.f32 %v4198, %v4207
    %v4210 = vmul.f32 %v4200, %v4208
    %v4214 = vsel %vm158, %v4209, 0
    %v4217 = vsel %vm158, %v4210, 0
    %4219 = vmatpush.msra.mxu0 0.0
    %4220 = vmatpush.msra.mxu0 0.0
    %4221 = vmatpush.msra.mxu0 0.0
    %4222 = vmatpush.msra.mxu0 0.0
    %4223 = vmatpush.msra.mxu0 0.0
    %4224 = vmatpush.msra.mxu0 0.0
    %4225 = vmatpush.msra.mxu0 0.0
    %4226 = vmatpush.msra.mxu0 0.0
    %4227 = vmatpush.msra.mxu0 0.0
    %4228 = vmatpush.msra.mxu0 0.0
    %4229 = vmatpush.msra.mxu0 0.0
    %4230 = vmatpush.msra.mxu0 0.0
    %4231 = vmatpush.msra.mxu0 0.0
    %4232 = vmatpush.msra.mxu0 0.0
    %4233 = vmatpush.msra.mxu0 %v4153
    %4234 = vmatpush.msra.mxu0 %v4151
    %4235 = vmatmul.f32.gmra.mxu0 %v4214
    %v4236 = vpop.f32.mrf.mxu0
    %v4237 = vadd.f32 0.0, %v4236
    %4238 = vmatmul.f32.gmra.mxu0 %v4217
    %v4239 = vpop.f32.mrf.mxu0
    %v4240 = vadd.f32 0.0, %v4239
    %4241 = vdwg.mxu0
    %4242 = vxpose.xlu0.b32.start [1/16] %v4209, 128
    %4243 = vxpose.xlu0.b32.cont [2/16] %v4210, 128
    %4244 = vxpose.xlu0.b32.cont [3/16] 0.0, 128
    %4245 = vxpose.xlu0.b32.cont [4/16] 0.0, 128
    %4246 = vxpose.xlu0.b32.cont [5/16] 0.0, 128
    %4247 = vxpose.xlu0.b32.cont [6/16] 0.0, 128
    %4248 = vxpose.xlu0.b32.cont [7/16] 0.0, 128
    %4249 = vxpose.xlu0.b32.cont [8/16] 0.0, 128
    %4250 = vxpose.xlu0.b32.cont [9/16] 0.0, 128
    %4251 = vxpose.xlu0.b32.cont [10/16] 0.0, 128
    %4252 = vxpose.xlu0.b32.cont [11/16] 0.0, 128
    %4253 = vxpose.xlu0.b32.cont [12/16] 0.0, 128
    %4254 = vxpose.xlu0.b32.cont [13/16] 0.0, 128
    %4255 = vxpose.xlu0.b32.cont [14/16] 0.0, 128
    %4256 = vxpose.xlu0.b32.cont [15/16] 0.0, 128
    %4257 = vxpose.xlu0.b32.end [16/16] 0.0, 128
    %v4258 = vpop.trf.xlu0
    %v4259 = vpop.trf.xlu0
    %v4260 = vpop.trf.xlu0
    %v4261 = vpop.trf.xlu0
    %v4262 = vpop.trf.xlu0
    %v4263 = vpop.trf.xlu0
    %v4264 = vpop.trf.xlu0
    %v4265 = vpop.trf.xlu0
    %v4266 = vpop.trf.xlu0
    %v4267 = vpop.trf.xlu0
    %v4268 = vpop.trf.xlu0
    %v4269 = vpop.trf.xlu0
    %v4270 = vpop.trf.xlu0
    %v4271 = vpop.trf.xlu0
    %v4272 = vpop.trf.xlu0
    %v4273 = vpop.trf.xlu0
    %v4277 = vsel %vm158, %v4258, 0
    %v4280 = vsel %vm158, %v4259, 0
    %4282 = vmatpush.msra.mxu0 0.0
    %4283 = vmatpush.msra.mxu0 0.0
    %4284 = vmatpush.msra.mxu0 0.0
    %4285 = vmatpush.msra.mxu0 0.0
    %4286 = vmatpush.msra.mxu0 0.0
    %4287 = vmatpush.msra.mxu0 0.0
    %4288 = vmatpush.msra.mxu0 0.0
    %4289 = vmatpush.msra.mxu0 0.0
    %4290 = vmatpush.msra.mxu0 0.0
    %4291 = vmatpush.msra.mxu0 0.0
    %4292 = vmatpush.msra.mxu0 0.0
    %4293 = vmatpush.msra.mxu0 0.0
    %4294 = vmatpush.msra.mxu0 0.0
    %4295 = vmatpush.msra.mxu0 0.0
    %4296 = vmatpush.msra.mxu0 %v4149
    %4297 = vmatpush.msra.mxu0 %v4147
    %4298 = vmatmul.f32.gmra.mxu0 %v4277
    %v4299 = vpop.f32.mrf.mxu0
    %v4300 = vadd.f32 0.0, %v4299
    %4301 = vmatmul.f32.gmra.mxu0 %v4280
    %v4302 = vpop.f32.mrf.mxu0
    %v4303 = vadd.f32 0.0, %v4302
    %4304 = vdwg.mxu0
    %4307 = vrot.lane.b32.xlu0 %v4078, 64
    %v4308 = vpop.permute.xlu0 %4307
    %4309 = vrot.lane.b32.xlu0 %v4081, 64
    %v4310 = vpop.permute.xlu0 %4309
    %4315 = vrot.lane.b32.xlu0 %v4237, 80
    %v4316 = vpop.permute.xlu0 %4315
    %4317 = vrot.lane.b32.xlu0 %v4240, 80
    %v4318 = vpop.permute.xlu0 %4317
    %4323 = vrot.lane.b32.xlu0 %v4141, 96
    %v4324 = vpop.permute.xlu0 %4323
    %4325 = vrot.lane.b32.xlu0 %v4144, 96
    %v4326 = vpop.permute.xlu0 %4325
    %4331 = vrot.lane.b32.xlu0 %v4300, 112
    %v4332 = vpop.permute.xlu0 %4331
    %4333 = vrot.lane.b32.xlu0 %v4303, 112
    %v4334 = vpop.permute.xlu0 %4333
    %v4337 = vsel %vm501, %v3983, %v4308
    %v4338 = vsel %vm501, %v3984, %v4310
    %v4339 = vsel %vm504, %v4337, %v4316
    %v4340 = vsel %vm504, %v4338, %v4318
    %v4341 = vsel %vm507, %v4339, %v4324
    %v4342 = vsel %vm507, %v4340, %v4326
    %v4343 = vsel %vm510, %v4341, %v4332
    %v4344 = vsel %vm510, %v4342, %v4334
    %v4345 = vpack.c.bf16 %v4344, %v4343
    %4346 = vmatpush.bf16.msra.mxu0 %v553
    %4347 = vmatpush.bf16.msra.mxu0 %v552
    %4348 = vmatpush.bf16.msra.mxu0 %v551
    %4349 = vmatpush.bf16.msra.mxu0 %v550
    %4350 = vmatpush.bf16.msra.mxu0 %v549
    %4351 = vmatpush.bf16.msra.mxu0 %v548
    %4352 = vmatpush.bf16.msra.mxu0 %v547
    %4353 = vmatpush.bf16.msra.mxu0 %v546
    %4354 = vmatmul.bf16.gmra.mxu0 %v4345
    %v4355 = vpop.f32.mrf.mxu0
    %v4356 = vadd.f32 0.0, %v4355
    %v4357 = vpop.f32.mrf.mxu0
    %v4358 = vadd.f32 0.0, %v4357
    %4359 = vdwg.mxu0
    %v4360 = vmul.f32 %v4356, %v107
    %v4361 = vmul.f32 %v4358, %v107
    %v4362 = vsel %vm54, %v4360, 0.0
    %4363 = vadd.xlane.f32.xlu0 %v4362
    %v4364 = vpop.xlane.xlu0 %4363
    %v4365 = vsel %vm54, %v4361, 0.0
    %4366 = vadd.xlane.f32.xlu0 %v4365
    %v4367 = vpop.xlane.xlu0 %4366
    %v4368 = vmul.f32 %v4364, %v67
    %v4369 = vmul.f32 %v4367, %v67
    %v4370 = vmul.f32 %v4360, %v3959
    %v4371 = vmul.f32 %v4361, %v3960
    %v4372 = vsel %vm54, %v4370, 0.0
    %4373 = vadd.xlane.f32.xlu0 %v4372
    %v4374 = vpop.xlane.xlu0 %4373
    %v4375 = vsel %vm54, %v4371, 0.0
    %4376 = vadd.xlane.f32.xlu0 %v4375
    %v4377 = vpop.xlane.xlu0 %4376
    %v4378 = vmul.f32 %v4374, %v67
    %v4379 = vmul.f32 %v4377, %v67
    %v4380 = vsub.f32 %v4360, %v4368
    %v4381 = vsub.f32 %v4361, %v4369
    %v4382 = vmul.f32 %v3959, %v4378
    %v4383 = vmul.f32 %v3960, %v4379
    %v4384 = vsub.f32 %v4380, %v4382
    %v4385 = vsub.f32 %v4381, %v4383
    %v4386 = vmul.f32 %v3948, %v4384
    %v4387 = vmul.f32 %v3958, %v4385
    %v4388 = vsub.f32 %v3915, %v4386
    %v4389 = vsub.f32 %v3916, %v4387
    %v4390 = vsel %vm54, %v4388, 0.0
    %4391 = vadd.xlane.f32.xlu0 %v4390
    %v4392 = vpop.xlane.xlu0 %4391
    %v4393 = vsel %vm54, %v4389, 0.0
    %4394 = vadd.xlane.f32.xlu0 %v4393
    %v4395 = vpop.xlane.xlu0 %4394
    %v4396 = vmul.f32 %v4392, %v67
    %v4397 = vmul.f32 %v4395, %v67
    %v4398 = vsub.f32 %v4388, %v4396
    %v4399 = vsub.f32 %v4389, %v4397
    %v4400 = vmul.f32 %v4398, %v4398
    %v4401 = vmul.f32 %v4399, %v4399
    %v4402 = vsel %vm54, %v4400, 0.0
    %4403 = vadd.xlane.f32.xlu0 %v4402
    %v4404 = vpop.xlane.xlu0 %4403
    %v4405 = vsel %vm54, %v4401, 0.0
    %4406 = vadd.xlane.f32.xlu0 %v4405
    %v4407 = vpop.xlane.xlu0 %4406
    %v4408 = vmul.f32 %v4404, %v67
    %v4409 = vmul.f32 %v4407, %v67
    %v4410 = vadd.f32 %v4408, 1e-05
    %v4411 = vadd.f32 %v4409, 1e-05
    %v4412 = vrsqrt.pop %v4410
    %v4413 = vmul.f32 %v4412, %v4410
    %v4414 = vmul.f32 %v4413, %v4412
    %v4415 = vmul.f32 0.5, %v4414
    %v4416 = vsub.f32 1.5, %v4415
    %v4417 = vmul.f32 %v4412, %v4416
    %vm4418 = vweird.f32 %v4410
    %vm4419 = vweird.f32 %v4412
    %vm4420 = vmor %vm4418, %vm4419
    %v4421 = vsel %vm4420, %v4412, %v4417
    %v4422 = vrsqrt.pop %v4411
    %v4423 = vmul.f32 %v4422, %v4411
    %v4424 = vmul.f32 %v4423, %v4422
    %v4425 = vmul.f32 0.5, %v4424
    %v4426 = vsub.f32 1.5, %v4425
    %v4427 = vmul.f32 %v4422, %v4426
    %vm4428 = vweird.f32 %v4411
    %vm4429 = vweird.f32 %v4422
    %vm4430 = vmor %vm4428, %vm4429
    %v4431 = vsel %vm4430, %v4422, %v4427
    %v4432 = vmul.f32 %v4398, %v4421
    %v4433 = vmul.f32 %v4399, %v4431
    %v4434 = vmul.f32 %v107, %v4432
    %v4435 = vmul.f32 %v107, %v4433
    %v4436 = vadd.f32 %v4434, %v112
    %v4437 = vadd.f32 %v4435, %v112
    %v4438 = vpack.c.bf16 %v4437, %v4436
    %v4440 = vsel %vm54, %v4438, 0
    %4442 = vmatpush.bf16.msra.mxu0 0
    %4443 = vmatpush.bf16.msra.mxu0 0
    %4444 = vmatpush.bf16.msra.mxu0 0
    %4445 = vmatpush.bf16.msra.mxu0 0
    %4446 = vmatpush.bf16.msra.mxu0 0
    %4447 = vmatpush.bf16.msra.mxu0 0
    %4448 = vmatpush.bf16.msra.mxu0 %v126
    %4449 = vmatpush.bf16.msra.mxu0 %v125
    %4450 = vmatmul.bf16.gmra.mxu0 %v4440
    %v4451 = vpop.f32.mrf.mxu0
    %v4452 = vadd.f32 0.0, %v4451
    %v4453 = vpop.f32.mrf.mxu0
    %v4454 = vadd.f32 0.0, %v4453
    %4455 = vdwg.mxu0
    %v4456 = vmax.f32 %v4452, 0.0
    %v4457 = vmax.f32 %v4454, 0.0
    %4460 = vrot.lane.b32.xlu0 %v4452, 64
    %v4461 = vpop.permute.xlu0 %4460
    %4462 = vrot.lane.b32.xlu0 %v4454, 64
    %v4463 = vpop.permute.xlu0 %4462
    %4464 = vrot.lane.b32.xlu0 %v4452, 32
    %v4465 = vpop.permute.xlu0 %4464
    %4466 = vrot.lane.b32.xlu0 %v4454, 32
    %v4467 = vpop.permute.xlu0 %4466
    %v4468 = vsel %vm158, %v4461, 0
    %v4470 = vsel %vm158, %v4463, 0
    %v4472 = vsel %vm158, %v4465, 0
    %v4474 = vsel %vm158, %v4467, 0
    %4476 = vmatpush.xpose.msra.mxu0 0.0
    %4477 = vmatpush.xpose.msra.mxu0 0.0
    %4478 = vmatpush.xpose.msra.mxu0 0.0
    %4479 = vmatpush.xpose.msra.mxu0 0.0
    %4480 = vmatpush.xpose.msra.mxu0 0.0
    %4481 = vmatpush.xpose.msra.mxu0 0.0
    %4482 = vmatpush.xpose.msra.mxu0 0.0
    %4483 = vmatpush.xpose.msra.mxu0 0.0
    %4484 = vmatpush.xpose.msra.mxu0 0.0
    %4485 = vmatpush.xpose.msra.mxu0 0.0
    %4486 = vmatpush.xpose.msra.mxu0 0.0
    %4487 = vmatpush.xpose.msra.mxu0 0.0
    %4488 = vmatpush.xpose.msra.mxu0 0.0
    %4489 = vmatpush.xpose.msra.mxu0 0.0
    %4490 = vmatpush.xpose.msra.mxu0 %v4474
    %4491 = vmatpush.xpose.msra.mxu0 %v4472
    %4492 = vmatmul.f32.gmra.mxu0 %v4468
    %v4493 = vpop.f32.mrf.mxu0
    %v4494 = vadd.f32 0.0, %v4493
    %4495 = vmatmul.f32.gmra.mxu0 %v4470
    %v4496 = vpop.f32.mrf.mxu0
    %v4497 = vadd.f32 0.0, %v4496
    %4498 = vdwg.mxu0
    %v4499 = vmul.f32 %v4494, 0.25
    %v4500 = vmul.f32 %v4497, 0.25
    %v4501 = vadd.f32 %v4499, %v52
    %v4502 = vadd.f32 %v4500, %v53
    %v4503 = vsel %vm158, %v4501, -inf
    %4504 = vmax.xlane.f32.xlu0 %v4503
    %v4505 = vpop.xlane.xlu0 %4504
    %v4506 = vsel %vm158, %v4502, -inf
    %4507 = vmax.xlane.f32.xlu0 %v4506
    %v4508 = vpop.xlane.xlu0 %4507
    %v4509 = vsub.f32 %v4501, %v4505
    %v4510 = vsub.f32 %v4502, %v4508
    %v4511 = vmul.f32 %v4509, 1.442695
    %v4512 = vpow.pop %v4511
    %v4513 = vmul.f32 %v4510, 1.442695
    %v4514 = vpow.pop %v4513
    %v4515 = vsel %vm158, %v4512, 0.0
    %4516 = vadd.xlane.f32.xlu0 %v4515
    %v4517 = vpop.xlane.xlu0 %4516
    %v4518 = vsel %vm158, %v4514, 0.0
    %4519 = vadd.xlane.f32.xlu0 %v4518
    %v4520 = vpop.xlane.xlu0 %4519
    %v4521 = vrcp.pop %v4517
    %v4522 = vrcp.pop %v4520
    %v4523 = vmul.f32 %v4512, %v4521
    %v4524 = vmul.f32 %v4514, %v4522
    %v4528 = vsel %vm158, %v4523, 0
    %v4531 = vsel %vm158, %v4524, 0
    %4533 = vmatpush.msra.mxu0 0.0
    %4534 = vmatpush.msra.mxu0 0.0
    %4535 = vmatpush.msra.mxu0 0.0
    %4536 = vmatpush.msra.mxu0 0.0
    %4537 = vmatpush.msra.mxu0 0.0
    %4538 = vmatpush.msra.mxu0 0.0
    %4539 = vmatpush.msra.mxu0 0.0
    %4540 = vmatpush.msra.mxu0 0.0
    %4541 = vmatpush.msra.mxu0 0.0
    %4542 = vmatpush.msra.mxu0 0.0
    %4543 = vmatpush.msra.mxu0 0.0
    %4544 = vmatpush.msra.mxu0 0.0
    %4545 = vmatpush.msra.mxu0 0.0
    %4546 = vmatpush.msra.mxu0 0.0
    %4547 = vmatpush.msra.mxu0 %v4467
    %4548 = vmatpush.msra.mxu0 %v4465
    %4549 = vmatmul.f32.gmra.mxu0 %v4528
    %v4550 = vpop.f32.mrf.mxu0
    %v4551 = vadd.f32 0.0, %v4550
    %4552 = vmatmul.f32.gmra.mxu0 %v4531
    %v4553 = vpop.f32.mrf.mxu0
    %v4554 = vadd.f32 0.0, %v4553
    %4555 = vdwg.mxu0
    %4556 = vxpose.xlu0.b32.start [1/16] %v4523, 128
    %4557 = vxpose.xlu0.b32.cont [2/16] %v4524, 128
    %4558 = vxpose.xlu0.b32.cont [3/16] 0.0, 128
    %4559 = vxpose.xlu0.b32.cont [4/16] 0.0, 128
    %4560 = vxpose.xlu0.b32.cont [5/16] 0.0, 128
    %4561 = vxpose.xlu0.b32.cont [6/16] 0.0, 128
    %4562 = vxpose.xlu0.b32.cont [7/16] 0.0, 128
    %4563 = vxpose.xlu0.b32.cont [8/16] 0.0, 128
    %4564 = vxpose.xlu0.b32.cont [9/16] 0.0, 128
    %4565 = vxpose.xlu0.b32.cont [10/16] 0.0, 128
    %4566 = vxpose.xlu0.b32.cont [11/16] 0.0, 128
    %4567 = vxpose.xlu0.b32.cont [12/16] 0.0, 128
    %4568 = vxpose.xlu0.b32.cont [13/16] 0.0, 128
    %4569 = vxpose.xlu0.b32.cont [14/16] 0.0, 128
    %4570 = vxpose.xlu0.b32.cont [15/16] 0.0, 128
    %4571 = vxpose.xlu0.b32.end [16/16] 0.0, 128
    %v4572 = vpop.trf.xlu0
    %v4573 = vpop.trf.xlu0
    %v4574 = vpop.trf.xlu0
    %v4575 = vpop.trf.xlu0
    %v4576 = vpop.trf.xlu0
    %v4577 = vpop.trf.xlu0
    %v4578 = vpop.trf.xlu0
    %v4579 = vpop.trf.xlu0
    %v4580 = vpop.trf.xlu0
    %v4581 = vpop.trf.xlu0
    %v4582 = vpop.trf.xlu0
    %v4583 = vpop.trf.xlu0
    %v4584 = vpop.trf.xlu0
    %v4585 = vpop.trf.xlu0
    %v4586 = vpop.trf.xlu0
    %v4587 = vpop.trf.xlu0
    %v4591 = vsel %vm158, %v4572, 0
    %v4594 = vsel %vm158, %v4573, 0
    %4596 = vmatpush.msra.mxu0 0.0
    %4597 = vmatpush.msra.mxu0 0.0
    %4598 = vmatpush.msra.mxu0 0.0
    %4599 = vmatpush.msra.mxu0 0.0
    %4600 = vmatpush.msra.mxu0 0.0
    %4601 = vmatpush.msra.mxu0 0.0
    %4602 = vmatpush.msra.mxu0 0.0
    %4603 = vmatpush.msra.mxu0 0.0
    %4604 = vmatpush.msra.mxu0 0.0
    %4605 = vmatpush.msra.mxu0 0.0
    %4606 = vmatpush.msra.mxu0 0.0
    %4607 = vmatpush.msra.mxu0 0.0
    %4608 = vmatpush.msra.mxu0 0.0
    %4609 = vmatpush.msra.mxu0 0.0
    %4610 = vmatpush.msra.mxu0 %v4463
    %4611 = vmatpush.msra.mxu0 %v4461
    %4612 = vmatmul.f32.gmra.mxu0 %v4591
    %v4613 = vpop.f32.mrf.mxu0
    %v4614 = vadd.f32 0.0, %v4613
    %4615 = vmatmul.f32.gmra.mxu0 %v4594
    %v4616 = vpop.f32.mrf.mxu0
    %v4617 = vadd.f32 0.0, %v4616
    %4618 = vdwg.mxu0
    %4619 = vrot.lane.b32.xlu0 %v4452, 48
    %v4620 = vpop.permute.xlu0 %4619
    %4621 = vrot.lane.b32.xlu0 %v4454, 48
    %v4622 = vpop.permute.xlu0 %4621
    %4623 = vrot.lane.b32.xlu0 %v4452, 16
    %v4624 = vpop.permute.xlu0 %4623
    %4625 = vrot.lane.b32.xlu0 %v4454, 16
    %v4626 = vpop.permute.xlu0 %4625
    %v4627 = vsel %vm158, %v4620, 0
    %v4629 = vsel %vm158, %v4622, 0
    %v4631 = vsel %vm158, %v4624, 0
    %v4633 = vsel %vm158, %v4626, 0
    %4635 = vmatpush.xpose.msra.mxu0 0.0
    %4636 = vmatpush.xpose.msra.mxu0 0.0
    %4637 = vmatpush.xpose.msra.mxu0 0.0
    %4638 = vmatpush.xpose.msra.mxu0 0.0
    %4639 = vmatpush.xpose.msra.mxu0 0.0
    %4640 = vmatpush.xpose.msra.mxu0 0.0
    %4641 = vmatpush.xpose.msra.mxu0 0.0
    %4642 = vmatpush.xpose.msra.mxu0 0.0
    %4643 = vmatpush.xpose.msra.mxu0 0.0
    %4644 = vmatpush.xpose.msra.mxu0 0.0
    %4645 = vmatpush.xpose.msra.mxu0 0.0
    %4646 = vmatpush.xpose.msra.mxu0 0.0
    %4647 = vmatpush.xpose.msra.mxu0 0.0
    %4648 = vmatpush.xpose.msra.mxu0 0.0
    %4649 = vmatpush.xpose.msra.mxu0 %v4633
    %4650 = vmatpush.xpose.msra.mxu0 %v4631
    %4651 = vmatmul.f32.gmra.mxu0 %v4627
    %v4652 = vpop.f32.mrf.mxu0
    %v4653 = vadd.f32 0.0, %v4652
    %4654 = vmatmul.f32.gmra.mxu0 %v4629
    %v4655 = vpop.f32.mrf.mxu0
    %v4656 = vadd.f32 0.0, %v4655
    %4657 = vdwg.mxu0
    %v4658 = vmul.f32 %v4653, 0.25
    %v4659 = vmul.f32 %v4656, 0.25
    %v4660 = vadd.f32 %v4658, %v52
    %v4661 = vadd.f32 %v4659, %v53
    %v4662 = vsel %vm158, %v4660, -inf
    %4663 = vmax.xlane.f32.xlu0 %v4662
    %v4664 = vpop.xlane.xlu0 %4663
    %v4665 = vsel %vm158, %v4661, -inf
    %4666 = vmax.xlane.f32.xlu0 %v4665
    %v4667 = vpop.xlane.xlu0 %4666
    %v4668 = vsub.f32 %v4660, %v4664
    %v4669 = vsub.f32 %v4661, %v4667
    %v4670 = vmul.f32 %v4668, 1.442695
    %v4671 = vpow.pop %v4670
    %v4672 = vmul.f32 %v4669, 1.442695
    %v4673 = vpow.pop %v4672
    %v4674 = vsel %vm158, %v4671, 0.0
    %4675 = vadd.xlane.f32.xlu0 %v4674
    %v4676 = vpop.xlane.xlu0 %4675
    %v4677 = vsel %vm158, %v4673, 0.0
    %4678 = vadd.xlane.f32.xlu0 %v4677
    %v4679 = vpop.xlane.xlu0 %4678
    %v4680 = vrcp.pop %v4676
    %v4681 = vrcp.pop %v4679
    %v4682 = vmul.f32 %v4671, %v4680
    %v4683 = vmul.f32 %v4673, %v4681
    %v4687 = vsel %vm158, %v4682, 0
    %v4690 = vsel %vm158, %v4683, 0
    %4692 = vmatpush.msra.mxu0 0.0
    %4693 = vmatpush.msra.mxu0 0.0
    %4694 = vmatpush.msra.mxu0 0.0
    %4695 = vmatpush.msra.mxu0 0.0
    %4696 = vmatpush.msra.mxu0 0.0
    %4697 = vmatpush.msra.mxu0 0.0
    %4698 = vmatpush.msra.mxu0 0.0
    %4699 = vmatpush.msra.mxu0 0.0
    %4700 = vmatpush.msra.mxu0 0.0
    %4701 = vmatpush.msra.mxu0 0.0
    %4702 = vmatpush.msra.mxu0 0.0
    %4703 = vmatpush.msra.mxu0 0.0
    %4704 = vmatpush.msra.mxu0 0.0
    %4705 = vmatpush.msra.mxu0 0.0
    %4706 = vmatpush.msra.mxu0 %v4626
    %4707 = vmatpush.msra.mxu0 %v4624
    %4708 = vmatmul.f32.gmra.mxu0 %v4687
    %v4709 = vpop.f32.mrf.mxu0
    %v4710 = vadd.f32 0.0, %v4709
    %4711 = vmatmul.f32.gmra.mxu0 %v4690
    %v4712 = vpop.f32.mrf.mxu0
    %v4713 = vadd.f32 0.0, %v4712
    %4714 = vdwg.mxu0
    %4715 = vxpose.xlu0.b32.start [1/16] %v4682, 128
    %4716 = vxpose.xlu0.b32.cont [2/16] %v4683, 128
    %4717 = vxpose.xlu0.b32.cont [3/16] 0.0, 128
    %4718 = vxpose.xlu0.b32.cont [4/16] 0.0, 128
    %4719 = vxpose.xlu0.b32.cont [5/16] 0.0, 128
    %4720 = vxpose.xlu0.b32.cont [6/16] 0.0, 128
    %4721 = vxpose.xlu0.b32.cont [7/16] 0.0, 128
    %4722 = vxpose.xlu0.b32.cont [8/16] 0.0, 128
    %4723 = vxpose.xlu0.b32.cont [9/16] 0.0, 128
    %4724 = vxpose.xlu0.b32.cont [10/16] 0.0, 128
    %4725 = vxpose.xlu0.b32.cont [11/16] 0.0, 128
    %4726 = vxpose.xlu0.b32.cont [12/16] 0.0, 128
    %4727 = vxpose.xlu0.b32.cont [13/16] 0.0, 128
    %4728 = vxpose.xlu0.b32.cont [14/16] 0.0, 128
    %4729 = vxpose.xlu0.b32.cont [15/16] 0.0, 128
    %4730 = vxpose.xlu0.b32.end [16/16] 0.0, 128
    %v4731 = vpop.trf.xlu0
    %v4732 = vpop.trf.xlu0
    %v4733 = vpop.trf.xlu0
    %v4734 = vpop.trf.xlu0
    %v4735 = vpop.trf.xlu0
    %v4736 = vpop.trf.xlu0
    %v4737 = vpop.trf.xlu0
    %v4738 = vpop.trf.xlu0
    %v4739 = vpop.trf.xlu0
    %v4740 = vpop.trf.xlu0
    %v4741 = vpop.trf.xlu0
    %v4742 = vpop.trf.xlu0
    %v4743 = vpop.trf.xlu0
    %v4744 = vpop.trf.xlu0
    %v4745 = vpop.trf.xlu0
    %v4746 = vpop.trf.xlu0
    %v4750 = vsel %vm158, %v4731, 0
    %v4753 = vsel %vm158, %v4732, 0
    %4755 = vmatpush.msra.mxu0 0.0
    %4756 = vmatpush.msra.mxu0 0.0
    %4757 = vmatpush.msra.mxu0 0.0
    %4758 = vmatpush.msra.mxu0 0.0
    %4759 = vmatpush.msra.mxu0 0.0
    %4760 = vmatpush.msra.mxu0 0.0
    %4761 = vmatpush.msra.mxu0 0.0
    %4762 = vmatpush.msra.mxu0 0.0
    %4763 = vmatpush.msra.mxu0 0.0
    %4764 = vmatpush.msra.mxu0 0.0
    %4765 = vmatpush.msra.mxu0 0.0
    %4766 = vmatpush.msra.mxu0 0.0
    %4767 = vmatpush.msra.mxu0 0.0
    %4768 = vmatpush.msra.mxu0 0.0
    %4769 = vmatpush.msra.mxu0 %v4622
    %4770 = vmatpush.msra.mxu0 %v4620
    %4771 = vmatmul.f32.gmra.mxu0 %v4750
    %v4772 = vpop.f32.mrf.mxu0
    %v4773 = vadd.f32 0.0, %v4772
    %4774 = vmatmul.f32.gmra.mxu0 %v4753
    %v4775 = vpop.f32.mrf.mxu0
    %v4776 = vadd.f32 0.0, %v4775
    %4777 = vdwg.mxu0
    %4780 = vrot.lane.b32.xlu0 %v4551, 64
    %v4781 = vpop.permute.xlu0 %4780
    %4782 = vrot.lane.b32.xlu0 %v4554, 64
    %v4783 = vpop.permute.xlu0 %4782
    %4788 = vrot.lane.b32.xlu0 %v4710, 80
    %v4789 = vpop.permute.xlu0 %4788
    %4790 = vrot.lane.b32.xlu0 %v4713, 80
    %v4791 = vpop.permute.xlu0 %4790
    %4796 = vrot.lane.b32.xlu0 %v4614, 96
    %v4797 = vpop.permute.xlu0 %4796
    %4798 = vrot.lane.b32.xlu0 %v4617, 96
    %v4799 = vpop.permute.xlu0 %4798
    %4804 = vrot.lane.b32.xlu0 %v4773, 112
    %v4805 = vpop.permute.xlu0 %4804
    %4806 = vrot.lane.b32.xlu0 %v4776, 112
    %v4807 = vpop.permute.xlu0 %4806
    %v4810 = vsel %vm501, %v4456, %v4781
    %v4811 = vsel %vm501, %v4457, %v4783
    %v4812 = vsel %vm504, %v4810, %v4789
    %v4813 = vsel %vm504, %v4811, %v4791
    %v4814 = vsel %vm507, %v4812, %v4797
    %v4815 = vsel %vm507, %v4813, %v4799
    %v4816 = vsel %vm510, %v4814, %v4805
    %v4817 = vsel %vm510, %v4815, %v4807
    %v4818 = vpack.c.bf16 %v4817, %v4816
    %4819 = vmatpush.bf16.msra.mxu0 %v553
    %4820 = vmatpush.bf16.msra.mxu0 %v552
    %4821 = vmatpush.bf16.msra.mxu0 %v551
    %4822 = vmatpush.bf16.msra.mxu0 %v550
    %4823 = vmatpush.bf16.msra.mxu0 %v549
    %4824 = vmatpush.bf16.msra.mxu0 %v548
    %4825 = vmatpush.bf16.msra.mxu0 %v547
    %4826 = vmatpush.bf16.msra.mxu0 %v546
    %4827 = vmatmul.bf16.gmra.mxu0 %v4818
    %v4828 = vpop.f32.mrf.mxu0
    %v4829 = vadd.f32 0.0, %v4828
    %v4830 = vpop.f32.mrf.mxu0
    %v4831 = vadd.f32 0.0, %v4830
    %4832 = vdwg.mxu0
    %v4833 = vmul.f32 %v4829, %v107
    %v4834 = vmul.f32 %v4831, %v107
    %v4835 = vsel %vm54, %v4833, 0.0
    %4836 = vadd.xlane.f32.xlu0 %v4835
    %v4837 = vpop.xlane.xlu0 %4836
    %v4838 = vsel %vm54, %v4834, 0.0
    %4839 = vadd.xlane.f32.xlu0 %v4838
    %v4840 = vpop.xlane.xlu0 %4839
    %v4841 = vmul.f32 %v4837, %v67
    %v4842 = vmul.f32 %v4840, %v67
    %v4843 = vmul.f32 %v4833, %v4432
    %v4844 = vmul.f32 %v4834, %v4433
    %v4845 = vsel %vm54, %v4843, 0.0
    %4846 = vadd.xlane.f32.xlu0 %v4845
    %v4847 = vpop.xlane.xlu0 %4846
    %v4848 = vsel %vm54, %v4844, 0.0
    %4849 = vadd.xlane.f32.xlu0 %v4848
    %v4850 = vpop.xlane.xlu0 %4849
    %v4851 = vmul.f32 %v4847, %v67
    %v4852 = vmul.f32 %v4850, %v67
    %v4853 = vsub.f32 %v4833, %v4841
    %v4854 = vsub.f32 %v4834, %v4842
    %v4855 = vmul.f32 %v4432, %v4851
    %v4856 = vmul.f32 %v4433, %v4852
    %v4857 = vsub.f32 %v4853, %v4855
    %v4858 = vsub.f32 %v4854, %v4856
    %v4859 = vmul.f32 %v4421, %v4857
    %v4860 = vmul.f32 %v4431, %v4858
    %v4861 = vsub.f32 %v4388, %v4859
    %v4862 = vsub.f32 %v4389, %v4860
    %v4863 = vsel %vm54, %v4861, 0.0
    %4864 = vadd.xlane.f32.xlu0 %v4863
    %v4865 = vpop.xlane.xlu0 %4864
    %v4866 = vsel %vm54, %v4862, 0.0
    %4867 = vadd.xlane.f32.xlu0 %v4866
    %v4868 = vpop.xlane.xlu0 %4867
    %v4869 = vmul.f32 %v4865, %v67
    %v4870 = vmul.f32 %v4868, %v67
    %v4871 = vsub.f32 %v4861, %v4869
    %v4872 = vsub.f32 %v4862, %v4870
    %v4873 = vmul.f32 %v4871, %v4871
    %v4874 = vmul.f32 %v4872, %v4872
    %v4875 = vsel %vm54, %v4873, 0.0
    %4876 = vadd.xlane.f32.xlu0 %v4875
    %v4877 = vpop.xlane.xlu0 %4876
    %v4878 = vsel %vm54, %v4874, 0.0
    %4879 = vadd.xlane.f32.xlu0 %v4878
    %v4880 = vpop.xlane.xlu0 %4879
    %v4881 = vmul.f32 %v4877, %v67
    %v4882 = vmul.f32 %v4880, %v67
    %v4883 = vadd.f32 %v4881, 1e-05
    %v4884 = vadd.f32 %v4882, 1e-05
    %v4885 = vrsqrt.pop %v4883
    %v4886 = vmul.f32 %v4885, %v4883
    %v4887 = vmul.f32 %v4886, %v4885
    %v4888 = vmul.f32 0.5, %v4887
    %v4889 = vsub.f32 1.5, %v4888
    %v4890 = vmul.f32 %v4885, %v4889
    %vm4891 = vweird.f32 %v4883
    %vm4892 = vweird.f32 %v4885
    %vm4893 = vmor %vm4891, %vm4892
    %v4894 = vsel %vm4893, %v4885, %v4890
    %v4895 = vrsqrt.pop %v4884
    %v4896 = vmul.f32 %v4895, %v4884
    %v4897 = vmul.f32 %v4896, %v4895
    %v4898 = vmul.f32 0.5, %v4897
    %v4899 = vsub.f32 1.5, %v4898
    %v4900 = vmul.f32 %v4895, %v4899
    %vm4901 = vweird.f32 %v4884
    %vm4902 = vweird.f32 %v4895
    %vm4903 = vmor %vm4901, %vm4902
    %v4904 = vsel %vm4903, %v4895, %v4900
    %v4905 = vmul.f32 %v4871, %v4894
    %v4906 = vmul.f32 %v4872, %v4904
    %v4907 = vmul.f32 %v107, %v4905
    %v4908 = vmul.f32 %v107, %v4906
    %v4909 = vadd.f32 %v4907, %v112
    %v4910 = vadd.f32 %v4908, %v112
    %v4911 = vpack.c.bf16 %v4910, %v4909
    %v4913 = vsel %vm54, %v4911, 0
    %4915 = vmatpush.bf16.msra.mxu0 0
    %4916 = vmatpush.bf16.msra.mxu0 0
    %4917 = vmatpush.bf16.msra.mxu0 0
    %4918 = vmatpush.bf16.msra.mxu0 0
    %4919 = vmatpush.bf16.msra.mxu0 0
    %4920 = vmatpush.bf16.msra.mxu0 0
    %4921 = vmatpush.bf16.msra.mxu0 %v126
    %4922 = vmatpush.bf16.msra.mxu0 %v125
    %4923 = vmatmul.bf16.gmra.mxu0 %v4913
    %v4924 = vpop.f32.mrf.mxu0
    %v4925 = vadd.f32 0.0, %v4924
    %v4926 = vpop.f32.mrf.mxu0
    %v4927 = vadd.f32 0.0, %v4926
    %4928 = vdwg.mxu0
    %v4929 = vmax.f32 %v4925, 0.0
    %v4930 = vmax.f32 %v4927, 0.0
    %4933 = vrot.lane.b32.xlu0 %v4925, 64
    %v4934 = vpop.permute.xlu0 %4933
    %4935 = vrot.lane.b32.xlu0 %v4927, 64
    %v4936 = vpop.permute.xlu0 %4935
    %4937 = vrot.lane.b32.xlu0 %v4925, 32
    %v4938 = vpop.permute.xlu0 %4937
    %4939 = vrot.lane.b32.xlu0 %v4927, 32
    %v4940 = vpop.permute.xlu0 %4939
    %v4941 = vsel %vm158, %v4934, 0
    %v4943 = vsel %vm158, %v4936, 0
    %v4945 = vsel %vm158, %v4938, 0
    %v4947 = vsel %vm158, %v4940, 0
    %4949 = vmatpush.xpose.msra.mxu0 0.0
    %4950 = vmatpush.xpose.msra.mxu0 0.0
    %4951 = vmatpush.xpose.msra.mxu0 0.0
    %4952 = vmatpush.xpose.msra.mxu0 0.0
    %4953 = vmatpush.xpose.msra.mxu0 0.0
    %4954 = vmatpush.xpose.msra.mxu0 0.0
    %4955 = vmatpush.xpose.msra.mxu0 0.0
    %4956 = vmatpush.xpose.msra.mxu0 0.0
    %4957 = vmatpush.xpose.msra.mxu0 0.0
    %4958 = vmatpush.xpose.msra.mxu0 0.0
    %4959 = vmatpush.xpose.msra.mxu0 0.0
    %4960 = vmatpush.xpose.msra.mxu0 0.0
    %4961 = vmatpush.xpose.msra.mxu0 0.0
    %4962 = vmatpush.xpose.msra.mxu0 0.0
    %4963 = vmatpush.xpose.msra.mxu0 %v4947
    %4964 = vmatpush.xpose.msra.mxu0 %v4945
    %4965 = vmatmul.f32.gmra.mxu0 %v4941
    %v4966 = vpop.f32.mrf.mxu0
    %v4967 = vadd.f32 0.0, %v4966
    %4968 = vmatmul.f32.gmra.mxu0 %v4943
    %v4969 = vpop.f32.mrf.mxu0
    %v4970 = vadd.f32 0.0, %v4969
    %4971 = vdwg.mxu0
    %v4972 = vmul.f32 %v4967, 0.25
    %v4973 = vmul.f32 %v4970, 0.25
    %v4974 = vadd.f32 %v4972, %v52
    %v4975 = vadd.f32 %v4973, %v53
    %v4976 = vsel %vm158, %v4974, -inf
    %4977 = vmax.xlane.f32.xlu0 %v4976
    %v4978 = vpop.xlane.xlu0 %4977
    %v4979 = vsel %vm158, %v4975, -inf
    %4980 = vmax.xlane.f32.xlu0 %v4979
    %v4981 = vpop.xlane.xlu0 %4980
    %v4982 = vsub.f32 %v4974, %v4978
    %v4983 = vsub.f32 %v4975, %v4981
    %v4984 = vmul.f32 %v4982, 1.442695
    %v4985 = vpow.pop %v4984
    %v4986 = vmul.f32 %v4983, 1.442695
    %v4987 = vpow.pop %v4986
    %v4988 = vsel %vm158, %v4985, 0.0
    %4989 = vadd.xlane.f32.xlu0 %v4988
    %v4990 = vpop.xlane.xlu0 %4989
    %v4991 = vsel %vm158, %v4987, 0.0
    %4992 = vadd.xlane.f32.xlu0 %v4991
    %v4993 = vpop.xlane.xlu0 %4992
    %v4994 = vrcp.pop %v4990
    %v4995 = vrcp.pop %v4993
    %v4996 = vmul.f32 %v4985, %v4994
    %v4997 = vmul.f32 %v4987, %v4995
    %v5001 = vsel %vm158, %v4996, 0
    %v5004 = vsel %vm158, %v4997, 0
    %5006 = vmatpush.msra.mxu0 0.0
    %5007 = vmatpush.msra.mxu0 0.0
    %5008 = vmatpush.msra.mxu0 0.0
    %5009 = vmatpush.msra.mxu0 0.0
    %5010 = vmatpush.msra.mxu0 0.0
    %5011 = vmatpush.msra.mxu0 0.0
    %5012 = vmatpush.msra.mxu0 0.0
    %5013 = vmatpush.msra.mxu0 0.0
    %5014 = vmatpush.msra.mxu0 0.0
    %5015 = vmatpush.msra.mxu0 0.0
    %5016 = vmatpush.msra.mxu0 0.0
    %5017 = vmatpush.msra.mxu0 0.0
    %5018 = vmatpush.msra.mxu0 0.0
    %5019 = vmatpush.msra.mxu0 0.0
    %5020 = vmatpush.msra.mxu0 %v4940
    %5021 = vmatpush.msra.mxu0 %v4938
    %5022 = vmatmul.f32.gmra.mxu0 %v5001
    %v5023 = vpop.f32.mrf.mxu0
    %v5024 = vadd.f32 0.0, %v5023
    %5025 = vmatmul.f32.gmra.mxu0 %v5004
    %v5026 = vpop.f32.mrf.mxu0
    %v5027 = vadd.f32 0.0, %v5026
    %5028 = vdwg.mxu0
    %5029 = vxpose.xlu0.b32.start [1/16] %v4996, 128
    %5030 = vxpose.xlu0.b32.cont [2/16] %v4997, 128
    %5031 = vxpose.xlu0.b32.cont [3/16] 0.0, 128
    %5032 = vxpose.xlu0.b32.cont [4/16] 0.0, 128
    %5033 = vxpose.xlu0.b32.cont [5/16] 0.0, 128
    %5034 = vxpose.xlu0.b32.cont [6/16] 0.0, 128
    %5035 = vxpose.xlu0.b32.cont [7/16] 0.0, 128
    %5036 = vxpose.xlu0.b32.cont [8/16] 0.0, 128
    %5037 = vxpose.xlu0.b32.cont [9/16] 0.0, 128
    %5038 = vxpose.xlu0.b32.cont [10/16] 0.0, 128
    %5039 = vxpose.xlu0.b32.cont [11/16] 0.0, 128
    %5040 = vxpose.xlu0.b32.cont [12/16] 0.0, 128
    %5041 = vxpose.xlu0.b32.cont [13/16] 0.0, 128
    %5042 = vxpose.xlu0.b32.cont [14/16] 0.0, 128
    %5043 = vxpose.xlu0.b32.cont [15/16] 0.0, 128
    %5044 = vxpose.xlu0.b32.end [16/16] 0.0, 128
    %v5045 = vpop.trf.xlu0
    %v5046 = vpop.trf.xlu0
    %v5047 = vpop.trf.xlu0
    %v5048 = vpop.trf.xlu0
    %v5049 = vpop.trf.xlu0
    %v5050 = vpop.trf.xlu0
    %v5051 = vpop.trf.xlu0
    %v5052 = vpop.trf.xlu0
    %v5053 = vpop.trf.xlu0
    %v5054 = vpop.trf.xlu0
    %v5055 = vpop.trf.xlu0
    %v5056 = vpop.trf.xlu0
    %v5057 = vpop.trf.xlu0
    %v5058 = vpop.trf.xlu0
    %v5059 = vpop.trf.xlu0
    %v5060 = vpop.trf.xlu0
    %v5064 = vsel %vm158, %v5045, 0
    %v5067 = vsel %vm158, %v5046, 0
    %5069 = vmatpush.msra.mxu0 0.0
    %5070 = vmatpush.msra.mxu0 0.0
    %5071 = vmatpush.msra.mxu0 0.0
    %5072 = vmatpush.msra.mxu0 0.0
    %5073 = vmatpush.msra.mxu0 0.0
    %5074 = vmatpush.msra.mxu0 0.0
    %5075 = vmatpush.msra.mxu0 0.0
    %5076 = vmatpush.msra.mxu0 0.0
    %5077 = vmatpush.msra.mxu0 0.0
    %5078 = vmatpush.msra.mxu0 0.0
    %5079 = vmatpush.msra.mxu0 0.0
    %5080 = vmatpush.msra.mxu0 0.0
    %5081 = vmatpush.msra.mxu0 0.0
    %5082 = vmatpush.msra.mxu0 0.0
    %5083 = vmatpush.msra.mxu0 %v4936
    %5084 = vmatpush.msra.mxu0 %v4934
    %5085 = vmatmul.f32.gmra.mxu0 %v5064
    %v5086 = vpop.f32.mrf.mxu0
    %v5087 = vadd.f32 0.0, %v5086
    %5088 = vmatmul.f32.gmra.mxu0 %v5067
    %v5089 = vpop.f32.mrf.mxu0
    %v5090 = vadd.f32 0.0, %v5089
    %5091 = vdwg.mxu0
    %5092 = vrot.lane.b32.xlu0 %v4925, 48
    %v5093 = vpop.permute.xlu0 %5092
    %5094 = vrot.lane.b32.xlu0 %v4927, 48
    %v5095 = vpop.permute.xlu0 %5094
    %5096 = vrot.lane.b32.xlu0 %v4925, 16
    %v5097 = vpop.permute.xlu0 %5096
    %5098 = vrot.lane.b32.xlu0 %v4927, 16
    %v5099 = vpop.permute.xlu0 %5098
    %v5100 = vsel %vm158, %v5093, 0
    %v5102 = vsel %vm158, %v5095, 0
    %v5104 = vsel %vm158, %v5097, 0
    %v5106 = vsel %vm158, %v5099, 0
    %5108 = vmatpush.xpose.msra.mxu0 0.0
    %5109 = vmatpush.xpose.msra.mxu0 0.0
    %5110 = vmatpush.xpose.msra.mxu0 0.0
    %5111 = vmatpush.xpose.msra.mxu0 0.0
    %5112 = vmatpush.xpose.msra.mxu0 0.0
    %5113 = vmatpush.xpose.msra.mxu0 0.0
    %5114 = vmatpush.xpose.msra.mxu0 0.0
    %5115 = vmatpush.xpose.msra.mxu0 0.0
    %5116 = vmatpush.xpose.msra.mxu0 0.0
    %5117 = vmatpush.xpose.msra.mxu0 0.0
    %5118 = vmatpush.xpose.msra.mxu0 0.0
    %5119 = vmatpush.xpose.msra.mxu0 0.0
    %5120 = vmatpush.xpose.msra.mxu0 0.0
    %5121 = vmatpush.xpose.msra.mxu0 0.0
    %5122 = vmatpush.xpose.msra.mxu0 %v5106
    %5123 = vmatpush.xpose.msra.mxu0 %v5104
    %5124 = vmatmul.f32.gmra.mxu0 %v5100
    %v5125 = vpop.f32.mrf.mxu0
    %v5126 = vadd.f32 0.0, %v5125
    %5127 = vmatmul.f32.gmra.mxu0 %v5102
    %v5128 = vpop.f32.mrf.mxu0
    %v5129 = vadd.f32 0.0, %v5128
    %5130 = vdwg.mxu0
    %v5131 = vmul.f32 %v5126, 0.25
    %v5132 = vmul.f32 %v5129, 0.25
    %v5133 = vadd.f32 %v5131, %v52
    %v5134 = vadd.f32 %v5132, %v53
    %v5135 = vsel %vm158, %v5133, -inf
    %5136 = vmax.xlane.f32.xlu0 %v5135
    %v5137 = vpop.xlane.xlu0 %5136
    %v5138 = vsel %vm158, %v5134, -inf
    %5139 = vmax.xlane.f32.xlu0 %v5138
    %v5140 = vpop.xlane.xlu0 %5139
    %v5141 = vsub.f32 %v5133, %v5137
    %v5142 = vsub.f32 %v5134, %v5140
    %v5143 = vmul.f32 %v5141, 1.442695
    %v5144 = vpow.pop %v5143
    %v5145 = vmul.f32 %v5142, 1.442695
    %v5146 = vpow.pop %v5145
    %v5147 = vsel %vm158, %v5144, 0.0
    %5148 = vadd.xlane.f32.xlu0 %v5147
    %v5149 = vpop.xlane.xlu0 %5148
    %v5150 = vsel %vm158, %v5146, 0.0
    %5151 = vadd.xlane.f32.xlu0 %v5150
    %v5152 = vpop.xlane.xlu0 %5151
    %v5153 = vrcp.pop %v5149
    %v5154 = vrcp.pop %v5152
    %v5155 = vmul.f32 %v5144, %v5153
    %v5156 = vmul.f32 %v5146, %v5154
    %v5160 = vsel %vm158, %v5155, 0
    %v5163 = vsel %vm158, %v5156, 0
    %5165 = vmatpush.msra.mxu0 0.0
    %5166 = vmatpush.msra.mxu0 0.0
    %5167 = vmatpush.msra.mxu0 0.0
    %5168 = vmatpush.msra.mxu0 0.0
    %5169 = vmatpush.msra.mxu0 0.0
    %5170 = vmatpush.msra.mxu0 0.0
    %5171 = vmatpush.msra.mxu0 0.0
    %5172 = vmatpush.msra.mxu0 0.0
    %5173 = vmatpush.msra.mxu0 0.0
    %5174 = vmatpush.msra.mxu0 0.0
    %5175 = vmatpush.msra.mxu0 0.0
    %5176 = vmatpush.msra.mxu0 0.0
    %5177 = vmatpush.msra.mxu0 0.0
    %5178 = vmatpush.msra.mxu0 0.0
    %5179 = vmatpush.msra.mxu0 %v5099
    %5180 = vmatpush.msra.mxu0 %v5097
    %5181 = vmatmul.f32.gmra.mxu0 %v5160
    %v5182 = vpop.f32.mrf.mxu0
    %v5183 = vadd.f32 0.0, %v5182
    %5184 = vmatmul.f32.gmra.mxu0 %v5163
    %v5185 = vpop.f32.mrf.mxu0
    %v5186 = vadd.f32 0.0, %v5185
    %5187 = vdwg.mxu0
    %5188 = vxpose.xlu0.b32.start [1/16] %v5155, 128
    %5189 = vxpose.xlu0.b32.cont [2/16] %v5156, 128
    %5190 = vxpose.xlu0.b32.cont [3/16] 0.0, 128
    %5191 = vxpose.xlu0.b32.cont [4/16] 0.0, 128
    %5192 = vxpose.xlu0.b32.cont [5/16] 0.0, 128
    %5193 = vxpose.xlu0.b32.cont [6/16] 0.0, 128
    %5194 = vxpose.xlu0.b32.cont [7/16] 0.0, 128
    %5195 = vxpose.xlu0.b32.cont [8/16] 0.0, 128
    %5196 = vxpose.xlu0.b32.cont [9/16] 0.0, 128
    %5197 = vxpose.xlu0.b32.cont [10/16] 0.0, 128
    %5198 = vxpose.xlu0.b32.cont [11/16] 0.0, 128
    %5199 = vxpose.xlu0.b32.cont [12/16] 0.0, 128
    %5200 = vxpose.xlu0.b32.cont [13/16] 0.0, 128
    %5201 = vxpose.xlu0.b32.cont [14/16] 0.0, 128
    %5202 = vxpose.xlu0.b32.cont [15/16] 0.0, 128
    %5203 = vxpose.xlu0.b32.end [16/16] 0.0, 128
    %v5204 = vpop.trf.xlu0
    %v5205 = vpop.trf.xlu0
    %v5206 = vpop.trf.xlu0
    %v5207 = vpop.trf.xlu0
    %v5208 = vpop.trf.xlu0
    %v5209 = vpop.trf.xlu0
    %v5210 = vpop.trf.xlu0
    %v5211 = vpop.trf.xlu0
    %v5212 = vpop.trf.xlu0
    %v5213 = vpop.trf.xlu0
    %v5214 = vpop.trf.xlu0
    %v5215 = vpop.trf.xlu0
    %v5216 = vpop.trf.xlu0
    %v5217 = vpop.trf.xlu0
    %v5218 = vpop.trf.xlu0
    %v5219 = vpop.trf.xlu0
    %v5223 = vsel %vm158, %v5204, 0
    %v5226 = vsel %vm158, %v5205, 0
    %5228 = vmatpush.msra.mxu0 0.0
    %5229 = vmatpush.msra.mxu0 0.0
    %5230 = vmatpush.msra.mxu0 0.0
    %5231 = vmatpush.msra.mxu0 0.0
    %5232 = vmatpush.msra.mxu0 0.0
    %5233 = vmatpush.msra.mxu0 0.0
    %5234 = vmatpush.msra.mxu0 0.0
    %5235 = vmatpush.msra.mxu0 0.0
    %5236 = vmatpush.msra.mxu0 0.0
    %5237 = vmatpush.msra.mxu0 0.0
    %5238 = vmatpush.msra.mxu0 0.0
    %5239 = vmatpush.msra.mxu0 0.0
    %5240 = vmatpush.msra.mxu0 0.0
    %5241 = vmatpush.msra.mxu0 0.0
    %5242 = vmatpush.msra.mxu0 %v5095
    %5243 = vmatpush.msra.mxu0 %v5093
    %5244 = vmatmul.f32.gmra.mxu0 %v5223
    %v5245 = vpop.f32.mrf.mxu0
    %v5246 = vadd.f32 0.0, %v5245
    %5247 = vmatmul.f32.gmra.mxu0 %v5226
    %v5248 = vpop.f32.mrf.mxu0
    %v5249 = vadd.f32 0.0, %v5248
    %5250 = vdwg.mxu0
    %5253 = vrot.lane.b32.xlu0 %v5024, 64
    %v5254 = vpop.permute.xlu0 %5253
    %5255 = vrot.lane.b32.xlu0 %v5027, 64
    %v5256 = vpop.permute.xlu0 %5255
    %5261 = vrot.lane.b32.xlu0 %v5183, 80
    %v5262 = vpop.permute.xlu0 %5261
    %5263 = vrot.lane.b32.xlu0 %v5186, 80
    %v5264 = vpop.permute.xlu0 %5263
    %5269 = vrot.lane.b32.xlu0 %v5087, 96
    %v5270 = vpop.permute.xlu0 %5269
    %5271 = vrot.lane.b32.xlu0 %v5090, 96
    %v5272 = vpop.permute.xlu0 %5271
    %5277 = vrot.lane.b32.xlu0 %v5246, 112
    %v5278 = vpop.permute.xlu0 %5277
    %5279 = vrot.lane.b32.xlu0 %v5249, 112
    %v5280 = vpop.permute.xlu0 %5279
    %v5283 = vsel %vm501, %v4929, %v5254
    %v5284 = vsel %vm501, %v4930, %v5256
    %v5285 = vsel %vm504, %v5283, %v5262
    %v5286 = vsel %vm504, %v5284, %v5264
    %v5287 = vsel %vm507, %v5285, %v5270
    %v5288 = vsel %vm507, %v5286, %v5272
    %v5289 = vsel %vm510, %v5287, %v5278
    %v5290 = vsel %vm510, %v5288, %v5280
    %v5291 = vpack.c.bf16 %v5290, %v5289
    %5292 = vmatpush.bf16.msra.mxu0 %v553
    %5293 = vmatpush.bf16.msra.mxu0 %v552
    %5294 = vmatpush.bf16.msra.mxu0 %v551
    %5295 = vmatpush.bf16.msra.mxu0 %v550
    %5296 = vmatpush.bf16.msra.mxu0 %v549
    %5297 = vmatpush.bf16.msra.mxu0 %v548
    %5298 = vmatpush.bf16.msra.mxu0 %v547
    %5299 = vmatpush.bf16.msra.mxu0 %v546
    %5300 = vmatmul.bf16.gmra.mxu0 %v5291
    %v5301 = vpop.f32.mrf.mxu0
    %v5302 = vadd.f32 0.0, %v5301
    %v5303 = vpop.f32.mrf.mxu0
    %v5304 = vadd.f32 0.0, %v5303
    %5305 = vdwg.mxu0
    %v5306 = vmul.f32 %v5302, %v107
    %v5307 = vmul.f32 %v5304, %v107
    %v5308 = vsel %vm54, %v5306, 0.0
    %5309 = vadd.xlane.f32.xlu0 %v5308
    %v5310 = vpop.xlane.xlu0 %5309
    %v5311 = vsel %vm54, %v5307, 0.0
    %5312 = vadd.xlane.f32.xlu0 %v5311
    %v5313 = vpop.xlane.xlu0 %5312
    %v5314 = vmul.f32 %v5310, %v67
    %v5315 = vmul.f32 %v5313, %v67
    %v5316 = vmul.f32 %v5306, %v4905
    %v5317 = vmul.f32 %v5307, %v4906
    %v5318 = vsel %vm54, %v5316, 0.0
    %5319 = vadd.xlane.f32.xlu0 %v5318
    %v5320 = vpop.xlane.xlu0 %5319
    %v5321 = vsel %vm54, %v5317, 0.0
    %5322 = vadd.xlane.f32.xlu0 %v5321
    %v5323 = vpop.xlane.xlu0 %5322
    %v5324 = vmul.f32 %v5320, %v67
    %v5325 = vmul.f32 %v5323, %v67
    %v5326 = vsub.f32 %v5306, %v5314
    %v5327 = vsub.f32 %v5307, %v5315
    %v5328 = vmul.f32 %v4905, %v5324
    %v5329 = vmul.f32 %v4906, %v5325
    %v5330 = vsub.f32 %v5326, %v5328
    %v5331 = vsub.f32 %v5327, %v5329
    %v5332 = vmul.f32 %v4894, %v5330
    %v5333 = vmul.f32 %v4904, %v5331
    %v5334 = vsub.f32 %v4861, %v5332
    %v5335 = vsub.f32 %v4862, %v5333
    %v5336 = vsel %vm54, %v5334, 0.0
    %5337 = vadd.xlane.f32.xlu0 %v5336
    %v5338 = vpop.xlane.xlu0 %5337
    %v5339 = vsel %vm54, %v5335, 0.0
    %5340 = vadd.xlane.f32.xlu0 %v5339
    %v5341 = vpop.xlane.xlu0 %5340
    %v5342 = vmul.f32 %v5338, %v67
    %v5343 = vmul.f32 %v5341, %v67
    %v5344 = vsub.f32 %v5334, %v5342
    %v5345 = vsub.f32 %v5335, %v5343
    %v5346 = vmul.f32 %v5344, %v5344
    %v5347 = vmul.f32 %v5345, %v5345
    %v5348 = vsel %vm54, %v5346, 0.0
    %5349 = vadd.xlane.f32.xlu0 %v5348
    %v5350 = vpop.xlane.xlu0 %5349
    %v5351 = vsel %vm54, %v5347, 0.0
    %5352 = vadd.xlane.f32.xlu0 %v5351
    %v5353 = vpop.xlane.xlu0 %5352
    %v5354 = vmul.f32 %v5350, %v67
    %v5355 = vmul.f32 %v5353, %v67
    %v5356 = vadd.f32 %v5354, 1e-05
    %v5357 = vadd.f32 %v5355, 1e-05
    %v5358 = vrsqrt.pop %v5356
    %v5359 = vmul.f32 %v5358, %v5356
    %v5360 = vmul.f32 %v5359, %v5358
    %v5361 = vmul.f32 0.5, %v5360
    %v5362 = vsub.f32 1.5, %v5361
    %v5363 = vmul.f32 %v5358, %v5362
    %vm5364 = vweird.f32 %v5356
    %vm5365 = vweird.f32 %v5358
    %vm5366 = vmor %vm5364, %vm5365
    %v5367 = vsel %vm5366, %v5358, %v5363
    %v5368 = vrsqrt.pop %v5357
    %v5369 = vmul.f32 %v5368, %v5357
    %v5370 = vmul.f32 %v5369, %v5368
    %v5371 = vmul.f32 0.5, %v5370
    %v5372 = vsub.f32 1.5, %v5371
    %v5373 = vmul.f32 %v5368, %v5372
    %vm5374 = vweird.f32 %v5357
    %vm5375 = vweird.f32 %v5368
    %vm5376 = vmor %vm5374, %vm5375
    %v5377 = vsel %vm5376, %v5368, %v5373
    %v5378 = vmul.f32 %v5344, %v5367
    %v5379 = vmul.f32 %v5345, %v5377
    %v5380 = vmul.f32 %v107, %v5378
    %v5381 = vmul.f32 %v107, %v5379
    %v5382 = vadd.f32 %v5380, %v112
    %v5383 = vadd.f32 %v5381, %v112
    %v5384 = vpack.c.bf16 %v5383, %v5382
    %v5386 = vsel %vm54, %v5384, 0
    %5388 = vmatpush.bf16.msra.mxu0 0
    %5389 = vmatpush.bf16.msra.mxu0 0
    %5390 = vmatpush.bf16.msra.mxu0 0
    %5391 = vmatpush.bf16.msra.mxu0 0
    %5392 = vmatpush.bf16.msra.mxu0 0
    %5393 = vmatpush.bf16.msra.mxu0 0
    %5394 = vmatpush.bf16.msra.mxu0 %v126
    %5395 = vmatpush.bf16.msra.mxu0 %v125
    %5396 = vmatmul.bf16.gmra.mxu0 %v5386
    %v5397 = vpop.f32.mrf.mxu0
    %v5398 = vadd.f32 0.0, %v5397
    %v5399 = vpop.f32.mrf.mxu0
    %v5400 = vadd.f32 0.0, %v5399
    %5401 = vdwg.mxu0
    %v5402 = vmax.f32 %v5398, 0.0
    %v5403 = vmax.f32 %v5400, 0.0
    %5406 = vrot.lane.b32.xlu0 %v5398, 64
    %v5407 = vpop.permute.xlu0 %5406
    %5408 = vrot.lane.b32.xlu0 %v5400, 64
    %v5409 = vpop.permute.xlu0 %5408
    %5410 = vrot.lane.b32.xlu0 %v5398, 32
    %v5411 = vpop.permute.xlu0 %5410
    %5412 = vrot.lane.b32.xlu0 %v5400, 32
    %v5413 = vpop.permute.xlu0 %5412
    %v5414 = vsel %vm158, %v5407, 0
    %v5416 = vsel %vm158, %v5409, 0
    %v5418 = vsel %vm158, %v5411, 0
    %v5420 = vsel %vm158, %v5413, 0
    %5422 = vmatpush.xpose.msra.mxu0 0.0
    %5423 = vmatpush.xpose.msra.mxu0 0.0
    %5424 = vmatpush.xpose.msra.mxu0 0.0
    %5425 = vmatpush.xpose.msra.mxu0 0.0
    %5426 = vmatpush.xpose.msra.mxu0 0.0
    %5427 = vmatpush.xpose.msra.mxu0 0.0
    %5428 = vmatpush.xpose.msra.mxu0 0.0
    %5429 = vmatpush.xpose.msra.mxu0 0.0
    %5430 = vmatpush.xpose.msra.mxu0 0.0
    %5431 = vmatpush.xpose.msra.mxu0 0.0
    %5432 = vmatpush.xpose.msra.mxu0 0.0
    %5433 = vmatpush.xpose.msra.mxu0 0.0
    %5434 = vmatpush.xpose.msra.mxu0 0.0
    %5435 = vmatpush.xpose.msra.mxu0 0.0
    %5436 = vmatpush.xpose.msra.mxu0 %v5420
    %5437 = vmatpush.xpose.msra.mxu0 %v5418
    %5438 = vmatmul.f32.gmra.mxu0 %v5414
    %v5439 = vpop.f32.mrf.mxu0
    %v5440 = vadd.f32 0.0, %v5439
    %5441 = vmatmul.f32.gmra.mxu0 %v5416
    %v5442 = vpop.f32.mrf.mxu0
    %v5443 = vadd.f32 0.0, %v5442
    %5444 = vdwg.mxu0
    %v5445 = vmul.f32 %v5440, 0.25
    %v5446 = vmul.f32 %v5443, 0.25
    %v5447 = vadd.f32 %v5445, %v52
    %v5448 = vadd.f32 %v5446, %v53
    %v5449 = vsel %vm158, %v5447, -inf
    %5450 = vmax.xlane.f32.xlu0 %v5449
    %v5451 = vpop.xlane.xlu0 %5450
    %v5452 = vsel %vm158, %v5448, -inf
    %5453 = vmax.xlane.f32.xlu0 %v5452
    %v5454 = vpop.xlane.xlu0 %5453
    %v5455 = vsub.f32 %v5447, %v5451
    %v5456 = vsub.f32 %v5448, %v5454
    %v5457 = vmul.f32 %v5455, 1.442695
    %v5458 = vpow.pop %v5457
    %v5459 = vmul.f32 %v5456, 1.442695
    %v5460 = vpow.pop %v5459
    %v5461 = vsel %vm158, %v5458, 0.0
    %5462 = vadd.xlane.f32.xlu0 %v5461
    %v5463 = vpop.xlane.xlu0 %5462
    %v5464 = vsel %vm158, %v5460, 0.0
    %5465 = vadd.xlane.f32.xlu0 %v5464
    %v5466 = vpop.xlane.xlu0 %5465
    %v5467 = vrcp.pop %v5463
    %v5468 = vrcp.pop %v5466
    %v5469 = vmul.f32 %v5458, %v5467
    %v5470 = vmul.f32 %v5460, %v5468
    %v5474 = vsel %vm158, %v5469, 0
    %v5477 = vsel %vm158, %v5470, 0
    %5479 = vmatpush.msra.mxu0 0.0
    %5480 = vmatpush.msra.mxu0 0.0
    %5481 = vmatpush.msra.mxu0 0.0
    %5482 = vmatpush.msra.mxu0 0.0
    %5483 = vmatpush.msra.mxu0 0.0
    %5484 = vmatpush.msra.mxu0 0.0
    %5485 = vmatpush.msra.mxu0 0.0
    %5486 = vmatpush.msra.mxu0 0.0
    %5487 = vmatpush.msra.mxu0 0.0
    %5488 = vmatpush.msra.mxu0 0.0
    %5489 = vmatpush.msra.mxu0 0.0
    %5490 = vmatpush.msra.mxu0 0.0
    %5491 = vmatpush.msra.mxu0 0.0
    %5492 = vmatpush.msra.mxu0 0.0
    %5493 = vmatpush.msra.mxu0 %v5413
    %5494 = vmatpush.msra.mxu0 %v5411
    %5495 = vmatmul.f32.gmra.mxu0 %v5474
    %v5496 = vpop.f32.mrf.mxu0
    %v5497 = vadd.f32 0.0, %v5496
    %5498 = vmatmul.f32.gmra.mxu0 %v5477
    %v5499 = vpop.f32.mrf.mxu0
    %v5500 = vadd.f32 0.0, %v5499
    %5501 = vdwg.mxu0
    %5502 = vxpose.xlu0.b32.start [1/16] %v5469, 128
    %5503 = vxpose.xlu0.b32.cont [2/16] %v5470, 128
    %5504 = vxpose.xlu0.b32.cont [3/16] 0.0, 128
    %5505 = vxpose.xlu0.b32.cont [4/16] 0.0, 128
    %5506 = vxpose.xlu0.b32.cont [5/16] 0.0, 128
    %5507 = vxpose.xlu0.b32.cont [6/16] 0.0, 128
    %5508 = vxpose.xlu0.b32.cont [7/16] 0.0, 128
    %5509 = vxpose.xlu0.b32.cont [8/16] 0.0, 128
    %5510 = vxpose.xlu0.b32.cont [9/16] 0.0, 128
    %5511 = vxpose.xlu0.b32.cont [10/16] 0.0, 128
    %5512 = vxpose.xlu0.b32.cont [11/16] 0.0, 128
    %5513 = vxpose.xlu0.b32.cont [12/16] 0.0, 128
    %5514 = vxpose.xlu0.b32.cont [13/16] 0.0, 128
    %5515 = vxpose.xlu0.b32.cont [14/16] 0.0, 128
    %5516 = vxpose.xlu0.b32.cont [15/16] 0.0, 128
    %5517 = vxpose.xlu0.b32.end [16/16] 0.0, 128
    %v5518 = vpop.trf.xlu0
    %v5519 = vpop.trf.xlu0
    %v5520 = vpop.trf.xlu0
    %v5521 = vpop.trf.xlu0
    %v5522 = vpop.trf.xlu0
    %v5523 = vpop.trf.xlu0
    %v5524 = vpop.trf.xlu0
    %v5525 = vpop.trf.xlu0
    %v5526 = vpop.trf.xlu0
    %v5527 = vpop.trf.xlu0
    %v5528 = vpop.trf.xlu0
    %v5529 = vpop.trf.xlu0
    %v5530 = vpop.trf.xlu0
    %v5531 = vpop.trf.xlu0
    %v5532 = vpop.trf.xlu0
    %v5533 = vpop.trf.xlu0
    %v5537 = vsel %vm158, %v5518, 0
    %v5540 = vsel %vm158, %v5519, 0
    %5542 = vmatpush.msra.mxu0 0.0
    %5543 = vmatpush.msra.mxu0 0.0
    %5544 = vmatpush.msra.mxu0 0.0
    %5545 = vmatpush.msra.mxu0 0.0
    %5546 = vmatpush.msra.mxu0 0.0
    %5547 = vmatpush.msra.mxu0 0.0
    %5548 = vmatpush.msra.mxu0 0.0
    %5549 = vmatpush.msra.mxu0 0.0
    %5550 = vmatpush.msra.mxu0 0.0
    %5551 = vmatpush.msra.mxu0 0.0
    %5552 = vmatpush.msra.mxu0 0.0
    %5553 = vmatpush.msra.mxu0 0.0
    %5554 = vmatpush.msra.mxu0 0.0
    %5555 = vmatpush.msra.mxu0 0.0
    %5556 = vmatpush.msra.mxu0 %v5409
    %5557 = vmatpush.msra.mxu0 %v5407
    %5558 = vmatmul.f32.gmra.mxu0 %v5537
    %v5559 = vpop.f32.mrf.mxu0
    %v5560 = vadd.f32 0.0, %v5559
    %5561 = vmatmul.f32.gmra.mxu0 %v5540
    %v5562 = vpop.f32.mrf.mxu0
    %v5563 = vadd.f32 0.0, %v5562
    %5564 = vdwg.mxu0
    %5565 = vrot.lane.b32.xlu0 %v5398, 48
    %v5566 = vpop.permute.xlu0 %5565
    %5567 = vrot.lane.b32.xlu0 %v5400, 48
    %v5568 = vpop.permute.xlu0 %5567
    %5569 = vrot.lane.b32.xlu0 %v5398, 16
    %v5570 = vpop.permute.xlu0 %5569
    %5571 = vrot.lane.b32.xlu0 %v5400, 16
    %v5572 = vpop.permute.xlu0 %5571
    %v5573 = vsel %vm158, %v5566, 0
    %v5575 = vsel %vm158, %v5568, 0
    %v5577 = vsel %vm158, %v5570, 0
    %v5579 = vsel %vm158, %v5572, 0
    %5581 = vmatpush.xpose.msra.mxu0 0.0
    %5582 = vmatpush.xpose.msra.mxu0 0.0
    %5583 = vmatpush.xpose.msra.mxu0 0.0
    %5584 = vmatpush.xpose.msra.mxu0 0.0
    %5585 = vmatpush.xpose.msra.mxu0 0.0
    %5586 = vmatpush.xpose.msra.mxu0 0.0
    %5587 = vmatpush.xpose.msra.mxu0 0.0
    %5588 = vmatpush.xpose.msra.mxu0 0.0
    %5589 = vmatpush.xpose.msra.mxu0 0.0
    %5590 = vmatpush.xpose.msra.mxu0 0.0
    %5591 = vmatpush.xpose.msra.mxu0 0.0
    %5592 = vmatpush.xpose.msra.mxu0 0.0
    %5593 = vmatpush.xpose.msra.mxu0 0.0
    %5594 = vmatpush.xpose.msra.mxu0 0.0
    %5595 = vmatpush.xpose.msra.mxu0 %v5579
    %5596 = vmatpush.xpose.msra.mxu0 %v5577
    %5597 = vmatmul.f32.gmra.mxu0 %v5573
    %v5598 = vpop.f32.mrf.mxu0
    %v5599 = vadd.f32 0.0, %v5598
    %5600 = vmatmul.f32.gmra.mxu0 %v5575
    %v5601 = vpop.f32.mrf.mxu0
    %v5602 = vadd.f32 0.0, %v5601
    %5603 = vdwg.mxu0
    %v5604 = vmul.f32 %v5599, 0.25
    %v5605 = vmul.f32 %v5602, 0.25
    %v5606 = vadd.f32 %v5604, %v52
    %v5607 = vadd.f32 %v5605, %v53
    %v5608 = vsel %vm158, %v5606, -inf
    %5609 = vmax.xlane.f32.xlu0 %v5608
    %v5610 = vpop.xlane.xlu0 %5609
    %v5611 = vsel %vm158, %v5607, -inf
    %5612 = vmax.xlane.f32.xlu0 %v5611
    %v5613 = vpop.xlane.xlu0 %5612
    %v5614 = vsub.f32 %v5606, %v5610
    %v5615 = vsub.f32 %v5607, %v5613
    %v5616 = vmul.f32 %v5614, 1.442695
    %v5617 = vpow.pop %v5616
    %v5618 = vmul.f32 %v5615, 1.442695
    %v5619 = vpow.pop %v5618
    %v5620 = vsel %vm158, %v5617, 0.0
    %5621 = vadd.xlane.f32.xlu0 %v5620
    %v5622 = vpop.xlane.xlu0 %5621
    %v5623 = vsel %vm158, %v5619, 0.0
    %5624 = vadd.xlane.f32.xlu0 %v5623
    %v5625 = vpop.xlane.xlu0 %5624
    %v5626 = vrcp.pop %v5622
    %v5627 = vrcp.pop %v5625
    %v5628 = vmul.f32 %v5617, %v5626
    %v5629 = vmul.f32 %v5619, %v5627
    %v5633 = vsel %vm158, %v5628, 0
    %v5636 = vsel %vm158, %v5629, 0
    %5638 = vmatpush.msra.mxu0 0.0
    %5639 = vmatpush.msra.mxu0 0.0
    %5640 = vmatpush.msra.mxu0 0.0
    %5641 = vmatpush.msra.mxu0 0.0
    %5642 = vmatpush.msra.mxu0 0.0
    %5643 = vmatpush.msra.mxu0 0.0
    %5644 = vmatpush.msra.mxu0 0.0
    %5645 = vmatpush.msra.mxu0 0.0
    %5646 = vmatpush.msra.mxu0 0.0
    %5647 = vmatpush.msra.mxu0 0.0
    %5648 = vmatpush.msra.mxu0 0.0
    %5649 = vmatpush.msra.mxu0 0.0
    %5650 = vmatpush.msra.mxu0 0.0
    %5651 = vmatpush.msra.mxu0 0.0
    %5652 = vmatpush.msra.mxu0 %v5572
    %5653 = vmatpush.msra.mxu0 %v5570
    %5654 = vmatmul.f32.gmra.mxu0 %v5633
    %v5655 = vpop.f32.mrf.mxu0
    %v5656 = vadd.f32 0.0, %v5655
    %5657 = vmatmul.f32.gmra.mxu0 %v5636
    %v5658 = vpop.f32.mrf.mxu0
    %v5659 = vadd.f32 0.0, %v5658
    %5660 = vdwg.mxu0
    %5661 = vxpose.xlu0.b32.start [1/16] %v5628, 128
    %5662 = vxpose.xlu0.b32.cont [2/16] %v5629, 128
    %5663 = vxpose.xlu0.b32.cont [3/16] 0.0, 128
    %5664 = vxpose.xlu0.b32.cont [4/16] 0.0, 128
    %5665 = vxpose.xlu0.b32.cont [5/16] 0.0, 128
    %5666 = vxpose.xlu0.b32.cont [6/16] 0.0, 128
    %5667 = vxpose.xlu0.b32.cont [7/16] 0.0, 128
    %5668 = vxpose.xlu0.b32.cont [8/16] 0.0, 128
    %5669 = vxpose.xlu0.b32.cont [9/16] 0.0, 128
    %5670 = vxpose.xlu0.b32.cont [10/16] 0.0, 128
    %5671 = vxpose.xlu0.b32.cont [11/16] 0.0, 128
    %5672 = vxpose.xlu0.b32.cont [12/16] 0.0, 128
    %5673 = vxpose.xlu0.b32.cont [13/16] 0.0, 128
    %5674 = vxpose.xlu0.b32.cont [14/16] 0.0, 128
    %5675 = vxpose.xlu0.b32.cont [15/16] 0.0, 128
    %5676 = vxpose.xlu0.b32.end [16/16] 0.0, 128
    %v5677 = vpop.trf.xlu0
    %v5678 = vpop.trf.xlu0
    %v5679 = vpop.trf.xlu0
    %v5680 = vpop.trf.xlu0
    %v5681 = vpop.trf.xlu0
    %v5682 = vpop.trf.xlu0
    %v5683 = vpop.trf.xlu0
    %v5684 = vpop.trf.xlu0
    %v5685 = vpop.trf.xlu0
    %v5686 = vpop.trf.xlu0
    %v5687 = vpop.trf.xlu0
    %v5688 = vpop.trf.xlu0
    %v5689 = vpop.trf.xlu0
    %v5690 = vpop.trf.xlu0
    %v5691 = vpop.trf.xlu0
    %v5692 = vpop.trf.xlu0
    %v5696 = vsel %vm158, %v5677, 0
    %v5699 = vsel %vm158, %v5678, 0
    %5701 = vmatpush.msra.mxu0 0.0
    %5702 = vmatpush.msra.mxu0 0.0
    %5703 = vmatpush.msra.mxu0 0.0
    %5704 = vmatpush.msra.mxu0 0.0
    %5705 = vmatpush.msra.mxu0 0.0
    %5706 = vmatpush.msra.mxu0 0.0
    %5707 = vmatpush.msra.mxu0 0.0
    %5708 = vmatpush.msra.mxu0 0.0
    %5709 = vmatpush.msra.mxu0 0.0
    %5710 = vmatpush.msra.mxu0 0.0
    %5711 = vmatpush.msra.mxu0 0.0
    %5712 = vmatpush.msra.mxu0 0.0
    %5713 = vmatpush.msra.mxu0 0.0
    %5714 = vmatpush.msra.mxu0 0.0
    %5715 = vmatpush.msra.mxu0 %v5568
    %5716 = vmatpush.msra.mxu0 %v5566
    %5717 = vmatmul.f32.gmra.mxu0 %v5696
    %v5718 = vpop.f32.mrf.mxu0
    %v5719 = vadd.f32 0.0, %v5718
    %5720 = vmatmul.f32.gmra.mxu0 %v5699
    %v5721 = vpop.f32.mrf.mxu0
    %v5722 = vadd.f32 0.0, %v5721
    %5723 = vdwg.mxu0
    %5726 = vrot.lane.b32.xlu0 %v5497, 64
    %v5727 = vpop.permute.xlu0 %5726
    %5728 = vrot.lane.b32.xlu0 %v5500, 64
    %v5729 = vpop.permute.xlu0 %5728
    %5734 = vrot.lane.b32.xlu0 %v5656, 80
    %v5735 = vpop.permute.xlu0 %5734
    %5736 = vrot.lane.b32.xlu0 %v5659, 80
    %v5737 = vpop.permute.xlu0 %5736
    %5742 = vrot.lane.b32.xlu0 %v5560, 96
    %v5743 = vpop.permute.xlu0 %5742
    %5744 = vrot.lane.b32.xlu0 %v5563, 96
    %v5745 = vpop.permute.xlu0 %5744
    %5750 = vrot.lane.b32.xlu0 %v5719, 112
    %v5751 = vpop.permute.xlu0 %5750
    %5752 = vrot.lane.b32.xlu0 %v5722, 112
    %v5753 = vpop.permute.xlu0 %5752
    %v5756 = vsel %vm501, %v5402, %v5727
    %v5757 = vsel %vm501, %v5403, %v5729
    %v5758 = vsel %vm504, %v5756, %v5735
    %v5759 = vsel %vm504, %v5757, %v5737
    %v5760 = vsel %vm507, %v5758, %v5743
    %v5761 = vsel %vm507, %v5759, %v5745
    %v5762 = vsel %vm510, %v5760, %v5751
    %v5763 = vsel %vm510, %v5761, %v5753
    %v5764 = vpack.c.bf16 %v5763, %v5762
    %5765 = vmatpush.bf16.msra.mxu0 %v553
    %5766 = vmatpush.bf16.msra.mxu0 %v552
    %5767 = vmatpush.bf16.msra.mxu0 %v551
    %5768 = vmatpush.bf16.msra.mxu0 %v550
    %5769 = vmatpush.bf16.msra.mxu0 %v549
    %5770 = vmatpush.bf16.msra.mxu0 %v548
    %5771 = vmatpush.bf16.msra.mxu0 %v547
    %5772 = vmatpush.bf16.msra.mxu0 %v546
    %5773 = vmatmul.bf16.gmra.mxu0 %v5764
    %v5774 = vpop.f32.mrf.mxu0
    %v5775 = vadd.f32 0.0, %v5774
    %v5776 = vpop.f32.mrf.mxu0
    %v5777 = vadd.f32 0.0, %v5776
    %5778 = vdwg.mxu0
    %v5779 = vmul.f32 %v5775, %v107
    %v5780 = vmul.f32 %v5777, %v107
    %v5781 = vsel %vm54, %v5779, 0.0
    %5782 = vadd.xlane.f32.xlu0 %v5781
    %v5783 = vpop.xlane.xlu0 %5782
    %v5784 = vsel %vm54, %v5780, 0.0
    %5785 = vadd.xlane.f32.xlu0 %v5784
    %v5786 = vpop.xlane.xlu0 %5785
    %v5787 = vmul.f32 %v5783, %v67
    %v5788 = vmul.f32 %v5786, %v67
    %v5789 = vmul.f32 %v5779, %v5378
    %v5790 = vmul.f32 %v5780, %v5379
    %v5791 = vsel %vm54, %v5789, 0.0
    %5792 = vadd.xlane.f32.xlu0 %v5791
    %v5793 = vpop.xlane.xlu0 %5792
    %v5794 = vsel %vm54, %v5790, 0.0
    %5795 = vadd.xlane.f32.xlu0 %v5794
    %v5796 = vpop.xlane.xlu0 %5795
    %v5797 = vmul.f32 %v5793, %v67
    %v5798 = vmul.f32 %v5796, %v67
    %v5799 = vsub.f32 %v5779, %v5787
    %v5800 = vsub.f32 %v5780, %v5788
    %v5801 = vmul.f32 %v5378, %v5797
    %v5802 = vmul.f32 %v5379, %v5798
    %v5803 = vsub.f32 %v5799, %v5801
    %v5804 = vsub.f32 %v5800, %v5802
    %v5805 = vmul.f32 %v5367, %v5803
    %v5806 = vmul.f32 %v5377, %v5804
    %v5807 = vsub.f32 %v5334, %v5805
    %v5808 = vsub.f32 %v5335, %v5806
    %5809 = vst.msk [vmem:[#allocation2] sm:$0xff] %vm54, %v5807
    %5810 = vst.msk [vmem:[#allocation2 + $0x8] sm:$0xff] %vm54, %v5808
    %v5811 = vsel %vm54, %v5807, 0.0
    %5812 = vadd.xlane.f32.xlu0 %v5811
    %v5813 = vpop.xlane.xlu0 %5812
    %v5814 = vsel %vm54, %v5808, 0.0
    %5815 = vadd.xlane.f32.xlu0 %v5814
    %v5816 = vpop.xlane.xlu0 %5815
    %v5817 = vmul.f32 %v5813, %v67
    %v5818 = vmul.f32 %v5816, %v67
    %v5819 = vsub.f32 %v5807, %v5817
    %v5820 = vsub.f32 %v5808, %v5818
    %v5821 = vmul.f32 %v5819, %v5819
    %v5822 = vmul.f32 %v5820, %v5820
    %v5823 = vsel %vm54, %v5821, 0.0
    %5824 = vadd.xlane.f32.xlu0 %v5823
    %v5825 = vpop.xlane.xlu0 %5824
    %v5826 = vsel %vm54, %v5822, 0.0
    %5827 = vadd.xlane.f32.xlu0 %v5826
    %v5828 = vpop.xlane.xlu0 %5827
    %v5829 = vmul.f32 %v5825, %v67
    %v5830 = vmul.f32 %v5828, %v67
    %v5831 = vadd.f32 %v5829, 1e-05
    %v5832 = vadd.f32 %v5830, 1e-05
    %v5833 = vrsqrt.pop %v5831
    %v5834 = vmul.f32 %v5833, %v5831
    %v5835 = vmul.f32 %v5834, %v5833
    %v5836 = vmul.f32 0.5, %v5835
    %v5837 = vsub.f32 1.5, %v5836
    %v5838 = vmul.f32 %v5833, %v5837
    %vm5839 = vweird.f32 %v5831
    %vm5840 = vweird.f32 %v5833
    %vm5841 = vmor %vm5839, %vm5840
    %v5842 = vsel %vm5841, %v5833, %v5838
    %v5843 = vrsqrt.pop %v5832
    %v5844 = vmul.f32 %v5843, %v5832
    %v5845 = vmul.f32 %v5844, %v5843
    %v5846 = vmul.f32 0.5, %v5845
    %v5847 = vsub.f32 1.5, %v5846
    %v5848 = vmul.f32 %v5843, %v5847
    %vm5849 = vweird.f32 %v5832
    %vm5850 = vweird.f32 %v5843
    %vm5851 = vmor %vm5849, %vm5850
    %v5852 = vsel %vm5851, %v5843, %v5848
    %v5853 = vmul.f32 %v5819, %v5842
    %v5854 = vmul.f32 %v5820, %v5852
    %v5855 = vmul.f32 %v107, %v5853
    %v5856 = vmul.f32 %v107, %v5854
    %v5857 = vadd.f32 %v5855, %v112
    %v5858 = vadd.f32 %v5856, %v112
    %v5859 = vpack.c.bf16 %v5858, %v5857
    %v5861 = vsel %vm54, %v5859, 0
    %5863 = vmatpush.bf16.msra.mxu0 0
    %5864 = vmatpush.bf16.msra.mxu0 0
    %5865 = vmatpush.bf16.msra.mxu0 0
    %5866 = vmatpush.bf16.msra.mxu0 0
    %5867 = vmatpush.bf16.msra.mxu0 0
    %5868 = vmatpush.bf16.msra.mxu0 0
    %5869 = vmatpush.bf16.msra.mxu0 %v126
    %5870 = vmatpush.bf16.msra.mxu0 %v125
    %5871 = vmatmul.bf16.gmra.mxu0 %v5861
    %v5872 = vpop.f32.mrf.mxu0
    %v5873 = vadd.f32 0.0, %v5872
    %v5874 = vpop.f32.mrf.mxu0
    %v5875 = vadd.f32 0.0, %v5874
    %5876 = vdwg.mxu0
    %v5877 = vmax.f32 %v5873, 0.0
    %v5878 = vmax.f32 %v5875, 0.0
    %v5879 = vmul.f32 %v5877, %v5877
    %v5880 = vmul.f32 %v5878, %v5878
    %v5881 = vsel %vm501, %v5879, 0.0
    %v5882 = vsel %vm501, %v5880, 0.0
    %v5883 = vadd.f32 %v5881, %v5882
    %5884 = vadd.xlane.f32.xlu0 %v5883
    %v5885 = vpop.xlane.xlu0 %5884
    %v5886 = vrot.slane %v5885, 4
    %v5887 = vadd.f32 %v5885, %v5886
    %v5888 = vrot.slane %v5887, 2
    %v5889 = vadd.f32 %v5887, %v5888
    %v5890 = vrot.slane %v5889, 1
    %v5891 = vadd.f32 %v5889, %v5890
    %s5892 = vtos %v5891
    %s5893 = smul.f32 %s5892, -0.5
    %5896 = vrot.lane.b32.xlu0 %v5873, 64
    %v5897 = vpop.permute.xlu0 %5896
    %5898 = vrot.lane.b32.xlu0 %v5875, 64
    %v5899 = vpop.permute.xlu0 %5898
    %5900 = vrot.lane.b32.xlu0 %v5873, 32
    %v5901 = vpop.permute.xlu0 %5900
    %5902 = vrot.lane.b32.xlu0 %v5875, 32
    %v5903 = vpop.permute.xlu0 %5902
    %v5904 = vsel %vm158, %v5897, 0
    %v5906 = vsel %vm158, %v5899, 0
    %v5908 = vsel %vm158, %v5901, 0
    %v5910 = vsel %vm158, %v5903, 0
    %5912 = vmatpush.xpose.msra.mxu0 0.0
    %5913 = vmatpush.xpose.msra.mxu0 0.0
    %5914 = vmatpush.xpose.msra.mxu0 0.0
    %5915 = vmatpush.xpose.msra.mxu0 0.0
    %5916 = vmatpush.xpose.msra.mxu0 0.0
    %5917 = vmatpush.xpose.msra.mxu0 0.0
    %5918 = vmatpush.xpose.msra.mxu0 0.0
    %5919 = vmatpush.xpose.msra.mxu0 0.0
    %5920 = vmatpush.xpose.msra.mxu0 0.0
    %5921 = vmatpush.xpose.msra.mxu0 0.0
    %5922 = vmatpush.xpose.msra.mxu0 0.0
    %5923 = vmatpush.xpose.msra.mxu0 0.0
    %5924 = vmatpush.xpose.msra.mxu0 0.0
    %5925 = vmatpush.xpose.msra.mxu0 0.0
    %5926 = vmatpush.xpose.msra.mxu0 %v5910
    %5927 = vmatpush.xpose.msra.mxu0 %v5908
    %5928 = vmatmul.f32.gmra.mxu0 %v5904
    %v5929 = vpop.f32.mrf.mxu0
    %v5930 = vadd.f32 0.0, %v5929
    %5931 = vmatmul.f32.gmra.mxu0 %v5906
    %v5932 = vpop.f32.mrf.mxu0
    %v5933 = vadd.f32 0.0, %v5932
    %5934 = vdwg.mxu0
    %v5935 = vmul.f32 %v5930, 0.25
    %v5936 = vmul.f32 %v5933, 0.25
    %v5937 = vadd.f32 %v5935, %v52
    %v5938 = vadd.f32 %v5936, %v53
    %v5939 = vsel %vm158, %v5937, -inf
    %5940 = vmax.xlane.f32.xlu0 %v5939
    %v5941 = vpop.xlane.xlu0 %5940
    %v5942 = vsel %vm158, %v5938, -inf
    %5943 = vmax.xlane.f32.xlu0 %v5942
    %v5944 = vpop.xlane.xlu0 %5943
    %v5945 = vsub.f32 %v5937, %v5941
    %v5946 = vsub.f32 %v5938, %v5944
    %v5947 = vmul.f32 %v5945, 1.442695
    %v5948 = vpow.pop %v5947
    %v5949 = vmul.f32 %v5946, 1.442695
    %v5950 = vpow.pop %v5949
    %v5951 = vsel %vm158, %v5948, 0.0
    %5952 = vadd.xlane.f32.xlu0 %v5951
    %v5953 = vpop.xlane.xlu0 %5952
    %v5954 = vsel %vm158, %v5950, 0.0
    %5955 = vadd.xlane.f32.xlu0 %v5954
    %v5956 = vpop.xlane.xlu0 %5955
    %v5957 = vlog2.pop %v5953
    %v5958 = vmul.f32 %v5957, 0.6931472
    %v5959 = vlog2.pop %v5956
    %v5960 = vmul.f32 %v5959, 0.6931472
    %v5961 = vadd.f32 %v5941, %v5958
    %v5962 = vadd.f32 %v5944, %v5960
    %vm5963 = vcmask 7168
    %v5964 = vsel %vm5963, %v5961, 0.0
    %v5965 = vsel %vm5963, %v5962, 0.0
    %v5966 = vadd.f32 %v5964, %v5965
    %5967 = vadd.xlane.f32.xlu0 %v5966
    %v5968 = vpop.xlane.xlu0 %5967
    %v5969 = vrot.slane %v5968, 4
    %v5970 = vadd.f32 %v5968, %v5969
    %v5971 = vrot.slane %v5970, 2
    %v5972 = vadd.f32 %v5970, %v5971
    %v5973 = vrot.slane %v5972, 1
    %v5974 = vadd.f32 %v5972, %v5973
    %s5975 = vtos %v5974
    %v5976 = vrcp.pop 0.25
    %v5977 = vmul.f32 0.25, %v5976
    %v5978 = vsub.f32 1.0, %v5977
    %v5979 = vmul.f32 %v5976, %v5978
    %v5980 = vadd.f32 %v5976, %v5979
    %vm5981 = vweird.f32 %v5976
    %v5982 = vsel %vm5981, %v5976, %v5980
    %s5983 = vtos %v5982
    %s5984 = smul.f32 %s5975, %s5983
    %s5985 = ssub.f32 %s5893, %s5984
    %5986 = vrot.lane.b32.xlu0 %v5873, 48
    %v5987 = vpop.permute.xlu0 %5986
    %5988 = vrot.lane.b32.xlu0 %v5875, 48
    %v5989 = vpop.permute.xlu0 %5988
    %5990 = vrot.lane.b32.xlu0 %v5873, 16
    %v5991 = vpop.permute.xlu0 %5990
    %5992 = vrot.lane.b32.xlu0 %v5875, 16
    %v5993 = vpop.permute.xlu0 %5992
    %v5994 = vsel %vm158, %v5987, 0
    %v5996 = vsel %vm158, %v5989, 0
    %v5998 = vsel %vm158, %v5991, 0
    %v6000 = vsel %vm158, %v5993, 0
    %6002 = vmatpush.xpose.msra.mxu0 0.0
    %6003 = vmatpush.xpose.msra.mxu0 0.0
    %6004 = vmatpush.xpose.msra.mxu0 0.0
    %6005 = vmatpush.xpose.msra.mxu0 0.0
    %6006 = vmatpush.xpose.msra.mxu0 0.0
    %6007 = vmatpush.xpose.msra.mxu0 0.0
    %6008 = vmatpush.xpose.msra.mxu0 0.0
    %6009 = vmatpush.xpose.msra.mxu0 0.0
    %6010 = vmatpush.xpose.msra.mxu0 0.0
    %6011 = vmatpush.xpose.msra.mxu0 0.0
    %6012 = vmatpush.xpose.msra.mxu0 0.0
    %6013 = vmatpush.xpose.msra.mxu0 0.0
    %6014 = vmatpush.xpose.msra.mxu0 0.0
    %6015 = vmatpush.xpose.msra.mxu0 0.0
    %6016 = vmatpush.xpose.msra.mxu0 %v6000
    %6017 = vmatpush.xpose.msra.mxu0 %v5998
    %6018 = vmatmul.f32.gmra.mxu0 %v5994
    %v6019 = vpop.f32.mrf.mxu0
    %v6020 = vadd.f32 0.0, %v6019
    %6021 = vmatmul.f32.gmra.mxu0 %v5996
    %v6022 = vpop.f32.mrf.mxu0
    %v6023 = vadd.f32 0.0, %v6022
    %6024 = vdwg.mxu0
    %v6025 = vmul.f32 %v6020, 0.25
    %v6026 = vmul.f32 %v6023, 0.25
    %v6027 = vadd.f32 %v6025, %v52
    %v6028 = vadd.f32 %v6026, %v53
    %v6029 = vsel %vm158, %v6027, -inf
    %6030 = vmax.xlane.f32.xlu0 %v6029
    %v6031 = vpop.xlane.xlu0 %6030
    %v6032 = vsel %vm158, %v6028, -inf
    %6033 = vmax.xlane.f32.xlu0 %v6032
    %v6034 = vpop.xlane.xlu0 %6033
    %v6035 = vsub.f32 %v6027, %v6031
    %v6036 = vsub.f32 %v6028, %v6034
    %v6037 = vmul.f32 %v6035, 1.442695
    %v6038 = vpow.pop %v6037
    %v6039 = vmul.f32 %v6036, 1.442695
    %v6040 = vpow.pop %v6039
    %v6041 = vsel %vm158, %v6038, 0.0
    %6042 = vadd.xlane.f32.xlu0 %v6041
    %v6043 = vpop.xlane.xlu0 %6042
    %v6044 = vsel %vm158, %v6040, 0.0
    %6045 = vadd.xlane.f32.xlu0 %v6044
    %v6046 = vpop.xlane.xlu0 %6045
    %v6047 = vlog2.pop %v6043
    %v6048 = vmul.f32 %v6047, 0.6931472
    %v6049 = vlog2.pop %v6046
    %v6050 = vmul.f32 %v6049, 0.6931472
    %v6051 = vadd.f32 %v6031, %v6048
    %v6052 = vadd.f32 %v6034, %v6050
    %v6053 = vsel %vm5963, %v6051, 0.0
    %v6054 = vsel %vm5963, %v6052, 0.0
    %v6055 = vadd.f32 %v6053, %v6054
    %6056 = vadd.xlane.f32.xlu0 %v6055
    %v6057 = vpop.xlane.xlu0 %6056
    %v6058 = vrot.slane %v6057, 4
    %v6059 = vadd.f32 %v6057, %v6058
    %v6060 = vrot.slane %v6059, 2
    %v6061 = vadd.f32 %v6059, %v6060
    %v6062 = vrot.slane %v6061, 1
    %v6063 = vadd.f32 %v6061, %v6062
    %s6064 = vtos %v6063
    %v6065 = vrcp.pop 0.25
    %v6066 = vmul.f32 0.25, %v6065
    %v6067 = vsub.f32 1.0, %v6066
    %v6068 = vmul.f32 %v6065, %v6067
    %v6069 = vadd.f32 %v6065, %v6068
    %vm6070 = vweird.f32 %v6065
    %v6071 = vsel %vm6070, %v6065, %v6069
    %s6072 = vtos %v6071
    %s6073 = smul.f32 %s6064, %s6072
    %s6074 = ssub.f32 %s5985, %s6073
    %s6075 = scalar_lea.smem [#allocation5], 0
    %6076 = sst [smem:[%s6075]] %s6074
    // Predicated region
    $region26: #{et_forward_pallas.1} parent=1 // pred_check
      _
    $region27: #{et_forward_pallas.1} parent=1 // pred_check_branch
      %6078 = sbr.rel (0) target = $region29
    $region28: #{et_forward_pallas.1} parent=1 // pred_region
      %6080 = vsyncadd [#allocation3], 0
      %s6081 = sshll.u32 [#allocation2], 4
      %s6082 = int_to_ptr.vmem [resolvable:$true] %s6081
      %s6083 = sshll.u32 %s6, 4
      %s6084 = int_to_ptr.hbm [resolvable:$true] %s6083
      %6089 = dma.vmem_to_hbm [thread:$0]  %s6082, 256, %s6084, [#allocation3], 128, 128, 8
    $region29: #{et_forward_pallas.1} parent=1 // pred_fallthru
      _
    // Predicated region
    $region30: #{et_forward_pallas.1} parent=1 // pred_check
      _
    $region31: #{et_forward_pallas.1} parent=1 // pred_check_branch
      %6091 = sbr.rel (0) target = $region33
    $region32: #{et_forward_pallas.1} parent=1 // pred_region
      %6093 = vsyncadd [#allocation4], 0
      %s6095 = sshll.u32 %s7, 4
      %s6096 = int_to_ptr.hbm [resolvable:$true] %s6095
      %6098 = dma.smem_to_hbm [#allocation5], 16, %s6096, [#allocation4]
    $region33: #{et_forward_pallas.1} parent=1 // pred_fallthru
      _
    // Predicated region
    $region34: #{et_forward_pallas.1} parent=1 // pred_check
      _
    $region35: #{et_forward_pallas.1} parent=1 // pred_check_branch
      %6100 = sbr.rel (0) target = $region37
    $region36: #{et_forward_pallas.1} parent=1 // pred_region
      %6102 = dma.done [#allocation3], 256
    $region37: #{et_forward_pallas.1} parent=1 // pred_fallthru
      _
    // Predicated region
    $region38: #{et_forward_pallas.1} parent=1 // pred_check
      _
    $region39: #{et_forward_pallas.1} parent=1 // pred_check_branch
      %6104 = sbr.rel (0) target = $region41
    $region40: #{et_forward_pallas.1} parent=1 // pred_region
      %6106 = dma.done [#allocation4], 16
    $region41: #{et_forward_pallas.1} parent=1 // pred_fallthru
      _
    %6107 = sfence
    %6108 = vsyncpa [#allocation3], 1
    %6109 = vsyncpa [#allocation4], 1

</llo_original>
